<compile_context>
chip_gen: v5e
topology: v5e:2x2
jax: 0.10.0
libtpu: 0.0.40
codegen_flags: <defaults>
</compile_context>

<pallas_src>
import jax
import jax.numpy as jnp
from jax.experimental import pallas as pl
from jax.experimental.pallas import tpu as pltpu

INPUT_SIZE = 16      # X_train.shape[1] — synthetic choice
NUM_CLASSES = 8      # len(label_encoder.classes_) — synthetic choice
HIDDEN = (128, 256, 1024, 1024, 256, 128)


def _round_up(x, m):
    return ((x + m - 1) // m) * m


def _mlp_kernel(x_ref, *refs):
    """Fused 7-layer forward pass for one batch tile.

    refs = (w1, b1, ..., w7, b7, out_ref). Weights are bf16 and resident in
    VMEM; biases are f32. All matmuls accumulate in f32 on the MXU; bias-add
    and ReLU run in f32 on the VPU.
    """
    out_ref = refs[-1]
    wb = refs[:-1]
    n_layers = len(wb) // 2

    h = x_ref[...]                                    # f32 (tile_b, 128)
    for layer in range(n_layers):
        w_ref = wb[2 * layer]
        b_ref = wb[2 * layer + 1]
        y = jnp.dot(h.astype(w_ref.dtype), w_ref[...],
                    preferred_element_type=jnp.float32)
        y = y + b_ref[...]                            # (1, N) broadcasts over rows
        if layer < n_layers - 1:
            y = jnp.maximum(y, 0.0)                   # ReLU (dropout -> identity)
        h = y
    out_ref[...] = h.astype(out_ref.dtype)


def mlp_forward(x, params, *, tile_b=128):
    """x: (B, INPUT_SIZE) float32. params: list of (W (in,out) f32, b (1,out) f32)."""
    B, F = x.shape
    num_classes = params[-1][0].shape[1]
    n_layers = len(params)

    F_pad = _round_up(F, 128)            # lane-dense input block
    C_pad = _round_up(num_classes, 128)  # lane-dense output block
    B_pad = _round_up(B, tile_b)

    # --- one-time padding / bf16 cast, outside the kernel -------------------
    x_p = jnp.zeros((B_pad, F_pad), jnp.float32).at[:B, :F].set(x)

    flat = []
    for i, (w, b) in enumerate(params):
        ki, ko = w.shape
        ki_p = F_pad if i == 0 else ki
        ko_p = C_pad if i == n_layers - 1 else ko
        w_p = (jnp.zeros((ki_p, ko_p), jnp.float32)
               .at[:ki, :ko].set(w)).astype(jnp.bfloat16)
        b_p = jnp.zeros((1, ko_p), jnp.float32).at[:, :ko].set(b)
        flat.extend([w_p, b_p])

    # --- BlockSpecs ----------------------------------------------------------
    # x / out are tiled over the batch; every weight/bias is one full block
    # with a constant index map (resident across the whole grid).
    in_specs = [pl.BlockSpec((tile_b, F_pad), lambda i: (i, 0))]
    in_specs += [pl.BlockSpec(a.shape, lambda i: (0, 0)) for a in flat]
    out_specs = pl.BlockSpec((tile_b, C_pad), lambda i: (i, 0))

    out = pl.pallas_call(
        _mlp_kernel,
        out_shape=jax.ShapeDtypeStruct((B_pad, C_pad), jnp.float32),
        grid_spec=pltpu.PrefetchScalarGridSpec(
            num_scalar_prefetch=0,
            grid=(B_pad // tile_b,),          # >= 2 steps lets v7x use both TCs
            in_specs=in_specs,
            out_specs=out_specs,
        ),
        compiler_params=pltpu.CompilerParams(
            dimension_semantics=("parallel",),
        ),
    )(x_p, *flat)

    return out[:B, :num_classes]


def init_params(key, input_size, num_classes):
    """Deterministic init mimicking nn.Linear default: U(-1/sqrt(fan_in), +)."""
    dims = [input_size, *HIDDEN, num_classes]
    params = []
    for i in range(len(dims) - 1):
        fan_in, fan_out = dims[i], dims[i + 1]
        key, kw, kb = jax.random.split(key, 3)
        bound = 1.0 / jnp.sqrt(jnp.float32(fan_in))
        w = jax.random.uniform(kw, (fan_in, fan_out), jnp.float32, -bound, bound)
        b = jax.random.uniform(kb, (1, fan_out), jnp.float32, -bound, bound)
        params.append((w, b))
    return params


def mlp_reference_f32(x, params):
    h = x
    for i, (w, b) in enumerate(params):
        h = h @ w + b
        if i < len(params) - 1:
            h = jnp.maximum(h, 0.0)
    return h


def mlp_reference_mixed(x, params):
    """Same mixed precision as the kernel: bf16 operands, f32 accumulate/VPU."""
    h = x
    for i, (w, b) in enumerate(params):
        h = jnp.dot(h.astype(jnp.bfloat16), w.astype(jnp.bfloat16),
                    preferred_element_type=jnp.float32) + b
        if i < len(params) - 1:
            h = jnp.maximum(h, 0.0)
    return h


if __name__ == "__main__":
    key = jax.random.PRNGKey(0)
    key, kx = jax.random.split(key)

    batch = 200                                   # exercises batch padding + grid of 2
    x = jax.random.normal(kx, (batch, INPUT_SIZE), jnp.float32)
    params = init_params(key, INPUT_SIZE, NUM_CLASSES)

    out = mlp_forward(x, params, tile_b=128)
    out = jax.block_until_ready(out)
    assert out.shape == (batch, NUM_CLASSES)

    # Tight check vs a reference that uses the same bf16/f32 mixed precision.
    ref_mixed = mlp_reference_mixed(x, params)
    assert jnp.allclose(out, ref_mixed, atol=1e-2, rtol=1e-2), "mismatch vs mixed ref"

    # Loose sanity check vs the pure-f32 reference (bf16 weight quantization).
    ref_f32 = mlp_reference_f32(x, params)
    assert jnp.allclose(out, ref_f32, atol=1.5e-1, rtol=1.5e-1), "mismatch vs f32 ref"

    print("KERNEL_OK")
</pallas_src>

<mosaic_0001>
module attributes {stable_mosaic.version = 11 : i64} {
  func.func @_mlp_kernel(%arg0: i32, %arg1: memref<128x128xf32, #tpu.memory_space<vmem>>, %arg2: memref<128x128xbf16, #tpu.memory_space<vmem>>, %arg3: memref<1x128xf32, #tpu.memory_space<vmem>>, %arg4: memref<128x256xbf16, #tpu.memory_space<vmem>>, %arg5: memref<1x256xf32, #tpu.memory_space<vmem>>, %arg6: memref<256x1024xbf16, #tpu.memory_space<vmem>>, %arg7: memref<1x1024xf32, #tpu.memory_space<vmem>>, %arg8: memref<1024x1024xbf16, #tpu.memory_space<vmem>>, %arg9: memref<1x1024xf32, #tpu.memory_space<vmem>>, %arg10: memref<1024x256xbf16, #tpu.memory_space<vmem>>, %arg11: memref<1x256xf32, #tpu.memory_space<vmem>>, %arg12: memref<256x128xbf16, #tpu.memory_space<vmem>>, %arg13: memref<1x128xf32, #tpu.memory_space<vmem>>, %arg14: memref<128x128xbf16, #tpu.memory_space<vmem>>, %arg15: memref<1x128xf32, #tpu.memory_space<vmem>>, %arg16: memref<128x128xf32, #tpu.memory_space<vmem>>) attributes {dimension_semantics = [#tpu.dimension_semantics<parallel>], iteration_bounds = array<i64: 2>, scalar_prefetch = 0 : i64, scratch_operands = 0 : i64, tpu.core_type = #tpu.core_type<tc>, window_params = [{transform_indices = @transform_0, window_bounds = array<i64: 128, 128>}, {pipeline_mode = #tpu.pipeline_mode<synchronous>, transform_indices = @transform_1, window_bounds = array<i64: 128, 128>}, {pipeline_mode = #tpu.pipeline_mode<synchronous>, transform_indices = @transform_2, window_bounds = array<i64: 1, 128>}, {pipeline_mode = #tpu.pipeline_mode<synchronous>, transform_indices = @transform_3, window_bounds = array<i64: 128, 256>}, {pipeline_mode = #tpu.pipeline_mode<synchronous>, transform_indices = @transform_4, window_bounds = array<i64: 1, 256>}, {pipeline_mode = #tpu.pipeline_mode<synchronous>, transform_indices = @transform_5, window_bounds = array<i64: 256, 1024>}, {pipeline_mode = #tpu.pipeline_mode<synchronous>, transform_indices = @transform_6, window_bounds = array<i64: 1, 1024>}, {pipeline_mode = #tpu.pipeline_mode<synchronous>, transform_indices = @transform_7, window_bounds = array<i64: 1024, 1024>}, {pipeline_mode = #tpu.pipeline_mode<synchronous>, transform_indices = @transform_8, window_bounds = array<i64: 1, 1024>}, {pipeline_mode = #tpu.pipeline_mode<synchronous>, transform_indices = @transform_9, window_bounds = array<i64: 1024, 256>}, {pipeline_mode = #tpu.pipeline_mode<synchronous>, transform_indices = @transform_10, window_bounds = array<i64: 1, 256>}, {pipeline_mode = #tpu.pipeline_mode<synchronous>, transform_indices = @transform_11, window_bounds = array<i64: 256, 128>}, {pipeline_mode = #tpu.pipeline_mode<synchronous>, transform_indices = @transform_12, window_bounds = array<i64: 1, 128>}, {pipeline_mode = #tpu.pipeline_mode<synchronous>, transform_indices = @transform_13, window_bounds = array<i64: 128, 128>}, {pipeline_mode = #tpu.pipeline_mode<synchronous>, transform_indices = @transform_14, window_bounds = array<i64: 1, 128>}, {transform_indices = @transform_15, window_bounds = array<i64: 128, 128>}]} {
    %c0 = arith.constant 0 : index
    %c0_0 = arith.constant 0 : index
    %0 = vector.load %arg1[%c0, %c0_0] : memref<128x128xf32, #tpu.memory_space<vmem>>, vector<128x128xf32>
    %1 = arith.truncf %0 : vector<128x128xf32> to vector<128x128xbf16>
    %c0_1 = arith.constant 0 : index
    %c0_2 = arith.constant 0 : index
    %2 = vector.load %arg2[%c0_1, %c0_2] : memref<128x128xbf16, #tpu.memory_space<vmem>>, vector<128x128xbf16>
    %cst = arith.constant dense<0.000000e+00> : vector<128x128xf32>
    %3 = tpu.matmul %1, %2, %cst {dimension_numbers = #tpu.dot_dimension_numbers<[1], [0], [0], [1], [0, 0, 1, 1], [], []>} : vector<128x128xbf16>, vector<128x128xbf16>, vector<128x128xf32> -> vector<128x128xf32>
    %c0_3 = arith.constant 0 : index
    %c0_4 = arith.constant 0 : index
    %4 = vector.load %arg3[%c0_3, %c0_4] : memref<1x128xf32, #tpu.memory_space<vmem>>, vector<1x128xf32>
    %5 = vector.broadcast %4 : vector<1x128xf32> to vector<128x128xf32>
    %6 = arith.addf %3, %5 : vector<128x128xf32>
    %cst_5 = arith.constant 0.000000e+00 : f32
    %7 = vector.broadcast %cst_5 : f32 to vector<128x128xf32>
    %8 = arith.maximumf %6, %7 : vector<128x128xf32>
    %9 = arith.truncf %8 : vector<128x128xf32> to vector<128x128xbf16>
    %c0_6 = arith.constant 0 : index
    %c0_7 = arith.constant 0 : index
    %10 = vector.load %arg4[%c0_6, %c0_7] : memref<128x256xbf16, #tpu.memory_space<vmem>>, vector<128x256xbf16>
    %cst_8 = arith.constant dense<0.000000e+00> : vector<128x256xf32>
    %11 = tpu.matmul %9, %10, %cst_8 {dimension_numbers = #tpu.dot_dimension_numbers<[1], [0], [0], [1], [0, 0, 1, 1], [], []>} : vector<128x128xbf16>, vector<128x256xbf16>, vector<128x256xf32> -> vector<128x256xf32>
    %c0_9 = arith.constant 0 : index
    %c0_10 = arith.constant 0 : index
    %12 = vector.load %arg5[%c0_9, %c0_10] : memref<1x256xf32, #tpu.memory_space<vmem>>, vector<1x256xf32>
    %13 = vector.broadcast %12 : vector<1x256xf32> to vector<128x256xf32>
    %14 = arith.addf %11, %13 : vector<128x256xf32>
    %cst_11 = arith.constant 0.000000e+00 : f32
    %15 = vector.broadcast %cst_11 : f32 to vector<128x256xf32>
    %16 = arith.maximumf %14, %15 : vector<128x256xf32>
    %17 = arith.truncf %16 : vector<128x256xf32> to vector<128x256xbf16>
    %c0_12 = arith.constant 0 : index
    %c0_13 = arith.constant 0 : index
    %18 = vector.load %arg6[%c0_12, %c0_13] : memref<256x1024xbf16, #tpu.memory_space<vmem>>, vector<256x1024xbf16>
    %cst_14 = arith.constant dense<0.000000e+00> : vector<128x1024xf32>
    %19 = tpu.matmul %17, %18, %cst_14 {dimension_numbers = #tpu.dot_dimension_numbers<[1], [0], [0], [1], [0, 0, 1, 1], [], []>} : vector<128x256xbf16>, vector<256x1024xbf16>, vector<128x1024xf32> -> vector<128x1024xf32>
    %c0_15 = arith.constant 0 : index
    %c0_16 = arith.constant 0 : index
    %20 = vector.load %arg7[%c0_15, %c0_16] : memref<1x1024xf32, #tpu.memory_space<vmem>>, vector<1x1024xf32>
    %21 = vector.broadcast %20 : vector<1x1024xf32> to vector<128x1024xf32>
    %22 = arith.addf %19, %21 : vector<128x1024xf32>
    %cst_17 = arith.constant 0.000000e+00 : f32
    %23 = vector.broadcast %cst_17 : f32 to vector<128x1024xf32>
    %24 = arith.maximumf %22, %23 : vector<128x1024xf32>
    %25 = arith.truncf %24 : vector<128x1024xf32> to vector<128x1024xbf16>
    %c0_18 = arith.constant 0 : index
    %c0_19 = arith.constant 0 : index
    %26 = vector.load %arg8[%c0_18, %c0_19] : memref<1024x1024xbf16, #tpu.memory_space<vmem>>, vector<1024x1024xbf16>
    %cst_20 = arith.constant dense<0.000000e+00> : vector<128x1024xf32>
    %27 = tpu.matmul %25, %26, %cst_20 {dimension_numbers = #tpu.dot_dimension_numbers<[1], [0], [0], [1], [0, 0, 1, 1], [], []>} : vector<128x1024xbf16>, vector<1024x1024xbf16>, vector<128x1024xf32> -> vector<128x1024xf32>
    %c0_21 = arith.constant 0 : index
    %c0_22 = arith.constant 0 : index
    %28 = vector.load %arg9[%c0_21, %c0_22] : memref<1x1024xf32, #tpu.memory_space<vmem>>, vector<1x1024xf32>
    %29 = vector.broadcast %28 : vector<1x1024xf32> to vector<128x1024xf32>
    %30 = arith.addf %27, %29 : vector<128x1024xf32>
    %cst_23 = arith.constant 0.000000e+00 : f32
    %31 = vector.broadcast %cst_23 : f32 to vector<128x1024xf32>
    %32 = arith.maximumf %30, %31 : vector<128x1024xf32>
    %33 = arith.truncf %32 : vector<128x1024xf32> to vector<128x1024xbf16>
    %c0_24 = arith.constant 0 : index
    %c0_25 = arith.constant 0 : index
    %34 = vector.load %arg10[%c0_24, %c0_25] : memref<1024x256xbf16, #tpu.memory_space<vmem>>, vector<1024x256xbf16>
    %cst_26 = arith.constant dense<0.000000e+00> : vector<128x256xf32>
    %35 = tpu.matmul %33, %34, %cst_26 {dimension_numbers = #tpu.dot_dimension_numbers<[1], [0], [0], [1], [0, 0, 1, 1], [], []>} : vector<128x1024xbf16>, vector<1024x256xbf16>, vector<128x256xf32> -> vector<128x256xf32>
    %c0_27 = arith.constant 0 : index
    %c0_28 = arith.constant 0 : index
    %36 = vector.load %arg11[%c0_27, %c0_28] : memref<1x256xf32, #tpu.memory_space<vmem>>, vector<1x256xf32>
    %37 = vector.broadcast %36 : vector<1x256xf32> to vector<128x256xf32>
    %38 = arith.addf %35, %37 : vector<128x256xf32>
    %cst_29 = arith.constant 0.000000e+00 : f32
    %39 = vector.broadcast %cst_29 : f32 to vector<128x256xf32>
    %40 = arith.maximumf %38, %39 : vector<128x256xf32>
    %41 = arith.truncf %40 : vector<128x256xf32> to vector<128x256xbf16>
    %c0_30 = arith.constant 0 : index
    %c0_31 = arith.constant 0 : index
    %42 = vector.load %arg12[%c0_30, %c0_31] : memref<256x128xbf16, #tpu.memory_space<vmem>>, vector<256x128xbf16>
    %cst_32 = arith.constant dense<0.000000e+00> : vector<128x128xf32>
    %43 = tpu.matmul %41, %42, %cst_32 {dimension_numbers = #tpu.dot_dimension_numbers<[1], [0], [0], [1], [0, 0, 1, 1], [], []>} : vector<128x256xbf16>, vector<256x128xbf16>, vector<128x128xf32> -> vector<128x128xf32>
    %c0_33 = arith.constant 0 : index
    %c0_34 = arith.constant 0 : index
    %44 = vector.load %arg13[%c0_33, %c0_34] : memref<1x128xf32, #tpu.memory_space<vmem>>, vector<1x128xf32>
    %45 = vector.broadcast %44 : vector<1x128xf32> to vector<128x128xf32>
    %46 = arith.addf %43, %45 : vector<128x128xf32>
    %cst_35 = arith.constant 0.000000e+00 : f32
    %47 = vector.broadcast %cst_35 : f32 to vector<128x128xf32>
    %48 = arith.maximumf %46, %47 : vector<128x128xf32>
    %49 = arith.truncf %48 : vector<128x128xf32> to vector<128x128xbf16>
    %c0_36 = arith.constant 0 : index
    %c0_37 = arith.constant 0 : index
    %50 = vector.load %arg14[%c0_36, %c0_37] : memref<128x128xbf16, #tpu.memory_space<vmem>>, vector<128x128xbf16>
    %cst_38 = arith.constant dense<0.000000e+00> : vector<128x128xf32>
    %51 = tpu.matmul %49, %50, %cst_38 {dimension_numbers = #tpu.dot_dimension_numbers<[1], [0], [0], [1], [0, 0, 1, 1], [], []>} : vector<128x128xbf16>, vector<128x128xbf16>, vector<128x128xf32> -> vector<128x128xf32>
    %c0_39 = arith.constant 0 : index
    %c0_40 = arith.constant 0 : index
    %52 = vector.load %arg15[%c0_39, %c0_40] : memref<1x128xf32, #tpu.memory_space<vmem>>, vector<1x128xf32>
    %53 = vector.broadcast %52 : vector<1x128xf32> to vector<128x128xf32>
    %54 = arith.addf %51, %53 : vector<128x128xf32>
    %c0_41 = arith.constant 0 : index
    %c0_42 = arith.constant 0 : index
    %55 = vector.load %arg16[%c0_41, %c0_42] : memref<128x128xf32, #tpu.memory_space<vmem>>, vector<128x128xf32>
    tpu.vector_store %arg16[%c0_41, %c0_42], %54 {strides = array<i32>} : memref<128x128xf32, #tpu.memory_space<vmem>>, vector<128x128xf32>,
    return
  }
  func.func @transform_0(%arg0: i32) -> (i32, i32) {
    %c0_i32 = arith.constant 0 : i32
    %c0_i32_0 = arith.constant 0 : i32
    return %arg0, %c0_i32 : i32, i32
  }
  func.func @transform_1(%arg0: i32) -> (i32, i32) {
    %c0_i32 = arith.constant 0 : i32
    %c0_i32_0 = arith.constant 0 : i32
    %c0_i32_1 = arith.constant 0 : i32
    return %c0_i32, %c0_i32_0 : i32, i32
  }
  func.func @transform_2(%arg0: i32) -> (i32, i32) {
    %c0_i32 = arith.constant 0 : i32
    %c0_i32_0 = arith.constant 0 : i32
    %c0_i32_1 = arith.constant 0 : i32
    return %c0_i32, %c0_i32_0 : i32, i32
  }
  func.func @transform_3(%arg0: i32) -> (i32, i32) {
    %c0_i32 = arith.constant 0 : i32
    %c0_i32_0 = arith.constant 0 : i32
    %c0_i32_1 = arith.constant 0 : i32
    return %c0_i32, %c0_i32_0 : i32, i32
  }
  func.func @transform_4(%arg0: i32) -> (i32, i32) {
    %c0_i32 = arith.constant 0 : i32
    %c0_i32_0 = arith.constant 0 : i32
    %c0_i32_1 = arith.constant 0 : i32
    return %c0_i32, %c0_i32_0 : i32, i32
  }
  func.func @transform_5(%arg0: i32) -> (i32, i32) {
    %c0_i32 = arith.constant 0 : i32
    %c0_i32_0 = arith.constant 0 : i32
    %c0_i32_1 = arith.constant 0 : i32
    return %c0_i32, %c0_i32_0 : i32, i32
  }
  func.func @transform_6(%arg0: i32) -> (i32, i32) {
    %c0_i32 = arith.constant 0 : i32
    %c0_i32_0 = arith.constant 0 : i32
    %c0_i32_1 = arith.constant 0 : i32
    return %c0_i32, %c0_i32_0 : i32, i32
  }
  func.func @transform_7(%arg0: i32) -> (i32, i32) {
    %c0_i32 = arith.constant 0 : i32
    %c0_i32_0 = arith.constant 0 : i32
    %c0_i32_1 = arith.constant 0 : i32
    return %c0_i32, %c0_i32_0 : i32, i32
  }
  func.func @transform_8(%arg0: i32) -> (i32, i32) {
    %c0_i32 = arith.constant 0 : i32
    %c0_i32_0 = arith.constant 0 : i32
    %c0_i32_1 = arith.constant 0 : i32
    return %c0_i32, %c0_i32_0 : i32, i32
  }
  func.func @transform_9(%arg0: i32) -> (i32, i32) {
    %c0_i32 = arith.constant 0 : i32
    %c0_i32_0 = arith.constant 0 : i32
    %c0_i32_1 = arith.constant 0 : i32
    return %c0_i32, %c0_i32_0 : i32, i32
  }
  func.func @transform_10(%arg0: i32) -> (i32, i32) {
    %c0_i32 = arith.constant 0 : i32
    %c0_i32_0 = arith.constant 0 : i32
    %c0_i32_1 = arith.constant 0 : i32
    return %c0_i32, %c0_i32_0 : i32, i32
  }
  func.func @transform_11(%arg0: i32) -> (i32, i32) {
    %c0_i32 = arith.constant 0 : i32
    %c0_i32_0 = arith.constant 0 : i32
    %c0_i32_1 = arith.constant 0 : i32
    return %c0_i32, %c0_i32_0 : i32, i32
  }
  func.func @transform_12(%arg0: i32) -> (i32, i32) {
    %c0_i32 = arith.constant 0 : i32
    %c0_i32_0 = arith.constant 0 : i32
    %c0_i32_1 = arith.constant 0 : i32
    return %c0_i32, %c0_i32_0 : i32, i32
  }
  func.func @transform_13(%arg0: i32) -> (i32, i32) {
    %c0_i32 = arith.constant 0 : i32
    %c0_i32_0 = arith.constant 0 : i32
    %c0_i32_1 = arith.constant 0 : i32
    return %c0_i32, %c0_i32_0 : i32, i32
  }
  func.func @transform_14(%arg0: i32) -> (i32, i32) {
    %c0_i32 = arith.constant 0 : i32
    %c0_i32_0 = arith.constant 0 : i32
    %c0_i32_1 = arith.constant 0 : i32
    return %c0_i32, %c0_i32_0 : i32, i32
  }
  func.func @transform_15(%arg0: i32) -> (i32, i32) {
    %c0_i32 = arith.constant 0 : i32
    %c0_i32_0 = arith.constant 0 : i32
    return %arg0, %c0_i32 : i32, i32
  }
}

</mosaic_0001>

<llo_original>
// kernel: tpu_custom_call.1
$region0: #{tpu_custom_call.1}
  #allocation0 [shape = 'u32[]', space=smem, size = 0x4, offset = 0x4, fixed_abs, tag = 'smem constant byte address 0x4 - core index']
  #allocation1 [shape = 'u32[72,128]{1,0:T(1,128)}', space=vmem, size = 0x9000, scoped, tag = 'internal scratch']
  %s0 = inlined_call_operand.hbm [shape: f32[256,128], index: 0, kind: input, shape index: {}]
  %s1 = inlined_call_operand.hbm [shape: bf16[128,128], index: 1, kind: input, shape index: {}]
  %s2 = inlined_call_operand.hbm [shape: f32[1,128], index: 2, kind: input, shape index: {}]
  %s3 = inlined_call_operand.hbm [shape: bf16[128,256], index: 3, kind: input, shape index: {}]
  %s4 = inlined_call_operand.hbm [shape: f32[1,256], index: 4, kind: input, shape index: {}]
  %s5 = inlined_call_operand.hbm [shape: bf16[256,1024], index: 5, kind: input, shape index: {}]
  %s6 = inlined_call_operand.hbm [shape: f32[1,1024], index: 6, kind: input, shape index: {}]
  %s7 = inlined_call_operand.hbm [shape: bf16[1024,1024], index: 7, kind: input, shape index: {}]
  %s8 = inlined_call_operand.hbm [shape: f32[1,1024], index: 8, kind: input, shape index: {}]
  %s9 = inlined_call_operand.hbm [shape: bf16[1024,256], index: 9, kind: input, shape index: {}]
  %s10 = inlined_call_operand.hbm [shape: f32[1,256], index: 10, kind: input, shape index: {}]
  %s11 = inlined_call_operand.hbm [shape: bf16[256,128], index: 11, kind: input, shape index: {}]
  %s12 = inlined_call_operand.hbm [shape: f32[1,128], index: 12, kind: input, shape index: {}]
  %s13 = inlined_call_operand.hbm [shape: bf16[128,128], index: 13, kind: input, shape index: {}]
  %s14 = inlined_call_operand.hbm [shape: f32[1,128], index: 14, kind: input, shape index: {}]
  %s15 = inlined_call_operand.hbm [shape: f32[256,128], index: 15, kind: output, shape index: {}]
  %s16 = sld [smem:[#allocation0]]
  $region153: #{tpu_custom_call.1} parent=0
    _
  %s18 = ssub.s32 1, %s16
  %s19 = scalar_select 0, %s18, %s16
  $region1: #{tpu_custom_call.1} parent=0
    #allocation2 [shape = 'u8[131072]{0}', space=vmem, size = 0x20000, scoped, tag = 'input window, operand 0']
    #allocation3 [shape = 's32[2]{0}', space=sflag, size = 0x8, scoped, tag = 'scoped memory for tpu_custom_call.1']
    #allocation4 [shape = 's32[2]{0}', space=sflag, size = 0x8, scoped, tag = 'scoped memory for tpu_custom_call.1']
    #allocation5 [shape = 'u8[32768]{0}', space=vmem, size = 0x8000, scoped, tag = 'input window, operand 1, single buffered']
    #allocation6 [shape = 's32[1]{0}', space=sflag, size = 0x4, scoped, tag = 'scoped memory for tpu_custom_call.1']
    #allocation7 [shape = 'u8[512]{0}', space=vmem, size = 0x400, scoped, tag = 'input window, operand 2, single buffered']
    #allocation8 [shape = 'u8[65536]{0}', space=vmem, size = 0x10000, scoped, tag = 'input window, operand 3, single buffered']
    #allocation9 [shape = 's32[1]{0}', space=sflag, size = 0x4, scoped, tag = 'scoped memory for tpu_custom_call.1']
    #allocation10 [shape = 'u8[1024]{0}', space=vmem, size = 0x400, scoped, tag = 'input window, operand 4, single buffered']
    #allocation11 [shape = 'u8[524288]{0}', space=vmem, size = 0x80000, scoped, tag = 'input window, operand 5, single buffered']
    #allocation12 [shape = 's32[1]{0}', space=sflag, size = 0x4, scoped, tag = 'scoped memory for tpu_custom_call.1']
    #allocation13 [shape = 'u8[4096]{0}', space=vmem, size = 0x1000, scoped, tag = 'input window, operand 6, single buffered']
    #allocation14 [shape = 'u8[2097152]{0}', space=vmem, size = 0x200000, scoped, tag = 'input window, operand 7, single buffered']
    #allocation15 [shape = 's32[1]{0}', space=sflag, size = 0x4, scoped, tag = 'scoped memory for tpu_custom_call.1']
    #allocation16 [shape = 'u8[4096]{0}', space=vmem, size = 0x1000, scoped, tag = 'input window, operand 8, single buffered']
    #allocation17 [shape = 'u8[524288]{0}', space=vmem, size = 0x80000, scoped, tag = 'input window, operand 9, single buffered']
    #allocation18 [shape = 's32[1]{0}', space=sflag, size = 0x4, scoped, tag = 'scoped memory for tpu_custom_call.1']
    #allocation19 [shape = 'u8[1024]{0}', space=vmem, size = 0x400, scoped, tag = 'input window, operand 10, single buffered']
    #allocation20 [shape = 'u8[65536]{0}', space=vmem, size = 0x10000, scoped, tag = 'input window, operand 11, single buffered']
    #allocation21 [shape = 's32[1]{0}', space=sflag, size = 0x4, scoped, tag = 'scoped memory for tpu_custom_call.1']
    #allocation22 [shape = 'u8[512]{0}', space=vmem, size = 0x400, scoped, tag = 'input window, operand 12, single buffered']
    #allocation23 [shape = 'u8[32768]{0}', space=vmem, size = 0x8000, scoped, tag = 'input window, operand 13, single buffered']
    #allocation24 [shape = 's32[1]{0}', space=sflag, size = 0x4, scoped, tag = 'scoped memory for tpu_custom_call.1']
    #allocation25 [shape = 'u8[512]{0}', space=vmem, size = 0x400, scoped, tag = 'input window, operand 14, single buffered']
    #allocation26 [shape = 'u8[131072]{0}', space=vmem, size = 0x20000, scoped, tag = 'output window, operand 0']
    %20 = vsyncpa [#allocation3], 0
    %s21 = scalar_lea.sflag [#allocation3], 1
    %22 = vsyncpa %s21, 0
    %23 = vsyncpa [#allocation6], 0
    %24 = vsyncpa [#allocation9], 0
    %25 = vsyncpa [#allocation12], 0
    %26 = vsyncpa [#allocation15], 0
    %27 = vsyncpa [#allocation18], 0
    %28 = vsyncpa [#allocation21], 0
    %29 = vsyncpa [#allocation24], 0
    %30 = vsyncpa [#allocation4], 0
    %s31 = scalar_lea.sflag [#allocation4], 1
    %32 = vsyncpa %s31, 0
    loop: start=0, step=1, limit=4
    $region2: #{tpu_custom_call.1} parent=1 // loop_pre_header
      _
    $region3: #{tpu_custom_call.1} parent=1 // loop_header
      %s34 = sphi 0, %s38
      %p35 = scmp.ge.s32.totalorder %s34, 4
      %s44 = sphi 0, %s46
      %s47 = sphi 0, %s44
      %s48 = sphi 0, %s47
      %s64 = sphi 0, %s48
      %s68 = sphi 0, %s68
      %s70 = sphi 0, %s68
      %s71 = sphi 0, %s70
      %s85 = sphi 0, %s71
      %s89 = sphi 0, %s89
      %s91 = sphi 0, %s89
      %s92 = sphi 0, %s91
      %s106 = sphi 0, %s92
      %s110 = sphi 0, %s110
      %s112 = sphi 0, %s110
      %s113 = sphi 0, %s112
      %s127 = sphi 0, %s113
      %s131 = sphi 0, %s131
      %s133 = sphi 0, %s131
      %s134 = sphi 0, %s133
      %s148 = sphi 0, %s134
      %s152 = sphi 0, %s152
      %s154 = sphi 0, %s152
      %s155 = sphi 0, %s154
      %s169 = sphi 0, %s155
      %s173 = sphi 0, %s173
      %s175 = sphi 0, %s173
      %s176 = sphi 0, %s175
      %s190 = sphi 0, %s176
      %s194 = sphi 0, %s194
      %s196 = sphi 0, %s194
      %s197 = sphi 0, %s196
      %s211 = sphi 0, %s197
      %s215 = sphi 0, %s215
      %s217 = sphi 0, %s215
      %s218 = sphi 0, %s217
      %s232 = sphi 0, %s218
      %s236 = sphi 0, %s236
      %s238 = sphi 0, %s236
      %s239 = sphi 0, %s238
      %s253 = sphi 0, %s239
      %s257 = sphi 0, %s257
      %s259 = sphi 0, %s257
      %s260 = sphi 0, %s259
      %s274 = sphi 0, %s260
      %s278 = sphi 0, %s278
      %s280 = sphi 0, %s278
      %s281 = sphi 0, %s280
      %s295 = sphi 0, %s281
      %s299 = sphi 0, %s299
      %s301 = sphi 0, %s299
      %s302 = sphi 0, %s301
      %s316 = sphi 0, %s302
      %s320 = sphi 0, %s320
      %s322 = sphi 0, %s320
      %s323 = sphi 0, %s322
      %s337 = sphi 0, %s323
      %s341 = sphi 0, %s341
      %s343 = sphi 0, %s341
      %s344 = sphi 0, %s343
      %s358 = sphi 0, %s344
      %s364 = sphi 0, %s366
      %s367 = sphi 0, %s364
      %s368 = sphi 0, %s367
      %s384 = sphi 0, %s368
    $region4: #{tpu_custom_call.1} parent=1 // loop_header_branch
      %37 = sbr.rel (%p35) target = $region8
    $region5: #{tpu_custom_call.1} parent=1 // loop_body
      %s39 = ssub.s32 %s34, 1
      %s40 = ssub.s32 %s34, 2
      %s41 = sadd.s32 %s34, 1
      %s42 = ssub.s32 %s34, %s41
      %p43 = scmp.eq.s32.totalorder %s42, 0
      %s45 = sadd.s32 %s44, 1
      %s46 = scalar_select %p43, %s44, %s45
      %p49 = pneg %p43
      %p50 = scmp.eq.s32.totalorder %s34, 1
      %p51 = por %p49, %p50
      %p52 = scmp.ne.s32.totalorder %s44, %s47
      %p53 = scmp.eq.s32.totalorder %s34, 0
      %p54 = por %p52, %p53
      %p55 = scmp.ne.s32.totalorder %s44, %s47
      %p56 = scmp.eq.s32.totalorder %s39, 1
      %p57 = por %p55, %p56
      %p58 = scmp.ne.s32.totalorder %s47, %s48
      %p59 = scmp.eq.s32.totalorder %s39, 0
      %p60 = por %p58, %p59
      %p61 = scmp.ne.s32.totalorder %s47, %s48
      %p62 = scmp.eq.s32.totalorder %s40, 1
      %p63 = por %p61, %p62
      %p65 = scmp.ne.s32.totalorder %s48, %s64
      %p66 = scmp.eq.s32.totalorder %s40, 0
      %p67 = por %p65, %p66
      %s69 = sadd.s32 %s68, 1
      %p72 = scmp.eq.s32.totalorder %s34, 1
      %p73 = scmp.ne.s32.totalorder %s68, %s70
      %p74 = scmp.eq.s32.totalorder %s34, 0
      %p75 = por %p73, %p74
      %p76 = scmp.ne.s32.totalorder %s68, %s70
      %p77 = scmp.eq.s32.totalorder %s39, 1
      %p78 = por %p76, %p77
      %p79 = scmp.ne.s32.totalorder %s70, %s71
      %p80 = scmp.eq.s32.totalorder %s39, 0
      %p81 = por %p79, %p80
      %p82 = scmp.ne.s32.totalorder %s70, %s71
      %p83 = scmp.eq.s32.totalorder %s40, 1
      %p84 = por %p82, %p83
      %p86 = scmp.ne.s32.totalorder %s71, %s85
      %p87 = scmp.eq.s32.totalorder %s40, 0
      %p88 = por %p86, %p87
      %s90 = sadd.s32 %s89, 1
      %p93 = scmp.eq.s32.totalorder %s34, 1
      %p94 = scmp.ne.s32.totalorder %s89, %s91
      %p95 = scmp.eq.s32.totalorder %s34, 0
      %p96 = por %p94, %p95
      %p97 = scmp.ne.s32.totalorder %s89, %s91
      %p98 = scmp.eq.s32.totalorder %s39, 1
      %p99 = por %p97, %p98
      %p100 = scmp.ne.s32.totalorder %s91, %s92
      %p101 = scmp.eq.s32.totalorder %s39, 0
      %p102 = por %p100, %p101
      %p103 = scmp.ne.s32.totalorder %s91, %s92
      %p104 = scmp.eq.s32.totalorder %s40, 1
      %p105 = por %p103, %p104
      %p107 = scmp.ne.s32.totalorder %s92, %s106
      %p108 = scmp.eq.s32.totalorder %s40, 0
      %p109 = por %p107, %p108
      %s111 = sadd.s32 %s110, 1
      %p114 = scmp.eq.s32.totalorder %s34, 1
      %p115 = scmp.ne.s32.totalorder %s110, %s112
      %p116 = scmp.eq.s32.totalorder %s34, 0
      %p117 = por %p115, %p116
      %p118 = scmp.ne.s32.totalorder %s110, %s112
      %p119 = scmp.eq.s32.totalorder %s39, 1
      %p120 = por %p118, %p119
      %p121 = scmp.ne.s32.totalorder %s112, %s113
      %p122 = scmp.eq.s32.totalorder %s39, 0
      %p123 = por %p121, %p122
      %p124 = scmp.ne.s32.totalorder %s112, %s113
      %p125 = scmp.eq.s32.totalorder %s40, 1
      %p126 = por %p124, %p125
      %p128 = scmp.ne.s32.totalorder %s113, %s127
      %p129 = scmp.eq.s32.totalorder %s40, 0
      %p130 = por %p128, %p129
      %s132 = sadd.s32 %s131, 1
      %p135 = scmp.eq.s32.totalorder %s34, 1
      %p136 = scmp.ne.s32.totalorder %s131, %s133
      %p137 = scmp.eq.s32.totalorder %s34, 0
      %p138 = por %p136, %p137
      %p139 = scmp.ne.s32.totalorder %s131, %s133
      %p140 = scmp.eq.s32.totalorder %s39, 1
      %p141 = por %p139, %p140
      %p142 = scmp.ne.s32.totalorder %s133, %s134
      %p143 = scmp.eq.s32.totalorder %s39, 0
      %p144 = por %p142, %p143
      %p145 = scmp.ne.s32.totalorder %s133, %s134
      %p146 = scmp.eq.s32.totalorder %s40, 1
      %p147 = por %p145, %p146
      %p149 = scmp.ne.s32.totalorder %s134, %s148
      %p150 = scmp.eq.s32.totalorder %s40, 0
      %p151 = por %p149, %p150
      %s153 = sadd.s32 %s152, 1
      %p156 = scmp.eq.s32.totalorder %s34, 1
      %p157 = scmp.ne.s32.totalorder %s152, %s154
      %p158 = scmp.eq.s32.totalorder %s34, 0
      %p159 = por %p157, %p158
      %p160 = scmp.ne.s32.totalorder %s152, %s154
      %p161 = scmp.eq.s32.totalorder %s39, 1
      %p162 = por %p160, %p161
      %p163 = scmp.ne.s32.totalorder %s154, %s155
      %p164 = scmp.eq.s32.totalorder %s39, 0
      %p165 = por %p163, %p164
      %p166 = scmp.ne.s32.totalorder %s154, %s155
      %p167 = scmp.eq.s32.totalorder %s40, 1
      %p168 = por %p166, %p167
      %p170 = scmp.ne.s32.totalorder %s155, %s169
      %p171 = scmp.eq.s32.totalorder %s40, 0
      %p172 = por %p170, %p171
      %s174 = sadd.s32 %s173, 1
      %p177 = scmp.eq.s32.totalorder %s34, 1
      %p178 = scmp.ne.s32.totalorder %s173, %s175
      %p179 = scmp.eq.s32.totalorder %s34, 0
      %p180 = por %p178, %p179
      %p181 = scmp.ne.s32.totalorder %s173, %s175
      %p182 = scmp.eq.s32.totalorder %s39, 1
      %p183 = por %p181, %p182
      %p184 = scmp.ne.s32.totalorder %s175, %s176
      %p185 = scmp.eq.s32.totalorder %s39, 0
      %p186 = por %p184, %p185
      %p187 = scmp.ne.s32.totalorder %s175, %s176
      %p188 = scmp.eq.s32.totalorder %s40, 1
      %p189 = por %p187, %p188
      %p191 = scmp.ne.s32.totalorder %s176, %s190
      %p192 = scmp.eq.s32.totalorder %s40, 0
      %p193 = por %p191, %p192
      %s195 = sadd.s32 %s194, 1
      %p198 = scmp.eq.s32.totalorder %s34, 1
      %p199 = scmp.ne.s32.totalorder %s194, %s196
      %p200 = scmp.eq.s32.totalorder %s34, 0
      %p201 = por %p199, %p200
      %p202 = scmp.ne.s32.totalorder %s194, %s196
      %p203 = scmp.eq.s32.totalorder %s39, 1
      %p204 = por %p202, %p203
      %p205 = scmp.ne.s32.totalorder %s196, %s197
      %p206 = scmp.eq.s32.totalorder %s39, 0
      %p207 = por %p205, %p206
      %p208 = scmp.ne.s32.totalorder %s196, %s197
      %p209 = scmp.eq.s32.totalorder %s40, 1
      %p210 = por %p208, %p209
      %p212 = scmp.ne.s32.totalorder %s197, %s211
      %p213 = scmp.eq.s32.totalorder %s40, 0
      %p214 = por %p212, %p213
      %s216 = sadd.s32 %s215, 1
      %p219 = scmp.eq.s32.totalorder %s34, 1
      %p220 = scmp.ne.s32.totalorder %s215, %s217
      %p221 = scmp.eq.s32.totalorder %s34, 0
      %p222 = por %p220, %p221
      %p223 = scmp.ne.s32.totalorder %s215, %s217
      %p224 = scmp.eq.s32.totalorder %s39, 1
      %p225 = por %p223, %p224
      %p226 = scmp.ne.s32.totalorder %s217, %s218
      %p227 = scmp.eq.s32.totalorder %s39, 0
      %p228 = por %p226, %p227
      %p229 = scmp.ne.s32.totalorder %s217, %s218
      %p230 = scmp.eq.s32.totalorder %s40, 1
      %p231 = por %p229, %p230
      %p233 = scmp.ne.s32.totalorder %s218, %s232
      %p234 = scmp.eq.s32.totalorder %s40, 0
      %p235 = por %p233, %p234
      %s237 = sadd.s32 %s236, 1
      %p240 = scmp.eq.s32.totalorder %s34, 1
      %p241 = scmp.ne.s32.totalorder %s236, %s238
      %p242 = scmp.eq.s32.totalorder %s34, 0
      %p243 = por %p241, %p242
      %p244 = scmp.ne.s32.totalorder %s236, %s238
      %p245 = scmp.eq.s32.totalorder %s39, 1
      %p246 = por %p244, %p245
      %p247 = scmp.ne.s32.totalorder %s238, %s239
      %p248 = scmp.eq.s32.totalorder %s39, 0
      %p249 = por %p247, %p248
      %p250 = scmp.ne.s32.totalorder %s238, %s239
      %p251 = scmp.eq.s32.totalorder %s40, 1
      %p252 = por %p250, %p251
      %p254 = scmp.ne.s32.totalorder %s239, %s253
      %p255 = scmp.eq.s32.totalorder %s40, 0
      %p256 = por %p254, %p255
      %s258 = sadd.s32 %s257, 1
      %p261 = scmp.eq.s32.totalorder %s34, 1
      %p262 = scmp.ne.s32.totalorder %s257, %s259
      %p263 = scmp.eq.s32.totalorder %s34, 0
      %p264 = por %p262, %p263
      %p265 = scmp.ne.s32.totalorder %s257, %s259
      %p266 = scmp.eq.s32.totalorder %s39, 1
      %p267 = por %p265, %p266
      %p268 = scmp.ne.s32.totalorder %s259, %s260
      %p269 = scmp.eq.s32.totalorder %s39, 0
      %p270 = por %p268, %p269
      %p271 = scmp.ne.s32.totalorder %s259, %s260
      %p272 = scmp.eq.s32.totalorder %s40, 1
      %p273 = por %p271, %p272
      %p275 = scmp.ne.s32.totalorder %s260, %s274
      %p276 = scmp.eq.s32.totalorder %s40, 0
      %p277 = por %p275, %p276
      %s279 = sadd.s32 %s278, 1
      %p282 = scmp.eq.s32.totalorder %s34, 1
      %p283 = scmp.ne.s32.totalorder %s278, %s280
      %p284 = scmp.eq.s32.totalorder %s34, 0
      %p285 = por %p283, %p284
      %p286 = scmp.ne.s32.totalorder %s278, %s280
      %p287 = scmp.eq.s32.totalorder %s39, 1
      %p288 = por %p286, %p287
      %p289 = scmp.ne.s32.totalorder %s280, %s281
      %p290 = scmp.eq.s32.totalorder %s39, 0
      %p291 = por %p289, %p290
      %p292 = scmp.ne.s32.totalorder %s280, %s281
      %p293 = scmp.eq.s32.totalorder %s40, 1
      %p294 = por %p292, %p293
      %p296 = scmp.ne.s32.totalorder %s281, %s295
      %p297 = scmp.eq.s32.totalorder %s40, 0
      %p298 = por %p296, %p297
      %s300 = sadd.s32 %s299, 1
      %p303 = scmp.eq.s32.totalorder %s34, 1
      %p304 = scmp.ne.s32.totalorder %s299, %s301
      %p305 = scmp.eq.s32.totalorder %s34, 0
      %p306 = por %p304, %p305
      %p307 = scmp.ne.s32.totalorder %s299, %s301
      %p308 = scmp.eq.s32.totalorder %s39, 1
      %p309 = por %p307, %p308
      %p310 = scmp.ne.s32.totalorder %s301, %s302
      %p311 = scmp.eq.s32.totalorder %s39, 0
      %p312 = por %p310, %p311
      %p313 = scmp.ne.s32.totalorder %s301, %s302
      %p314 = scmp.eq.s32.totalorder %s40, 1
      %p315 = por %p313, %p314
      %p317 = scmp.ne.s32.totalorder %s302, %s316
      %p318 = scmp.eq.s32.totalorder %s40, 0
      %p319 = por %p317, %p318
      %s321 = sadd.s32 %s320, 1
      %p324 = scmp.eq.s32.totalorder %s34, 1
      %p325 = scmp.ne.s32.totalorder %s320, %s322
      %p326 = scmp.eq.s32.totalorder %s34, 0
      %p327 = por %p325, %p326
      %p328 = scmp.ne.s32.totalorder %s320, %s322
      %p329 = scmp.eq.s32.totalorder %s39, 1
      %p330 = por %p328, %p329
      %p331 = scmp.ne.s32.totalorder %s322, %s323
      %p332 = scmp.eq.s32.totalorder %s39, 0
      %p333 = por %p331, %p332
      %p334 = scmp.ne.s32.totalorder %s322, %s323
      %p335 = scmp.eq.s32.totalorder %s40, 1
      %p336 = por %p334, %p335
      %p338 = scmp.ne.s32.totalorder %s323, %s337
      %p339 = scmp.eq.s32.totalorder %s40, 0
      %p340 = por %p338, %p339
      %s342 = sadd.s32 %s341, 1
      %p345 = scmp.eq.s32.totalorder %s34, 1
      %p346 = scmp.ne.s32.totalorder %s341, %s343
      %p347 = scmp.eq.s32.totalorder %s34, 0
      %p348 = por %p346, %p347
      %p349 = scmp.ne.s32.totalorder %s341, %s343
      %p350 = scmp.eq.s32.totalorder %s39, 1
      %p351 = por %p349, %p350
      %p352 = scmp.ne.s32.totalorder %s343, %s344
      %p353 = scmp.eq.s32.totalorder %s39, 0
      %p354 = por %p352, %p353
      %p355 = scmp.ne.s32.totalorder %s343, %s344
      %p356 = scmp.eq.s32.totalorder %s40, 1
      %p357 = por %p355, %p356
      %p359 = scmp.ne.s32.totalorder %s344, %s358
      %p360 = scmp.eq.s32.totalorder %s40, 0
      %p361 = por %p359, %p360
      %s362 = ssub.s32 %s34, %s41
      %p363 = scmp.eq.s32.totalorder %s362, 0
      %s365 = sadd.s32 %s364, 1
      %s366 = scalar_select %p363, %s364, %s365
      %p369 = pneg %p363
      %p370 = scmp.eq.s32.totalorder %s34, 1
      %p371 = por %p369, %p370
      %p372 = scmp.ne.s32.totalorder %s364, %s367
      %p373 = scmp.eq.s32.totalorder %s34, 0
      %p374 = por %p372, %p373
      %p375 = scmp.ne.s32.totalorder %s364, %s367
      %p376 = scmp.eq.s32.totalorder %s39, 1
      %p377 = por %p375, %p376
      %p378 = scmp.ne.s32.totalorder %s367, %s368
      %p379 = scmp.eq.s32.totalorder %s39, 0
      %p380 = por %p378, %p379
      %p381 = scmp.ne.s32.totalorder %s367, %s368
      %p382 = scmp.eq.s32.totalorder %s40, 1
      %p383 = por %p381, %p382
      %p385 = scmp.ne.s32.totalorder %s368, %s384
      %p386 = scmp.eq.s32.totalorder %s40, 0
      %p387 = por %p385, %p386
      %p388 = scmp.le.s32.totalorder 1, %s34
      %p389 = scmp.lt.s32.totalorder %s34, 3
      %p390 = pnand %p388, %p389
      %p391 = pneg %p390
      // Predicated region
      $region9: #{tpu_custom_call.1} parent=5 // pred_check
        _
      $region10: #{tpu_custom_call.1} parent=5 // pred_check_branch
        %393 = sbr.rel (%p390) target = $region12
      $region11: #{tpu_custom_call.1} parent=5 // pred_region
        %s394 = ssub.s32 %s34, 1
        // Predicated region
        $region13: #{tpu_custom_call.1} parent=11 // pred_check
          %p395 = pneg %p81
        $region14: #{tpu_custom_call.1} parent=11 // pred_check_branch
          %397 = sbr.rel (%p395) target = $region16
        $region15: #{tpu_custom_call.1} parent=11 // pred_region
          %399 = vsyncadd [#allocation6], 0
          %s400 = sshll.u32 %s1, 4
          %s401 = int_to_ptr.hbm [resolvable:$true] %s400
          %s402 = sshll.u32 [#allocation5], 4
          %s403 = int_to_ptr.vmem [resolvable:$true] %s402
          %408 = dma.hbm_to_vmem [thread:$0]  %s401, 1024, %s403, [#allocation6], 64, 64, 4
        $region16: #{tpu_custom_call.1} parent=11 // pred_fallthru
          _
        // Predicated region
        $region17: #{tpu_custom_call.1} parent=11 // pred_check
          %p409 = pneg %p102
        $region18: #{tpu_custom_call.1} parent=11 // pred_check_branch
          %411 = sbr.rel (%p409) target = $region20
        $region19: #{tpu_custom_call.1} parent=11 // pred_region
          %413 = vsyncadd [#allocation6], 0
          %s415 = sshll.u32 %s2, 4
          %s416 = int_to_ptr.hbm [resolvable:$true] %s415
          %s417 = sshll.u32 [#allocation7], 4
          %s418 = int_to_ptr.vmem [resolvable:$true] %s417
          %420 = dma.hbm_to_vmem [thread:$0]  %s416, 16, %s418, [#allocation6]
        $region20: #{tpu_custom_call.1} parent=11 // pred_fallthru
          _
        // Predicated region
        $region21: #{tpu_custom_call.1} parent=11 // pred_check
          %p421 = pneg %p123
        $region22: #{tpu_custom_call.1} parent=11 // pred_check_branch
          %423 = sbr.rel (%p421) target = $region24
        $region23: #{tpu_custom_call.1} parent=11 // pred_region
          %425 = vsyncadd [#allocation9], 0
          %s426 = sshll.u32 %s3, 4
          %s427 = int_to_ptr.hbm [resolvable:$true] %s426
          %s428 = sshll.u32 [#allocation8], 4
          %s429 = int_to_ptr.vmem [resolvable:$true] %s428
          %434 = dma.hbm_to_vmem [thread:$0]  %s427, 2048, %s429, [#allocation9], 128, 128, 8
        $region24: #{tpu_custom_call.1} parent=11 // pred_fallthru
          _
        // Predicated region
        $region25: #{tpu_custom_call.1} parent=11 // pred_check
          %p435 = pneg %p144
        $region26: #{tpu_custom_call.1} parent=11 // pred_check_branch
          %437 = sbr.rel (%p435) target = $region28
        $region27: #{tpu_custom_call.1} parent=11 // pred_region
          %439 = vsyncadd [#allocation9], 0
          %s441 = sshll.u32 %s4, 4
          %s442 = int_to_ptr.hbm [resolvable:$true] %s441
          %s443 = sshll.u32 [#allocation10], 4
          %s444 = int_to_ptr.vmem [resolvable:$true] %s443
          %446 = dma.hbm_to_vmem [thread:$0]  %s442, 32, %s444, [#allocation9]
        $region28: #{tpu_custom_call.1} parent=11 // pred_fallthru
          _
        // Predicated region
        $region29: #{tpu_custom_call.1} parent=11 // pred_check
          %p447 = pneg %p165
        $region30: #{tpu_custom_call.1} parent=11 // pred_check_branch
          %449 = sbr.rel (%p447) target = $region32
        $region31: #{tpu_custom_call.1} parent=11 // pred_region
          %451 = vsyncadd [#allocation12], 0
          %s452 = sshll.u32 %s5, 4
          %s453 = int_to_ptr.hbm [resolvable:$true] %s452
          %s454 = sshll.u32 [#allocation11], 4
          %s455 = int_to_ptr.vmem [resolvable:$true] %s454
          %460 = dma.hbm_to_vmem [thread:$0]  %s453, 16384, %s455, [#allocation12], 512, 512, 32
        $region32: #{tpu_custom_call.1} parent=11 // pred_fallthru
          _
        // Predicated region
        $region33: #{tpu_custom_call.1} parent=11 // pred_check
          %p461 = pneg %p186
        $region34: #{tpu_custom_call.1} parent=11 // pred_check_branch
          %463 = sbr.rel (%p461) target = $region36
        $region35: #{tpu_custom_call.1} parent=11 // pred_region
          %465 = vsyncadd [#allocation12], 0
          %s467 = sshll.u32 %s6, 4
          %s468 = int_to_ptr.hbm [resolvable:$true] %s467
          %s469 = sshll.u32 [#allocation13], 4
          %s470 = int_to_ptr.vmem [resolvable:$true] %s469
          %472 = dma.hbm_to_vmem [thread:$0]  %s468, 128, %s470, [#allocation12]
        $region36: #{tpu_custom_call.1} parent=11 // pred_fallthru
          _
        // Predicated region
        $region37: #{tpu_custom_call.1} parent=11 // pred_check
          %p473 = pneg %p207
        $region38: #{tpu_custom_call.1} parent=11 // pred_check_branch
          %475 = sbr.rel (%p473) target = $region40
        $region39: #{tpu_custom_call.1} parent=11 // pred_region
          %477 = vsyncadd [#allocation15], 0
          %s478 = sshll.u32 %s7, 4
          %s479 = int_to_ptr.hbm [resolvable:$true] %s478
          %s480 = sshll.u32 [#allocation14], 4
          %s481 = int_to_ptr.vmem [resolvable:$true] %s480
          %486 = dma.hbm_to_vmem [thread:$0]  %s479, 65536, %s481, [#allocation15], 512, 512, 32
        $region40: #{tpu_custom_call.1} parent=11 // pred_fallthru
          _
        // Predicated region
        $region41: #{tpu_custom_call.1} parent=11 // pred_check
          %p487 = pneg %p228
        $region42: #{tpu_custom_call.1} parent=11 // pred_check_branch
          %489 = sbr.rel (%p487) target = $region44
        $region43: #{tpu_custom_call.1} parent=11 // pred_region
          %491 = vsyncadd [#allocation15], 0
          %s493 = sshll.u32 %s8, 4
          %s494 = int_to_ptr.hbm [resolvable:$true] %s493
          %s495 = sshll.u32 [#allocation16], 4
          %s496 = int_to_ptr.vmem [resolvable:$true] %s495
          %498 = dma.hbm_to_vmem [thread:$0]  %s494, 128, %s496, [#allocation15]
        $region44: #{tpu_custom_call.1} parent=11 // pred_fallthru
          _
        // Predicated region
        $region45: #{tpu_custom_call.1} parent=11 // pred_check
          %p499 = pneg %p249
        $region46: #{tpu_custom_call.1} parent=11 // pred_check_branch
          %501 = sbr.rel (%p499) target = $region48
        $region47: #{tpu_custom_call.1} parent=11 // pred_region
          %503 = vsyncadd [#allocation18], 0
          %s504 = sshll.u32 %s9, 4
          %s505 = int_to_ptr.hbm [resolvable:$true] %s504
          %s506 = sshll.u32 [#allocation17], 4
          %s507 = int_to_ptr.vmem [resolvable:$true] %s506
          %512 = dma.hbm_to_vmem [thread:$0]  %s505, 16384, %s507, [#allocation18], 128, 128, 8
        $region48: #{tpu_custom_call.1} parent=11 // pred_fallthru
          _
        // Predicated region
        $region49: #{tpu_custom_call.1} parent=11 // pred_check
          %p513 = pneg %p270
        $region50: #{tpu_custom_call.1} parent=11 // pred_check_branch
          %515 = sbr.rel (%p513) target = $region52
        $region51: #{tpu_custom_call.1} parent=11 // pred_region
          %517 = vsyncadd [#allocation18], 0
          %s519 = sshll.u32 %s10, 4
          %s520 = int_to_ptr.hbm [resolvable:$true] %s519
          %s521 = sshll.u32 [#allocation19], 4
          %s522 = int_to_ptr.vmem [resolvable:$true] %s521
          %524 = dma.hbm_to_vmem [thread:$0]  %s520, 32, %s522, [#allocation18]
        $region52: #{tpu_custom_call.1} parent=11 // pred_fallthru
          _
        // Predicated region
        $region53: #{tpu_custom_call.1} parent=11 // pred_check
          %p525 = pneg %p291
        $region54: #{tpu_custom_call.1} parent=11 // pred_check_branch
          %527 = sbr.rel (%p525) target = $region56
        $region55: #{tpu_custom_call.1} parent=11 // pred_region
          %529 = vsyncadd [#allocation21], 0
          %s530 = sshll.u32 %s11, 4
          %s531 = int_to_ptr.hbm [resolvable:$true] %s530
          %s532 = sshll.u32 [#allocation20], 4
          %s533 = int_to_ptr.vmem [resolvable:$true] %s532
          %538 = dma.hbm_to_vmem [thread:$0]  %s531, 2048, %s533, [#allocation21], 64, 64, 4
        $region56: #{tpu_custom_call.1} parent=11 // pred_fallthru
          _
        // Predicated region
        $region57: #{tpu_custom_call.1} parent=11 // pred_check
          %p539 = pneg %p312
        $region58: #{tpu_custom_call.1} parent=11 // pred_check_branch
          %541 = sbr.rel (%p539) target = $region60
        $region59: #{tpu_custom_call.1} parent=11 // pred_region
          %543 = vsyncadd [#allocation21], 0
          %s545 = sshll.u32 %s12, 4
          %s546 = int_to_ptr.hbm [resolvable:$true] %s545
          %s547 = sshll.u32 [#allocation22], 4
          %s548 = int_to_ptr.vmem [resolvable:$true] %s547
          %550 = dma.hbm_to_vmem [thread:$0]  %s546, 16, %s548, [#allocation21]
        $region60: #{tpu_custom_call.1} parent=11 // pred_fallthru
          _
        // Predicated region
        $region61: #{tpu_custom_call.1} parent=11 // pred_check
          %p551 = pneg %p333
        $region62: #{tpu_custom_call.1} parent=11 // pred_check_branch
          %553 = sbr.rel (%p551) target = $region64
        $region63: #{tpu_custom_call.1} parent=11 // pred_region
          %555 = vsyncadd [#allocation24], 0
          %s556 = sshll.u32 %s13, 4
          %s557 = int_to_ptr.hbm [resolvable:$true] %s556
          %s558 = sshll.u32 [#allocation23], 4
          %s559 = int_to_ptr.vmem [resolvable:$true] %s558
          %564 = dma.hbm_to_vmem [thread:$0]  %s557, 1024, %s559, [#allocation24], 64, 64, 4
        $region64: #{tpu_custom_call.1} parent=11 // pred_fallthru
          _
        // Predicated region
        $region65: #{tpu_custom_call.1} parent=11 // pred_check
          %p565 = pneg %p354
        $region66: #{tpu_custom_call.1} parent=11 // pred_check_branch
          %567 = sbr.rel (%p565) target = $region68
        $region67: #{tpu_custom_call.1} parent=11 // pred_region
          %569 = vsyncadd [#allocation24], 0
          %s571 = sshll.u32 %s14, 4
          %s572 = int_to_ptr.hbm [resolvable:$true] %s571
          %s573 = sshll.u32 [#allocation25], 4
          %s574 = int_to_ptr.vmem [resolvable:$true] %s573
          %576 = dma.hbm_to_vmem [thread:$0]  %s572, 16, %s574, [#allocation24]
        $region68: #{tpu_custom_call.1} parent=11 // pred_fallthru
          _
      $region12: #{tpu_custom_call.1} parent=5 // pred_fallthru
        _
      %p577 = scmp.lt.s32.totalorder %s34, 2
      // Predicated region
      $region69: #{tpu_custom_call.1} parent=5 // pred_check
        %p578 = pneg %p577
      $region70: #{tpu_custom_call.1} parent=5 // pred_check_branch
        %580 = sbr.rel (%p578) target = $region72
      $region71: #{tpu_custom_call.1} parent=5 // pred_region
        // Predicated region
        $region73: #{tpu_custom_call.1} parent=71 // pred_check
          %p581 = pneg %p54
        $region74: #{tpu_custom_call.1} parent=71 // pred_check_branch
          %583 = sbr.rel (%p581) target = $region76
        $region75: #{tpu_custom_call.1} parent=71 // pred_region
          %s584 = sand.u32 %s44, 1
          %s585 = scalar_lea.sflag [#allocation3], %s584
          %s586 = sand.u32 %s44, 1
          %s587 = smul.addr %s586, 128
          %s588 = scalar_lea.vmem [#allocation2], %s587
          %s589 = smul.u32 16, %s34
          %591 = vsyncadd %s585, 0
          %s592 = smul.addr %s589, 8
          %s593 = scalar_lea.hbm %s0, %s592
          %s594 = sshll.u32 %s593, 4
          %s595 = int_to_ptr.hbm [resolvable:$true] %s594
          %s596 = sshll.u32 %s588, 4
          %s597 = int_to_ptr.vmem [resolvable:$true] %s596
          %602 = dma.hbm_to_vmem [thread:$0]  %s595, 2048, %s597, %s585, 128, 128, 8
        $region76: #{tpu_custom_call.1} parent=71 // pred_fallthru
          _
      $region72: #{tpu_custom_call.1} parent=5 // pred_fallthru
        _
      %p603 = scmp.le.s32.totalorder 1, %s34
      %p604 = scmp.lt.s32.totalorder %s34, 3
      %p605 = pnand %p603, %p604
      %p606 = pneg %p605
      // Predicated region
      $region77: #{tpu_custom_call.1} parent=5 // pred_check
        _
      $region78: #{tpu_custom_call.1} parent=5 // pred_check_branch
        %608 = sbr.rel (%p605) target = $region80
      $region79: #{tpu_custom_call.1} parent=5 // pred_region
        %s609 = ssub.s32 %s34, 1
        %s610 = sand.u32 %s47, 1
        %s611 = scalar_lea.sflag [#allocation3], %s610
        %s612 = sand.u32 %s47, 1
        %s613 = smul.addr %s612, 128
        %s614 = scalar_lea.vmem [#allocation2], %s613
        // Predicated region
        $region81: #{tpu_custom_call.1} parent=79 // pred_check
          %p615 = pneg %p60
        $region82: #{tpu_custom_call.1} parent=79 // pred_check_branch
          %617 = sbr.rel (%p615) target = $region84
        $region83: #{tpu_custom_call.1} parent=79 // pred_region
          %619 = dma.done %s611, 2048
        $region84: #{tpu_custom_call.1} parent=79 // pred_fallthru
          _
        // Predicated region
        $region85: #{tpu_custom_call.1} parent=79 // pred_check
          %p620 = pneg %p81
        $region86: #{tpu_custom_call.1} parent=79 // pred_check_branch
          %622 = sbr.rel (%p620) target = $region88
        $region87: #{tpu_custom_call.1} parent=79 // pred_region
          %624 = dma.done [#allocation6], 1024
        $region88: #{tpu_custom_call.1} parent=79 // pred_fallthru
          _
        // Predicated region
        $region89: #{tpu_custom_call.1} parent=79 // pred_check
          %p625 = pneg %p102
        $region90: #{tpu_custom_call.1} parent=79 // pred_check_branch
          %627 = sbr.rel (%p625) target = $region92
        $region91: #{tpu_custom_call.1} parent=79 // pred_region
          %629 = dma.done [#allocation6], 16
        $region92: #{tpu_custom_call.1} parent=79 // pred_fallthru
          _
        // Predicated region
        $region93: #{tpu_custom_call.1} parent=79 // pred_check
          %p630 = pneg %p123
        $region94: #{tpu_custom_call.1} parent=79 // pred_check_branch
          %632 = sbr.rel (%p630) target = $region96
        $region95: #{tpu_custom_call.1} parent=79 // pred_region
          %634 = dma.done [#allocation9], 2048
        $region96: #{tpu_custom_call.1} parent=79 // pred_fallthru
          _
        // Predicated region
        $region97: #{tpu_custom_call.1} parent=79 // pred_check
          %p635 = pneg %p144
        $region98: #{tpu_custom_call.1} parent=79 // pred_check_branch
          %637 = sbr.rel (%p635) target = $region100
        $region99: #{tpu_custom_call.1} parent=79 // pred_region
          %639 = dma.done [#allocation9], 32
        $region100: #{tpu_custom_call.1} parent=79 // pred_fallthru
          _
        // Predicated region
        $region101: #{tpu_custom_call.1} parent=79 // pred_check
          %p640 = pneg %p165
        $region102: #{tpu_custom_call.1} parent=79 // pred_check_branch
          %642 = sbr.rel (%p640) target = $region104
        $region103: #{tpu_custom_call.1} parent=79 // pred_region
          %644 = dma.done [#allocation12], 16384
        $region104: #{tpu_custom_call.1} parent=79 // pred_fallthru
          _
        // Predicated region
        $region105: #{tpu_custom_call.1} parent=79 // pred_check
          %p645 = pneg %p186
        $region106: #{tpu_custom_call.1} parent=79 // pred_check_branch
          %647 = sbr.rel (%p645) target = $region108
        $region107: #{tpu_custom_call.1} parent=79 // pred_region
          %649 = dma.done [#allocation12], 128
        $region108: #{tpu_custom_call.1} parent=79 // pred_fallthru
          _
        // Predicated region
        $region109: #{tpu_custom_call.1} parent=79 // pred_check
          %p650 = pneg %p207
        $region110: #{tpu_custom_call.1} parent=79 // pred_check_branch
          %652 = sbr.rel (%p650) target = $region112
        $region111: #{tpu_custom_call.1} parent=79 // pred_region
          %654 = dma.done [#allocation15], 65536
        $region112: #{tpu_custom_call.1} parent=79 // pred_fallthru
          _
        // Predicated region
        $region113: #{tpu_custom_call.1} parent=79 // pred_check
          %p655 = pneg %p228
        $region114: #{tpu_custom_call.1} parent=79 // pred_check_branch
          %657 = sbr.rel (%p655) target = $region116
        $region115: #{tpu_custom_call.1} parent=79 // pred_region
          %659 = dma.done [#allocation15], 128
        $region116: #{tpu_custom_call.1} parent=79 // pred_fallthru
          _
        // Predicated region
        $region117: #{tpu_custom_call.1} parent=79 // pred_check
          %p660 = pneg %p249
        $region118: #{tpu_custom_call.1} parent=79 // pred_check_branch
          %662 = sbr.rel (%p660) target = $region120
        $region119: #{tpu_custom_call.1} parent=79 // pred_region
          %664 = dma.done [#allocation18], 16384
        $region120: #{tpu_custom_call.1} parent=79 // pred_fallthru
          _
        // Predicated region
        $region121: #{tpu_custom_call.1} parent=79 // pred_check
          %p665 = pneg %p270
        $region122: #{tpu_custom_call.1} parent=79 // pred_check_branch
          %667 = sbr.rel (%p665) target = $region124
        $region123: #{tpu_custom_call.1} parent=79 // pred_region
          %669 = dma.done [#allocation18], 32
        $region124: #{tpu_custom_call.1} parent=79 // pred_fallthru
          _
        // Predicated region
        $region125: #{tpu_custom_call.1} parent=79 // pred_check
          %p670 = pneg %p291
        $region126: #{tpu_custom_call.1} parent=79 // pred_check_branch
          %672 = sbr.rel (%p670) target = $region128
        $region127: #{tpu_custom_call.1} parent=79 // pred_region
          %674 = dma.done [#allocation21], 2048
        $region128: #{tpu_custom_call.1} parent=79 // pred_fallthru
          _
        // Predicated region
        $region129: #{tpu_custom_call.1} parent=79 // pred_check
          %p675 = pneg %p312
        $region130: #{tpu_custom_call.1} parent=79 // pred_check_branch
          %677 = sbr.rel (%p675) target = $region132
        $region131: #{tpu_custom_call.1} parent=79 // pred_region
          %679 = dma.done [#allocation21], 16
        $region132: #{tpu_custom_call.1} parent=79 // pred_fallthru
          _
        // Predicated region
        $region133: #{tpu_custom_call.1} parent=79 // pred_check
          %p680 = pneg %p333
        $region134: #{tpu_custom_call.1} parent=79 // pred_check_branch
          %682 = sbr.rel (%p680) target = $region136
        $region135: #{tpu_custom_call.1} parent=79 // pred_region
          %684 = dma.done [#allocation24], 1024
        $region136: #{tpu_custom_call.1} parent=79 // pred_fallthru
          _
        // Predicated region
        $region137: #{tpu_custom_call.1} parent=79 // pred_check
          %p685 = pneg %p354
        $region138: #{tpu_custom_call.1} parent=79 // pred_check_branch
          %687 = sbr.rel (%p685) target = $region140
        $region139: #{tpu_custom_call.1} parent=79 // pred_region
          %689 = dma.done [#allocation24], 16
        $region140: #{tpu_custom_call.1} parent=79 // pred_fallthru
          _
        %s690 = sand.u32 %s47, 1
        %s691 = scalar_lea.sflag [#allocation3], %s690
        %s692 = sand.u32 %s47, 1
        %s693 = smul.addr %s692, 128
        %s694 = scalar_lea.vmem [#allocation2], %s693
        %p695 = pneg %p60
        %p696 = pneg %p57
        %p697 = pneg %p81
        %p698 = pneg %p78
        %p699 = pneg %p102
        %p700 = pneg %p99
        %p701 = pneg %p123
        %p702 = pneg %p120
        %p703 = pneg %p144
        %p704 = pneg %p141
        %p705 = pneg %p165
        %p706 = pneg %p162
        %p707 = pneg %p186
        %p708 = pneg %p183
        %p709 = pneg %p207
        %p710 = pneg %p204
        %p711 = pneg %p228
        %p712 = pneg %p225
        %p713 = pneg %p249
        %p714 = pneg %p246
        %p715 = pneg %p270
        %p716 = pneg %p267
        %p717 = pneg %p291
        %p718 = pneg %p288
        %p719 = pneg %p312
        %p720 = pneg %p309
        %p721 = pneg %p333
        %p722 = pneg %p330
        %p723 = pneg %p354
        %p724 = pneg %p351
        %p725 = pneg %p380
        %p726 = pneg %p377
        %s727 = sand.u32 %s367, 1
        %s728 = scalar_lea.sflag [#allocation4], %s727
        %s729 = sand.u32 %s367, 1
        %s730 = smul.addr %s729, 128
        %s731 = scalar_lea.vmem [#allocation26], %s730
        %s732 = smul.u32 16, %s39
        %s733 = smul.u32 16, %s39
        %v734 = vld [vmem:[%s614] sm:$0xff]
        %v735 = vld [vmem:[%s614 + $0x8] sm:$0xff]
        %v736 = vld [vmem:[%s614 + $0x10] sm:$0xff]
        %v737 = vld [vmem:[%s614 + $0x18] sm:$0xff]
        %v738 = vld [vmem:[%s614 + $0x20] sm:$0xff]
        %v739 = vld [vmem:[%s614 + $0x28] sm:$0xff]
        %v740 = vld [vmem:[%s614 + $0x30] sm:$0xff]
        %v741 = vld [vmem:[%s614 + $0x38] sm:$0xff]
        %v742 = vld [vmem:[%s614 + $0x40] sm:$0xff]
        %v743 = vld [vmem:[%s614 + $0x48] sm:$0xff]
        %v744 = vld [vmem:[%s614 + $0x50] sm:$0xff]
        %v745 = vld [vmem:[%s614 + $0x58] sm:$0xff]
        %v746 = vld [vmem:[%s614 + $0x60] sm:$0xff]
        %v747 = vld [vmem:[%s614 + $0x68] sm:$0xff]
        %v748 = vld [vmem:[%s614 + $0x70] sm:$0xff]
        %v749 = vld [vmem:[%s614 + $0x78] sm:$0xff]
        %v750 = vpack.c.bf16 %v735, %v734
        %v751 = vpack.c.bf16 %v737, %v736
        %v752 = vpack.c.bf16 %v739, %v738
        %v753 = vpack.c.bf16 %v741, %v740
        %v754 = vpack.c.bf16 %v743, %v742
        %v755 = vpack.c.bf16 %v745, %v744
        %v756 = vpack.c.bf16 %v747, %v746
        %v757 = vpack.c.bf16 %v749, %v748
        %v758 = vld [vmem:[#allocation5] sm:$0xf]
        %v759 = vld [vmem:[#allocation5 + $0x4] sm:$0xf]
        %v760 = vld [vmem:[#allocation5 + $0x8] sm:$0xf]
        %v761 = vld [vmem:[#allocation5 + $0xc] sm:$0xf]
        %v762 = vld [vmem:[#allocation5 + $0x10] sm:$0xf]
        %v763 = vld [vmem:[#allocation5 + $0x14] sm:$0xf]
        %v764 = vld [vmem:[#allocation5 + $0x18] sm:$0xf]
        %v765 = vld [vmem:[#allocation5 + $0x1c] sm:$0xf]
        %v766 = vld [vmem:[#allocation5 + $0x20] sm:$0xf]
        %v767 = vld [vmem:[#allocation5 + $0x24] sm:$0xf]
        %v768 = vld [vmem:[#allocation5 + $0x28] sm:$0xf]
        %v769 = vld [vmem:[#allocation5 + $0x2c] sm:$0xf]
        %v770 = vld [vmem:[#allocation5 + $0x30] sm:$0xf]
        %v771 = vld [vmem:[#allocation5 + $0x34] sm:$0xf]
        %v772 = vld [vmem:[#allocation5 + $0x38] sm:$0xf]
        %v773 = vld [vmem:[#allocation5 + $0x3c] sm:$0xf]
        %v774 = vld [vmem:[#allocation7] sm:$0x1]
        %v776 = vperm.slane %v774, 0
        %v794 = vunpack.c.l.b16 %v758
        %v795 = vunpack.c.l.b16 %v759
        %v796 = vunpack.c.l.b16 %v760
        %v797 = vunpack.c.l.b16 %v761
        %v798 = vunpack.c.l.b16 %v762
        %v799 = vunpack.c.l.b16 %v763
        %v800 = vunpack.c.l.b16 %v764
        %v801 = vunpack.c.l.b16 %v765
        %v802 = vunpack.c.l.b16 %v766
        %v803 = vunpack.c.l.b16 %v767
        %v804 = vunpack.c.l.b16 %v768
        %v805 = vunpack.c.l.b16 %v769
        %v806 = vunpack.c.l.b16 %v770
        %v807 = vunpack.c.l.b16 %v771
        %v808 = vunpack.c.l.b16 %v772
        %v809 = vunpack.c.l.b16 %v773
        %v810 = vpack.c.b16 %v795, %v794
        %v811 = vpack.c.b16 %v797, %v796
        %v812 = vpack.c.b16 %v799, %v798
        %v813 = vpack.c.b16 %v801, %v800
        %v814 = vpack.c.b16 %v803, %v802
        %v815 = vpack.c.b16 %v805, %v804
        %v816 = vpack.c.b16 %v807, %v806
        %v817 = vpack.c.b16 %v809, %v808
        %826 = vmatpush.bf16.msra.mxu0 %v817
        %827 = vmatpush.bf16.msra.mxu0 %v816
        %828 = vmatpush.bf16.msra.mxu0 %v815
        %829 = vmatpush.bf16.msra.mxu0 %v814
        %830 = vmatpush.bf16.msra.mxu0 %v813
        %831 = vmatpush.bf16.msra.mxu0 %v812
        %832 = vmatpush.bf16.msra.mxu0 %v811
        %833 = vmatpush.bf16.msra.mxu0 %v810
        %834 = vmatmul.bf16.gmra.mxu0 %v750
        %v835 = vpop.f32.mrf.mxu0
        %v836 = vadd.f32 %v776, %v835
        %v837 = vpop.f32.mrf.mxu0
        %v838 = vadd.f32 %v776, %v837
        %839 = vmatmul.bf16.gmra.mxu0 %v751
        %v840 = vpop.f32.mrf.mxu0
        %v841 = vadd.f32 %v776, %v840
        %v842 = vpop.f32.mrf.mxu0
        %v843 = vadd.f32 %v776, %v842
        %844 = vmatmul.bf16.gmra.mxu0 %v752
        %v845 = vpop.f32.mrf.mxu0
        %v846 = vadd.f32 %v776, %v845
        %v847 = vpop.f32.mrf.mxu0
        %v848 = vadd.f32 %v776, %v847
        %849 = vmatmul.bf16.gmra.mxu0 %v753
        %v850 = vpop.f32.mrf.mxu0
        %v851 = vadd.f32 %v776, %v850
        %v852 = vpop.f32.mrf.mxu0
        %v853 = vadd.f32 %v776, %v852
        %854 = vmatmul.bf16.gmra.mxu0 %v754
        %v855 = vpop.f32.mrf.mxu0
        %v856 = vadd.f32 %v776, %v855
        %v857 = vpop.f32.mrf.mxu0
        %v858 = vadd.f32 %v776, %v857
        %859 = vmatmul.bf16.gmra.mxu0 %v755
        %v860 = vpop.f32.mrf.mxu0
        %v861 = vadd.f32 %v776, %v860
        %v862 = vpop.f32.mrf.mxu0
        %v863 = vadd.f32 %v776, %v862
        %864 = vmatmul.bf16.gmra.mxu0 %v756
        %v865 = vpop.f32.mrf.mxu0
        %v866 = vadd.f32 %v776, %v865
        %v867 = vpop.f32.mrf.mxu0
        %v868 = vadd.f32 %v776, %v867
        %869 = vmatmul.bf16.gmra.mxu0 %v757
        %v870 = vpop.f32.mrf.mxu0
        %v871 = vadd.f32 %v776, %v870
        %v872 = vpop.f32.mrf.mxu0
        %v873 = vadd.f32 %v776, %v872
        %874 = vdwg.mxu0
        %v875 = vmax.f32 %v836, 0.0
        %v876 = vmax.f32 %v838, 0.0
        %v877 = vmax.f32 %v841, 0.0
        %v878 = vmax.f32 %v843, 0.0
        %v879 = vmax.f32 %v846, 0.0
        %v880 = vmax.f32 %v848, 0.0
        %v881 = vmax.f32 %v851, 0.0
        %v882 = vmax.f32 %v853, 0.0
        %v883 = vmax.f32 %v856, 0.0
        %v884 = vmax.f32 %v858, 0.0
        %v885 = vmax.f32 %v861, 0.0
        %v886 = vmax.f32 %v863, 0.0
        %v887 = vmax.f32 %v866, 0.0
        %v888 = vmax.f32 %v868, 0.0
        %v889 = vmax.f32 %v871, 0.0
        %v890 = vmax.f32 %v873, 0.0
        %v891 = vpack.c.bf16 %v876, %v875
        %v892 = vpack.c.bf16 %v878, %v877
        %v893 = vpack.c.bf16 %v880, %v879
        %v894 = vpack.c.bf16 %v882, %v881
        %v895 = vpack.c.bf16 %v884, %v883
        %v896 = vpack.c.bf16 %v886, %v885
        %v897 = vpack.c.bf16 %v888, %v887
        %v898 = vpack.c.bf16 %v890, %v889
        %v899 = vld [vmem:[#allocation8] sm:$0xff]
        %v900 = vld [vmem:[#allocation8 + $0x8] sm:$0xff]
        %v901 = vld [vmem:[#allocation8 + $0x10] sm:$0xff]
        %v902 = vld [vmem:[#allocation8 + $0x18] sm:$0xff]
        %v903 = vld [vmem:[#allocation8 + $0x20] sm:$0xff]
        %v904 = vld [vmem:[#allocation8 + $0x28] sm:$0xff]
        %v905 = vld [vmem:[#allocation8 + $0x30] sm:$0xff]
        %v906 = vld [vmem:[#allocation8 + $0x38] sm:$0xff]
        %v907 = vld [vmem:[#allocation8 + $0x40] sm:$0xff]
        %v908 = vld [vmem:[#allocation8 + $0x48] sm:$0xff]
        %v909 = vld [vmem:[#allocation8 + $0x50] sm:$0xff]
        %v910 = vld [vmem:[#allocation8 + $0x58] sm:$0xff]
        %v911 = vld [vmem:[#allocation8 + $0x60] sm:$0xff]
        %v912 = vld [vmem:[#allocation8 + $0x68] sm:$0xff]
        %v913 = vld [vmem:[#allocation8 + $0x70] sm:$0xff]
        %v914 = vld [vmem:[#allocation8 + $0x78] sm:$0xff]
        %v915 = vld [vmem:[#allocation10] sm:$0x3]
        %v917 = vperm.slane %v915, 0
        %v918 = vperm.slane %v915, 1
        %v937 = vunpack.c.l.b16 %v899
        %v938 = vunpack.c.h.b16 %v899
        %v939 = vunpack.c.l.b16 %v900
        %v940 = vunpack.c.h.b16 %v900
        %v941 = vunpack.c.l.b16 %v901
        %v942 = vunpack.c.h.b16 %v901
        %v943 = vunpack.c.l.b16 %v902
        %v944 = vunpack.c.h.b16 %v902
        %v945 = vunpack.c.l.b16 %v903
        %v946 = vunpack.c.h.b16 %v903
        %v947 = vunpack.c.l.b16 %v904
        %v948 = vunpack.c.h.b16 %v904
        %v949 = vunpack.c.l.b16 %v905
        %v950 = vunpack.c.h.b16 %v905
        %v951 = vunpack.c.l.b16 %v906
        %v952 = vunpack.c.h.b16 %v906
        %v953 = vunpack.c.l.b16 %v907
        %v954 = vunpack.c.h.b16 %v907
        %v955 = vunpack.c.l.b16 %v908
        %v956 = vunpack.c.h.b16 %v908
        %v957 = vunpack.c.l.b16 %v909
        %v958 = vunpack.c.h.b16 %v909
        %v959 = vunpack.c.l.b16 %v910
        %v960 = vunpack.c.h.b16 %v910
        %v961 = vunpack.c.l.b16 %v911
        %v962 = vunpack.c.h.b16 %v911
        %v963 = vunpack.c.l.b16 %v912
        %v964 = vunpack.c.h.b16 %v912
        %v965 = vunpack.c.l.b16 %v913
        %v966 = vunpack.c.h.b16 %v913
        %v967 = vunpack.c.l.b16 %v914
        %v968 = vunpack.c.h.b16 %v914
        %v969 = vpack.c.b16 %v939, %v937
        %v970 = vpack.c.b16 %v940, %v938
        %v971 = vpack.c.b16 %v943, %v941
        %v972 = vpack.c.b16 %v944, %v942
        %v973 = vpack.c.b16 %v947, %v945
        %v974 = vpack.c.b16 %v948, %v946
        %v975 = vpack.c.b16 %v951, %v949
        %v976 = vpack.c.b16 %v952, %v950
        %v977 = vpack.c.b16 %v955, %v953
        %v978 = vpack.c.b16 %v956, %v954
        %v979 = vpack.c.b16 %v959, %v957
        %v980 = vpack.c.b16 %v960, %v958
        %v981 = vpack.c.b16 %v963, %v961
        %v982 = vpack.c.b16 %v964, %v962
        %v983 = vpack.c.b16 %v967, %v965
        %v984 = vpack.c.b16 %v968, %v966
        %1001 = vmatpush.bf16.msra.mxu0 %v983
        %1002 = vmatpush.bf16.msra.mxu0 %v981
        %1003 = vmatpush.bf16.msra.mxu0 %v979
        %1004 = vmatpush.bf16.msra.mxu0 %v977
        %1005 = vmatpush.bf16.msra.mxu0 %v975
        %1006 = vmatpush.bf16.msra.mxu0 %v973
        %1007 = vmatpush.bf16.msra.mxu0 %v971
        %1008 = vmatpush.bf16.msra.mxu0 %v969
        %1009 = vmatmul.bf16.gmra.mxu0 %v891
        %v1010 = vpop.f32.mrf.mxu0
        %v1011 = vadd.f32 %v917, %v1010
        %v1012 = vpop.f32.mrf.mxu0
        %v1013 = vadd.f32 %v917, %v1012
        %1014 = vmatmul.bf16.gmra.mxu0 %v892
        %v1015 = vpop.f32.mrf.mxu0
        %v1016 = vadd.f32 %v917, %v1015
        %v1017 = vpop.f32.mrf.mxu0
        %v1018 = vadd.f32 %v917, %v1017
        %1019 = vmatmul.bf16.gmra.mxu0 %v893
        %v1020 = vpop.f32.mrf.mxu0
        %v1021 = vadd.f32 %v917, %v1020
        %v1022 = vpop.f32.mrf.mxu0
        %v1023 = vadd.f32 %v917, %v1022
        %1024 = vmatmul.bf16.gmra.mxu0 %v894
        %v1025 = vpop.f32.mrf.mxu0
        %v1026 = vadd.f32 %v917, %v1025
        %v1027 = vpop.f32.mrf.mxu0
        %v1028 = vadd.f32 %v917, %v1027
        %1029 = vmatmul.bf16.gmra.mxu0 %v895
        %v1030 = vpop.f32.mrf.mxu0
        %v1031 = vadd.f32 %v917, %v1030
        %v1032 = vpop.f32.mrf.mxu0
        %v1033 = vadd.f32 %v917, %v1032
        %1034 = vmatmul.bf16.gmra.mxu0 %v896
        %v1035 = vpop.f32.mrf.mxu0
        %v1036 = vadd.f32 %v917, %v1035
        %v1037 = vpop.f32.mrf.mxu0
        %v1038 = vadd.f32 %v917, %v1037
        %1039 = vmatmul.bf16.gmra.mxu0 %v897
        %v1040 = vpop.f32.mrf.mxu0
        %v1041 = vadd.f32 %v917, %v1040
        %v1042 = vpop.f32.mrf.mxu0
        %v1043 = vadd.f32 %v917, %v1042
        %1044 = vmatmul.bf16.gmra.mxu0 %v898
        %v1045 = vpop.f32.mrf.mxu0
        %v1046 = vadd.f32 %v917, %v1045
        %v1047 = vpop.f32.mrf.mxu0
        %v1048 = vadd.f32 %v917, %v1047
        %1049 = vdwg.mxu0
        %1050 = vmatpush.bf16.msra.mxu0 %v984
        %1051 = vmatpush.bf16.msra.mxu0 %v982
        %1052 = vmatpush.bf16.msra.mxu0 %v980
        %1053 = vmatpush.bf16.msra.mxu0 %v978
        %1054 = vmatpush.bf16.msra.mxu0 %v976
        %1055 = vmatpush.bf16.msra.mxu0 %v974
        %1056 = vmatpush.bf16.msra.mxu0 %v972
        %1057 = vmatpush.bf16.msra.mxu0 %v970
        %1058 = vmatmul.bf16.gmra.mxu0 %v891
        %v1059 = vpop.f32.mrf.mxu0
        %v1060 = vadd.f32 %v918, %v1059
        %v1061 = vpop.f32.mrf.mxu0
        %v1062 = vadd.f32 %v918, %v1061
        %1063 = vmatmul.bf16.gmra.mxu0 %v892
        %v1064 = vpop.f32.mrf.mxu0
        %v1065 = vadd.f32 %v918, %v1064
        %v1066 = vpop.f32.mrf.mxu0
        %v1067 = vadd.f32 %v918, %v1066
        %1068 = vmatmul.bf16.gmra.mxu0 %v893
        %v1069 = vpop.f32.mrf.mxu0
        %v1070 = vadd.f32 %v918, %v1069
        %v1071 = vpop.f32.mrf.mxu0
        %v1072 = vadd.f32 %v918, %v1071
        %1073 = vmatmul.bf16.gmra.mxu0 %v894
        %v1074 = vpop.f32.mrf.mxu0
        %v1075 = vadd.f32 %v918, %v1074
        %v1076 = vpop.f32.mrf.mxu0
        %v1077 = vadd.f32 %v918, %v1076
        %1078 = vmatmul.bf16.gmra.mxu0 %v895
        %v1079 = vpop.f32.mrf.mxu0
        %v1080 = vadd.f32 %v918, %v1079
        %v1081 = vpop.f32.mrf.mxu0
        %v1082 = vadd.f32 %v918, %v1081
        %1083 = vmatmul.bf16.gmra.mxu0 %v896
        %v1084 = vpop.f32.mrf.mxu0
        %v1085 = vadd.f32 %v918, %v1084
        %v1086 = vpop.f32.mrf.mxu0
        %v1087 = vadd.f32 %v918, %v1086
        %1088 = vmatmul.bf16.gmra.mxu0 %v897
        %v1089 = vpop.f32.mrf.mxu0
        %v1090 = vadd.f32 %v918, %v1089
        %v1091 = vpop.f32.mrf.mxu0
        %v1092 = vadd.f32 %v918, %v1091
        %1093 = vmatmul.bf16.gmra.mxu0 %v898
        %v1094 = vpop.f32.mrf.mxu0
        %v1095 = vadd.f32 %v918, %v1094
        %v1096 = vpop.f32.mrf.mxu0
        %v1097 = vadd.f32 %v918, %v1096
        %1098 = vdwg.mxu0
        %v1099 = vmax.f32 %v1011, 0.0
        %v1100 = vmax.f32 %v1060, 0.0
        %v1101 = vmax.f32 %v1013, 0.0
        %v1102 = vmax.f32 %v1062, 0.0
        %v1103 = vmax.f32 %v1016, 0.0
        %v1104 = vmax.f32 %v1065, 0.0
        %v1105 = vmax.f32 %v1018, 0.0
        %v1106 = vmax.f32 %v1067, 0.0
        %v1107 = vmax.f32 %v1021, 0.0
        %v1108 = vmax.f32 %v1070, 0.0
        %v1109 = vmax.f32 %v1023, 0.0
        %v1110 = vmax.f32 %v1072, 0.0
        %v1111 = vmax.f32 %v1026, 0.0
        %v1112 = vmax.f32 %v1075, 0.0
        %v1113 = vmax.f32 %v1028, 0.0
        %v1114 = vmax.f32 %v1077, 0.0
        %v1115 = vmax.f32 %v1031, 0.0
        %v1116 = vmax.f32 %v1080, 0.0
        %v1117 = vmax.f32 %v1033, 0.0
        %v1118 = vmax.f32 %v1082, 0.0
        %v1119 = vmax.f32 %v1036, 0.0
        %v1120 = vmax.f32 %v1085, 0.0
        %v1121 = vmax.f32 %v1038, 0.0
        %v1122 = vmax.f32 %v1087, 0.0
        %v1123 = vmax.f32 %v1041, 0.0
        %v1124 = vmax.f32 %v1090, 0.0
        %v1125 = vmax.f32 %v1043, 0.0
        %v1126 = vmax.f32 %v1092, 0.0
        %v1127 = vmax.f32 %v1046, 0.0
        %v1128 = vmax.f32 %v1095, 0.0
        %v1129 = vmax.f32 %v1048, 0.0
        %v1130 = vmax.f32 %v1097, 0.0
        %v1131 = vpack.c.bf16 %v1101, %v1099
        %v1132 = vpack.c.bf16 %v1102, %v1100
        %v1133 = vpack.c.bf16 %v1105, %v1103
        %v1134 = vpack.c.bf16 %v1106, %v1104
        %v1135 = vpack.c.bf16 %v1109, %v1107
        %v1136 = vpack.c.bf16 %v1110, %v1108
        %v1137 = vpack.c.bf16 %v1113, %v1111
        %v1138 = vpack.c.bf16 %v1114, %v1112
        %v1139 = vpack.c.bf16 %v1117, %v1115
        %v1140 = vpack.c.bf16 %v1118, %v1116
        %v1141 = vpack.c.bf16 %v1121, %v1119
        %v1142 = vpack.c.bf16 %v1122, %v1120
        %v1143 = vpack.c.bf16 %v1125, %v1123
        %v1144 = vpack.c.bf16 %v1126, %v1124
        %v1145 = vpack.c.bf16 %v1129, %v1127
        %v1146 = vpack.c.bf16 %v1130, %v1128
        %v1147 = vld [vmem:[#allocation11] sm:$0xff]
        %v1148 = vld [vmem:[#allocation11 + $0x8] sm:$0xff]
        %v1149 = vld [vmem:[#allocation11 + $0x10] sm:$0xff]
        %v1150 = vld [vmem:[#allocation11 + $0x18] sm:$0xff]
        %v1151 = vld [vmem:[#allocation11 + $0x20] sm:$0xff]
        %v1152 = vld [vmem:[#allocation11 + $0x28] sm:$0xff]
        %v1153 = vld [vmem:[#allocation11 + $0x30] sm:$0xff]
        %v1154 = vld [vmem:[#allocation11 + $0x38] sm:$0xff]
        %v1155 = vld [vmem:[#allocation11 + $0x40] sm:$0xff]
        %v1156 = vld [vmem:[#allocation11 + $0x48] sm:$0xff]
        %v1157 = vld [vmem:[#allocation11 + $0x50] sm:$0xff]
        %v1158 = vld [vmem:[#allocation11 + $0x58] sm:$0xff]
        %v1159 = vld [vmem:[#allocation11 + $0x60] sm:$0xff]
        %v1160 = vld [vmem:[#allocation11 + $0x68] sm:$0xff]
        %v1161 = vld [vmem:[#allocation11 + $0x70] sm:$0xff]
        %v1162 = vld [vmem:[#allocation11 + $0x78] sm:$0xff]
        %v1163 = vld [vmem:[#allocation11 + $0x80] sm:$0xff]
        %v1164 = vld [vmem:[#allocation11 + $0x88] sm:$0xff]
        %v1165 = vld [vmem:[#allocation11 + $0x90] sm:$0xff]
        %v1166 = vld [vmem:[#allocation11 + $0x98] sm:$0xff]
        %v1167 = vld [vmem:[#allocation11 + $0xa0] sm:$0xff]
        %v1168 = vld [vmem:[#allocation11 + $0xa8] sm:$0xff]
        %v1169 = vld [vmem:[#allocation11 + $0xb0] sm:$0xff]
        %v1170 = vld [vmem:[#allocation11 + $0xb8] sm:$0xff]
        %v1171 = vld [vmem:[#allocation11 + $0xc0] sm:$0xff]
        %v1172 = vld [vmem:[#allocation11 + $0xc8] sm:$0xff]
        %v1173 = vld [vmem:[#allocation11 + $0xd0] sm:$0xff]
        %v1174 = vld [vmem:[#allocation11 + $0xd8] sm:$0xff]
        %v1175 = vld [vmem:[#allocation11 + $0xe0] sm:$0xff]
        %v1176 = vld [vmem:[#allocation11 + $0xe8] sm:$0xff]
        %v1177 = vld [vmem:[#allocation11 + $0xf0] sm:$0xff]
        %v1178 = vld [vmem:[#allocation11 + $0xf8] sm:$0xff]
        %v1179 = vld [vmem:[#allocation11 + $0x100] sm:$0xff]
        %v1180 = vld [vmem:[#allocation11 + $0x108] sm:$0xff]
        %v1181 = vld [vmem:[#allocation11 + $0x110] sm:$0xff]
        %v1182 = vld [vmem:[#allocation11 + $0x118] sm:$0xff]
        %v1183 = vld [vmem:[#allocation11 + $0x120] sm:$0xff]
        %v1184 = vld [vmem:[#allocation11 + $0x128] sm:$0xff]
        %v1185 = vld [vmem:[#allocation11 + $0x130] sm:$0xff]
        %v1186 = vld [vmem:[#allocation11 + $0x138] sm:$0xff]
        %v1187 = vld [vmem:[#allocation11 + $0x140] sm:$0xff]
        %v1188 = vld [vmem:[#allocation11 + $0x148] sm:$0xff]
        %v1189 = vld [vmem:[#allocation11 + $0x150] sm:$0xff]
        %v1190 = vld [vmem:[#allocation11 + $0x158] sm:$0xff]
        %v1191 = vld [vmem:[#allocation11 + $0x160] sm:$0xff]
        %v1192 = vld [vmem:[#allocation11 + $0x168] sm:$0xff]
        %v1193 = vld [vmem:[#allocation11 + $0x170] sm:$0xff]
        %v1194 = vld [vmem:[#allocation11 + $0x178] sm:$0xff]
        %v1195 = vld [vmem:[#allocation11 + $0x180] sm:$0xff]
        %v1196 = vld [vmem:[#allocation11 + $0x188] sm:$0xff]
        %v1197 = vld [vmem:[#allocation11 + $0x190] sm:$0xff]
        %v1198 = vld [vmem:[#allocation11 + $0x198] sm:$0xff]
        %v1199 = vld [vmem:[#allocation11 + $0x1a0] sm:$0xff]
        %v1200 = vld [vmem:[#allocation11 + $0x1a8] sm:$0xff]
        %v1201 = vld [vmem:[#allocation11 + $0x1b0] sm:$0xff]
        %v1202 = vld [vmem:[#allocation11 + $0x1b8] sm:$0xff]
        %v1203 = vld [vmem:[#allocation11 + $0x1c0] sm:$0xff]
        %v1204 = vld [vmem:[#allocation11 + $0x1c8] sm:$0xff]
        %v1205 = vld [vmem:[#allocation11 + $0x1d0] sm:$0xff]
        %v1206 = vld [vmem:[#allocation11 + $0x1d8] sm:$0xff]
        %v1207 = vld [vmem:[#allocation11 + $0x1e0] sm:$0xff]
        %v1208 = vld [vmem:[#allocation11 + $0x1e8] sm:$0xff]
        %v1209 = vld [vmem:[#allocation11 + $0x1f0] sm:$0xff]
        %v1210 = vld [vmem:[#allocation11 + $0x1f8] sm:$0xff]
        %v1211 = vld [vmem:[#allocation11 + $0x200] sm:$0xff]
        %v1212 = vld [vmem:[#allocation11 + $0x208] sm:$0xff]
        %v1213 = vld [vmem:[#allocation11 + $0x210] sm:$0xff]
        %v1214 = vld [vmem:[#allocation11 + $0x218] sm:$0xff]
        %v1215 = vld [vmem:[#allocation11 + $0x220] sm:$0xff]
        %v1216 = vld [vmem:[#allocation11 + $0x228] sm:$0xff]
        %v1217 = vld [vmem:[#allocation11 + $0x230] sm:$0xff]
        %v1218 = vld [vmem:[#allocation11 + $0x238] sm:$0xff]
        %v1219 = vld [vmem:[#allocation11 + $0x240] sm:$0xff]
        %v1220 = vld [vmem:[#allocation11 + $0x248] sm:$0xff]
        %v1221 = vld [vmem:[#allocation11 + $0x250] sm:$0xff]
        %v1222 = vld [vmem:[#allocation11 + $0x258] sm:$0xff]
        %v1223 = vld [vmem:[#allocation11 + $0x260] sm:$0xff]
        %v1224 = vld [vmem:[#allocation11 + $0x268] sm:$0xff]
        %v1225 = vld [vmem:[#allocation11 + $0x270] sm:$0xff]
        %v1226 = vld [vmem:[#allocation11 + $0x278] sm:$0xff]
        %v1227 = vld [vmem:[#allocation11 + $0x280] sm:$0xff]
        %v1228 = vld [vmem:[#allocation11 + $0x288] sm:$0xff]
        %v1229 = vld [vmem:[#allocation11 + $0x290] sm:$0xff]
        %v1230 = vld [vmem:[#allocation11 + $0x298] sm:$0xff]
        %v1231 = vld [vmem:[#allocation11 + $0x2a0] sm:$0xff]
        %v1232 = vld [vmem:[#allocation11 + $0x2a8] sm:$0xff]
        %v1233 = vld [vmem:[#allocation11 + $0x2b0] sm:$0xff]
        %v1234 = vld [vmem:[#allocation11 + $0x2b8] sm:$0xff]
        %v1235 = vld [vmem:[#allocation11 + $0x2c0] sm:$0xff]
        %v1236 = vld [vmem:[#allocation11 + $0x2c8] sm:$0xff]
        %v1237 = vld [vmem:[#allocation11 + $0x2d0] sm:$0xff]
        %v1238 = vld [vmem:[#allocation11 + $0x2d8] sm:$0xff]
        %v1239 = vld [vmem:[#allocation11 + $0x2e0] sm:$0xff]
        %v1240 = vld [vmem:[#allocation11 + $0x2e8] sm:$0xff]
        %v1241 = vld [vmem:[#allocation11 + $0x2f0] sm:$0xff]
        %v1242 = vld [vmem:[#allocation11 + $0x2f8] sm:$0xff]
        %v1243 = vld [vmem:[#allocation11 + $0x300] sm:$0xff]
        %v1244 = vld [vmem:[#allocation11 + $0x308] sm:$0xff]
        %v1245 = vld [vmem:[#allocation11 + $0x310] sm:$0xff]
        %v1246 = vld [vmem:[#allocation11 + $0x318] sm:$0xff]
        %v1247 = vld [vmem:[#allocation11 + $0x320] sm:$0xff]
        %v1248 = vld [vmem:[#allocation11 + $0x328] sm:$0xff]
        %v1249 = vld [vmem:[#allocation11 + $0x330] sm:$0xff]
        %v1250 = vld [vmem:[#allocation11 + $0x338] sm:$0xff]
        %v1251 = vld [vmem:[#allocation11 + $0x340] sm:$0xff]
        %v1252 = vld [vmem:[#allocation11 + $0x348] sm:$0xff]
        %v1253 = vld [vmem:[#allocation11 + $0x350] sm:$0xff]
        %v1254 = vld [vmem:[#allocation11 + $0x358] sm:$0xff]
        %v1255 = vld [vmem:[#allocation11 + $0x360] sm:$0xff]
        %v1256 = vld [vmem:[#allocation11 + $0x368] sm:$0xff]
        %v1257 = vld [vmem:[#allocation11 + $0x370] sm:$0xff]
        %v1258 = vld [vmem:[#allocation11 + $0x378] sm:$0xff]
        %v1259 = vld [vmem:[#allocation11 + $0x380] sm:$0xff]
        %v1260 = vld [vmem:[#allocation11 + $0x388] sm:$0xff]
        %v1261 = vld [vmem:[#allocation11 + $0x390] sm:$0xff]
        %v1262 = vld [vmem:[#allocation11 + $0x398] sm:$0xff]
        %v1263 = vld [vmem:[#allocation11 + $0x3a0] sm:$0xff]
        %v1264 = vld [vmem:[#allocation11 + $0x3a8] sm:$0xff]
        %v1265 = vld [vmem:[#allocation11 + $0x3b0] sm:$0xff]
        %v1266 = vld [vmem:[#allocation11 + $0x3b8] sm:$0xff]
        %v1267 = vld [vmem:[#allocation11 + $0x3c0] sm:$0xff]
        %v1268 = vld [vmem:[#allocation11 + $0x3c8] sm:$0xff]
        %v1269 = vld [vmem:[#allocation11 + $0x3d0] sm:$0xff]
        %v1270 = vld [vmem:[#allocation11 + $0x3d8] sm:$0xff]
        %v1271 = vld [vmem:[#allocation11 + $0x3e0] sm:$0xff]
        %v1272 = vld [vmem:[#allocation11 + $0x3e8] sm:$0xff]
        %v1273 = vld [vmem:[#allocation11 + $0x3f0] sm:$0xff]
        %v1274 = vld [vmem:[#allocation11 + $0x3f8] sm:$0xff]
        %v1275 = vld [vmem:[#allocation13] sm:$0xff]
        %v1277 = vperm.slane %v1275, 0
        %v1278 = vperm.slane %v1275, 1
        %v1279 = vperm.slane %v1275, 2
        %v1280 = vperm.slane %v1275, 3
        %v1281 = vperm.slane %v1275, 4
        %v1282 = vperm.slane %v1275, 5
        %v1283 = vperm.slane %v1275, 6
        %v1284 = vperm.slane %v1275, 7
        %v1421 = vunpack.c.l.b16 %v1147
        %v1422 = vunpack.c.h.b16 %v1147
        %v1423 = vunpack.c.l.b16 %v1148
        %v1424 = vunpack.c.h.b16 %v1148
        %v1425 = vunpack.c.l.b16 %v1149
        %v1426 = vunpack.c.h.b16 %v1149
        %v1427 = vunpack.c.l.b16 %v1150
        %v1428 = vunpack.c.h.b16 %v1150
        %v1429 = vunpack.c.l.b16 %v1151
        %v1430 = vunpack.c.h.b16 %v1151
        %v1431 = vunpack.c.l.b16 %v1152
        %v1432 = vunpack.c.h.b16 %v1152
        %v1433 = vunpack.c.l.b16 %v1153
        %v1434 = vunpack.c.h.b16 %v1153
        %v1435 = vunpack.c.l.b16 %v1154
        %v1436 = vunpack.c.h.b16 %v1154
        %v1437 = vunpack.c.l.b16 %v1155
        %v1438 = vunpack.c.h.b16 %v1155
        %v1439 = vunpack.c.l.b16 %v1156
        %v1440 = vunpack.c.h.b16 %v1156
        %v1441 = vunpack.c.l.b16 %v1157
        %v1442 = vunpack.c.h.b16 %v1157
        %v1443 = vunpack.c.l.b16 %v1158
        %v1444 = vunpack.c.h.b16 %v1158
        %v1445 = vunpack.c.l.b16 %v1159
        %v1446 = vunpack.c.h.b16 %v1159
        %v1447 = vunpack.c.l.b16 %v1160
        %v1448 = vunpack.c.h.b16 %v1160
        %v1449 = vunpack.c.l.b16 %v1161
        %v1450 = vunpack.c.h.b16 %v1161
        %v1451 = vunpack.c.l.b16 %v1162
        %v1452 = vunpack.c.h.b16 %v1162
        %v1453 = vunpack.c.l.b16 %v1163
        %v1454 = vunpack.c.h.b16 %v1163
        %v1455 = vunpack.c.l.b16 %v1164
        %v1456 = vunpack.c.h.b16 %v1164
        %v1457 = vunpack.c.l.b16 %v1165
        %v1458 = vunpack.c.h.b16 %v1165
        %v1459 = vunpack.c.l.b16 %v1166
        %v1460 = vunpack.c.h.b16 %v1166
        %v1461 = vunpack.c.l.b16 %v1167
        %v1462 = vunpack.c.h.b16 %v1167
        %v1463 = vunpack.c.l.b16 %v1168
        %v1464 = vunpack.c.h.b16 %v1168
        %v1465 = vunpack.c.l.b16 %v1169
        %v1466 = vunpack.c.h.b16 %v1169
        %v1467 = vunpack.c.l.b16 %v1170
        %v1468 = vunpack.c.h.b16 %v1170
        %v1469 = vunpack.c.l.b16 %v1171
        %v1470 = vunpack.c.h.b16 %v1171
        %v1471 = vunpack.c.l.b16 %v1172
        %v1472 = vunpack.c.h.b16 %v1172
        %v1473 = vunpack.c.l.b16 %v1173
        %v1474 = vunpack.c.h.b16 %v1173
        %v1475 = vunpack.c.l.b16 %v1174
        %v1476 = vunpack.c.h.b16 %v1174
        %v1477 = vunpack.c.l.b16 %v1175
        %v1478 = vunpack.c.h.b16 %v1175
        %v1479 = vunpack.c.l.b16 %v1176
        %v1480 = vunpack.c.h.b16 %v1176
        %v1481 = vunpack.c.l.b16 %v1177
        %v1482 = vunpack.c.h.b16 %v1177
        %v1483 = vunpack.c.l.b16 %v1178
        %v1484 = vunpack.c.h.b16 %v1178
        %v1485 = vunpack.c.l.b16 %v1179
        %v1486 = vunpack.c.h.b16 %v1179
        %v1487 = vunpack.c.l.b16 %v1180
        %v1488 = vunpack.c.h.b16 %v1180
        %v1489 = vunpack.c.l.b16 %v1181
        %v1490 = vunpack.c.h.b16 %v1181
        %v1491 = vunpack.c.l.b16 %v1182
        %v1492 = vunpack.c.h.b16 %v1182
        %v1493 = vunpack.c.l.b16 %v1183
        %v1494 = vunpack.c.h.b16 %v1183
        %v1495 = vunpack.c.l.b16 %v1184
        %v1496 = vunpack.c.h.b16 %v1184
        %v1497 = vunpack.c.l.b16 %v1185
        %v1498 = vunpack.c.h.b16 %v1185
        %v1499 = vunpack.c.l.b16 %v1186
        %v1500 = vunpack.c.h.b16 %v1186
        %v1501 = vunpack.c.l.b16 %v1187
        %v1502 = vunpack.c.h.b16 %v1187
        %v1503 = vunpack.c.l.b16 %v1188
        %v1504 = vunpack.c.h.b16 %v1188
        %v1505 = vunpack.c.l.b16 %v1189
        %v1506 = vunpack.c.h.b16 %v1189
        %v1507 = vunpack.c.l.b16 %v1190
        %v1508 = vunpack.c.h.b16 %v1190
        %v1509 = vunpack.c.l.b16 %v1191
        %v1510 = vunpack.c.h.b16 %v1191
        %v1511 = vunpack.c.l.b16 %v1192
        %v1512 = vunpack.c.h.b16 %v1192
        %v1513 = vunpack.c.l.b16 %v1193
        %v1514 = vunpack.c.h.b16 %v1193
        %v1515 = vunpack.c.l.b16 %v1194
        %v1516 = vunpack.c.h.b16 %v1194
        %v1517 = vunpack.c.l.b16 %v1195
        %v1518 = vunpack.c.h.b16 %v1195
        %v1519 = vunpack.c.l.b16 %v1196
        %v1520 = vunpack.c.h.b16 %v1196
        %v1521 = vunpack.c.l.b16 %v1197
        %v1522 = vunpack.c.h.b16 %v1197
        %v1523 = vunpack.c.l.b16 %v1198
        %v1524 = vunpack.c.h.b16 %v1198
        %v1525 = vunpack.c.l.b16 %v1199
        %v1526 = vunpack.c.h.b16 %v1199
        %v1527 = vunpack.c.l.b16 %v1200
        %v1528 = vunpack.c.h.b16 %v1200
        %v1529 = vunpack.c.l.b16 %v1201
        %v1530 = vunpack.c.h.b16 %v1201
        %v1531 = vunpack.c.l.b16 %v1202
        %v1532 = vunpack.c.h.b16 %v1202
        %v1533 = vunpack.c.l.b16 %v1203
        %v1534 = vunpack.c.h.b16 %v1203
        %v1535 = vunpack.c.l.b16 %v1204
        %v1536 = vunpack.c.h.b16 %v1204
        %v1537 = vunpack.c.l.b16 %v1205
        %v1538 = vunpack.c.h.b16 %v1205
        %v1539 = vunpack.c.l.b16 %v1206
        %v1540 = vunpack.c.h.b16 %v1206
        %v1541 = vunpack.c.l.b16 %v1207
        %v1542 = vunpack.c.h.b16 %v1207
        %v1543 = vunpack.c.l.b16 %v1208
        %v1544 = vunpack.c.h.b16 %v1208
        %v1545 = vunpack.c.l.b16 %v1209
        %v1546 = vunpack.c.h.b16 %v1209
        %v1547 = vunpack.c.l.b16 %v1210
        %v1548 = vunpack.c.h.b16 %v1210
        %v1549 = vunpack.c.l.b16 %v1211
        %v1550 = vunpack.c.h.b16 %v1211
        %v1551 = vunpack.c.l.b16 %v1212
        %v1552 = vunpack.c.h.b16 %v1212
        %v1553 = vunpack.c.l.b16 %v1213
        %v1554 = vunpack.c.h.b16 %v1213
        %v1555 = vunpack.c.l.b16 %v1214
        %v1556 = vunpack.c.h.b16 %v1214
        %v1557 = vunpack.c.l.b16 %v1215
        %v1558 = vunpack.c.h.b16 %v1215
        %v1559 = vunpack.c.l.b16 %v1216
        %v1560 = vunpack.c.h.b16 %v1216
        %v1561 = vunpack.c.l.b16 %v1217
        %v1562 = vunpack.c.h.b16 %v1217
        %v1563 = vunpack.c.l.b16 %v1218
        %v1564 = vunpack.c.h.b16 %v1218
        %v1565 = vunpack.c.l.b16 %v1219
        %v1566 = vunpack.c.h.b16 %v1219
        %v1567 = vunpack.c.l.b16 %v1220
        %v1568 = vunpack.c.h.b16 %v1220
        %v1569 = vunpack.c.l.b16 %v1221
        %v1570 = vunpack.c.h.b16 %v1221
        %v1571 = vunpack.c.l.b16 %v1222
        %v1572 = vunpack.c.h.b16 %v1222
        %v1573 = vunpack.c.l.b16 %v1223
        %v1574 = vunpack.c.h.b16 %v1223
        %v1575 = vunpack.c.l.b16 %v1224
        %v1576 = vunpack.c.h.b16 %v1224
        %v1577 = vunpack.c.l.b16 %v1225
        %v1578 = vunpack.c.h.b16 %v1225
        %v1579 = vunpack.c.l.b16 %v1226
        %v1580 = vunpack.c.h.b16 %v1226
        %v1581 = vunpack.c.l.b16 %v1227
        %v1582 = vunpack.c.h.b16 %v1227
        %v1583 = vunpack.c.l.b16 %v1228
        %v1584 = vunpack.c.h.b16 %v1228
        %v1585 = vunpack.c.l.b16 %v1229
        %v1586 = vunpack.c.h.b16 %v1229
        %v1587 = vunpack.c.l.b16 %v1230
        %v1588 = vunpack.c.h.b16 %v1230
        %v1589 = vunpack.c.l.b16 %v1231
        %v1590 = vunpack.c.h.b16 %v1231
        %v1591 = vunpack.c.l.b16 %v1232
        %v1592 = vunpack.c.h.b16 %v1232
        %v1593 = vunpack.c.l.b16 %v1233
        %v1594 = vunpack.c.h.b16 %v1233
        %v1595 = vunpack.c.l.b16 %v1234
        %v1596 = vunpack.c.h.b16 %v1234
        %v1597 = vunpack.c.l.b16 %v1235
        %v1598 = vunpack.c.h.b16 %v1235
        %v1599 = vunpack.c.l.b16 %v1236
        %v1600 = vunpack.c.h.b16 %v1236
        %v1601 = vunpack.c.l.b16 %v1237
        %v1602 = vunpack.c.h.b16 %v1237
        %v1603 = vunpack.c.l.b16 %v1238
        %v1604 = vunpack.c.h.b16 %v1238
        %v1605 = vunpack.c.l.b16 %v1239
        %v1606 = vunpack.c.h.b16 %v1239
        %v1607 = vunpack.c.l.b16 %v1240
        %v1608 = vunpack.c.h.b16 %v1240
        %v1609 = vunpack.c.l.b16 %v1241
        %v1610 = vunpack.c.h.b16 %v1241
        %v1611 = vunpack.c.l.b16 %v1242
        %v1612 = vunpack.c.h.b16 %v1242
        %v1613 = vunpack.c.l.b16 %v1243
        %v1614 = vunpack.c.h.b16 %v1243
        %v1615 = vunpack.c.l.b16 %v1244
        %v1616 = vunpack.c.h.b16 %v1244
        %v1617 = vunpack.c.l.b16 %v1245
        %v1618 = vunpack.c.h.b16 %v1245
        %v1619 = vunpack.c.l.b16 %v1246
        %v1620 = vunpack.c.h.b16 %v1246
        %v1621 = vunpack.c.l.b16 %v1247
        %v1622 = vunpack.c.h.b16 %v1247
        %v1623 = vunpack.c.l.b16 %v1248
        %v1624 = vunpack.c.h.b16 %v1248
        %v1625 = vunpack.c.l.b16 %v1249
        %v1626 = vunpack.c.h.b16 %v1249
        %v1627 = vunpack.c.l.b16 %v1250
        %v1628 = vunpack.c.h.b16 %v1250
        %v1629 = vunpack.c.l.b16 %v1251
        %v1630 = vunpack.c.h.b16 %v1251
        %v1631 = vunpack.c.l.b16 %v1252
        %v1632 = vunpack.c.h.b16 %v1252
        %v1633 = vunpack.c.l.b16 %v1253
        %v1634 = vunpack.c.h.b16 %v1253
        %v1635 = vunpack.c.l.b16 %v1254
        %v1636 = vunpack.c.h.b16 %v1254
        %v1637 = vunpack.c.l.b16 %v1255
        %v1638 = vunpack.c.h.b16 %v1255
        %v1639 = vunpack.c.l.b16 %v1256
        %v1640 = vunpack.c.h.b16 %v1256
        %v1641 = vunpack.c.l.b16 %v1257
        %v1642 = vunpack.c.h.b16 %v1257
        %v1643 = vunpack.c.l.b16 %v1258
        %v1644 = vunpack.c.h.b16 %v1258
        %v1645 = vunpack.c.l.b16 %v1259
        %v1646 = vunpack.c.h.b16 %v1259
        %v1647 = vunpack.c.l.b16 %v1260
        %v1648 = vunpack.c.h.b16 %v1260
        %v1649 = vunpack.c.l.b16 %v1261
        %v1650 = vunpack.c.h.b16 %v1261
        %v1651 = vunpack.c.l.b16 %v1262
        %v1652 = vunpack.c.h.b16 %v1262
        %v1653 = vunpack.c.l.b16 %v1263
        %v1654 = vunpack.c.h.b16 %v1263
        %v1655 = vunpack.c.l.b16 %v1264
        %v1656 = vunpack.c.h.b16 %v1264
        %v1657 = vunpack.c.l.b16 %v1265
        %v1658 = vunpack.c.h.b16 %v1265
        %v1659 = vunpack.c.l.b16 %v1266
        %v1660 = vunpack.c.h.b16 %v1266
        %v1661 = vunpack.c.l.b16 %v1267
        %v1662 = vunpack.c.h.b16 %v1267
        %v1663 = vunpack.c.l.b16 %v1268
        %v1664 = vunpack.c.h.b16 %v1268
        %v1665 = vunpack.c.l.b16 %v1269
        %v1666 = vunpack.c.h.b16 %v1269
        %v1667 = vunpack.c.l.b16 %v1270
        %v1668 = vunpack.c.h.b16 %v1270
        %v1669 = vunpack.c.l.b16 %v1271
        %v1670 = vunpack.c.h.b16 %v1271
        %v1671 = vunpack.c.l.b16 %v1272
        %v1672 = vunpack.c.h.b16 %v1272
        %v1673 = vunpack.c.l.b16 %v1273
        %v1674 = vunpack.c.h.b16 %v1273
        %v1675 = vunpack.c.l.b16 %v1274
        %v1676 = vunpack.c.h.b16 %v1274
        %v1677 = vpack.c.b16 %v1429, %v1421
        %v1678 = vpack.c.b16 %v1430, %v1422
        %v1679 = vpack.c.b16 %v1431, %v1423
        %v1680 = vpack.c.b16 %v1432, %v1424
        %v1681 = vpack.c.b16 %v1433, %v1425
        %v1682 = vpack.c.b16 %v1434, %v1426
        %v1683 = vpack.c.b16 %v1435, %v1427
        %v1684 = vpack.c.b16 %v1436, %v1428
        %v1685 = vpack.c.b16 %v1445, %v1437
        %v1686 = vpack.c.b16 %v1446, %v1438
        %v1687 = vpack.c.b16 %v1447, %v1439
        %v1688 = vpack.c.b16 %v1448, %v1440
        %v1689 = vpack.c.b16 %v1449, %v1441
        %v1690 = vpack.c.b16 %v1450, %v1442
        %v1691 = vpack.c.b16 %v1451, %v1443
        %v1692 = vpack.c.b16 %v1452, %v1444
        %v1693 = vpack.c.b16 %v1461, %v1453
        %v1694 = vpack.c.b16 %v1462, %v1454
        %v1695 = vpack.c.b16 %v1463, %v1455
        %v1696 = vpack.c.b16 %v1464, %v1456
        %v1697 = vpack.c.b16 %v1465, %v1457
        %v1698 = vpack.c.b16 %v1466, %v1458
        %v1699 = vpack.c.b16 %v1467, %v1459
        %v1700 = vpack.c.b16 %v1468, %v1460
        %v1701 = vpack.c.b16 %v1477, %v1469
        %v1702 = vpack.c.b16 %v1478, %v1470
        %v1703 = vpack.c.b16 %v1479, %v1471
        %v1704 = vpack.c.b16 %v1480, %v1472
        %v1705 = vpack.c.b16 %v1481, %v1473
        %v1706 = vpack.c.b16 %v1482, %v1474
        %v1707 = vpack.c.b16 %v1483, %v1475
        %v1708 = vpack.c.b16 %v1484, %v1476
        %v1709 = vpack.c.b16 %v1493, %v1485
        %v1710 = vpack.c.b16 %v1494, %v1486
        %v1711 = vpack.c.b16 %v1495, %v1487
        %v1712 = vpack.c.b16 %v1496, %v1488
        %v1713 = vpack.c.b16 %v1497, %v1489
        %v1714 = vpack.c.b16 %v1498, %v1490
        %v1715 = vpack.c.b16 %v1499, %v1491
        %v1716 = vpack.c.b16 %v1500, %v1492
        %v1717 = vpack.c.b16 %v1509, %v1501
        %v1718 = vpack.c.b16 %v1510, %v1502
        %v1719 = vpack.c.b16 %v1511, %v1503
        %v1720 = vpack.c.b16 %v1512, %v1504
        %v1721 = vpack.c.b16 %v1513, %v1505
        %v1722 = vpack.c.b16 %v1514, %v1506
        %v1723 = vpack.c.b16 %v1515, %v1507
        %v1724 = vpack.c.b16 %v1516, %v1508
        %v1725 = vpack.c.b16 %v1525, %v1517
        %v1726 = vpack.c.b16 %v1526, %v1518
        %v1727 = vpack.c.b16 %v1527, %v1519
        %v1728 = vpack.c.b16 %v1528, %v1520
        %v1729 = vpack.c.b16 %v1529, %v1521
        %v1730 = vpack.c.b16 %v1530, %v1522
        %v1731 = vpack.c.b16 %v1531, %v1523
        %v1732 = vpack.c.b16 %v1532, %v1524
        %v1733 = vpack.c.b16 %v1541, %v1533
        %v1734 = vpack.c.b16 %v1542, %v1534
        %v1735 = vpack.c.b16 %v1543, %v1535
        %v1736 = vpack.c.b16 %v1544, %v1536
        %v1737 = vpack.c.b16 %v1545, %v1537
        %v1738 = vpack.c.b16 %v1546, %v1538
        %v1739 = vpack.c.b16 %v1547, %v1539
        %v1740 = vpack.c.b16 %v1548, %v1540
        %v1741 = vpack.c.b16 %v1557, %v1549
        %v1742 = vpack.c.b16 %v1558, %v1550
        %v1743 = vpack.c.b16 %v1559, %v1551
        %v1744 = vpack.c.b16 %v1560, %v1552
        %v1745 = vpack.c.b16 %v1561, %v1553
        %v1746 = vpack.c.b16 %v1562, %v1554
        %v1747 = vpack.c.b16 %v1563, %v1555
        %v1748 = vpack.c.b16 %v1564, %v1556
        %v1749 = vpack.c.b16 %v1573, %v1565
        %v1750 = vpack.c.b16 %v1574, %v1566
        %v1751 = vpack.c.b16 %v1575, %v1567
        %v1752 = vpack.c.b16 %v1576, %v1568
        %v1753 = vpack.c.b16 %v1577, %v1569
        %v1754 = vpack.c.b16 %v1578, %v1570
        %v1755 = vpack.c.b16 %v1579, %v1571
        %v1756 = vpack.c.b16 %v1580, %v1572
        %v1757 = vpack.c.b16 %v1589, %v1581
        %v1758 = vpack.c.b16 %v1590, %v1582
        %v1759 = vpack.c.b16 %v1591, %v1583
        %v1760 = vpack.c.b16 %v1592, %v1584
        %v1761 = vpack.c.b16 %v1593, %v1585
        %v1762 = vpack.c.b16 %v1594, %v1586
        %v1763 = vpack.c.b16 %v1595, %v1587
        %v1764 = vpack.c.b16 %v1596, %v1588
        %v1765 = vpack.c.b16 %v1605, %v1597
        %v1766 = vpack.c.b16 %v1606, %v1598
        %v1767 = vpack.c.b16 %v1607, %v1599
        %v1768 = vpack.c.b16 %v1608, %v1600
        %v1769 = vpack.c.b16 %v1609, %v1601
        %v1770 = vpack.c.b16 %v1610, %v1602
        %v1771 = vpack.c.b16 %v1611, %v1603
        %v1772 = vpack.c.b16 %v1612, %v1604
        %v1773 = vpack.c.b16 %v1621, %v1613
        %v1774 = vpack.c.b16 %v1622, %v1614
        %v1775 = vpack.c.b16 %v1623, %v1615
        %v1776 = vpack.c.b16 %v1624, %v1616
        %v1777 = vpack.c.b16 %v1625, %v1617
        %v1778 = vpack.c.b16 %v1626, %v1618
        %v1779 = vpack.c.b16 %v1627, %v1619
        %v1780 = vpack.c.b16 %v1628, %v1620
        %v1781 = vpack.c.b16 %v1637, %v1629
        %v1782 = vpack.c.b16 %v1638, %v1630
        %v1783 = vpack.c.b16 %v1639, %v1631
        %v1784 = vpack.c.b16 %v1640, %v1632
        %v1785 = vpack.c.b16 %v1641, %v1633
        %v1786 = vpack.c.b16 %v1642, %v1634
        %v1787 = vpack.c.b16 %v1643, %v1635
        %v1788 = vpack.c.b16 %v1644, %v1636
        %v1789 = vpack.c.b16 %v1653, %v1645
        %v1790 = vpack.c.b16 %v1654, %v1646
        %v1791 = vpack.c.b16 %v1655, %v1647
        %v1792 = vpack.c.b16 %v1656, %v1648
        %v1793 = vpack.c.b16 %v1657, %v1649
        %v1794 = vpack.c.b16 %v1658, %v1650
        %v1795 = vpack.c.b16 %v1659, %v1651
        %v1796 = vpack.c.b16 %v1660, %v1652
        %v1797 = vpack.c.b16 %v1669, %v1661
        %v1798 = vpack.c.b16 %v1670, %v1662
        %v1799 = vpack.c.b16 %v1671, %v1663
        %v1800 = vpack.c.b16 %v1672, %v1664
        %v1801 = vpack.c.b16 %v1673, %v1665
        %v1802 = vpack.c.b16 %v1674, %v1666
        %v1803 = vpack.c.b16 %v1675, %v1667
        %v1804 = vpack.c.b16 %v1676, %v1668
        %1933 = vmatpush.bf16.msra.mxu0 %v1733
        %1934 = vmatpush.bf16.msra.mxu0 %v1725
        %1935 = vmatpush.bf16.msra.mxu0 %v1717
        %1936 = vmatpush.bf16.msra.mxu0 %v1709
        %1937 = vmatpush.bf16.msra.mxu0 %v1701
        %1938 = vmatpush.bf16.msra.mxu0 %v1693
        %1939 = vmatpush.bf16.msra.mxu0 %v1685
        %1940 = vmatpush.bf16.msra.mxu0 %v1677
        %1941 = vmatmul.bf16.gmra.mxu0 %v1131
        %v1942 = vpop.f32.mrf.mxu0
        %v1943 = vadd.f32 %v1277, %v1942
        %v1944 = vpop.f32.mrf.mxu0
        %v1945 = vadd.f32 %v1277, %v1944
        %1946 = vmatmul.bf16.gmra.mxu0 %v1133
        %v1947 = vpop.f32.mrf.mxu0
        %v1948 = vadd.f32 %v1277, %v1947
        %v1949 = vpop.f32.mrf.mxu0
        %v1950 = vadd.f32 %v1277, %v1949
        %1951 = vmatmul.bf16.gmra.mxu0 %v1135
        %v1952 = vpop.f32.mrf.mxu0
        %v1953 = vadd.f32 %v1277, %v1952
        %v1954 = vpop.f32.mrf.mxu0
        %v1955 = vadd.f32 %v1277, %v1954
        %1956 = vmatmul.bf16.gmra.mxu0 %v1137
        %v1957 = vpop.f32.mrf.mxu0
        %v1958 = vadd.f32 %v1277, %v1957
        %v1959 = vpop.f32.mrf.mxu0
        %v1960 = vadd.f32 %v1277, %v1959
        %1961 = vmatmul.bf16.gmra.mxu0 %v1139
        %v1962 = vpop.f32.mrf.mxu0
        %v1963 = vadd.f32 %v1277, %v1962
        %v1964 = vpop.f32.mrf.mxu0
        %v1965 = vadd.f32 %v1277, %v1964
        %1966 = vmatmul.bf16.gmra.mxu0 %v1141
        %v1967 = vpop.f32.mrf.mxu0
        %v1968 = vadd.f32 %v1277, %v1967
        %v1969 = vpop.f32.mrf.mxu0
        %v1970 = vadd.f32 %v1277, %v1969
        %1971 = vmatmul.bf16.gmra.mxu0 %v1143
        %v1972 = vpop.f32.mrf.mxu0
        %v1973 = vadd.f32 %v1277, %v1972
        %v1974 = vpop.f32.mrf.mxu0
        %v1975 = vadd.f32 %v1277, %v1974
        %1976 = vmatmul.bf16.gmra.mxu0 %v1145
        %v1977 = vpop.f32.mrf.mxu0
        %v1978 = vadd.f32 %v1277, %v1977
        %v1979 = vpop.f32.mrf.mxu0
        %v1980 = vadd.f32 %v1277, %v1979
        %1981 = vdwg.mxu0
        %1982 = vmatpush.bf16.msra.mxu0 %v1797
        %1983 = vmatpush.bf16.msra.mxu0 %v1789
        %1984 = vmatpush.bf16.msra.mxu0 %v1781
        %1985 = vmatpush.bf16.msra.mxu0 %v1773
        %1986 = vmatpush.bf16.msra.mxu0 %v1765
        %1987 = vmatpush.bf16.msra.mxu0 %v1757
        %1988 = vmatpush.bf16.msra.mxu0 %v1749
        %1989 = vmatpush.bf16.msra.mxu0 %v1741
        %1990 = vmatmul.bf16.gmra.mxu0 %v1132
        %v1991 = vpop.f32.mrf.mxu0
        %v1992 = vadd.f32 %v1943, %v1991
        %v1993 = vpop.f32.mrf.mxu0
        %v1994 = vadd.f32 %v1945, %v1993
        %1995 = vmatmul.bf16.gmra.mxu0 %v1134
        %v1996 = vpop.f32.mrf.mxu0
        %v1997 = vadd.f32 %v1948, %v1996
        %v1998 = vpop.f32.mrf.mxu0
        %v1999 = vadd.f32 %v1950, %v1998
        %2000 = vmatmul.bf16.gmra.mxu0 %v1136
        %v2001 = vpop.f32.mrf.mxu0
        %v2002 = vadd.f32 %v1953, %v2001
        %v2003 = vpop.f32.mrf.mxu0
        %v2004 = vadd.f32 %v1955, %v2003
        %2005 = vmatmul.bf16.gmra.mxu0 %v1138
        %v2006 = vpop.f32.mrf.mxu0
        %v2007 = vadd.f32 %v1958, %v2006
        %v2008 = vpop.f32.mrf.mxu0
        %v2009 = vadd.f32 %v1960, %v2008
        %2010 = vmatmul.bf16.gmra.mxu0 %v1140
        %v2011 = vpop.f32.mrf.mxu0
        %v2012 = vadd.f32 %v1963, %v2011
        %v2013 = vpop.f32.mrf.mxu0
        %v2014 = vadd.f32 %v1965, %v2013
        %2015 = vmatmul.bf16.gmra.mxu0 %v1142
        %v2016 = vpop.f32.mrf.mxu0
        %v2017 = vadd.f32 %v1968, %v2016
        %v2018 = vpop.f32.mrf.mxu0
        %v2019 = vadd.f32 %v1970, %v2018
        %2020 = vmatmul.bf16.gmra.mxu0 %v1144
        %v2021 = vpop.f32.mrf.mxu0
        %v2022 = vadd.f32 %v1973, %v2021
        %v2023 = vpop.f32.mrf.mxu0
        %v2024 = vadd.f32 %v1975, %v2023
        %2025 = vmatmul.bf16.gmra.mxu0 %v1146
        %v2026 = vpop.f32.mrf.mxu0
        %v2027 = vadd.f32 %v1978, %v2026
        %v2028 = vpop.f32.mrf.mxu0
        %v2029 = vadd.f32 %v1980, %v2028
        %2030 = vdwg.mxu0
        %2031 = vmatpush.bf16.msra.mxu0 %v1734
        %2032 = vmatpush.bf16.msra.mxu0 %v1726
        %2033 = vmatpush.bf16.msra.mxu0 %v1718
        %2034 = vmatpush.bf16.msra.mxu0 %v1710
        %2035 = vmatpush.bf16.msra.mxu0 %v1702
        %2036 = vmatpush.bf16.msra.mxu0 %v1694
        %2037 = vmatpush.bf16.msra.mxu0 %v1686
        %2038 = vmatpush.bf16.msra.mxu0 %v1678
        %2039 = vmatmul.bf16.gmra.mxu0 %v1131
        %v2040 = vpop.f32.mrf.mxu0
        %v2041 = vadd.f32 %v1278, %v2040
        %v2042 = vpop.f32.mrf.mxu0
        %v2043 = vadd.f32 %v1278, %v2042
        %2044 = vmatmul.bf16.gmra.mxu0 %v1133
        %v2045 = vpop.f32.mrf.mxu0
        %v2046 = vadd.f32 %v1278, %v2045
        %v2047 = vpop.f32.mrf.mxu0
        %v2048 = vadd.f32 %v1278, %v2047
        %2049 = vmatmul.bf16.gmra.mxu0 %v1135
        %v2050 = vpop.f32.mrf.mxu0
        %v2051 = vadd.f32 %v1278, %v2050
        %v2052 = vpop.f32.mrf.mxu0
        %v2053 = vadd.f32 %v1278, %v2052
        %2054 = vmatmul.bf16.gmra.mxu0 %v1137
        %v2055 = vpop.f32.mrf.mxu0
        %v2056 = vadd.f32 %v1278, %v2055
        %v2057 = vpop.f32.mrf.mxu0
        %v2058 = vadd.f32 %v1278, %v2057
        %2059 = vmatmul.bf16.gmra.mxu0 %v1139
        %v2060 = vpop.f32.mrf.mxu0
        %v2061 = vadd.f32 %v1278, %v2060
        %v2062 = vpop.f32.mrf.mxu0
        %v2063 = vadd.f32 %v1278, %v2062
        %2064 = vmatmul.bf16.gmra.mxu0 %v1141
        %v2065 = vpop.f32.mrf.mxu0
        %v2066 = vadd.f32 %v1278, %v2065
        %v2067 = vpop.f32.mrf.mxu0
        %v2068 = vadd.f32 %v1278, %v2067
        %2069 = vmatmul.bf16.gmra.mxu0 %v1143
        %v2070 = vpop.f32.mrf.mxu0
        %v2071 = vadd.f32 %v1278, %v2070
        %v2072 = vpop.f32.mrf.mxu0
        %v2073 = vadd.f32 %v1278, %v2072
        %2074 = vmatmul.bf16.gmra.mxu0 %v1145
        %v2075 = vpop.f32.mrf.mxu0
        %v2076 = vadd.f32 %v1278, %v2075
        %v2077 = vpop.f32.mrf.mxu0
        %v2078 = vadd.f32 %v1278, %v2077
        %2079 = vdwg.mxu0
        %2080 = vmatpush.bf16.msra.mxu0 %v1798
        %2081 = vmatpush.bf16.msra.mxu0 %v1790
        %2082 = vmatpush.bf16.msra.mxu0 %v1782
        %2083 = vmatpush.bf16.msra.mxu0 %v1774
        %2084 = vmatpush.bf16.msra.mxu0 %v1766
        %2085 = vmatpush.bf16.msra.mxu0 %v1758
        %2086 = vmatpush.bf16.msra.mxu0 %v1750
        %2087 = vmatpush.bf16.msra.mxu0 %v1742
        %2088 = vmatmul.bf16.gmra.mxu0 %v1132
        %v2089 = vpop.f32.mrf.mxu0
        %v2090 = vadd.f32 %v2041, %v2089
        %v2091 = vpop.f32.mrf.mxu0
        %v2092 = vadd.f32 %v2043, %v2091
        %2093 = vmatmul.bf16.gmra.mxu0 %v1134
        %v2094 = vpop.f32.mrf.mxu0
        %v2095 = vadd.f32 %v2046, %v2094
        %v2096 = vpop.f32.mrf.mxu0
        %v2097 = vadd.f32 %v2048, %v2096
        %2098 = vmatmul.bf16.gmra.mxu0 %v1136
        %v2099 = vpop.f32.mrf.mxu0
        %v2100 = vadd.f32 %v2051, %v2099
        %v2101 = vpop.f32.mrf.mxu0
        %v2102 = vadd.f32 %v2053, %v2101
        %2103 = vmatmul.bf16.gmra.mxu0 %v1138
        %v2104 = vpop.f32.mrf.mxu0
        %v2105 = vadd.f32 %v2056, %v2104
        %v2106 = vpop.f32.mrf.mxu0
        %v2107 = vadd.f32 %v2058, %v2106
        %2108 = vmatmul.bf16.gmra.mxu0 %v1140
        %v2109 = vpop.f32.mrf.mxu0
        %v2110 = vadd.f32 %v2061, %v2109
        %v2111 = vpop.f32.mrf.mxu0
        %v2112 = vadd.f32 %v2063, %v2111
        %2113 = vmatmul.bf16.gmra.mxu0 %v1142
        %v2114 = vpop.f32.mrf.mxu0
        %v2115 = vadd.f32 %v2066, %v2114
        %v2116 = vpop.f32.mrf.mxu0
        %v2117 = vadd.f32 %v2068, %v2116
        %2118 = vmatmul.bf16.gmra.mxu0 %v1144
        %v2119 = vpop.f32.mrf.mxu0
        %v2120 = vadd.f32 %v2071, %v2119
        %v2121 = vpop.f32.mrf.mxu0
        %v2122 = vadd.f32 %v2073, %v2121
        %2123 = vmatmul.bf16.gmra.mxu0 %v1146
        %v2124 = vpop.f32.mrf.mxu0
        %v2125 = vadd.f32 %v2076, %v2124
        %v2126 = vpop.f32.mrf.mxu0
        %v2127 = vadd.f32 %v2078, %v2126
        %2128 = vdwg.mxu0
        %2129 = vmatpush.bf16.msra.mxu0 %v1735
        %2130 = vmatpush.bf16.msra.mxu0 %v1727
        %2131 = vmatpush.bf16.msra.mxu0 %v1719
        %2132 = vmatpush.bf16.msra.mxu0 %v1711
        %2133 = vmatpush.bf16.msra.mxu0 %v1703
        %2134 = vmatpush.bf16.msra.mxu0 %v1695
        %2135 = vmatpush.bf16.msra.mxu0 %v1687
        %2136 = vmatpush.bf16.msra.mxu0 %v1679
        %2137 = vmatmul.bf16.gmra.mxu0 %v1131
        %v2138 = vpop.f32.mrf.mxu0
        %v2139 = vadd.f32 %v1279, %v2138
        %v2140 = vpop.f32.mrf.mxu0
        %v2141 = vadd.f32 %v1279, %v2140
        %2142 = vmatmul.bf16.gmra.mxu0 %v1133
        %v2143 = vpop.f32.mrf.mxu0
        %v2144 = vadd.f32 %v1279, %v2143
        %v2145 = vpop.f32.mrf.mxu0
        %v2146 = vadd.f32 %v1279, %v2145
        %2147 = vmatmul.bf16.gmra.mxu0 %v1135
        %v2148 = vpop.f32.mrf.mxu0
        %v2149 = vadd.f32 %v1279, %v2148
        %v2150 = vpop.f32.mrf.mxu0
        %v2151 = vadd.f32 %v1279, %v2150
        %2152 = vmatmul.bf16.gmra.mxu0 %v1137
        %v2153 = vpop.f32.mrf.mxu0
        %v2154 = vadd.f32 %v1279, %v2153
        %v2155 = vpop.f32.mrf.mxu0
        %v2156 = vadd.f32 %v1279, %v2155
        %2157 = vmatmul.bf16.gmra.mxu0 %v1139
        %v2158 = vpop.f32.mrf.mxu0
        %v2159 = vadd.f32 %v1279, %v2158
        %v2160 = vpop.f32.mrf.mxu0
        %v2161 = vadd.f32 %v1279, %v2160
        %2162 = vmatmul.bf16.gmra.mxu0 %v1141
        %v2163 = vpop.f32.mrf.mxu0
        %v2164 = vadd.f32 %v1279, %v2163
        %v2165 = vpop.f32.mrf.mxu0
        %v2166 = vadd.f32 %v1279, %v2165
        %2167 = vmatmul.bf16.gmra.mxu0 %v1143
        %v2168 = vpop.f32.mrf.mxu0
        %v2169 = vadd.f32 %v1279, %v2168
        %v2170 = vpop.f32.mrf.mxu0
        %v2171 = vadd.f32 %v1279, %v2170
        %2172 = vmatmul.bf16.gmra.mxu0 %v1145
        %v2173 = vpop.f32.mrf.mxu0
        %v2174 = vadd.f32 %v1279, %v2173
        %v2175 = vpop.f32.mrf.mxu0
        %v2176 = vadd.f32 %v1279, %v2175
        %2177 = vdwg.mxu0
        %2178 = vmatpush.bf16.msra.mxu0 %v1799
        %2179 = vmatpush.bf16.msra.mxu0 %v1791
        %2180 = vmatpush.bf16.msra.mxu0 %v1783
        %2181 = vmatpush.bf16.msra.mxu0 %v1775
        %2182 = vmatpush.bf16.msra.mxu0 %v1767
        %2183 = vmatpush.bf16.msra.mxu0 %v1759
        %2184 = vmatpush.bf16.msra.mxu0 %v1751
        %2185 = vmatpush.bf16.msra.mxu0 %v1743
        %2186 = vmatmul.bf16.gmra.mxu0 %v1132
        %v2187 = vpop.f32.mrf.mxu0
        %v2188 = vadd.f32 %v2139, %v2187
        %v2189 = vpop.f32.mrf.mxu0
        %v2190 = vadd.f32 %v2141, %v2189
        %2191 = vmatmul.bf16.gmra.mxu0 %v1134
        %v2192 = vpop.f32.mrf.mxu0
        %v2193 = vadd.f32 %v2144, %v2192
        %v2194 = vpop.f32.mrf.mxu0
        %v2195 = vadd.f32 %v2146, %v2194
        %2196 = vmatmul.bf16.gmra.mxu0 %v1136
        %v2197 = vpop.f32.mrf.mxu0
        %v2198 = vadd.f32 %v2149, %v2197
        %v2199 = vpop.f32.mrf.mxu0
        %v2200 = vadd.f32 %v2151, %v2199
        %2201 = vmatmul.bf16.gmra.mxu0 %v1138
        %v2202 = vpop.f32.mrf.mxu0
        %v2203 = vadd.f32 %v2154, %v2202
        %v2204 = vpop.f32.mrf.mxu0
        %v2205 = vadd.f32 %v2156, %v2204
        %2206 = vmatmul.bf16.gmra.mxu0 %v1140
        %v2207 = vpop.f32.mrf.mxu0
        %v2208 = vadd.f32 %v2159, %v2207
        %v2209 = vpop.f32.mrf.mxu0
        %v2210 = vadd.f32 %v2161, %v2209
        %2211 = vmatmul.bf16.gmra.mxu0 %v1142
        %v2212 = vpop.f32.mrf.mxu0
        %v2213 = vadd.f32 %v2164, %v2212
        %v2214 = vpop.f32.mrf.mxu0
        %v2215 = vadd.f32 %v2166, %v2214
        %2216 = vmatmul.bf16.gmra.mxu0 %v1144
        %v2217 = vpop.f32.mrf.mxu0
        %v2218 = vadd.f32 %v2169, %v2217
        %v2219 = vpop.f32.mrf.mxu0
        %v2220 = vadd.f32 %v2171, %v2219
        %2221 = vmatmul.bf16.gmra.mxu0 %v1146
        %v2222 = vpop.f32.mrf.mxu0
        %v2223 = vadd.f32 %v2174, %v2222
        %v2224 = vpop.f32.mrf.mxu0
        %v2225 = vadd.f32 %v2176, %v2224
        %2226 = vdwg.mxu0
        %2227 = vmatpush.bf16.msra.mxu0 %v1736
        %2228 = vmatpush.bf16.msra.mxu0 %v1728
        %2229 = vmatpush.bf16.msra.mxu0 %v1720
        %2230 = vmatpush.bf16.msra.mxu0 %v1712
        %2231 = vmatpush.bf16.msra.mxu0 %v1704
        %2232 = vmatpush.bf16.msra.mxu0 %v1696
        %2233 = vmatpush.bf16.msra.mxu0 %v1688
        %2234 = vmatpush.bf16.msra.mxu0 %v1680
        %2235 = vmatmul.bf16.gmra.mxu0 %v1131
        %v2236 = vpop.f32.mrf.mxu0
        %v2237 = vadd.f32 %v1280, %v2236
        %v2238 = vpop.f32.mrf.mxu0
        %v2239 = vadd.f32 %v1280, %v2238
        %2240 = vmatmul.bf16.gmra.mxu0 %v1133
        %v2241 = vpop.f32.mrf.mxu0
        %v2242 = vadd.f32 %v1280, %v2241
        %v2243 = vpop.f32.mrf.mxu0
        %v2244 = vadd.f32 %v1280, %v2243
        %2245 = vmatmul.bf16.gmra.mxu0 %v1135
        %v2246 = vpop.f32.mrf.mxu0
        %v2247 = vadd.f32 %v1280, %v2246
        %v2248 = vpop.f32.mrf.mxu0
        %v2249 = vadd.f32 %v1280, %v2248
        %2250 = vmatmul.bf16.gmra.mxu0 %v1137
        %v2251 = vpop.f32.mrf.mxu0
        %v2252 = vadd.f32 %v1280, %v2251
        %v2253 = vpop.f32.mrf.mxu0
        %v2254 = vadd.f32 %v1280, %v2253
        %2255 = vmatmul.bf16.gmra.mxu0 %v1139
        %v2256 = vpop.f32.mrf.mxu0
        %v2257 = vadd.f32 %v1280, %v2256
        %v2258 = vpop.f32.mrf.mxu0
        %v2259 = vadd.f32 %v1280, %v2258
        %2260 = vmatmul.bf16.gmra.mxu0 %v1141
        %v2261 = vpop.f32.mrf.mxu0
        %v2262 = vadd.f32 %v1280, %v2261
        %v2263 = vpop.f32.mrf.mxu0
        %v2264 = vadd.f32 %v1280, %v2263
        %2265 = vmatmul.bf16.gmra.mxu0 %v1143
        %v2266 = vpop.f32.mrf.mxu0
        %v2267 = vadd.f32 %v1280, %v2266
        %v2268 = vpop.f32.mrf.mxu0
        %v2269 = vadd.f32 %v1280, %v2268
        %2270 = vmatmul.bf16.gmra.mxu0 %v1145
        %v2271 = vpop.f32.mrf.mxu0
        %v2272 = vadd.f32 %v1280, %v2271
        %v2273 = vpop.f32.mrf.mxu0
        %v2274 = vadd.f32 %v1280, %v2273
        %2275 = vdwg.mxu0
        %2276 = vmatpush.bf16.msra.mxu0 %v1800
        %2277 = vmatpush.bf16.msra.mxu0 %v1792
        %2278 = vmatpush.bf16.msra.mxu0 %v1784
        %2279 = vmatpush.bf16.msra.mxu0 %v1776
        %2280 = vmatpush.bf16.msra.mxu0 %v1768
        %2281 = vmatpush.bf16.msra.mxu0 %v1760
        %2282 = vmatpush.bf16.msra.mxu0 %v1752
        %2283 = vmatpush.bf16.msra.mxu0 %v1744
        %2284 = vmatmul.bf16.gmra.mxu0 %v1132
        %v2285 = vpop.f32.mrf.mxu0
        %v2286 = vadd.f32 %v2237, %v2285
        %v2287 = vpop.f32.mrf.mxu0
        %v2288 = vadd.f32 %v2239, %v2287
        %2289 = vmatmul.bf16.gmra.mxu0 %v1134
        %v2290 = vpop.f32.mrf.mxu0
        %v2291 = vadd.f32 %v2242, %v2290
        %v2292 = vpop.f32.mrf.mxu0
        %v2293 = vadd.f32 %v2244, %v2292
        %2294 = vmatmul.bf16.gmra.mxu0 %v1136
        %v2295 = vpop.f32.mrf.mxu0
        %v2296 = vadd.f32 %v2247, %v2295
        %v2297 = vpop.f32.mrf.mxu0
        %v2298 = vadd.f32 %v2249, %v2297
        %2299 = vmatmul.bf16.gmra.mxu0 %v1138
        %v2300 = vpop.f32.mrf.mxu0
        %v2301 = vadd.f32 %v2252, %v2300
        %v2302 = vpop.f32.mrf.mxu0
        %v2303 = vadd.f32 %v2254, %v2302
        %2304 = vmatmul.bf16.gmra.mxu0 %v1140
        %v2305 = vpop.f32.mrf.mxu0
        %v2306 = vadd.f32 %v2257, %v2305
        %v2307 = vpop.f32.mrf.mxu0
        %v2308 = vadd.f32 %v2259, %v2307
        %2309 = vmatmul.bf16.gmra.mxu0 %v1142
        %v2310 = vpop.f32.mrf.mxu0
        %v2311 = vadd.f32 %v2262, %v2310
        %v2312 = vpop.f32.mrf.mxu0
        %v2313 = vadd.f32 %v2264, %v2312
        %2314 = vmatmul.bf16.gmra.mxu0 %v1144
        %v2315 = vpop.f32.mrf.mxu0
        %v2316 = vadd.f32 %v2267, %v2315
        %v2317 = vpop.f32.mrf.mxu0
        %v2318 = vadd.f32 %v2269, %v2317
        %2319 = vmatmul.bf16.gmra.mxu0 %v1146
        %v2320 = vpop.f32.mrf.mxu0
        %v2321 = vadd.f32 %v2272, %v2320
        %v2322 = vpop.f32.mrf.mxu0
        %v2323 = vadd.f32 %v2274, %v2322
        %2324 = vdwg.mxu0
        %2325 = vmatpush.bf16.msra.mxu0 %v1737
        %2326 = vmatpush.bf16.msra.mxu0 %v1729
        %2327 = vmatpush.bf16.msra.mxu0 %v1721
        %2328 = vmatpush.bf16.msra.mxu0 %v1713
        %2329 = vmatpush.bf16.msra.mxu0 %v1705
        %2330 = vmatpush.bf16.msra.mxu0 %v1697
        %2331 = vmatpush.bf16.msra.mxu0 %v1689
        %2332 = vmatpush.bf16.msra.mxu0 %v1681
        %2333 = vmatmul.bf16.gmra.mxu0 %v1131
        %v2334 = vpop.f32.mrf.mxu0
        %v2335 = vadd.f32 %v1281, %v2334
        %v2336 = vpop.f32.mrf.mxu0
        %v2337 = vadd.f32 %v1281, %v2336
        %2338 = vmatmul.bf16.gmra.mxu0 %v1133
        %v2339 = vpop.f32.mrf.mxu0
        %v2340 = vadd.f32 %v1281, %v2339
        %v2341 = vpop.f32.mrf.mxu0
        %v2342 = vadd.f32 %v1281, %v2341
        %2343 = vmatmul.bf16.gmra.mxu0 %v1135
        %v2344 = vpop.f32.mrf.mxu0
        %v2345 = vadd.f32 %v1281, %v2344
        %v2346 = vpop.f32.mrf.mxu0
        %v2347 = vadd.f32 %v1281, %v2346
        %2348 = vmatmul.bf16.gmra.mxu0 %v1137
        %v2349 = vpop.f32.mrf.mxu0
        %v2350 = vadd.f32 %v1281, %v2349
        %v2351 = vpop.f32.mrf.mxu0
        %v2352 = vadd.f32 %v1281, %v2351
        %2353 = vmatmul.bf16.gmra.mxu0 %v1139
        %v2354 = vpop.f32.mrf.mxu0
        %v2355 = vadd.f32 %v1281, %v2354
        %v2356 = vpop.f32.mrf.mxu0
        %v2357 = vadd.f32 %v1281, %v2356
        %2358 = vmatmul.bf16.gmra.mxu0 %v1141
        %v2359 = vpop.f32.mrf.mxu0
        %v2360 = vadd.f32 %v1281, %v2359
        %v2361 = vpop.f32.mrf.mxu0
        %v2362 = vadd.f32 %v1281, %v2361
        %2363 = vmatmul.bf16.gmra.mxu0 %v1143
        %v2364 = vpop.f32.mrf.mxu0
        %v2365 = vadd.f32 %v1281, %v2364
        %v2366 = vpop.f32.mrf.mxu0
        %v2367 = vadd.f32 %v1281, %v2366
        %2368 = vmatmul.bf16.gmra.mxu0 %v1145
        %v2369 = vpop.f32.mrf.mxu0
        %v2370 = vadd.f32 %v1281, %v2369
        %v2371 = vpop.f32.mrf.mxu0
        %v2372 = vadd.f32 %v1281, %v2371
        %2373 = vdwg.mxu0
        %2374 = vmatpush.bf16.msra.mxu0 %v1801
        %2375 = vmatpush.bf16.msra.mxu0 %v1793
        %2376 = vmatpush.bf16.msra.mxu0 %v1785
        %2377 = vmatpush.bf16.msra.mxu0 %v1777
        %2378 = vmatpush.bf16.msra.mxu0 %v1769
        %2379 = vmatpush.bf16.msra.mxu0 %v1761
        %2380 = vmatpush.bf16.msra.mxu0 %v1753
        %2381 = vmatpush.bf16.msra.mxu0 %v1745
        %2382 = vmatmul.bf16.gmra.mxu0 %v1132
        %v2383 = vpop.f32.mrf.mxu0
        %v2384 = vadd.f32 %v2335, %v2383
        %v2385 = vpop.f32.mrf.mxu0
        %v2386 = vadd.f32 %v2337, %v2385
        %2387 = vmatmul.bf16.gmra.mxu0 %v1134
        %v2388 = vpop.f32.mrf.mxu0
        %v2389 = vadd.f32 %v2340, %v2388
        %v2390 = vpop.f32.mrf.mxu0
        %v2391 = vadd.f32 %v2342, %v2390
        %2392 = vmatmul.bf16.gmra.mxu0 %v1136
        %v2393 = vpop.f32.mrf.mxu0
        %v2394 = vadd.f32 %v2345, %v2393
        %v2395 = vpop.f32.mrf.mxu0
        %v2396 = vadd.f32 %v2347, %v2395
        %2397 = vmatmul.bf16.gmra.mxu0 %v1138
        %v2398 = vpop.f32.mrf.mxu0
        %v2399 = vadd.f32 %v2350, %v2398
        %v2400 = vpop.f32.mrf.mxu0
        %v2401 = vadd.f32 %v2352, %v2400
        %2402 = vmatmul.bf16.gmra.mxu0 %v1140
        %v2403 = vpop.f32.mrf.mxu0
        %v2404 = vadd.f32 %v2355, %v2403
        %v2405 = vpop.f32.mrf.mxu0
        %v2406 = vadd.f32 %v2357, %v2405
        %2407 = vmatmul.bf16.gmra.mxu0 %v1142
        %v2408 = vpop.f32.mrf.mxu0
        %v2409 = vadd.f32 %v2360, %v2408
        %v2410 = vpop.f32.mrf.mxu0
        %v2411 = vadd.f32 %v2362, %v2410
        %2412 = vmatmul.bf16.gmra.mxu0 %v1144
        %v2413 = vpop.f32.mrf.mxu0
        %v2414 = vadd.f32 %v2365, %v2413
        %v2415 = vpop.f32.mrf.mxu0
        %v2416 = vadd.f32 %v2367, %v2415
        %2417 = vmatmul.bf16.gmra.mxu0 %v1146
        %v2418 = vpop.f32.mrf.mxu0
        %v2419 = vadd.f32 %v2370, %v2418
        %v2420 = vpop.f32.mrf.mxu0
        %v2421 = vadd.f32 %v2372, %v2420
        %2422 = vdwg.mxu0
        %2423 = vmatpush.bf16.msra.mxu0 %v1738
        %2424 = vmatpush.bf16.msra.mxu0 %v1730
        %2425 = vmatpush.bf16.msra.mxu0 %v1722
        %2426 = vmatpush.bf16.msra.mxu0 %v1714
        %2427 = vmatpush.bf16.msra.mxu0 %v1706
        %2428 = vmatpush.bf16.msra.mxu0 %v1698
        %2429 = vmatpush.bf16.msra.mxu0 %v1690
        %2430 = vmatpush.bf16.msra.mxu0 %v1682
        %2431 = vmatmul.bf16.gmra.mxu0 %v1131
        %v2432 = vpop.f32.mrf.mxu0
        %v2433 = vadd.f32 %v1282, %v2432
        %v2434 = vpop.f32.mrf.mxu0
        %v2435 = vadd.f32 %v1282, %v2434
        %2436 = vmatmul.bf16.gmra.mxu0 %v1133
        %v2437 = vpop.f32.mrf.mxu0
        %v2438 = vadd.f32 %v1282, %v2437
        %v2439 = vpop.f32.mrf.mxu0
        %v2440 = vadd.f32 %v1282, %v2439
        %2441 = vmatmul.bf16.gmra.mxu0 %v1135
        %v2442 = vpop.f32.mrf.mxu0
        %v2443 = vadd.f32 %v1282, %v2442
        %v2444 = vpop.f32.mrf.mxu0
        %v2445 = vadd.f32 %v1282, %v2444
        %2446 = vmatmul.bf16.gmra.mxu0 %v1137
        %v2447 = vpop.f32.mrf.mxu0
        %v2448 = vadd.f32 %v1282, %v2447
        %v2449 = vpop.f32.mrf.mxu0
        %v2450 = vadd.f32 %v1282, %v2449
        %2451 = vmatmul.bf16.gmra.mxu0 %v1139
        %v2452 = vpop.f32.mrf.mxu0
        %v2453 = vadd.f32 %v1282, %v2452
        %v2454 = vpop.f32.mrf.mxu0
        %v2455 = vadd.f32 %v1282, %v2454
        %2456 = vmatmul.bf16.gmra.mxu0 %v1141
        %v2457 = vpop.f32.mrf.mxu0
        %v2458 = vadd.f32 %v1282, %v2457
        %v2459 = vpop.f32.mrf.mxu0
        %v2460 = vadd.f32 %v1282, %v2459
        %2461 = vmatmul.bf16.gmra.mxu0 %v1143
        %v2462 = vpop.f32.mrf.mxu0
        %v2463 = vadd.f32 %v1282, %v2462
        %v2464 = vpop.f32.mrf.mxu0
        %v2465 = vadd.f32 %v1282, %v2464
        %2466 = vmatmul.bf16.gmra.mxu0 %v1145
        %v2467 = vpop.f32.mrf.mxu0
        %v2468 = vadd.f32 %v1282, %v2467
        %v2469 = vpop.f32.mrf.mxu0
        %v2470 = vadd.f32 %v1282, %v2469
        %2471 = vdwg.mxu0
        %2472 = vmatpush.bf16.msra.mxu0 %v1802
        %2473 = vmatpush.bf16.msra.mxu0 %v1794
        %2474 = vmatpush.bf16.msra.mxu0 %v1786
        %2475 = vmatpush.bf16.msra.mxu0 %v1778
        %2476 = vmatpush.bf16.msra.mxu0 %v1770
        %2477 = vmatpush.bf16.msra.mxu0 %v1762
        %2478 = vmatpush.bf16.msra.mxu0 %v1754
        %2479 = vmatpush.bf16.msra.mxu0 %v1746
        %2480 = vmatmul.bf16.gmra.mxu0 %v1132
        %v2481 = vpop.f32.mrf.mxu0
        %v2482 = vadd.f32 %v2433, %v2481
        %v2483 = vpop.f32.mrf.mxu0
        %v2484 = vadd.f32 %v2435, %v2483
        %2485 = vmatmul.bf16.gmra.mxu0 %v1134
        %v2486 = vpop.f32.mrf.mxu0
        %v2487 = vadd.f32 %v2438, %v2486
        %v2488 = vpop.f32.mrf.mxu0
        %v2489 = vadd.f32 %v2440, %v2488
        %2490 = vmatmul.bf16.gmra.mxu0 %v1136
        %v2491 = vpop.f32.mrf.mxu0
        %v2492 = vadd.f32 %v2443, %v2491
        %v2493 = vpop.f32.mrf.mxu0
        %v2494 = vadd.f32 %v2445, %v2493
        %2495 = vmatmul.bf16.gmra.mxu0 %v1138
        %v2496 = vpop.f32.mrf.mxu0
        %v2497 = vadd.f32 %v2448, %v2496
        %v2498 = vpop.f32.mrf.mxu0
        %v2499 = vadd.f32 %v2450, %v2498
        %2500 = vmatmul.bf16.gmra.mxu0 %v1140
        %v2501 = vpop.f32.mrf.mxu0
        %v2502 = vadd.f32 %v2453, %v2501
        %v2503 = vpop.f32.mrf.mxu0
        %v2504 = vadd.f32 %v2455, %v2503
        %2505 = vmatmul.bf16.gmra.mxu0 %v1142
        %v2506 = vpop.f32.mrf.mxu0
        %v2507 = vadd.f32 %v2458, %v2506
        %v2508 = vpop.f32.mrf.mxu0
        %v2509 = vadd.f32 %v2460, %v2508
        %2510 = vmatmul.bf16.gmra.mxu0 %v1144
        %v2511 = vpop.f32.mrf.mxu0
        %v2512 = vadd.f32 %v2463, %v2511
        %v2513 = vpop.f32.mrf.mxu0
        %v2514 = vadd.f32 %v2465, %v2513
        %2515 = vmatmul.bf16.gmra.mxu0 %v1146
        %v2516 = vpop.f32.mrf.mxu0
        %v2517 = vadd.f32 %v2468, %v2516
        %v2518 = vpop.f32.mrf.mxu0
        %v2519 = vadd.f32 %v2470, %v2518
        %2520 = vdwg.mxu0
        %2521 = vmatpush.bf16.msra.mxu0 %v1739
        %2522 = vmatpush.bf16.msra.mxu0 %v1731
        %2523 = vmatpush.bf16.msra.mxu0 %v1723
        %2524 = vmatpush.bf16.msra.mxu0 %v1715
        %2525 = vmatpush.bf16.msra.mxu0 %v1707
        %2526 = vmatpush.bf16.msra.mxu0 %v1699
        %2527 = vmatpush.bf16.msra.mxu0 %v1691
        %2528 = vmatpush.bf16.msra.mxu0 %v1683
        %2529 = vmatmul.bf16.gmra.mxu0 %v1131
        %v2530 = vpop.f32.mrf.mxu0
        %v2531 = vadd.f32 %v1283, %v2530
        %v2532 = vpop.f32.mrf.mxu0
        %v2533 = vadd.f32 %v1283, %v2532
        %2534 = vmatmul.bf16.gmra.mxu0 %v1133
        %v2535 = vpop.f32.mrf.mxu0
        %v2536 = vadd.f32 %v1283, %v2535
        %v2537 = vpop.f32.mrf.mxu0
        %v2538 = vadd.f32 %v1283, %v2537
        %2539 = vmatmul.bf16.gmra.mxu0 %v1135
        %v2540 = vpop.f32.mrf.mxu0
        %v2541 = vadd.f32 %v1283, %v2540
        %v2542 = vpop.f32.mrf.mxu0
        %v2543 = vadd.f32 %v1283, %v2542
        %2544 = vmatmul.bf16.gmra.mxu0 %v1137
        %v2545 = vpop.f32.mrf.mxu0
        %v2546 = vadd.f32 %v1283, %v2545
        %v2547 = vpop.f32.mrf.mxu0
        %v2548 = vadd.f32 %v1283, %v2547
        %2549 = vmatmul.bf16.gmra.mxu0 %v1139
        %v2550 = vpop.f32.mrf.mxu0
        %v2551 = vadd.f32 %v1283, %v2550
        %v2552 = vpop.f32.mrf.mxu0
        %v2553 = vadd.f32 %v1283, %v2552
        %2554 = vmatmul.bf16.gmra.mxu0 %v1141
        %v2555 = vpop.f32.mrf.mxu0
        %v2556 = vadd.f32 %v1283, %v2555
        %v2557 = vpop.f32.mrf.mxu0
        %v2558 = vadd.f32 %v1283, %v2557
        %2559 = vmatmul.bf16.gmra.mxu0 %v1143
        %v2560 = vpop.f32.mrf.mxu0
        %v2561 = vadd.f32 %v1283, %v2560
        %v2562 = vpop.f32.mrf.mxu0
        %v2563 = vadd.f32 %v1283, %v2562
        %2564 = vmatmul.bf16.gmra.mxu0 %v1145
        %v2565 = vpop.f32.mrf.mxu0
        %v2566 = vadd.f32 %v1283, %v2565
        %v2567 = vpop.f32.mrf.mxu0
        %v2568 = vadd.f32 %v1283, %v2567
        %2569 = vdwg.mxu0
        %2570 = vmatpush.bf16.msra.mxu0 %v1803
        %2571 = vmatpush.bf16.msra.mxu0 %v1795
        %2572 = vmatpush.bf16.msra.mxu0 %v1787
        %2573 = vmatpush.bf16.msra.mxu0 %v1779
        %2574 = vmatpush.bf16.msra.mxu0 %v1771
        %2575 = vmatpush.bf16.msra.mxu0 %v1763
        %2576 = vmatpush.bf16.msra.mxu0 %v1755
        %2577 = vmatpush.bf16.msra.mxu0 %v1747
        %2578 = vmatmul.bf16.gmra.mxu0 %v1132
        %v2579 = vpop.f32.mrf.mxu0
        %v2580 = vadd.f32 %v2531, %v2579
        %v2581 = vpop.f32.mrf.mxu0
        %v2582 = vadd.f32 %v2533, %v2581
        %2583 = vmatmul.bf16.gmra.mxu0 %v1134
        %v2584 = vpop.f32.mrf.mxu0
        %v2585 = vadd.f32 %v2536, %v2584
        %v2586 = vpop.f32.mrf.mxu0
        %v2587 = vadd.f32 %v2538, %v2586
        %2588 = vmatmul.bf16.gmra.mxu0 %v1136
        %v2589 = vpop.f32.mrf.mxu0
        %v2590 = vadd.f32 %v2541, %v2589
        %v2591 = vpop.f32.mrf.mxu0
        %v2592 = vadd.f32 %v2543, %v2591
        %2593 = vmatmul.bf16.gmra.mxu0 %v1138
        %v2594 = vpop.f32.mrf.mxu0
        %v2595 = vadd.f32 %v2546, %v2594
        %v2596 = vpop.f32.mrf.mxu0
        %v2597 = vadd.f32 %v2548, %v2596
        %2598 = vmatmul.bf16.gmra.mxu0 %v1140
        %v2599 = vpop.f32.mrf.mxu0
        %v2600 = vadd.f32 %v2551, %v2599
        %v2601 = vpop.f32.mrf.mxu0
        %v2602 = vadd.f32 %v2553, %v2601
        %2603 = vmatmul.bf16.gmra.mxu0 %v1142
        %v2604 = vpop.f32.mrf.mxu0
        %v2605 = vadd.f32 %v2556, %v2604
        %v2606 = vpop.f32.mrf.mxu0
        %v2607 = vadd.f32 %v2558, %v2606
        %2608 = vmatmul.bf16.gmra.mxu0 %v1144
        %v2609 = vpop.f32.mrf.mxu0
        %v2610 = vadd.f32 %v2561, %v2609
        %v2611 = vpop.f32.mrf.mxu0
        %v2612 = vadd.f32 %v2563, %v2611
        %2613 = vmatmul.bf16.gmra.mxu0 %v1146
        %v2614 = vpop.f32.mrf.mxu0
        %v2615 = vadd.f32 %v2566, %v2614
        %v2616 = vpop.f32.mrf.mxu0
        %v2617 = vadd.f32 %v2568, %v2616
        %2618 = vdwg.mxu0
        %2619 = vmatpush.bf16.msra.mxu0 %v1740
        %2620 = vmatpush.bf16.msra.mxu0 %v1732
        %2621 = vmatpush.bf16.msra.mxu0 %v1724
        %2622 = vmatpush.bf16.msra.mxu0 %v1716
        %2623 = vmatpush.bf16.msra.mxu0 %v1708
        %2624 = vmatpush.bf16.msra.mxu0 %v1700
        %2625 = vmatpush.bf16.msra.mxu0 %v1692
        %2626 = vmatpush.bf16.msra.mxu0 %v1684
        %2627 = vmatmul.bf16.gmra.mxu0 %v1131
        %v2628 = vpop.f32.mrf.mxu0
        %v2629 = vadd.f32 %v1284, %v2628
        %v2630 = vpop.f32.mrf.mxu0
        %v2631 = vadd.f32 %v1284, %v2630
        %2632 = vmatmul.bf16.gmra.mxu0 %v1133
        %v2633 = vpop.f32.mrf.mxu0
        %v2634 = vadd.f32 %v1284, %v2633
        %v2635 = vpop.f32.mrf.mxu0
        %v2636 = vadd.f32 %v1284, %v2635
        %2637 = vmatmul.bf16.gmra.mxu0 %v1135
        %v2638 = vpop.f32.mrf.mxu0
        %v2639 = vadd.f32 %v1284, %v2638
        %v2640 = vpop.f32.mrf.mxu0
        %v2641 = vadd.f32 %v1284, %v2640
        %2642 = vmatmul.bf16.gmra.mxu0 %v1137
        %v2643 = vpop.f32.mrf.mxu0
        %v2644 = vadd.f32 %v1284, %v2643
        %v2645 = vpop.f32.mrf.mxu0
        %v2646 = vadd.f32 %v1284, %v2645
        %2647 = vmatmul.bf16.gmra.mxu0 %v1139
        %v2648 = vpop.f32.mrf.mxu0
        %v2649 = vadd.f32 %v1284, %v2648
        %v2650 = vpop.f32.mrf.mxu0
        %v2651 = vadd.f32 %v1284, %v2650
        %2652 = vmatmul.bf16.gmra.mxu0 %v1141
        %v2653 = vpop.f32.mrf.mxu0
        %v2654 = vadd.f32 %v1284, %v2653
        %v2655 = vpop.f32.mrf.mxu0
        %v2656 = vadd.f32 %v1284, %v2655
        %2657 = vmatmul.bf16.gmra.mxu0 %v1143
        %v2658 = vpop.f32.mrf.mxu0
        %v2659 = vadd.f32 %v1284, %v2658
        %v2660 = vpop.f32.mrf.mxu0
        %v2661 = vadd.f32 %v1284, %v2660
        %2662 = vmatmul.bf16.gmra.mxu0 %v1145
        %v2663 = vpop.f32.mrf.mxu0
        %v2664 = vadd.f32 %v1284, %v2663
        %v2665 = vpop.f32.mrf.mxu0
        %v2666 = vadd.f32 %v1284, %v2665
        %2667 = vdwg.mxu0
        %2668 = vmatpush.bf16.msra.mxu0 %v1804
        %2669 = vmatpush.bf16.msra.mxu0 %v1796
        %2670 = vmatpush.bf16.msra.mxu0 %v1788
        %2671 = vmatpush.bf16.msra.mxu0 %v1780
        %2672 = vmatpush.bf16.msra.mxu0 %v1772
        %2673 = vmatpush.bf16.msra.mxu0 %v1764
        %2674 = vmatpush.bf16.msra.mxu0 %v1756
        %2675 = vmatpush.bf16.msra.mxu0 %v1748
        %2676 = vmatmul.bf16.gmra.mxu0 %v1132
        %v2677 = vpop.f32.mrf.mxu0
        %v2678 = vadd.f32 %v2629, %v2677
        %v2679 = vpop.f32.mrf.mxu0
        %v2680 = vadd.f32 %v2631, %v2679
        %2681 = vmatmul.bf16.gmra.mxu0 %v1134
        %v2682 = vpop.f32.mrf.mxu0
        %v2683 = vadd.f32 %v2634, %v2682
        %v2684 = vpop.f32.mrf.mxu0
        %v2685 = vadd.f32 %v2636, %v2684
        %2686 = vmatmul.bf16.gmra.mxu0 %v1136
        %v2687 = vpop.f32.mrf.mxu0
        %v2688 = vadd.f32 %v2639, %v2687
        %v2689 = vpop.f32.mrf.mxu0
        %v2690 = vadd.f32 %v2641, %v2689
        %2691 = vmatmul.bf16.gmra.mxu0 %v1138
        %v2692 = vpop.f32.mrf.mxu0
        %v2693 = vadd.f32 %v2644, %v2692
        %v2694 = vpop.f32.mrf.mxu0
        %v2695 = vadd.f32 %v2646, %v2694
        %2696 = vmatmul.bf16.gmra.mxu0 %v1140
        %v2697 = vpop.f32.mrf.mxu0
        %v2698 = vadd.f32 %v2649, %v2697
        %v2699 = vpop.f32.mrf.mxu0
        %v2700 = vadd.f32 %v2651, %v2699
        %2701 = vmatmul.bf16.gmra.mxu0 %v1142
        %v2702 = vpop.f32.mrf.mxu0
        %v2703 = vadd.f32 %v2654, %v2702
        %v2704 = vpop.f32.mrf.mxu0
        %v2705 = vadd.f32 %v2656, %v2704
        %2706 = vmatmul.bf16.gmra.mxu0 %v1144
        %v2707 = vpop.f32.mrf.mxu0
        %v2708 = vadd.f32 %v2659, %v2707
        %v2709 = vpop.f32.mrf.mxu0
        %v2710 = vadd.f32 %v2661, %v2709
        %2711 = vmatmul.bf16.gmra.mxu0 %v1146
        %v2712 = vpop.f32.mrf.mxu0
        %v2713 = vadd.f32 %v2664, %v2712
        %v2714 = vpop.f32.mrf.mxu0
        %v2715 = vadd.f32 %v2666, %v2714
        %2716 = vdwg.mxu0
        %v2717 = vmax.f32 %v1992, 0.0
        %v2718 = vmax.f32 %v2090, 0.0
        %v2719 = vmax.f32 %v2188, 0.0
        %v2720 = vmax.f32 %v2286, 0.0
        %v2721 = vmax.f32 %v2384, 0.0
        %v2722 = vmax.f32 %v2482, 0.0
        %v2723 = vmax.f32 %v2580, 0.0
        %v2724 = vmax.f32 %v2678, 0.0
        %v2725 = vmax.f32 %v1994, 0.0
        %v2726 = vmax.f32 %v2092, 0.0
        %v2727 = vmax.f32 %v2190, 0.0
        %v2728 = vmax.f32 %v2288, 0.0
        %v2729 = vmax.f32 %v2386, 0.0
        %v2730 = vmax.f32 %v2484, 0.0
        %v2731 = vmax.f32 %v2582, 0.0
        %v2732 = vmax.f32 %v2680, 0.0
        %v2733 = vmax.f32 %v1997, 0.0
        %v2734 = vmax.f32 %v2095, 0.0
        %v2735 = vmax.f32 %v2193, 0.0
        %v2736 = vmax.f32 %v2291, 0.0
        %v2737 = vmax.f32 %v2389, 0.0
        %v2738 = vmax.f32 %v2487, 0.0
        %v2739 = vmax.f32 %v2585, 0.0
        %v2740 = vmax.f32 %v2683, 0.0
        %v2741 = vmax.f32 %v1999, 0.0
        %v2742 = vmax.f32 %v2097, 0.0
        %v2743 = vmax.f32 %v2195, 0.0
        %v2744 = vmax.f32 %v2293, 0.0
        %v2745 = vmax.f32 %v2391, 0.0
        %v2746 = vmax.f32 %v2489, 0.0
        %v2747 = vmax.f32 %v2587, 0.0
        %v2748 = vmax.f32 %v2685, 0.0
        %v2749 = vmax.f32 %v2002, 0.0
        %v2750 = vmax.f32 %v2100, 0.0
        %v2751 = vmax.f32 %v2198, 0.0
        %v2752 = vmax.f32 %v2296, 0.0
        %v2753 = vmax.f32 %v2394, 0.0
        %v2754 = vmax.f32 %v2492, 0.0
        %v2755 = vmax.f32 %v2590, 0.0
        %v2756 = vmax.f32 %v2688, 0.0
        %v2757 = vmax.f32 %v2004, 0.0
        %v2758 = vmax.f32 %v2102, 0.0
        %v2759 = vmax.f32 %v2200, 0.0
        %v2760 = vmax.f32 %v2298, 0.0
        %v2761 = vmax.f32 %v2396, 0.0
        %v2762 = vmax.f32 %v2494, 0.0
        %v2763 = vmax.f32 %v2592, 0.0
        %v2764 = vmax.f32 %v2690, 0.0
        %v2765 = vmax.f32 %v2007, 0.0
        %v2766 = vmax.f32 %v2105, 0.0
        %v2767 = vmax.f32 %v2203, 0.0
        %v2768 = vmax.f32 %v2301, 0.0
        %v2769 = vmax.f32 %v2399, 0.0
        %v2770 = vmax.f32 %v2497, 0.0
        %v2771 = vmax.f32 %v2595, 0.0
        %v2772 = vmax.f32 %v2693, 0.0
        %v2773 = vmax.f32 %v2009, 0.0
        %v2774 = vmax.f32 %v2107, 0.0
        %v2775 = vmax.f32 %v2205, 0.0
        %v2776 = vmax.f32 %v2303, 0.0
        %v2777 = vmax.f32 %v2401, 0.0
        %v2778 = vmax.f32 %v2499, 0.0
        %v2779 = vmax.f32 %v2597, 0.0
        %v2780 = vmax.f32 %v2695, 0.0
        %v2781 = vmax.f32 %v2012, 0.0
        %v2782 = vmax.f32 %v2110, 0.0
        %v2783 = vmax.f32 %v2208, 0.0
        %v2784 = vmax.f32 %v2306, 0.0
        %v2785 = vmax.f32 %v2404, 0.0
        %v2786 = vmax.f32 %v2502, 0.0
        %v2787 = vmax.f32 %v2600, 0.0
        %v2788 = vmax.f32 %v2698, 0.0
        %v2789 = vmax.f32 %v2014, 0.0
        %v2790 = vmax.f32 %v2112, 0.0
        %v2791 = vmax.f32 %v2210, 0.0
        %v2792 = vmax.f32 %v2308, 0.0
        %v2793 = vmax.f32 %v2406, 0.0
        %v2794 = vmax.f32 %v2504, 0.0
        %v2795 = vmax.f32 %v2602, 0.0
        %v2796 = vmax.f32 %v2700, 0.0
        %v2797 = vmax.f32 %v2017, 0.0
        %v2798 = vmax.f32 %v2115, 0.0
        %v2799 = vmax.f32 %v2213, 0.0
        %v2800 = vmax.f32 %v2311, 0.0
        %v2801 = vmax.f32 %v2409, 0.0
        %v2802 = vmax.f32 %v2507, 0.0
        %v2803 = vmax.f32 %v2605, 0.0
        %v2804 = vmax.f32 %v2703, 0.0
        %v2805 = vmax.f32 %v2019, 0.0
        %v2806 = vmax.f32 %v2117, 0.0
        %v2807 = vmax.f32 %v2215, 0.0
        %v2808 = vmax.f32 %v2313, 0.0
        %v2809 = vmax.f32 %v2411, 0.0
        %v2810 = vmax.f32 %v2509, 0.0
        %v2811 = vmax.f32 %v2607, 0.0
        %v2812 = vmax.f32 %v2705, 0.0
        %v2813 = vmax.f32 %v2022, 0.0
        %v2814 = vmax.f32 %v2120, 0.0
        %v2815 = vmax.f32 %v2218, 0.0
        %v2816 = vmax.f32 %v2316, 0.0
        %v2817 = vmax.f32 %v2414, 0.0
        %v2818 = vmax.f32 %v2512, 0.0
        %v2819 = vmax.f32 %v2610, 0.0
        %v2820 = vmax.f32 %v2708, 0.0
        %v2821 = vmax.f32 %v2024, 0.0
        %v2822 = vmax.f32 %v2122, 0.0
        %v2823 = vmax.f32 %v2220, 0.0
        %v2824 = vmax.f32 %v2318, 0.0
        %v2825 = vmax.f32 %v2416, 0.0
        %v2826 = vmax.f32 %v2514, 0.0
        %v2827 = vmax.f32 %v2612, 0.0
        %v2828 = vmax.f32 %v2710, 0.0
        %v2829 = vmax.f32 %v2027, 0.0
        %v2830 = vmax.f32 %v2125, 0.0
        %v2831 = vmax.f32 %v2223, 0.0
        %v2832 = vmax.f32 %v2321, 0.0
        %v2833 = vmax.f32 %v2419, 0.0
        %v2834 = vmax.f32 %v2517, 0.0
        %v2835 = vmax.f32 %v2615, 0.0
        %v2836 = vmax.f32 %v2713, 0.0
        %v2837 = vmax.f32 %v2029, 0.0
        %v2838 = vmax.f32 %v2127, 0.0
        %v2839 = vmax.f32 %v2225, 0.0
        %v2840 = vmax.f32 %v2323, 0.0
        %v2841 = vmax.f32 %v2421, 0.0
        %v2842 = vmax.f32 %v2519, 0.0
        %v2843 = vmax.f32 %v2617, 0.0
        %v2844 = vmax.f32 %v2715, 0.0
        %v2845 = vpack.c.bf16 %v2725, %v2717
        %v2846 = vpack.c.bf16 %v2726, %v2718
        %v2847 = vpack.c.bf16 %v2727, %v2719
        %v2848 = vpack.c.bf16 %v2728, %v2720
        %v2849 = vpack.c.bf16 %v2729, %v2721
        %v2850 = vpack.c.bf16 %v2730, %v2722
        %v2851 = vpack.c.bf16 %v2731, %v2723
        %v2852 = vpack.c.bf16 %v2732, %v2724
        %v2853 = vpack.c.bf16 %v2741, %v2733
        %v2854 = vpack.c.bf16 %v2742, %v2734
        %v2855 = vpack.c.bf16 %v2743, %v2735
        %v2856 = vpack.c.bf16 %v2744, %v2736
        %v2857 = vpack.c.bf16 %v2745, %v2737
        %v2858 = vpack.c.bf16 %v2746, %v2738
        %v2859 = vpack.c.bf16 %v2747, %v2739
        %v2860 = vpack.c.bf16 %v2748, %v2740
        %v2861 = vpack.c.bf16 %v2757, %v2749
        %v2862 = vpack.c.bf16 %v2758, %v2750
        %v2863 = vpack.c.bf16 %v2759, %v2751
        %v2864 = vpack.c.bf16 %v2760, %v2752
        %v2865 = vpack.c.bf16 %v2761, %v2753
        %v2866 = vpack.c.bf16 %v2762, %v2754
        %v2867 = vpack.c.bf16 %v2763, %v2755
        %v2868 = vpack.c.bf16 %v2764, %v2756
        %v2869 = vpack.c.bf16 %v2773, %v2765
        %v2870 = vpack.c.bf16 %v2774, %v2766
        %v2871 = vpack.c.bf16 %v2775, %v2767
        %v2872 = vpack.c.bf16 %v2776, %v2768
        %v2873 = vpack.c.bf16 %v2777, %v2769
        %v2874 = vpack.c.bf16 %v2778, %v2770
        %v2875 = vpack.c.bf16 %v2779, %v2771
        %v2876 = vpack.c.bf16 %v2780, %v2772
        %v2877 = vpack.c.bf16 %v2789, %v2781
        %v2878 = vpack.c.bf16 %v2790, %v2782
        %v2879 = vpack.c.bf16 %v2791, %v2783
        %v2880 = vpack.c.bf16 %v2792, %v2784
        %v2881 = vpack.c.bf16 %v2793, %v2785
        %v2882 = vpack.c.bf16 %v2794, %v2786
        %v2883 = vpack.c.bf16 %v2795, %v2787
        %v2884 = vpack.c.bf16 %v2796, %v2788
        %v2885 = vpack.c.bf16 %v2805, %v2797
        %v2886 = vpack.c.bf16 %v2806, %v2798
        %v2887 = vpack.c.bf16 %v2807, %v2799
        %v2888 = vpack.c.bf16 %v2808, %v2800
        %v2889 = vpack.c.bf16 %v2809, %v2801
        %v2890 = vpack.c.bf16 %v2810, %v2802
        %v2891 = vpack.c.bf16 %v2811, %v2803
        %v2892 = vpack.c.bf16 %v2812, %v2804
        %v2893 = vpack.c.bf16 %v2821, %v2813
        %v2894 = vpack.c.bf16 %v2822, %v2814
        %v2895 = vpack.c.bf16 %v2823, %v2815
        %v2896 = vpack.c.bf16 %v2824, %v2816
        %v2897 = vpack.c.bf16 %v2825, %v2817
        %v2898 = vpack.c.bf16 %v2826, %v2818
        %v2899 = vpack.c.bf16 %v2827, %v2819
        %v2900 = vpack.c.bf16 %v2828, %v2820
        %v2901 = vpack.c.bf16 %v2837, %v2829
        %v2902 = vpack.c.bf16 %v2838, %v2830
        %v2903 = vpack.c.bf16 %v2839, %v2831
        %v2904 = vpack.c.bf16 %v2840, %v2832
        %v2905 = vpack.c.bf16 %v2841, %v2833
        %v2906 = vpack.c.bf16 %v2842, %v2834
        %v2907 = vpack.c.bf16 %v2843, %v2835
        %v2908 = vpack.c.bf16 %v2844, %v2836
        %v2909 = vld [vmem:[#allocation14] sm:$0xff]
        %v2910 = vld [vmem:[#allocation14 + $0x8] sm:$0xff]
        %v2911 = vld [vmem:[#allocation14 + $0x10] sm:$0xff]
        %v2912 = vld [vmem:[#allocation14 + $0x18] sm:$0xff]
        %v2913 = vld [vmem:[#allocation14 + $0x20] sm:$0xff]
        %v2914 = vld [vmem:[#allocation14 + $0x28] sm:$0xff]
        %v2915 = vld [vmem:[#allocation14 + $0x30] sm:$0xff]
        %v2916 = vld [vmem:[#allocation14 + $0x38] sm:$0xff]
        %v2917 = vld [vmem:[#allocation14 + $0x40] sm:$0xff]
        %v2918 = vld [vmem:[#allocation14 + $0x48] sm:$0xff]
        %v2919 = vld [vmem:[#allocation14 + $0x50] sm:$0xff]
        %v2920 = vld [vmem:[#allocation14 + $0x58] sm:$0xff]
        %v2921 = vld [vmem:[#allocation14 + $0x60] sm:$0xff]
        %v2922 = vld [vmem:[#allocation14 + $0x68] sm:$0xff]
        %v2923 = vld [vmem:[#allocation14 + $0x70] sm:$0xff]
        %v2924 = vld [vmem:[#allocation14 + $0x78] sm:$0xff]
        %v2925 = vld [vmem:[#allocation14 + $0x80] sm:$0xff]
        %v2926 = vld [vmem:[#allocation14 + $0x88] sm:$0xff]
        %v2927 = vld [vmem:[#allocation14 + $0x90] sm:$0xff]
        %v2928 = vld [vmem:[#allocation14 + $0x98] sm:$0xff]
        %v2929 = vld [vmem:[#allocation14 + $0xa0] sm:$0xff]
        %v2930 = vld [vmem:[#allocation14 + $0xa8] sm:$0xff]
        %v2931 = vld [vmem:[#allocation14 + $0xb0] sm:$0xff]
        %v2932 = vld [vmem:[#allocation14 + $0xb8] sm:$0xff]
        %v2933 = vld [vmem:[#allocation14 + $0xc0] sm:$0xff]
        %v2934 = vld [vmem:[#allocation14 + $0xc8] sm:$0xff]
        %v2935 = vld [vmem:[#allocation14 + $0xd0] sm:$0xff]
        %v2936 = vld [vmem:[#allocation14 + $0xd8] sm:$0xff]
        %v2937 = vld [vmem:[#allocation14 + $0xe0] sm:$0xff]
        %v2938 = vld [vmem:[#allocation14 + $0xe8] sm:$0xff]
        %v2939 = vld [vmem:[#allocation14 + $0xf0] sm:$0xff]
        %v2940 = vld [vmem:[#allocation14 + $0xf8] sm:$0xff]
        %v2941 = vld [vmem:[#allocation14 + $0x100] sm:$0xff]
        %v2942 = vld [vmem:[#allocation14 + $0x108] sm:$0xff]
        %v2943 = vld [vmem:[#allocation14 + $0x110] sm:$0xff]
        %v2944 = vld [vmem:[#allocation14 + $0x118] sm:$0xff]
        %v2945 = vld [vmem:[#allocation14 + $0x120] sm:$0xff]
        %v2946 = vld [vmem:[#allocation14 + $0x128] sm:$0xff]
        %v2947 = vld [vmem:[#allocation14 + $0x130] sm:$0xff]
        %v2948 = vld [vmem:[#allocation14 + $0x138] sm:$0xff]
        %v2949 = vld [vmem:[#allocation14 + $0x140] sm:$0xff]
        %v2950 = vld [vmem:[#allocation14 + $0x148] sm:$0xff]
        %v2951 = vld [vmem:[#allocation14 + $0x150] sm:$0xff]
        %v2952 = vld [vmem:[#allocation14 + $0x158] sm:$0xff]
        %v2953 = vld [vmem:[#allocation14 + $0x160] sm:$0xff]
        %v2954 = vld [vmem:[#allocation14 + $0x168] sm:$0xff]
        %v2955 = vld [vmem:[#allocation14 + $0x170] sm:$0xff]
        %v2956 = vld [vmem:[#allocation14 + $0x178] sm:$0xff]
        %v2957 = vld [vmem:[#allocation14 + $0x180] sm:$0xff]
        %v2958 = vld [vmem:[#allocation14 + $0x188] sm:$0xff]
        %v2959 = vld [vmem:[#allocation14 + $0x190] sm:$0xff]
        %v2960 = vld [vmem:[#allocation14 + $0x198] sm:$0xff]
        %v2961 = vld [vmem:[#allocation14 + $0x1a0] sm:$0xff]
        %v2962 = vld [vmem:[#allocation14 + $0x1a8] sm:$0xff]
        %v2963 = vld [vmem:[#allocation14 + $0x1b0] sm:$0xff]
        %v2964 = vld [vmem:[#allocation14 + $0x1b8] sm:$0xff]
        %v2965 = vld [vmem:[#allocation14 + $0x1c0] sm:$0xff]
        %v2966 = vld [vmem:[#allocation14 + $0x1c8] sm:$0xff]
        %v2967 = vld [vmem:[#allocation14 + $0x1d0] sm:$0xff]
        %v2968 = vld [vmem:[#allocation14 + $0x1d8] sm:$0xff]
        %v2969 = vld [vmem:[#allocation14 + $0x1e0] sm:$0xff]
        %v2970 = vld [vmem:[#allocation14 + $0x1e8] sm:$0xff]
        %v2971 = vld [vmem:[#allocation14 + $0x1f0] sm:$0xff]
        %v2972 = vld [vmem:[#allocation14 + $0x1f8] sm:$0xff]
        %v2973 = vld [vmem:[#allocation14 + $0x200] sm:$0xff]
        %v2974 = vld [vmem:[#allocation14 + $0x208] sm:$0xff]
        %v2975 = vld [vmem:[#allocation14 + $0x210] sm:$0xff]
        %v2976 = vld [vmem:[#allocation14 + $0x218] sm:$0xff]
        %v2977 = vld [vmem:[#allocation14 + $0x220] sm:$0xff]
        %v2978 = vld [vmem:[#allocation14 + $0x228] sm:$0xff]
        %v2979 = vld [vmem:[#allocation14 + $0x230] sm:$0xff]
        %v2980 = vld [vmem:[#allocation14 + $0x238] sm:$0xff]
        %v2981 = vld [vmem:[#allocation14 + $0x240] sm:$0xff]
        %v2982 = vld [vmem:[#allocation14 + $0x248] sm:$0xff]
        %v2983 = vld [vmem:[#allocation14 + $0x250] sm:$0xff]
        %v2984 = vld [vmem:[#allocation14 + $0x258] sm:$0xff]
        %v2985 = vld [vmem:[#allocation14 + $0x260] sm:$0xff]
        %v2986 = vld [vmem:[#allocation14 + $0x268] sm:$0xff]
        %v2987 = vld [vmem:[#allocation14 + $0x270] sm:$0xff]
        %v2988 = vld [vmem:[#allocation14 + $0x278] sm:$0xff]
        %v2989 = vld [vmem:[#allocation14 + $0x280] sm:$0xff]
        %v2990 = vld [vmem:[#allocation14 + $0x288] sm:$0xff]
        %v2991 = vld [vmem:[#allocation14 + $0x290] sm:$0xff]
        %v2992 = vld [vmem:[#allocation14 + $0x298] sm:$0xff]
        %v2993 = vld [vmem:[#allocation14 + $0x2a0] sm:$0xff]
        %v2994 = vld [vmem:[#allocation14 + $0x2a8] sm:$0xff]
        %v2995 = vld [vmem:[#allocation14 + $0x2b0] sm:$0xff]
        %v2996 = vld [vmem:[#allocation14 + $0x2b8] sm:$0xff]
        %v2997 = vld [vmem:[#allocation14 + $0x2c0] sm:$0xff]
        %v2998 = vld [vmem:[#allocation14 + $0x2c8] sm:$0xff]
        %v2999 = vld [vmem:[#allocation14 + $0x2d0] sm:$0xff]
        %v3000 = vld [vmem:[#allocation14 + $0x2d8] sm:$0xff]
        %v3001 = vld [vmem:[#allocation14 + $0x2e0] sm:$0xff]
        %v3002 = vld [vmem:[#allocation14 + $0x2e8] sm:$0xff]
        %v3003 = vld [vmem:[#allocation14 + $0x2f0] sm:$0xff]
        %v3004 = vld [vmem:[#allocation14 + $0x2f8] sm:$0xff]
        %v3005 = vld [vmem:[#allocation14 + $0x300] sm:$0xff]
        %v3006 = vld [vmem:[#allocation14 + $0x308] sm:$0xff]
        %v3007 = vld [vmem:[#allocation14 + $0x310] sm:$0xff]
        %v3008 = vld [vmem:[#allocation14 + $0x318] sm:$0xff]
        %v3009 = vld [vmem:[#allocation14 + $0x320] sm:$0xff]
        %v3010 = vld [vmem:[#allocation14 + $0x328] sm:$0xff]
        %v3011 = vld [vmem:[#allocation14 + $0x330] sm:$0xff]
        %v3012 = vld [vmem:[#allocation14 + $0x338] sm:$0xff]
        %v3013 = vld [vmem:[#allocation14 + $0x340] sm:$0xff]
        %v3014 = vld [vmem:[#allocation14 + $0x348] sm:$0xff]
        %v3015 = vld [vmem:[#allocation14 + $0x350] sm:$0xff]
        %v3016 = vld [vmem:[#allocation14 + $0x358] sm:$0xff]
        %v3017 = vld [vmem:[#allocation14 + $0x360] sm:$0xff]
        %v3018 = vld [vmem:[#allocation14 + $0x368] sm:$0xff]
        %v3019 = vld [vmem:[#allocation14 + $0x370] sm:$0xff]
        %v3020 = vld [vmem:[#allocation14 + $0x378] sm:$0xff]
        %v3021 = vld [vmem:[#allocation14 + $0x380] sm:$0xff]
        %v3022 = vld [vmem:[#allocation14 + $0x388] sm:$0xff]
        %v3023 = vld [vmem:[#allocation14 + $0x390] sm:$0xff]
        %v3024 = vld [vmem:[#allocation14 + $0x398] sm:$0xff]
        %v3025 = vld [vmem:[#allocation14 + $0x3a0] sm:$0xff]
        %v3026 = vld [vmem:[#allocation14 + $0x3a8] sm:$0xff]
        %v3027 = vld [vmem:[#allocation14 + $0x3b0] sm:$0xff]
        %v3028 = vld [vmem:[#allocation14 + $0x3b8] sm:$0xff]
        %v3029 = vld [vmem:[#allocation14 + $0x3c0] sm:$0xff]
        %v3030 = vld [vmem:[#allocation14 + $0x3c8] sm:$0xff]
        %v3031 = vld [vmem:[#allocation14 + $0x3d0] sm:$0xff]
        %v3032 = vld [vmem:[#allocation14 + $0x3d8] sm:$0xff]
        %v3033 = vld [vmem:[#allocation14 + $0x3e0] sm:$0xff]
        %v3034 = vld [vmem:[#allocation14 + $0x3e8] sm:$0xff]
        %v3035 = vld [vmem:[#allocation14 + $0x3f0] sm:$0xff]
        %v3036 = vld [vmem:[#allocation14 + $0x3f8] sm:$0xff]
        %v3037 = vld [vmem:[#allocation14 + $0x400] sm:$0xff]
        %v3038 = vld [vmem:[#allocation14 + $0x408] sm:$0xff]
        %v3039 = vld [vmem:[#allocation14 + $0x410] sm:$0xff]
        %v3040 = vld [vmem:[#allocation14 + $0x418] sm:$0xff]
        %v3041 = vld [vmem:[#allocation14 + $0x420] sm:$0xff]
        %v3042 = vld [vmem:[#allocation14 + $0x428] sm:$0xff]
        %v3043 = vld [vmem:[#allocation14 + $0x430] sm:$0xff]
        %v3044 = vld [vmem:[#allocation14 + $0x438] sm:$0xff]
        %v3045 = vld [vmem:[#allocation14 + $0x440] sm:$0xff]
        %v3046 = vld [vmem:[#allocation14 + $0x448] sm:$0xff]
        %v3047 = vld [vmem:[#allocation14 + $0x450] sm:$0xff]
        %v3048 = vld [vmem:[#allocation14 + $0x458] sm:$0xff]
        %v3049 = vld [vmem:[#allocation14 + $0x460] sm:$0xff]
        %v3050 = vld [vmem:[#allocation14 + $0x468] sm:$0xff]
        %v3051 = vld [vmem:[#allocation14 + $0x470] sm:$0xff]
        %v3052 = vld [vmem:[#allocation14 + $0x478] sm:$0xff]
        %v3053 = vld [vmem:[#allocation14 + $0x480] sm:$0xff]
        %v3054 = vld [vmem:[#allocation14 + $0x488] sm:$0xff]
        %v3055 = vld [vmem:[#allocation14 + $0x490] sm:$0xff]
        %v3056 = vld [vmem:[#allocation14 + $0x498] sm:$0xff]
        %v3057 = vld [vmem:[#allocation14 + $0x4a0] sm:$0xff]
        %v3058 = vld [vmem:[#allocation14 + $0x4a8] sm:$0xff]
        %v3059 = vld [vmem:[#allocation14 + $0x4b0] sm:$0xff]
        %v3060 = vld [vmem:[#allocation14 + $0x4b8] sm:$0xff]
        %v3061 = vld [vmem:[#allocation14 + $0x4c0] sm:$0xff]
        %v3062 = vld [vmem:[#allocation14 + $0x4c8] sm:$0xff]
        %v3063 = vld [vmem:[#allocation14 + $0x4d0] sm:$0xff]
        %v3064 = vld [vmem:[#allocation14 + $0x4d8] sm:$0xff]
        %v3065 = vld [vmem:[#allocation14 + $0x4e0] sm:$0xff]
        %v3066 = vld [vmem:[#allocation14 + $0x4e8] sm:$0xff]
        %v3067 = vld [vmem:[#allocation14 + $0x4f0] sm:$0xff]
        %v3068 = vld [vmem:[#allocation14 + $0x4f8] sm:$0xff]
        %v3069 = vld [vmem:[#allocation14 + $0x500] sm:$0xff]
        %v3070 = vld [vmem:[#allocation14 + $0x508] sm:$0xff]
        %v3071 = vld [vmem:[#allocation14 + $0x510] sm:$0xff]
        %v3072 = vld [vmem:[#allocation14 + $0x518] sm:$0xff]
        %v3073 = vld [vmem:[#allocation14 + $0x520] sm:$0xff]
        %v3074 = vld [vmem:[#allocation14 + $0x528] sm:$0xff]
        %v3075 = vld [vmem:[#allocation14 + $0x530] sm:$0xff]
        %v3076 = vld [vmem:[#allocation14 + $0x538] sm:$0xff]
        %v3077 = vld [vmem:[#allocation14 + $0x540] sm:$0xff]
        %v3078 = vld [vmem:[#allocation14 + $0x548] sm:$0xff]
        %v3079 = vld [vmem:[#allocation14 + $0x550] sm:$0xff]
        %v3080 = vld [vmem:[#allocation14 + $0x558] sm:$0xff]
        %v3081 = vld [vmem:[#allocation14 + $0x560] sm:$0xff]
        %v3082 = vld [vmem:[#allocation14 + $0x568] sm:$0xff]
        %v3083 = vld [vmem:[#allocation14 + $0x570] sm:$0xff]
        %v3084 = vld [vmem:[#allocation14 + $0x578] sm:$0xff]
        %v3085 = vld [vmem:[#allocation14 + $0x580] sm:$0xff]
        %v3086 = vld [vmem:[#allocation14 + $0x588] sm:$0xff]
        %v3087 = vld [vmem:[#allocation14 + $0x590] sm:$0xff]
        %v3088 = vld [vmem:[#allocation14 + $0x598] sm:$0xff]
        %v3089 = vld [vmem:[#allocation14 + $0x5a0] sm:$0xff]
        %v3090 = vld [vmem:[#allocation14 + $0x5a8] sm:$0xff]
        %v3091 = vld [vmem:[#allocation14 + $0x5b0] sm:$0xff]
        %v3092 = vld [vmem:[#allocation14 + $0x5b8] sm:$0xff]
        %v3093 = vld [vmem:[#allocation14 + $0x5c0] sm:$0xff]
        %v3094 = vld [vmem:[#allocation14 + $0x5c8] sm:$0xff]
        %v3095 = vld [vmem:[#allocation14 + $0x5d0] sm:$0xff]
        %v3096 = vld [vmem:[#allocation14 + $0x5d8] sm:$0xff]
        %v3097 = vld [vmem:[#allocation14 + $0x5e0] sm:$0xff]
        %v3098 = vld [vmem:[#allocation14 + $0x5e8] sm:$0xff]
        %v3099 = vld [vmem:[#allocation14 + $0x5f0] sm:$0xff]
        %v3100 = vld [vmem:[#allocation14 + $0x5f8] sm:$0xff]
        %v3101 = vld [vmem:[#allocation14 + $0x600] sm:$0xff]
        %v3102 = vld [vmem:[#allocation14 + $0x608] sm:$0xff]
        %v3103 = vld [vmem:[#allocation14 + $0x610] sm:$0xff]
        %v3104 = vld [vmem:[#allocation14 + $0x618] sm:$0xff]
        %v3105 = vld [vmem:[#allocation14 + $0x620] sm:$0xff]
        %v3106 = vld [vmem:[#allocation14 + $0x628] sm:$0xff]
        %v3107 = vld [vmem:[#allocation14 + $0x630] sm:$0xff]
        %v3108 = vld [vmem:[#allocation14 + $0x638] sm:$0xff]
        %v3109 = vld [vmem:[#allocation14 + $0x640] sm:$0xff]
        %v3110 = vld [vmem:[#allocation14 + $0x648] sm:$0xff]
        %v3111 = vld [vmem:[#allocation14 + $0x650] sm:$0xff]
        %v3112 = vld [vmem:[#allocation14 + $0x658] sm:$0xff]
        %v3113 = vld [vmem:[#allocation14 + $0x660] sm:$0xff]
        %v3114 = vld [vmem:[#allocation14 + $0x668] sm:$0xff]
        %v3115 = vld [vmem:[#allocation14 + $0x670] sm:$0xff]
        %v3116 = vld [vmem:[#allocation14 + $0x678] sm:$0xff]
        %v3117 = vld [vmem:[#allocation14 + $0x680] sm:$0xff]
        %v3118 = vld [vmem:[#allocation14 + $0x688] sm:$0xff]
        %v3119 = vld [vmem:[#allocation14 + $0x690] sm:$0xff]
        %v3120 = vld [vmem:[#allocation14 + $0x698] sm:$0xff]
        %v3121 = vld [vmem:[#allocation14 + $0x6a0] sm:$0xff]
        %v3122 = vld [vmem:[#allocation14 + $0x6a8] sm:$0xff]
        %v3123 = vld [vmem:[#allocation14 + $0x6b0] sm:$0xff]
        %v3124 = vld [vmem:[#allocation14 + $0x6b8] sm:$0xff]
        %v3125 = vld [vmem:[#allocation14 + $0x6c0] sm:$0xff]
        %v3126 = vld [vmem:[#allocation14 + $0x6c8] sm:$0xff]
        %v3127 = vld [vmem:[#allocation14 + $0x6d0] sm:$0xff]
        %v3128 = vld [vmem:[#allocation14 + $0x6d8] sm:$0xff]
        %v3129 = vld [vmem:[#allocation14 + $0x6e0] sm:$0xff]
        %v3130 = vld [vmem:[#allocation14 + $0x6e8] sm:$0xff]
        %v3131 = vld [vmem:[#allocation14 + $0x6f0] sm:$0xff]
        %v3132 = vld [vmem:[#allocation14 + $0x6f8] sm:$0xff]
        %v3133 = vld [vmem:[#allocation14 + $0x700] sm:$0xff]
        %v3134 = vld [vmem:[#allocation14 + $0x708] sm:$0xff]
        %v3135 = vld [vmem:[#allocation14 + $0x710] sm:$0xff]
        %v3136 = vld [vmem:[#allocation14 + $0x718] sm:$0xff]
        %v3137 = vld [vmem:[#allocation14 + $0x720] sm:$0xff]
        %v3138 = vld [vmem:[#allocation14 + $0x728] sm:$0xff]
        %v3139 = vld [vmem:[#allocation14 + $0x730] sm:$0xff]
        %v3140 = vld [vmem:[#allocation14 + $0x738] sm:$0xff]
        %v3141 = vld [vmem:[#allocation14 + $0x740] sm:$0xff]
        %v3142 = vld [vmem:[#allocation14 + $0x748] sm:$0xff]
        %v3143 = vld [vmem:[#allocation14 + $0x750] sm:$0xff]
        %v3144 = vld [vmem:[#allocation14 + $0x758] sm:$0xff]
        %v3145 = vld [vmem:[#allocation14 + $0x760] sm:$0xff]
        %v3146 = vld [vmem:[#allocation14 + $0x768] sm:$0xff]
        %v3147 = vld [vmem:[#allocation14 + $0x770] sm:$0xff]
        %v3148 = vld [vmem:[#allocation14 + $0x778] sm:$0xff]
        %v3149 = vld [vmem:[#allocation14 + $0x780] sm:$0xff]
        %v3150 = vld [vmem:[#allocation14 + $0x788] sm:$0xff]
        %v3151 = vld [vmem:[#allocation14 + $0x790] sm:$0xff]
        %v3152 = vld [vmem:[#allocation14 + $0x798] sm:$0xff]
        %v3153 = vld [vmem:[#allocation14 + $0x7a0] sm:$0xff]
        %v3154 = vld [vmem:[#allocation14 + $0x7a8] sm:$0xff]
        %v3155 = vld [vmem:[#allocation14 + $0x7b0] sm:$0xff]
        %v3156 = vld [vmem:[#allocation14 + $0x7b8] sm:$0xff]
        %v3157 = vld [vmem:[#allocation14 + $0x7c0] sm:$0xff]
        %v3158 = vld [vmem:[#allocation14 + $0x7c8] sm:$0xff]
        %v3159 = vld [vmem:[#allocation14 + $0x7d0] sm:$0xff]
        %v3160 = vld [vmem:[#allocation14 + $0x7d8] sm:$0xff]
        %v3161 = vld [vmem:[#allocation14 + $0x7e0] sm:$0xff]
        %v3162 = vld [vmem:[#allocation14 + $0x7e8] sm:$0xff]
        %v3163 = vld [vmem:[#allocation14 + $0x7f0] sm:$0xff]
        %v3164 = vld [vmem:[#allocation14 + $0x7f8] sm:$0xff]
        %v3165 = vld [vmem:[#allocation14 + $0x800] sm:$0xff]
        %v3166 = vld [vmem:[#allocation14 + $0x808] sm:$0xff]
        %v3167 = vld [vmem:[#allocation14 + $0x810] sm:$0xff]
        %v3168 = vld [vmem:[#allocation14 + $0x818] sm:$0xff]
        %v3169 = vld [vmem:[#allocation14 + $0x820] sm:$0xff]
        %v3170 = vld [vmem:[#allocation14 + $0x828] sm:$0xff]
        %v3171 = vld [vmem:[#allocation14 + $0x830] sm:$0xff]
        %v3172 = vld [vmem:[#allocation14 + $0x838] sm:$0xff]
        %v3173 = vld [vmem:[#allocation14 + $0x840] sm:$0xff]
        %v3174 = vld [vmem:[#allocation14 + $0x848] sm:$0xff]
        %v3175 = vld [vmem:[#allocation14 + $0x850] sm:$0xff]
        %v3176 = vld [vmem:[#allocation14 + $0x858] sm:$0xff]
        %v3177 = vld [vmem:[#allocation14 + $0x860] sm:$0xff]
        %v3178 = vld [vmem:[#allocation14 + $0x868] sm:$0xff]
        %v3179 = vld [vmem:[#allocation14 + $0x870] sm:$0xff]
        %v3180 = vld [vmem:[#allocation14 + $0x878] sm:$0xff]
        %v3181 = vld [vmem:[#allocation14 + $0x880] sm:$0xff]
        %v3182 = vld [vmem:[#allocation14 + $0x888] sm:$0xff]
        %v3183 = vld [vmem:[#allocation14 + $0x890] sm:$0xff]
        %v3184 = vld [vmem:[#allocation14 + $0x898] sm:$0xff]
        %v3185 = vld [vmem:[#allocation14 + $0x8a0] sm:$0xff]
        %v3186 = vld [vmem:[#allocation14 + $0x8a8] sm:$0xff]
        %v3187 = vld [vmem:[#allocation14 + $0x8b0] sm:$0xff]
        %v3188 = vld [vmem:[#allocation14 + $0x8b8] sm:$0xff]
        %v3189 = vld [vmem:[#allocation14 + $0x8c0] sm:$0xff]
        %v3190 = vld [vmem:[#allocation14 + $0x8c8] sm:$0xff]
        %v3191 = vld [vmem:[#allocation14 + $0x8d0] sm:$0xff]
        %v3192 = vld [vmem:[#allocation14 + $0x8d8] sm:$0xff]
        %v3193 = vld [vmem:[#allocation14 + $0x8e0] sm:$0xff]
        %v3194 = vld [vmem:[#allocation14 + $0x8e8] sm:$0xff]
        %v3195 = vld [vmem:[#allocation14 + $0x8f0] sm:$0xff]
        %v3196 = vld [vmem:[#allocation14 + $0x8f8] sm:$0xff]
        %v3197 = vld [vmem:[#allocation14 + $0x900] sm:$0xff]
        %v3198 = vld [vmem:[#allocation14 + $0x908] sm:$0xff]
        %v3199 = vld [vmem:[#allocation14 + $0x910] sm:$0xff]
        %v3200 = vld [vmem:[#allocation14 + $0x918] sm:$0xff]
        %v3201 = vld [vmem:[#allocation14 + $0x920] sm:$0xff]
        %v3202 = vld [vmem:[#allocation14 + $0x928] sm:$0xff]
        %v3203 = vld [vmem:[#allocation14 + $0x930] sm:$0xff]
        %v3204 = vld [vmem:[#allocation14 + $0x938] sm:$0xff]
        %v3205 = vld [vmem:[#allocation14 + $0x940] sm:$0xff]
        %v3206 = vld [vmem:[#allocation14 + $0x948] sm:$0xff]
        %v3207 = vld [vmem:[#allocation14 + $0x950] sm:$0xff]
        %v3208 = vld [vmem:[#allocation14 + $0x958] sm:$0xff]
        %v3209 = vld [vmem:[#allocation14 + $0x960] sm:$0xff]
        %v3210 = vld [vmem:[#allocation14 + $0x968] sm:$0xff]
        %v3211 = vld [vmem:[#allocation14 + $0x970] sm:$0xff]
        %v3212 = vld [vmem:[#allocation14 + $0x978] sm:$0xff]
        %v3213 = vld [vmem:[#allocation14 + $0x980] sm:$0xff]
        %v3214 = vld [vmem:[#allocation14 + $0x988] sm:$0xff]
        %v3215 = vld [vmem:[#allocation14 + $0x990] sm:$0xff]
        %v3216 = vld [vmem:[#allocation14 + $0x998] sm:$0xff]
        %v3217 = vld [vmem:[#allocation14 + $0x9a0] sm:$0xff]
        %v3218 = vld [vmem:[#allocation14 + $0x9a8] sm:$0xff]
        %v3219 = vld [vmem:[#allocation14 + $0x9b0] sm:$0xff]
        %v3220 = vld [vmem:[#allocation14 + $0x9b8] sm:$0xff]
        %v3221 = vld [vmem:[#allocation14 + $0x9c0] sm:$0xff]
        %v3222 = vld [vmem:[#allocation14 + $0x9c8] sm:$0xff]
        %v3223 = vld [vmem:[#allocation14 + $0x9d0] sm:$0xff]
        %v3224 = vld [vmem:[#allocation14 + $0x9d8] sm:$0xff]
        %v3225 = vld [vmem:[#allocation14 + $0x9e0] sm:$0xff]
        %v3226 = vld [vmem:[#allocation14 + $0x9e8] sm:$0xff]
        %v3227 = vld [vmem:[#allocation14 + $0x9f0] sm:$0xff]
        %v3228 = vld [vmem:[#allocation14 + $0x9f8] sm:$0xff]
        %v3229 = vld [vmem:[#allocation14 + $0xa00] sm:$0xff]
        %v3230 = vld [vmem:[#allocation14 + $0xa08] sm:$0xff]
        %v3231 = vld [vmem:[#allocation14 + $0xa10] sm:$0xff]
        %v3232 = vld [vmem:[#allocation14 + $0xa18] sm:$0xff]
        %v3233 = vld [vmem:[#allocation14 + $0xa20] sm:$0xff]
        %v3234 = vld [vmem:[#allocation14 + $0xa28] sm:$0xff]
        %v3235 = vld [vmem:[#allocation14 + $0xa30] sm:$0xff]
        %v3236 = vld [vmem:[#allocation14 + $0xa38] sm:$0xff]
        %v3237 = vld [vmem:[#allocation14 + $0xa40] sm:$0xff]
        %v3238 = vld [vmem:[#allocation14 + $0xa48] sm:$0xff]
        %v3239 = vld [vmem:[#allocation14 + $0xa50] sm:$0xff]
        %v3240 = vld [vmem:[#allocation14 + $0xa58] sm:$0xff]
        %v3241 = vld [vmem:[#allocation14 + $0xa60] sm:$0xff]
        %v3242 = vld [vmem:[#allocation14 + $0xa68] sm:$0xff]
        %v3243 = vld [vmem:[#allocation14 + $0xa70] sm:$0xff]
        %v3244 = vld [vmem:[#allocation14 + $0xa78] sm:$0xff]
        %v3245 = vld [vmem:[#allocation14 + $0xa80] sm:$0xff]
        %v3246 = vld [vmem:[#allocation14 + $0xa88] sm:$0xff]
        %v3247 = vld [vmem:[#allocation14 + $0xa90] sm:$0xff]
        %v3248 = vld [vmem:[#allocation14 + $0xa98] sm:$0xff]
        %v3249 = vld [vmem:[#allocation14 + $0xaa0] sm:$0xff]
        %v3250 = vld [vmem:[#allocation14 + $0xaa8] sm:$0xff]
        %v3251 = vld [vmem:[#allocation14 + $0xab0] sm:$0xff]
        %v3252 = vld [vmem:[#allocation14 + $0xab8] sm:$0xff]
        %v3253 = vld [vmem:[#allocation14 + $0xac0] sm:$0xff]
        %v3254 = vld [vmem:[#allocation14 + $0xac8] sm:$0xff]
        %v3255 = vld [vmem:[#allocation14 + $0xad0] sm:$0xff]
        %v3256 = vld [vmem:[#allocation14 + $0xad8] sm:$0xff]
        %v3257 = vld [vmem:[#allocation14 + $0xae0] sm:$0xff]
        %v3258 = vld [vmem:[#allocation14 + $0xae8] sm:$0xff]
        %v3259 = vld [vmem:[#allocation14 + $0xaf0] sm:$0xff]
        %v3260 = vld [vmem:[#allocation14 + $0xaf8] sm:$0xff]
        %v3261 = vld [vmem:[#allocation14 + $0xb00] sm:$0xff]
        %v3262 = vld [vmem:[#allocation14 + $0xb08] sm:$0xff]
        %v3263 = vld [vmem:[#allocation14 + $0xb10] sm:$0xff]
        %v3264 = vld [vmem:[#allocation14 + $0xb18] sm:$0xff]
        %v3265 = vld [vmem:[#allocation14 + $0xb20] sm:$0xff]
        %v3266 = vld [vmem:[#allocation14 + $0xb28] sm:$0xff]
        %v3267 = vld [vmem:[#allocation14 + $0xb30] sm:$0xff]
        %v3268 = vld [vmem:[#allocation14 + $0xb38] sm:$0xff]
        %v3269 = vld [vmem:[#allocation14 + $0xb40] sm:$0xff]
        %v3270 = vld [vmem:[#allocation14 + $0xb48] sm:$0xff]
        %v3271 = vld [vmem:[#allocation14 + $0xb50] sm:$0xff]
        %v3272 = vld [vmem:[#allocation14 + $0xb58] sm:$0xff]
        %v3273 = vld [vmem:[#allocation14 + $0xb60] sm:$0xff]
        %v3274 = vld [vmem:[#allocation14 + $0xb68] sm:$0xff]
        %v3275 = vld [vmem:[#allocation14 + $0xb70] sm:$0xff]
        %v3276 = vld [vmem:[#allocation14 + $0xb78] sm:$0xff]
        %v3277 = vld [vmem:[#allocation14 + $0xb80] sm:$0xff]
        %v3278 = vld [vmem:[#allocation14 + $0xb88] sm:$0xff]
        %v3279 = vld [vmem:[#allocation14 + $0xb90] sm:$0xff]
        %v3280 = vld [vmem:[#allocation14 + $0xb98] sm:$0xff]
        %v3281 = vld [vmem:[#allocation14 + $0xba0] sm:$0xff]
        %v3282 = vld [vmem:[#allocation14 + $0xba8] sm:$0xff]
        %v3283 = vld [vmem:[#allocation14 + $0xbb0] sm:$0xff]
        %v3284 = vld [vmem:[#allocation14 + $0xbb8] sm:$0xff]
        %v3285 = vld [vmem:[#allocation14 + $0xbc0] sm:$0xff]
        %v3286 = vld [vmem:[#allocation14 + $0xbc8] sm:$0xff]
        %v3287 = vld [vmem:[#allocation14 + $0xbd0] sm:$0xff]
        %v3288 = vld [vmem:[#allocation14 + $0xbd8] sm:$0xff]
        %v3289 = vld [vmem:[#allocation14 + $0xbe0] sm:$0xff]
        %v3290 = vld [vmem:[#allocation14 + $0xbe8] sm:$0xff]
        %v3291 = vld [vmem:[#allocation14 + $0xbf0] sm:$0xff]
        %v3292 = vld [vmem:[#allocation14 + $0xbf8] sm:$0xff]
        %v3293 = vld [vmem:[#allocation14 + $0xc00] sm:$0xff]
        %v3294 = vld [vmem:[#allocation14 + $0xc08] sm:$0xff]
        %v3295 = vld [vmem:[#allocation14 + $0xc10] sm:$0xff]
        %v3296 = vld [vmem:[#allocation14 + $0xc18] sm:$0xff]
        %v3297 = vld [vmem:[#allocation14 + $0xc20] sm:$0xff]
        %v3298 = vld [vmem:[#allocation14 + $0xc28] sm:$0xff]
        %v3299 = vld [vmem:[#allocation14 + $0xc30] sm:$0xff]
        %v3300 = vld [vmem:[#allocation14 + $0xc38] sm:$0xff]
        %v3301 = vld [vmem:[#allocation14 + $0xc40] sm:$0xff]
        %v3302 = vld [vmem:[#allocation14 + $0xc48] sm:$0xff]
        %v3303 = vld [vmem:[#allocation14 + $0xc50] sm:$0xff]
        %v3304 = vld [vmem:[#allocation14 + $0xc58] sm:$0xff]
        %v3305 = vld [vmem:[#allocation14 + $0xc60] sm:$0xff]
        %v3306 = vld [vmem:[#allocation14 + $0xc68] sm:$0xff]
        %v3307 = vld [vmem:[#allocation14 + $0xc70] sm:$0xff]
        %v3308 = vld [vmem:[#allocation14 + $0xc78] sm:$0xff]
        %v3309 = vld [vmem:[#allocation14 + $0xc80] sm:$0xff]
        %v3310 = vld [vmem:[#allocation14 + $0xc88] sm:$0xff]
        %v3311 = vld [vmem:[#allocation14 + $0xc90] sm:$0xff]
        %v3312 = vld [vmem:[#allocation14 + $0xc98] sm:$0xff]
        %v3313 = vld [vmem:[#allocation14 + $0xca0] sm:$0xff]
        %v3314 = vld [vmem:[#allocation14 + $0xca8] sm:$0xff]
        %v3315 = vld [vmem:[#allocation14 + $0xcb0] sm:$0xff]
        %v3316 = vld [vmem:[#allocation14 + $0xcb8] sm:$0xff]
        %v3317 = vld [vmem:[#allocation14 + $0xcc0] sm:$0xff]
        %v3318 = vld [vmem:[#allocation14 + $0xcc8] sm:$0xff]
        %v3319 = vld [vmem:[#allocation14 + $0xcd0] sm:$0xff]
        %v3320 = vld [vmem:[#allocation14 + $0xcd8] sm:$0xff]
        %v3321 = vld [vmem:[#allocation14 + $0xce0] sm:$0xff]
        %v3322 = vld [vmem:[#allocation14 + $0xce8] sm:$0xff]
        %v3323 = vld [vmem:[#allocation14 + $0xcf0] sm:$0xff]
        %v3324 = vld [vmem:[#allocation14 + $0xcf8] sm:$0xff]
        %v3325 = vld [vmem:[#allocation14 + $0xd00] sm:$0xff]
        %v3326 = vld [vmem:[#allocation14 + $0xd08] sm:$0xff]
        %v3327 = vld [vmem:[#allocation14 + $0xd10] sm:$0xff]
        %v3328 = vld [vmem:[#allocation14 + $0xd18] sm:$0xff]
        %v3329 = vld [vmem:[#allocation14 + $0xd20] sm:$0xff]
        %v3330 = vld [vmem:[#allocation14 + $0xd28] sm:$0xff]
        %v3331 = vld [vmem:[#allocation14 + $0xd30] sm:$0xff]
        %v3332 = vld [vmem:[#allocation14 + $0xd38] sm:$0xff]
        %v3333 = vld [vmem:[#allocation14 + $0xd40] sm:$0xff]
        %v3334 = vld [vmem:[#allocation14 + $0xd48] sm:$0xff]
        %v3335 = vld [vmem:[#allocation14 + $0xd50] sm:$0xff]
        %v3336 = vld [vmem:[#allocation14 + $0xd58] sm:$0xff]
        %v3337 = vld [vmem:[#allocation14 + $0xd60] sm:$0xff]
        %v3338 = vld [vmem:[#allocation14 + $0xd68] sm:$0xff]
        %v3339 = vld [vmem:[#allocation14 + $0xd70] sm:$0xff]
        %v3340 = vld [vmem:[#allocation14 + $0xd78] sm:$0xff]
        %v3341 = vld [vmem:[#allocation14 + $0xd80] sm:$0xff]
        %v3342 = vld [vmem:[#allocation14 + $0xd88] sm:$0xff]
        %v3343 = vld [vmem:[#allocation14 + $0xd90] sm:$0xff]
        %v3344 = vld [vmem:[#allocation14 + $0xd98] sm:$0xff]
        %v3345 = vld [vmem:[#allocation14 + $0xda0] sm:$0xff]
        %v3346 = vld [vmem:[#allocation14 + $0xda8] sm:$0xff]
        %v3347 = vld [vmem:[#allocation14 + $0xdb0] sm:$0xff]
        %v3348 = vld [vmem:[#allocation14 + $0xdb8] sm:$0xff]
        %v3349 = vld [vmem:[#allocation14 + $0xdc0] sm:$0xff]
        %v3350 = vld [vmem:[#allocation14 + $0xdc8] sm:$0xff]
        %v3351 = vld [vmem:[#allocation14 + $0xdd0] sm:$0xff]
        %v3352 = vld [vmem:[#allocation14 + $0xdd8] sm:$0xff]
        %v3353 = vld [vmem:[#allocation14 + $0xde0] sm:$0xff]
        %v3354 = vld [vmem:[#allocation14 + $0xde8] sm:$0xff]
        %v3355 = vld [vmem:[#allocation14 + $0xdf0] sm:$0xff]
        %v3356 = vld [vmem:[#allocation14 + $0xdf8] sm:$0xff]
        %v3357 = vld [vmem:[#allocation14 + $0xe00] sm:$0xff]
        %v3358 = vld [vmem:[#allocation14 + $0xe08] sm:$0xff]
        %v3359 = vld [vmem:[#allocation14 + $0xe10] sm:$0xff]
        %v3360 = vld [vmem:[#allocation14 + $0xe18] sm:$0xff]
        %v3361 = vld [vmem:[#allocation14 + $0xe20] sm:$0xff]
        %v3362 = vld [vmem:[#allocation14 + $0xe28] sm:$0xff]
        %v3363 = vld [vmem:[#allocation14 + $0xe30] sm:$0xff]
        %v3364 = vld [vmem:[#allocation14 + $0xe38] sm:$0xff]
        %v3365 = vld [vmem:[#allocation14 + $0xe40] sm:$0xff]
        %v3366 = vld [vmem:[#allocation14 + $0xe48] sm:$0xff]
        %v3367 = vld [vmem:[#allocation14 + $0xe50] sm:$0xff]
        %v3368 = vld [vmem:[#allocation14 + $0xe58] sm:$0xff]
        %v3369 = vld [vmem:[#allocation14 + $0xe60] sm:$0xff]
        %v3370 = vld [vmem:[#allocation14 + $0xe68] sm:$0xff]
        %v3371 = vld [vmem:[#allocation14 + $0xe70] sm:$0xff]
        %v3372 = vld [vmem:[#allocation14 + $0xe78] sm:$0xff]
        %v3373 = vld [vmem:[#allocation14 + $0xe80] sm:$0xff]
        %v3374 = vld [vmem:[#allocation14 + $0xe88] sm:$0xff]
        %v3375 = vld [vmem:[#allocation14 + $0xe90] sm:$0xff]
        %v3376 = vld [vmem:[#allocation14 + $0xe98] sm:$0xff]
        %v3377 = vld [vmem:[#allocation14 + $0xea0] sm:$0xff]
        %v3378 = vld [vmem:[#allocation14 + $0xea8] sm:$0xff]
        %v3379 = vld [vmem:[#allocation14 + $0xeb0] sm:$0xff]
        %v3380 = vld [vmem:[#allocation14 + $0xeb8] sm:$0xff]
        %v3381 = vld [vmem:[#allocation14 + $0xec0] sm:$0xff]
        %v3382 = vld [vmem:[#allocation14 + $0xec8] sm:$0xff]
        %v3383 = vld [vmem:[#allocation14 + $0xed0] sm:$0xff]
        %v3384 = vld [vmem:[#allocation14 + $0xed8] sm:$0xff]
        %v3385 = vld [vmem:[#allocation14 + $0xee0] sm:$0xff]
        %v3386 = vld [vmem:[#allocation14 + $0xee8] sm:$0xff]
        %v3387 = vld [vmem:[#allocation14 + $0xef0] sm:$0xff]
        %v3388 = vld [vmem:[#allocation14 + $0xef8] sm:$0xff]
        %v3389 = vld [vmem:[#allocation14 + $0xf00] sm:$0xff]
        %v3390 = vld [vmem:[#allocation14 + $0xf08] sm:$0xff]
        %v3391 = vld [vmem:[#allocation14 + $0xf10] sm:$0xff]
        %v3392 = vld [vmem:[#allocation14 + $0xf18] sm:$0xff]
        %v3393 = vld [vmem:[#allocation14 + $0xf20] sm:$0xff]
        %v3394 = vld [vmem:[#allocation14 + $0xf28] sm:$0xff]
        %v3395 = vld [vmem:[#allocation14 + $0xf30] sm:$0xff]
        %v3396 = vld [vmem:[#allocation14 + $0xf38] sm:$0xff]
        %v3397 = vld [vmem:[#allocation14 + $0xf40] sm:$0xff]
        %v3398 = vld [vmem:[#allocation14 + $0xf48] sm:$0xff]
        %v3399 = vld [vmem:[#allocation14 + $0xf50] sm:$0xff]
        %v3400 = vld [vmem:[#allocation14 + $0xf58] sm:$0xff]
        %v3401 = vld [vmem:[#allocation14 + $0xf60] sm:$0xff]
        %v3402 = vld [vmem:[#allocation14 + $0xf68] sm:$0xff]
        %v3403 = vld [vmem:[#allocation14 + $0xf70] sm:$0xff]
        %v3404 = vld [vmem:[#allocation14 + $0xf78] sm:$0xff]
        %v3405 = vld [vmem:[#allocation14 + $0xf80] sm:$0xff]
        %v3406 = vld [vmem:[#allocation14 + $0xf88] sm:$0xff]
        %v3407 = vld [vmem:[#allocation14 + $0xf90] sm:$0xff]
        %v3408 = vld [vmem:[#allocation14 + $0xf98] sm:$0xff]
        %v3409 = vld [vmem:[#allocation14 + $0xfa0] sm:$0xff]
        %v3410 = vld [vmem:[#allocation14 + $0xfa8] sm:$0xff]
        %v3411 = vld [vmem:[#allocation14 + $0xfb0] sm:$0xff]
        %v3412 = vld [vmem:[#allocation14 + $0xfb8] sm:$0xff]
        %v3413 = vld [vmem:[#allocation14 + $0xfc0] sm:$0xff]
        %v3414 = vld [vmem:[#allocation14 + $0xfc8] sm:$0xff]
        %v3415 = vld [vmem:[#allocation14 + $0xfd0] sm:$0xff]
        %v3416 = vld [vmem:[#allocation14 + $0xfd8] sm:$0xff]
        %v3417 = vld [vmem:[#allocation14 + $0xfe0] sm:$0xff]
        %v3418 = vld [vmem:[#allocation14 + $0xfe8] sm:$0xff]
        %v3419 = vld [vmem:[#allocation14 + $0xff0] sm:$0xff]
        %v3420 = vld [vmem:[#allocation14 + $0xff8] sm:$0xff]
        %v3421 = vld [vmem:[#allocation16] sm:$0xff]
        %v3423 = vperm.slane %v3421, 0
        %v3424 = vperm.slane %v3421, 1
        %v3425 = vperm.slane %v3421, 2
        %v3426 = vperm.slane %v3421, 3
        %v3427 = vperm.slane %v3421, 4
        %v3428 = vperm.slane %v3421, 5
        %v3429 = vperm.slane %v3421, 6
        %v3430 = vperm.slane %v3421, 7
        %v3951 = vunpack.c.l.b16 %v2909
        %v3952 = vunpack.c.h.b16 %v2909
        %v3953 = vunpack.c.l.b16 %v2910
        %v3954 = vunpack.c.h.b16 %v2910
        %v3955 = vunpack.c.l.b16 %v2911
        %v3956 = vunpack.c.h.b16 %v2911
        %v3957 = vunpack.c.l.b16 %v2912
        %v3958 = vunpack.c.h.b16 %v2912
        %v3959 = vunpack.c.l.b16 %v2913
        %v3960 = vunpack.c.h.b16 %v2913
        %v3961 = vunpack.c.l.b16 %v2914
        %v3962 = vunpack.c.h.b16 %v2914
        %v3963 = vunpack.c.l.b16 %v2915
        %v3964 = vunpack.c.h.b16 %v2915
        %v3965 = vunpack.c.l.b16 %v2916
        %v3966 = vunpack.c.h.b16 %v2916
        %v3967 = vunpack.c.l.b16 %v2917
        %v3968 = vunpack.c.h.b16 %v2917
        %v3969 = vunpack.c.l.b16 %v2918
        %v3970 = vunpack.c.h.b16 %v2918
        %v3971 = vunpack.c.l.b16 %v2919
        %v3972 = vunpack.c.h.b16 %v2919
        %v3973 = vunpack.c.l.b16 %v2920
        %v3974 = vunpack.c.h.b16 %v2920
        %v3975 = vunpack.c.l.b16 %v2921
        %v3976 = vunpack.c.h.b16 %v2921
        %v3977 = vunpack.c.l.b16 %v2922
        %v3978 = vunpack.c.h.b16 %v2922
        %v3979 = vunpack.c.l.b16 %v2923
        %v3980 = vunpack.c.h.b16 %v2923
        %v3981 = vunpack.c.l.b16 %v2924
        %v3982 = vunpack.c.h.b16 %v2924
        %v3983 = vunpack.c.l.b16 %v2925
        %v3984 = vunpack.c.h.b16 %v2925
        %v3985 = vunpack.c.l.b16 %v2926
        %v3986 = vunpack.c.h.b16 %v2926
        %v3987 = vunpack.c.l.b16 %v2927
        %v3988 = vunpack.c.h.b16 %v2927
        %v3989 = vunpack.c.l.b16 %v2928
        %v3990 = vunpack.c.h.b16 %v2928
        %v3991 = vunpack.c.l.b16 %v2929
        %v3992 = vunpack.c.h.b16 %v2929
        %v3993 = vunpack.c.l.b16 %v2930
        %v3994 = vunpack.c.h.b16 %v2930
        %v3995 = vunpack.c.l.b16 %v2931
        %v3996 = vunpack.c.h.b16 %v2931
        %v3997 = vunpack.c.l.b16 %v2932
        %v3998 = vunpack.c.h.b16 %v2932
        %v3999 = vunpack.c.l.b16 %v2933
        %v4000 = vunpack.c.h.b16 %v2933
        %v4001 = vunpack.c.l.b16 %v2934
        %v4002 = vunpack.c.h.b16 %v2934
        %v4003 = vunpack.c.l.b16 %v2935
        %v4004 = vunpack.c.h.b16 %v2935
        %v4005 = vunpack.c.l.b16 %v2936
        %v4006 = vunpack.c.h.b16 %v2936
        %v4007 = vunpack.c.l.b16 %v2937
        %v4008 = vunpack.c.h.b16 %v2937
        %v4009 = vunpack.c.l.b16 %v2938
        %v4010 = vunpack.c.h.b16 %v2938
        %v4011 = vunpack.c.l.b16 %v2939
        %v4012 = vunpack.c.h.b16 %v2939
        %v4013 = vunpack.c.l.b16 %v2940
        %v4014 = vunpack.c.h.b16 %v2940
        %v4015 = vunpack.c.l.b16 %v2941
        %v4016 = vunpack.c.h.b16 %v2941
        %v4017 = vunpack.c.l.b16 %v2942
        %v4018 = vunpack.c.h.b16 %v2942
        %v4019 = vunpack.c.l.b16 %v2943
        %v4020 = vunpack.c.h.b16 %v2943
        %v4021 = vunpack.c.l.b16 %v2944
        %v4022 = vunpack.c.h.b16 %v2944
        %v4023 = vunpack.c.l.b16 %v2945
        %v4024 = vunpack.c.h.b16 %v2945
        %v4025 = vunpack.c.l.b16 %v2946
        %v4026 = vunpack.c.h.b16 %v2946
        %v4027 = vunpack.c.l.b16 %v2947
        %v4028 = vunpack.c.h.b16 %v2947
        %v4029 = vunpack.c.l.b16 %v2948
        %v4030 = vunpack.c.h.b16 %v2948
        %v4031 = vunpack.c.l.b16 %v2949
        %v4032 = vunpack.c.h.b16 %v2949
        %v4033 = vunpack.c.l.b16 %v2950
        %v4034 = vunpack.c.h.b16 %v2950
        %v4035 = vunpack.c.l.b16 %v2951
        %v4036 = vunpack.c.h.b16 %v2951
        %v4037 = vunpack.c.l.b16 %v2952
        %v4038 = vunpack.c.h.b16 %v2952
        %v4039 = vunpack.c.l.b16 %v2953
        %v4040 = vunpack.c.h.b16 %v2953
        %v4041 = vunpack.c.l.b16 %v2954
        %v4042 = vunpack.c.h.b16 %v2954
        %v4043 = vunpack.c.l.b16 %v2955
        %v4044 = vunpack.c.h.b16 %v2955
        %v4045 = vunpack.c.l.b16 %v2956
        %v4046 = vunpack.c.h.b16 %v2956
        %v4047 = vunpack.c.l.b16 %v2957
        %v4048 = vunpack.c.h.b16 %v2957
        %v4049 = vunpack.c.l.b16 %v2958
        %v4050 = vunpack.c.h.b16 %v2958
        %v4051 = vunpack.c.l.b16 %v2959
        %v4052 = vunpack.c.h.b16 %v2959
        %v4053 = vunpack.c.l.b16 %v2960
        %v4054 = vunpack.c.h.b16 %v2960
        %v4055 = vunpack.c.l.b16 %v2961
        %v4056 = vunpack.c.h.b16 %v2961
        %v4057 = vunpack.c.l.b16 %v2962
        %v4058 = vunpack.c.h.b16 %v2962
        %v4059 = vunpack.c.l.b16 %v2963
        %v4060 = vunpack.c.h.b16 %v2963
        %v4061 = vunpack.c.l.b16 %v2964
        %v4062 = vunpack.c.h.b16 %v2964
        %v4063 = vunpack.c.l.b16 %v2965
        %v4064 = vunpack.c.h.b16 %v2965
        %v4065 = vunpack.c.l.b16 %v2966
        %v4066 = vunpack.c.h.b16 %v2966
        %v4067 = vunpack.c.l.b16 %v2967
        %v4068 = vunpack.c.h.b16 %v2967
        %v4069 = vunpack.c.l.b16 %v2968
        %v4070 = vunpack.c.h.b16 %v2968
        %v4071 = vunpack.c.l.b16 %v2969
        %v4072 = vunpack.c.h.b16 %v2969
        %v4073 = vunpack.c.l.b16 %v2970
        %v4074 = vunpack.c.h.b16 %v2970
        %v4075 = vunpack.c.l.b16 %v2971
        %v4076 = vunpack.c.h.b16 %v2971
        %v4077 = vunpack.c.l.b16 %v2972
        %v4078 = vunpack.c.h.b16 %v2972
        %v4079 = vunpack.c.l.b16 %v2973
        %v4080 = vunpack.c.h.b16 %v2973
        %v4081 = vunpack.c.l.b16 %v2974
        %v4082 = vunpack.c.h.b16 %v2974
        %v4083 = vunpack.c.l.b16 %v2975
        %v4084 = vunpack.c.h.b16 %v2975
        %v4085 = vunpack.c.l.b16 %v2976
        %v4086 = vunpack.c.h.b16 %v2976
        %v4087 = vunpack.c.l.b16 %v2977
        %v4088 = vunpack.c.h.b16 %v2977
        %v4089 = vunpack.c.l.b16 %v2978
        %v4090 = vunpack.c.h.b16 %v2978
        %v4091 = vunpack.c.l.b16 %v2979
        %v4092 = vunpack.c.h.b16 %v2979
        %v4093 = vunpack.c.l.b16 %v2980
        %v4094 = vunpack.c.h.b16 %v2980
        %v4095 = vunpack.c.l.b16 %v2981
        %v4096 = vunpack.c.h.b16 %v2981
        %v4097 = vunpack.c.l.b16 %v2982
        %v4098 = vunpack.c.h.b16 %v2982
        %v4099 = vunpack.c.l.b16 %v2983
        %v4100 = vunpack.c.h.b16 %v2983
        %v4101 = vunpack.c.l.b16 %v2984
        %v4102 = vunpack.c.h.b16 %v2984
        %v4103 = vunpack.c.l.b16 %v2985
        %v4104 = vunpack.c.h.b16 %v2985
        %v4105 = vunpack.c.l.b16 %v2986
        %v4106 = vunpack.c.h.b16 %v2986
        %v4107 = vunpack.c.l.b16 %v2987
        %v4108 = vunpack.c.h.b16 %v2987
        %v4109 = vunpack.c.l.b16 %v2988
        %v4110 = vunpack.c.h.b16 %v2988
        %v4111 = vunpack.c.l.b16 %v2989
        %v4112 = vunpack.c.h.b16 %v2989
        %v4113 = vunpack.c.l.b16 %v2990
        %v4114 = vunpack.c.h.b16 %v2990
        %v4115 = vunpack.c.l.b16 %v2991
        %v4116 = vunpack.c.h.b16 %v2991
        %v4117 = vunpack.c.l.b16 %v2992
        %v4118 = vunpack.c.h.b16 %v2992
        %v4119 = vunpack.c.l.b16 %v2993
        %v4120 = vunpack.c.h.b16 %v2993
        %v4121 = vunpack.c.l.b16 %v2994
        %v4122 = vunpack.c.h.b16 %v2994
        %v4123 = vunpack.c.l.b16 %v2995
        %v4124 = vunpack.c.h.b16 %v2995
        %v4125 = vunpack.c.l.b16 %v2996
        %v4126 = vunpack.c.h.b16 %v2996
        %v4127 = vunpack.c.l.b16 %v2997
        %v4128 = vunpack.c.h.b16 %v2997
        %v4129 = vunpack.c.l.b16 %v2998
        %v4130 = vunpack.c.h.b16 %v2998
        %v4131 = vunpack.c.l.b16 %v2999
        %v4132 = vunpack.c.h.b16 %v2999
        %v4133 = vunpack.c.l.b16 %v3000
        %v4134 = vunpack.c.h.b16 %v3000
        %v4135 = vunpack.c.l.b16 %v3001
        %v4136 = vunpack.c.h.b16 %v3001
        %v4137 = vunpack.c.l.b16 %v3002
        %v4138 = vunpack.c.h.b16 %v3002
        %v4139 = vunpack.c.l.b16 %v3003
        %v4140 = vunpack.c.h.b16 %v3003
        %v4141 = vunpack.c.l.b16 %v3004
        %v4142 = vunpack.c.h.b16 %v3004
        %v4143 = vunpack.c.l.b16 %v3005
        %v4144 = vunpack.c.h.b16 %v3005
        %v4145 = vunpack.c.l.b16 %v3006
        %v4146 = vunpack.c.h.b16 %v3006
        %v4147 = vunpack.c.l.b16 %v3007
        %v4148 = vunpack.c.h.b16 %v3007
        %v4149 = vunpack.c.l.b16 %v3008
        %v4150 = vunpack.c.h.b16 %v3008
        %v4151 = vunpack.c.l.b16 %v3009
        %v4152 = vunpack.c.h.b16 %v3009
        %v4153 = vunpack.c.l.b16 %v3010
        %v4154 = vunpack.c.h.b16 %v3010
        %v4155 = vunpack.c.l.b16 %v3011
        %v4156 = vunpack.c.h.b16 %v3011
        %v4157 = vunpack.c.l.b16 %v3012
        %v4158 = vunpack.c.h.b16 %v3012
        %v4159 = vunpack.c.l.b16 %v3013
        %v4160 = vunpack.c.h.b16 %v3013
        %v4161 = vunpack.c.l.b16 %v3014
        %v4162 = vunpack.c.h.b16 %v3014
        %v4163 = vunpack.c.l.b16 %v3015
        %v4164 = vunpack.c.h.b16 %v3015
        %v4165 = vunpack.c.l.b16 %v3016
        %v4166 = vunpack.c.h.b16 %v3016
        %v4167 = vunpack.c.l.b16 %v3017
        %v4168 = vunpack.c.h.b16 %v3017
        %v4169 = vunpack.c.l.b16 %v3018
        %v4170 = vunpack.c.h.b16 %v3018
        %v4171 = vunpack.c.l.b16 %v3019
        %v4172 = vunpack.c.h.b16 %v3019
        %v4173 = vunpack.c.l.b16 %v3020
        %v4174 = vunpack.c.h.b16 %v3020
        %v4175 = vunpack.c.l.b16 %v3021
        %v4176 = vunpack.c.h.b16 %v3021
        %v4177 = vunpack.c.l.b16 %v3022
        %v4178 = vunpack.c.h.b16 %v3022
        %v4179 = vunpack.c.l.b16 %v3023
        %v4180 = vunpack.c.h.b16 %v3023
        %v4181 = vunpack.c.l.b16 %v3024
        %v4182 = vunpack.c.h.b16 %v3024
        %v4183 = vunpack.c.l.b16 %v3025
        %v4184 = vunpack.c.h.b16 %v3025
        %v4185 = vunpack.c.l.b16 %v3026
        %v4186 = vunpack.c.h.b16 %v3026
        %v4187 = vunpack.c.l.b16 %v3027
        %v4188 = vunpack.c.h.b16 %v3027
        %v4189 = vunpack.c.l.b16 %v3028
        %v4190 = vunpack.c.h.b16 %v3028
        %v4191 = vunpack.c.l.b16 %v3029
        %v4192 = vunpack.c.h.b16 %v3029
        %v4193 = vunpack.c.l.b16 %v3030
        %v4194 = vunpack.c.h.b16 %v3030
        %v4195 = vunpack.c.l.b16 %v3031
        %v4196 = vunpack.c.h.b16 %v3031
        %v4197 = vunpack.c.l.b16 %v3032
        %v4198 = vunpack.c.h.b16 %v3032
        %v4199 = vunpack.c.l.b16 %v3033
        %v4200 = vunpack.c.h.b16 %v3033
        %v4201 = vunpack.c.l.b16 %v3034
        %v4202 = vunpack.c.h.b16 %v3034
        %v4203 = vunpack.c.l.b16 %v3035
        %v4204 = vunpack.c.h.b16 %v3035
        %v4205 = vunpack.c.l.b16 %v3036
        %v4206 = vunpack.c.h.b16 %v3036
        %v4207 = vunpack.c.l.b16 %v3037
        %v4208 = vunpack.c.h.b16 %v3037
        %v4209 = vunpack.c.l.b16 %v3038
        %v4210 = vunpack.c.h.b16 %v3038
        %v4211 = vunpack.c.l.b16 %v3039
        %v4212 = vunpack.c.h.b16 %v3039
        %v4213 = vunpack.c.l.b16 %v3040
        %v4214 = vunpack.c.h.b16 %v3040
        %v4215 = vunpack.c.l.b16 %v3041
        %v4216 = vunpack.c.h.b16 %v3041
        %v4217 = vunpack.c.l.b16 %v3042
        %v4218 = vunpack.c.h.b16 %v3042
        %v4219 = vunpack.c.l.b16 %v3043
        %v4220 = vunpack.c.h.b16 %v3043
        %v4221 = vunpack.c.l.b16 %v3044
        %v4222 = vunpack.c.h.b16 %v3044
        %v4223 = vunpack.c.l.b16 %v3045
        %v4224 = vunpack.c.h.b16 %v3045
        %v4225 = vunpack.c.l.b16 %v3046
        %v4226 = vunpack.c.h.b16 %v3046
        %v4227 = vunpack.c.l.b16 %v3047
        %v4228 = vunpack.c.h.b16 %v3047
        %v4229 = vunpack.c.l.b16 %v3048
        %v4230 = vunpack.c.h.b16 %v3048
        %v4231 = vunpack.c.l.b16 %v3049
        %v4232 = vunpack.c.h.b16 %v3049
        %v4233 = vunpack.c.l.b16 %v3050
        %v4234 = vunpack.c.h.b16 %v3050
        %v4235 = vunpack.c.l.b16 %v3051
        %v4236 = vunpack.c.h.b16 %v3051
        %v4237 = vunpack.c.l.b16 %v3052
        %v4238 = vunpack.c.h.b16 %v3052
        %v4239 = vunpack.c.l.b16 %v3053
        %v4240 = vunpack.c.h.b16 %v3053
        %v4241 = vunpack.c.l.b16 %v3054
        %v4242 = vunpack.c.h.b16 %v3054
        %v4243 = vunpack.c.l.b16 %v3055
        %v4244 = vunpack.c.h.b16 %v3055
        %v4245 = vunpack.c.l.b16 %v3056
        %v4246 = vunpack.c.h.b16 %v3056
        %v4247 = vunpack.c.l.b16 %v3057
        %v4248 = vunpack.c.h.b16 %v3057
        %v4249 = vunpack.c.l.b16 %v3058
        %v4250 = vunpack.c.h.b16 %v3058
        %v4251 = vunpack.c.l.b16 %v3059
        %v4252 = vunpack.c.h.b16 %v3059
        %v4253 = vunpack.c.l.b16 %v3060
        %v4254 = vunpack.c.h.b16 %v3060
        %v4255 = vunpack.c.l.b16 %v3061
        %v4256 = vunpack.c.h.b16 %v3061
        %v4257 = vunpack.c.l.b16 %v3062
        %v4258 = vunpack.c.h.b16 %v3062
        %v4259 = vunpack.c.l.b16 %v3063
        %v4260 = vunpack.c.h.b16 %v3063
        %v4261 = vunpack.c.l.b16 %v3064
        %v4262 = vunpack.c.h.b16 %v3064
        %v4263 = vunpack.c.l.b16 %v3065
        %v4264 = vunpack.c.h.b16 %v3065
        %v4265 = vunpack.c.l.b16 %v3066
        %v4266 = vunpack.c.h.b16 %v3066
        %v4267 = vunpack.c.l.b16 %v3067
        %v4268 = vunpack.c.h.b16 %v3067
        %v4269 = vunpack.c.l.b16 %v3068
        %v4270 = vunpack.c.h.b16 %v3068
        %v4271 = vunpack.c.l.b16 %v3069
        %v4272 = vunpack.c.h.b16 %v3069
        %v4273 = vunpack.c.l.b16 %v3070
        %v4274 = vunpack.c.h.b16 %v3070
        %v4275 = vunpack.c.l.b16 %v3071
        %v4276 = vunpack.c.h.b16 %v3071
        %v4277 = vunpack.c.l.b16 %v3072
        %v4278 = vunpack.c.h.b16 %v3072
        %v4279 = vunpack.c.l.b16 %v3073
        %v4280 = vunpack.c.h.b16 %v3073
        %v4281 = vunpack.c.l.b16 %v3074
        %v4282 = vunpack.c.h.b16 %v3074
        %v4283 = vunpack.c.l.b16 %v3075
        %v4284 = vunpack.c.h.b16 %v3075
        %v4285 = vunpack.c.l.b16 %v3076
        %v4286 = vunpack.c.h.b16 %v3076
        %v4287 = vunpack.c.l.b16 %v3077
        %v4288 = vunpack.c.h.b16 %v3077
        %v4289 = vunpack.c.l.b16 %v3078
        %v4290 = vunpack.c.h.b16 %v3078
        %v4291 = vunpack.c.l.b16 %v3079
        %v4292 = vunpack.c.h.b16 %v3079
        %v4293 = vunpack.c.l.b16 %v3080
        %v4294 = vunpack.c.h.b16 %v3080
        %v4295 = vunpack.c.l.b16 %v3081
        %v4296 = vunpack.c.h.b16 %v3081
        %v4297 = vunpack.c.l.b16 %v3082
        %v4298 = vunpack.c.h.b16 %v3082
        %v4299 = vunpack.c.l.b16 %v3083
        %v4300 = vunpack.c.h.b16 %v3083
        %v4301 = vunpack.c.l.b16 %v3084
        %v4302 = vunpack.c.h.b16 %v3084
        %v4303 = vunpack.c.l.b16 %v3085
        %v4304 = vunpack.c.h.b16 %v3085
        %v4305 = vunpack.c.l.b16 %v3086
        %v4306 = vunpack.c.h.b16 %v3086
        %v4307 = vunpack.c.l.b16 %v3087
        %v4308 = vunpack.c.h.b16 %v3087
        %v4309 = vunpack.c.l.b16 %v3088
        %v4310 = vunpack.c.h.b16 %v3088
        %v4311 = vunpack.c.l.b16 %v3089
        %v4312 = vunpack.c.h.b16 %v3089
        %v4313 = vunpack.c.l.b16 %v3090
        %v4314 = vunpack.c.h.b16 %v3090
        %v4315 = vunpack.c.l.b16 %v3091
        %v4316 = vunpack.c.h.b16 %v3091
        %v4317 = vunpack.c.l.b16 %v3092
        %v4318 = vunpack.c.h.b16 %v3092
        %v4319 = vunpack.c.l.b16 %v3093
        %v4320 = vunpack.c.h.b16 %v3093
        %v4321 = vunpack.c.l.b16 %v3094
        %v4322 = vunpack.c.h.b16 %v3094
        %v4323 = vunpack.c.l.b16 %v3095
        %v4324 = vunpack.c.h.b16 %v3095
        %v4325 = vunpack.c.l.b16 %v3096
        %v4326 = vunpack.c.h.b16 %v3096
        %v4327 = vunpack.c.l.b16 %v3097
        %v4328 = vunpack.c.h.b16 %v3097
        %v4329 = vunpack.c.l.b16 %v3098
        %v4330 = vunpack.c.h.b16 %v3098
        %v4331 = vunpack.c.l.b16 %v3099
        %v4332 = vunpack.c.h.b16 %v3099
        %v4333 = vunpack.c.l.b16 %v3100
        %v4334 = vunpack.c.h.b16 %v3100
        %v4335 = vunpack.c.l.b16 %v3101
        %v4336 = vunpack.c.h.b16 %v3101
        %v4337 = vunpack.c.l.b16 %v3102
        %v4338 = vunpack.c.h.b16 %v3102
        %v4339 = vunpack.c.l.b16 %v3103
        %v4340 = vunpack.c.h.b16 %v3103
        %v4341 = vunpack.c.l.b16 %v3104
        %v4342 = vunpack.c.h.b16 %v3104
        %v4343 = vunpack.c.l.b16 %v3105
        %v4344 = vunpack.c.h.b16 %v3105
        %v4345 = vunpack.c.l.b16 %v3106
        %v4346 = vunpack.c.h.b16 %v3106
        %v4347 = vunpack.c.l.b16 %v3107
        %v4348 = vunpack.c.h.b16 %v3107
        %v4349 = vunpack.c.l.b16 %v3108
        %v4350 = vunpack.c.h.b16 %v3108
        %v4351 = vunpack.c.l.b16 %v3109
        %v4352 = vunpack.c.h.b16 %v3109
        %v4353 = vunpack.c.l.b16 %v3110
        %v4354 = vunpack.c.h.b16 %v3110
        %v4355 = vunpack.c.l.b16 %v3111
        %v4356 = vunpack.c.h.b16 %v3111
        %v4357 = vunpack.c.l.b16 %v3112
        %v4358 = vunpack.c.h.b16 %v3112
        %v4359 = vunpack.c.l.b16 %v3113
        %v4360 = vunpack.c.h.b16 %v3113
        %v4361 = vunpack.c.l.b16 %v3114
        %v4362 = vunpack.c.h.b16 %v3114
        %v4363 = vunpack.c.l.b16 %v3115
        %v4364 = vunpack.c.h.b16 %v3115
        %v4365 = vunpack.c.l.b16 %v3116
        %v4366 = vunpack.c.h.b16 %v3116
        %v4367 = vunpack.c.l.b16 %v3117
        %v4368 = vunpack.c.h.b16 %v3117
        %v4369 = vunpack.c.l.b16 %v3118
        %v4370 = vunpack.c.h.b16 %v3118
        %v4371 = vunpack.c.l.b16 %v3119
        %v4372 = vunpack.c.h.b16 %v3119
        %v4373 = vunpack.c.l.b16 %v3120
        %v4374 = vunpack.c.h.b16 %v3120
        %v4375 = vunpack.c.l.b16 %v3121
        %v4376 = vunpack.c.h.b16 %v3121
        %v4377 = vunpack.c.l.b16 %v3122
        %v4378 = vunpack.c.h.b16 %v3122
        %v4379 = vunpack.c.l.b16 %v3123
        %v4380 = vunpack.c.h.b16 %v3123
        %v4381 = vunpack.c.l.b16 %v3124
        %v4382 = vunpack.c.h.b16 %v3124
        %v4383 = vunpack.c.l.b16 %v3125
        %v4384 = vunpack.c.h.b16 %v3125
        %v4385 = vunpack.c.l.b16 %v3126
        %v4386 = vunpack.c.h.b16 %v3126
        %v4387 = vunpack.c.l.b16 %v3127
        %v4388 = vunpack.c.h.b16 %v3127
        %v4389 = vunpack.c.l.b16 %v3128
        %v4390 = vunpack.c.h.b16 %v3128
        %v4391 = vunpack.c.l.b16 %v3129
        %v4392 = vunpack.c.h.b16 %v3129
        %v4393 = vunpack.c.l.b16 %v3130
        %v4394 = vunpack.c.h.b16 %v3130
        %v4395 = vunpack.c.l.b16 %v3131
        %v4396 = vunpack.c.h.b16 %v3131
        %v4397 = vunpack.c.l.b16 %v3132
        %v4398 = vunpack.c.h.b16 %v3132
        %v4399 = vunpack.c.l.b16 %v3133
        %v4400 = vunpack.c.h.b16 %v3133
        %v4401 = vunpack.c.l.b16 %v3134
        %v4402 = vunpack.c.h.b16 %v3134
        %v4403 = vunpack.c.l.b16 %v3135
        %v4404 = vunpack.c.h.b16 %v3135
        %v4405 = vunpack.c.l.b16 %v3136
        %v4406 = vunpack.c.h.b16 %v3136
        %v4407 = vunpack.c.l.b16 %v3137
        %v4408 = vunpack.c.h.b16 %v3137
        %v4409 = vunpack.c.l.b16 %v3138
        %v4410 = vunpack.c.h.b16 %v3138
        %v4411 = vunpack.c.l.b16 %v3139
        %v4412 = vunpack.c.h.b16 %v3139
        %v4413 = vunpack.c.l.b16 %v3140
        %v4414 = vunpack.c.h.b16 %v3140
        %v4415 = vunpack.c.l.b16 %v3141
        %v4416 = vunpack.c.h.b16 %v3141
        %v4417 = vunpack.c.l.b16 %v3142
        %v4418 = vunpack.c.h.b16 %v3142
        %v4419 = vunpack.c.l.b16 %v3143
        %v4420 = vunpack.c.h.b16 %v3143
        %v4421 = vunpack.c.l.b16 %v3144
        %v4422 = vunpack.c.h.b16 %v3144
        %v4423 = vunpack.c.l.b16 %v3145
        %v4424 = vunpack.c.h.b16 %v3145
        %v4425 = vunpack.c.l.b16 %v3146
        %v4426 = vunpack.c.h.b16 %v3146
        %v4427 = vunpack.c.l.b16 %v3147
        %v4428 = vunpack.c.h.b16 %v3147
        %v4429 = vunpack.c.l.b16 %v3148
        %v4430 = vunpack.c.h.b16 %v3148
        %v4431 = vunpack.c.l.b16 %v3149
        %v4432 = vunpack.c.h.b16 %v3149
        %v4433 = vunpack.c.l.b16 %v3150
        %v4434 = vunpack.c.h.b16 %v3150
        %v4435 = vunpack.c.l.b16 %v3151
        %v4436 = vunpack.c.h.b16 %v3151
        %v4437 = vunpack.c.l.b16 %v3152
        %v4438 = vunpack.c.h.b16 %v3152
        %v4439 = vunpack.c.l.b16 %v3153
        %v4440 = vunpack.c.h.b16 %v3153
        %v4441 = vunpack.c.l.b16 %v3154
        %v4442 = vunpack.c.h.b16 %v3154
        %v4443 = vunpack.c.l.b16 %v3155
        %v4444 = vunpack.c.h.b16 %v3155
        %v4445 = vunpack.c.l.b16 %v3156
        %v4446 = vunpack.c.h.b16 %v3156
        %v4447 = vunpack.c.l.b16 %v3157
        %v4448 = vunpack.c.h.b16 %v3157
        %v4449 = vunpack.c.l.b16 %v3158
        %v4450 = vunpack.c.h.b16 %v3158
        %v4451 = vunpack.c.l.b16 %v3159
        %v4452 = vunpack.c.h.b16 %v3159
        %v4453 = vunpack.c.l.b16 %v3160
        %v4454 = vunpack.c.h.b16 %v3160
        %v4455 = vunpack.c.l.b16 %v3161
        %v4456 = vunpack.c.h.b16 %v3161
        %v4457 = vunpack.c.l.b16 %v3162
        %v4458 = vunpack.c.h.b16 %v3162
        %v4459 = vunpack.c.l.b16 %v3163
        %v4460 = vunpack.c.h.b16 %v3163
        %v4461 = vunpack.c.l.b16 %v3164
        %v4462 = vunpack.c.h.b16 %v3164
        %v4463 = vunpack.c.l.b16 %v3165
        %v4464 = vunpack.c.h.b16 %v3165
        %v4465 = vunpack.c.l.b16 %v3166
        %v4466 = vunpack.c.h.b16 %v3166
        %v4467 = vunpack.c.l.b16 %v3167
        %v4468 = vunpack.c.h.b16 %v3167
        %v4469 = vunpack.c.l.b16 %v3168
        %v4470 = vunpack.c.h.b16 %v3168
        %v4471 = vunpack.c.l.b16 %v3169
        %v4472 = vunpack.c.h.b16 %v3169
        %v4473 = vunpack.c.l.b16 %v3170
        %v4474 = vunpack.c.h.b16 %v3170
        %v4475 = vunpack.c.l.b16 %v3171
        %v4476 = vunpack.c.h.b16 %v3171
        %v4477 = vunpack.c.l.b16 %v3172
        %v4478 = vunpack.c.h.b16 %v3172
        %v4479 = vunpack.c.l.b16 %v3173
        %v4480 = vunpack.c.h.b16 %v3173
        %v4481 = vunpack.c.l.b16 %v3174
        %v4482 = vunpack.c.h.b16 %v3174
        %v4483 = vunpack.c.l.b16 %v3175
        %v4484 = vunpack.c.h.b16 %v3175
        %v4485 = vunpack.c.l.b16 %v3176
        %v4486 = vunpack.c.h.b16 %v3176
        %v4487 = vunpack.c.l.b16 %v3177
        %v4488 = vunpack.c.h.b16 %v3177
        %v4489 = vunpack.c.l.b16 %v3178
        %v4490 = vunpack.c.h.b16 %v3178
        %v4491 = vunpack.c.l.b16 %v3179
        %v4492 = vunpack.c.h.b16 %v3179
        %v4493 = vunpack.c.l.b16 %v3180
        %v4494 = vunpack.c.h.b16 %v3180
        %v4495 = vunpack.c.l.b16 %v3181
        %v4496 = vunpack.c.h.b16 %v3181
        %v4497 = vunpack.c.l.b16 %v3182
        %v4498 = vunpack.c.h.b16 %v3182
        %v4499 = vunpack.c.l.b16 %v3183
        %v4500 = vunpack.c.h.b16 %v3183
        %v4501 = vunpack.c.l.b16 %v3184
        %v4502 = vunpack.c.h.b16 %v3184
        %v4503 = vunpack.c.l.b16 %v3185
        %v4504 = vunpack.c.h.b16 %v3185
        %v4505 = vunpack.c.l.b16 %v3186
        %v4506 = vunpack.c.h.b16 %v3186
        %v4507 = vunpack.c.l.b16 %v3187
        %v4508 = vunpack.c.h.b16 %v3187
        %v4509 = vunpack.c.l.b16 %v3188
        %v4510 = vunpack.c.h.b16 %v3188
        %v4511 = vunpack.c.l.b16 %v3189
        %v4512 = vunpack.c.h.b16 %v3189
        %v4513 = vunpack.c.l.b16 %v3190
        %v4514 = vunpack.c.h.b16 %v3190
        %v4515 = vunpack.c.l.b16 %v3191
        %v4516 = vunpack.c.h.b16 %v3191
        %v4517 = vunpack.c.l.b16 %v3192
        %v4518 = vunpack.c.h.b16 %v3192
        %v4519 = vunpack.c.l.b16 %v3193
        %v4520 = vunpack.c.h.b16 %v3193
        %v4521 = vunpack.c.l.b16 %v3194
        %v4522 = vunpack.c.h.b16 %v3194
        %v4523 = vunpack.c.l.b16 %v3195
        %v4524 = vunpack.c.h.b16 %v3195
        %v4525 = vunpack.c.l.b16 %v3196
        %v4526 = vunpack.c.h.b16 %v3196
        %v4527 = vunpack.c.l.b16 %v3197
        %v4528 = vunpack.c.h.b16 %v3197
        %v4529 = vunpack.c.l.b16 %v3198
        %v4530 = vunpack.c.h.b16 %v3198
        %v4531 = vunpack.c.l.b16 %v3199
        %v4532 = vunpack.c.h.b16 %v3199
        %v4533 = vunpack.c.l.b16 %v3200
        %v4534 = vunpack.c.h.b16 %v3200
        %v4535 = vunpack.c.l.b16 %v3201
        %v4536 = vunpack.c.h.b16 %v3201
        %v4537 = vunpack.c.l.b16 %v3202
        %v4538 = vunpack.c.h.b16 %v3202
        %v4539 = vunpack.c.l.b16 %v3203
        %v4540 = vunpack.c.h.b16 %v3203
        %v4541 = vunpack.c.l.b16 %v3204
        %v4542 = vunpack.c.h.b16 %v3204
        %v4543 = vunpack.c.l.b16 %v3205
        %v4544 = vunpack.c.h.b16 %v3205
        %v4545 = vunpack.c.l.b16 %v3206
        %v4546 = vunpack.c.h.b16 %v3206
        %v4547 = vunpack.c.l.b16 %v3207
        %v4548 = vunpack.c.h.b16 %v3207
        %v4549 = vunpack.c.l.b16 %v3208
        %v4550 = vunpack.c.h.b16 %v3208
        %v4551 = vunpack.c.l.b16 %v3209
        %v4552 = vunpack.c.h.b16 %v3209
        %v4553 = vunpack.c.l.b16 %v3210
        %v4554 = vunpack.c.h.b16 %v3210
        %v4555 = vunpack.c.l.b16 %v3211
        %v4556 = vunpack.c.h.b16 %v3211
        %v4557 = vunpack.c.l.b16 %v3212
        %v4558 = vunpack.c.h.b16 %v3212
        %v4559 = vunpack.c.l.b16 %v3213
        %v4560 = vunpack.c.h.b16 %v3213
        %v4561 = vunpack.c.l.b16 %v3214
        %v4562 = vunpack.c.h.b16 %v3214
        %v4563 = vunpack.c.l.b16 %v3215
        %v4564 = vunpack.c.h.b16 %v3215
        %v4565 = vunpack.c.l.b16 %v3216
        %v4566 = vunpack.c.h.b16 %v3216
        %v4567 = vunpack.c.l.b16 %v3217
        %v4568 = vunpack.c.h.b16 %v3217
        %v4569 = vunpack.c.l.b16 %v3218
        %v4570 = vunpack.c.h.b16 %v3218
        %v4571 = vunpack.c.l.b16 %v3219
        %v4572 = vunpack.c.h.b16 %v3219
        %v4573 = vunpack.c.l.b16 %v3220
        %v4574 = vunpack.c.h.b16 %v3220
        %v4575 = vunpack.c.l.b16 %v3221
        %v4576 = vunpack.c.h.b16 %v3221
        %v4577 = vunpack.c.l.b16 %v3222
        %v4578 = vunpack.c.h.b16 %v3222
        %v4579 = vunpack.c.l.b16 %v3223
        %v4580 = vunpack.c.h.b16 %v3223
        %v4581 = vunpack.c.l.b16 %v3224
        %v4582 = vunpack.c.h.b16 %v3224
        %v4583 = vunpack.c.l.b16 %v3225
        %v4584 = vunpack.c.h.b16 %v3225
        %v4585 = vunpack.c.l.b16 %v3226
        %v4586 = vunpack.c.h.b16 %v3226
        %v4587 = vunpack.c.l.b16 %v3227
        %v4588 = vunpack.c.h.b16 %v3227
        %v4589 = vunpack.c.l.b16 %v3228
        %v4590 = vunpack.c.h.b16 %v3228
        %v4591 = vunpack.c.l.b16 %v3229
        %v4592 = vunpack.c.h.b16 %v3229
        %v4593 = vunpack.c.l.b16 %v3230
        %v4594 = vunpack.c.h.b16 %v3230
        %v4595 = vunpack.c.l.b16 %v3231
        %v4596 = vunpack.c.h.b16 %v3231
        %v4597 = vunpack.c.l.b16 %v3232
        %v4598 = vunpack.c.h.b16 %v3232
        %v4599 = vunpack.c.l.b16 %v3233
        %v4600 = vunpack.c.h.b16 %v3233
        %v4601 = vunpack.c.l.b16 %v3234
        %v4602 = vunpack.c.h.b16 %v3234
        %v4603 = vunpack.c.l.b16 %v3235
        %v4604 = vunpack.c.h.b16 %v3235
        %v4605 = vunpack.c.l.b16 %v3236
        %v4606 = vunpack.c.h.b16 %v3236
        %v4607 = vunpack.c.l.b16 %v3237
        %v4608 = vunpack.c.h.b16 %v3237
        %v4609 = vunpack.c.l.b16 %v3238
        %v4610 = vunpack.c.h.b16 %v3238
        %v4611 = vunpack.c.l.b16 %v3239
        %v4612 = vunpack.c.h.b16 %v3239
        %v4613 = vunpack.c.l.b16 %v3240
        %v4614 = vunpack.c.h.b16 %v3240
        %v4615 = vunpack.c.l.b16 %v3241
        %v4616 = vunpack.c.h.b16 %v3241
        %v4617 = vunpack.c.l.b16 %v3242
        %v4618 = vunpack.c.h.b16 %v3242
        %v4619 = vunpack.c.l.b16 %v3243
        %v4620 = vunpack.c.h.b16 %v3243
        %v4621 = vunpack.c.l.b16 %v3244
        %v4622 = vunpack.c.h.b16 %v3244
        %v4623 = vunpack.c.l.b16 %v3245
        %v4624 = vunpack.c.h.b16 %v3245
        %v4625 = vunpack.c.l.b16 %v3246
        %v4626 = vunpack.c.h.b16 %v3246
        %v4627 = vunpack.c.l.b16 %v3247
        %v4628 = vunpack.c.h.b16 %v3247
        %v4629 = vunpack.c.l.b16 %v3248
        %v4630 = vunpack.c.h.b16 %v3248
        %v4631 = vunpack.c.l.b16 %v3249
        %v4632 = vunpack.c.h.b16 %v3249
        %v4633 = vunpack.c.l.b16 %v3250
        %v4634 = vunpack.c.h.b16 %v3250
        %v4635 = vunpack.c.l.b16 %v3251
        %v4636 = vunpack.c.h.b16 %v3251
        %v4637 = vunpack.c.l.b16 %v3252
        %v4638 = vunpack.c.h.b16 %v3252
        %v4639 = vunpack.c.l.b16 %v3253
        %v4640 = vunpack.c.h.b16 %v3253
        %v4641 = vunpack.c.l.b16 %v3254
        %v4642 = vunpack.c.h.b16 %v3254
        %v4643 = vunpack.c.l.b16 %v3255
        %v4644 = vunpack.c.h.b16 %v3255
        %v4645 = vunpack.c.l.b16 %v3256
        %v4646 = vunpack.c.h.b16 %v3256
        %v4647 = vunpack.c.l.b16 %v3257
        %v4648 = vunpack.c.h.b16 %v3257
        %v4649 = vunpack.c.l.b16 %v3258
        %v4650 = vunpack.c.h.b16 %v3258
        %v4651 = vunpack.c.l.b16 %v3259
        %v4652 = vunpack.c.h.b16 %v3259
        %v4653 = vunpack.c.l.b16 %v3260
        %v4654 = vunpack.c.h.b16 %v3260
        %v4655 = vunpack.c.l.b16 %v3261
        %v4656 = vunpack.c.h.b16 %v3261
        %v4657 = vunpack.c.l.b16 %v3262
        %v4658 = vunpack.c.h.b16 %v3262
        %v4659 = vunpack.c.l.b16 %v3263
        %v4660 = vunpack.c.h.b16 %v3263
        %v4661 = vunpack.c.l.b16 %v3264
        %v4662 = vunpack.c.h.b16 %v3264
        %v4663 = vunpack.c.l.b16 %v3265
        %v4664 = vunpack.c.h.b16 %v3265
        %v4665 = vunpack.c.l.b16 %v3266
        %v4666 = vunpack.c.h.b16 %v3266
        %v4667 = vunpack.c.l.b16 %v3267
        %v4668 = vunpack.c.h.b16 %v3267
        %v4669 = vunpack.c.l.b16 %v3268
        %v4670 = vunpack.c.h.b16 %v3268
        %v4671 = vunpack.c.l.b16 %v3269
        %v4672 = vunpack.c.h.b16 %v3269
        %v4673 = vunpack.c.l.b16 %v3270
        %v4674 = vunpack.c.h.b16 %v3270
        %v4675 = vunpack.c.l.b16 %v3271
        %v4676 = vunpack.c.h.b16 %v3271
        %v4677 = vunpack.c.l.b16 %v3272
        %v4678 = vunpack.c.h.b16 %v3272
        %v4679 = vunpack.c.l.b16 %v3273
        %v4680 = vunpack.c.h.b16 %v3273
        %v4681 = vunpack.c.l.b16 %v3274
        %v4682 = vunpack.c.h.b16 %v3274
        %v4683 = vunpack.c.l.b16 %v3275
        %v4684 = vunpack.c.h.b16 %v3275
        %v4685 = vunpack.c.l.b16 %v3276
        %v4686 = vunpack.c.h.b16 %v3276
        %v4687 = vunpack.c.l.b16 %v3277
        %v4688 = vunpack.c.h.b16 %v3277
        %v4689 = vunpack.c.l.b16 %v3278
        %v4690 = vunpack.c.h.b16 %v3278
        %v4691 = vunpack.c.l.b16 %v3279
        %v4692 = vunpack.c.h.b16 %v3279
        %v4693 = vunpack.c.l.b16 %v3280
        %v4694 = vunpack.c.h.b16 %v3280
        %v4695 = vunpack.c.l.b16 %v3281
        %v4696 = vunpack.c.h.b16 %v3281
        %v4697 = vunpack.c.l.b16 %v3282
        %v4698 = vunpack.c.h.b16 %v3282
        %v4699 = vunpack.c.l.b16 %v3283
        %v4700 = vunpack.c.h.b16 %v3283
        %v4701 = vunpack.c.l.b16 %v3284
        %v4702 = vunpack.c.h.b16 %v3284
        %v4703 = vunpack.c.l.b16 %v3285
        %v4704 = vunpack.c.h.b16 %v3285
        %v4705 = vunpack.c.l.b16 %v3286
        %v4706 = vunpack.c.h.b16 %v3286
        %v4707 = vunpack.c.l.b16 %v3287
        %v4708 = vunpack.c.h.b16 %v3287
        %v4709 = vunpack.c.l.b16 %v3288
        %v4710 = vunpack.c.h.b16 %v3288
        %v4711 = vunpack.c.l.b16 %v3289
        %v4712 = vunpack.c.h.b16 %v3289
        %v4713 = vunpack.c.l.b16 %v3290
        %v4714 = vunpack.c.h.b16 %v3290
        %v4715 = vunpack.c.l.b16 %v3291
        %v4716 = vunpack.c.h.b16 %v3291
        %v4717 = vunpack.c.l.b16 %v3292
        %v4718 = vunpack.c.h.b16 %v3292
        %v4719 = vunpack.c.l.b16 %v3293
        %v4720 = vunpack.c.h.b16 %v3293
        %v4721 = vunpack.c.l.b16 %v3294
        %v4722 = vunpack.c.h.b16 %v3294
        %v4723 = vunpack.c.l.b16 %v3295
        %v4724 = vunpack.c.h.b16 %v3295
        %v4725 = vunpack.c.l.b16 %v3296
        %v4726 = vunpack.c.h.b16 %v3296
        %v4727 = vunpack.c.l.b16 %v3297
        %v4728 = vunpack.c.h.b16 %v3297
        %v4729 = vunpack.c.l.b16 %v3298
        %v4730 = vunpack.c.h.b16 %v3298
        %v4731 = vunpack.c.l.b16 %v3299
        %v4732 = vunpack.c.h.b16 %v3299
        %v4733 = vunpack.c.l.b16 %v3300
        %v4734 = vunpack.c.h.b16 %v3300
        %v4735 = vunpack.c.l.b16 %v3301
        %v4736 = vunpack.c.h.b16 %v3301
        %v4737 = vunpack.c.l.b16 %v3302
        %v4738 = vunpack.c.h.b16 %v3302
        %v4739 = vunpack.c.l.b16 %v3303
        %v4740 = vunpack.c.h.b16 %v3303
        %v4741 = vunpack.c.l.b16 %v3304
        %v4742 = vunpack.c.h.b16 %v3304
        %v4743 = vunpack.c.l.b16 %v3305
        %v4744 = vunpack.c.h.b16 %v3305
        %v4745 = vunpack.c.l.b16 %v3306
        %v4746 = vunpack.c.h.b16 %v3306
        %v4747 = vunpack.c.l.b16 %v3307
        %v4748 = vunpack.c.h.b16 %v3307
        %v4749 = vunpack.c.l.b16 %v3308
        %v4750 = vunpack.c.h.b16 %v3308
        %v4751 = vunpack.c.l.b16 %v3309
        %v4752 = vunpack.c.h.b16 %v3309
        %v4753 = vunpack.c.l.b16 %v3310
        %v4754 = vunpack.c.h.b16 %v3310
        %v4755 = vunpack.c.l.b16 %v3311
        %v4756 = vunpack.c.h.b16 %v3311
        %v4757 = vunpack.c.l.b16 %v3312
        %v4758 = vunpack.c.h.b16 %v3312
        %v4759 = vunpack.c.l.b16 %v3313
        %v4760 = vunpack.c.h.b16 %v3313
        %v4761 = vunpack.c.l.b16 %v3314
        %v4762 = vunpack.c.h.b16 %v3314
        %v4763 = vunpack.c.l.b16 %v3315
        %v4764 = vunpack.c.h.b16 %v3315
        %v4765 = vunpack.c.l.b16 %v3316
        %v4766 = vunpack.c.h.b16 %v3316
        %v4767 = vunpack.c.l.b16 %v3317
        %v4768 = vunpack.c.h.b16 %v3317
        %v4769 = vunpack.c.l.b16 %v3318
        %v4770 = vunpack.c.h.b16 %v3318
        %v4771 = vunpack.c.l.b16 %v3319
        %v4772 = vunpack.c.h.b16 %v3319
        %v4773 = vunpack.c.l.b16 %v3320
        %v4774 = vunpack.c.h.b16 %v3320
        %v4775 = vunpack.c.l.b16 %v3321
        %v4776 = vunpack.c.h.b16 %v3321
        %v4777 = vunpack.c.l.b16 %v3322
        %v4778 = vunpack.c.h.b16 %v3322
        %v4779 = vunpack.c.l.b16 %v3323
        %v4780 = vunpack.c.h.b16 %v3323
        %v4781 = vunpack.c.l.b16 %v3324
        %v4782 = vunpack.c.h.b16 %v3324
        %v4783 = vunpack.c.l.b16 %v3325
        %v4784 = vunpack.c.h.b16 %v3325
        %v4785 = vunpack.c.l.b16 %v3326
        %v4786 = vunpack.c.h.b16 %v3326
        %v4787 = vunpack.c.l.b16 %v3327
        %v4788 = vunpack.c.h.b16 %v3327
        %v4789 = vunpack.c.l.b16 %v3328
        %v4790 = vunpack.c.h.b16 %v3328
        %v4791 = vunpack.c.l.b16 %v3329
        %v4792 = vunpack.c.h.b16 %v3329
        %v4793 = vunpack.c.l.b16 %v3330
        %v4794 = vunpack.c.h.b16 %v3330
        %v4795 = vunpack.c.l.b16 %v3331
        %v4796 = vunpack.c.h.b16 %v3331
        %v4797 = vunpack.c.l.b16 %v3332
        %v4798 = vunpack.c.h.b16 %v3332
        %v4799 = vunpack.c.l.b16 %v3333
        %v4800 = vunpack.c.h.b16 %v3333
        %v4801 = vunpack.c.l.b16 %v3334
        %v4802 = vunpack.c.h.b16 %v3334
        %v4803 = vunpack.c.l.b16 %v3335
        %v4804 = vunpack.c.h.b16 %v3335
        %v4805 = vunpack.c.l.b16 %v3336
        %v4806 = vunpack.c.h.b16 %v3336
        %v4807 = vunpack.c.l.b16 %v3337
        %v4808 = vunpack.c.h.b16 %v3337
        %v4809 = vunpack.c.l.b16 %v3338
        %v4810 = vunpack.c.h.b16 %v3338
        %v4811 = vunpack.c.l.b16 %v3339
        %v4812 = vunpack.c.h.b16 %v3339
        %v4813 = vunpack.c.l.b16 %v3340
        %v4814 = vunpack.c.h.b16 %v3340
        %v4815 = vunpack.c.l.b16 %v3341
        %v4816 = vunpack.c.h.b16 %v3341
        %v4817 = vunpack.c.l.b16 %v3342
        %v4818 = vunpack.c.h.b16 %v3342
        %v4819 = vunpack.c.l.b16 %v3343
        %v4820 = vunpack.c.h.b16 %v3343
        %v4821 = vunpack.c.l.b16 %v3344
        %v4822 = vunpack.c.h.b16 %v3344
        %v4823 = vunpack.c.l.b16 %v3345
        %v4824 = vunpack.c.h.b16 %v3345
        %v4825 = vunpack.c.l.b16 %v3346
        %v4826 = vunpack.c.h.b16 %v3346
        %v4827 = vunpack.c.l.b16 %v3347
        %v4828 = vunpack.c.h.b16 %v3347
        %v4829 = vunpack.c.l.b16 %v3348
        %v4830 = vunpack.c.h.b16 %v3348
        %v4831 = vunpack.c.l.b16 %v3349
        %v4832 = vunpack.c.h.b16 %v3349
        %v4833 = vunpack.c.l.b16 %v3350
        %v4834 = vunpack.c.h.b16 %v3350
        %v4835 = vunpack.c.l.b16 %v3351
        %v4836 = vunpack.c.h.b16 %v3351
        %v4837 = vunpack.c.l.b16 %v3352
        %v4838 = vunpack.c.h.b16 %v3352
        %v4839 = vunpack.c.l.b16 %v3353
        %v4840 = vunpack.c.h.b16 %v3353
        %v4841 = vunpack.c.l.b16 %v3354
        %v4842 = vunpack.c.h.b16 %v3354
        %v4843 = vunpack.c.l.b16 %v3355
        %v4844 = vunpack.c.h.b16 %v3355
        %v4845 = vunpack.c.l.b16 %v3356
        %v4846 = vunpack.c.h.b16 %v3356
        %v4847 = vunpack.c.l.b16 %v3357
        %v4848 = vunpack.c.h.b16 %v3357
        %v4849 = vunpack.c.l.b16 %v3358
        %v4850 = vunpack.c.h.b16 %v3358
        %v4851 = vunpack.c.l.b16 %v3359
        %v4852 = vunpack.c.h.b16 %v3359
        %v4853 = vunpack.c.l.b16 %v3360
        %v4854 = vunpack.c.h.b16 %v3360
        %v4855 = vunpack.c.l.b16 %v3361
        %v4856 = vunpack.c.h.b16 %v3361
        %v4857 = vunpack.c.l.b16 %v3362
        %v4858 = vunpack.c.h.b16 %v3362
        %v4859 = vunpack.c.l.b16 %v3363
        %v4860 = vunpack.c.h.b16 %v3363
        %v4861 = vunpack.c.l.b16 %v3364
        %v4862 = vunpack.c.h.b16 %v3364
        %v4863 = vunpack.c.l.b16 %v3365
        %v4864 = vunpack.c.h.b16 %v3365
        %v4865 = vunpack.c.l.b16 %v3366
        %v4866 = vunpack.c.h.b16 %v3366
        %v4867 = vunpack.c.l.b16 %v3367
        %v4868 = vunpack.c.h.b16 %v3367
        %v4869 = vunpack.c.l.b16 %v3368
        %v4870 = vunpack.c.h.b16 %v3368
        %v4871 = vunpack.c.l.b16 %v3369
        %v4872 = vunpack.c.h.b16 %v3369
        %v4873 = vunpack.c.l.b16 %v3370
        %v4874 = vunpack.c.h.b16 %v3370
        %v4875 = vunpack.c.l.b16 %v3371
        %v4876 = vunpack.c.h.b16 %v3371
        %v4877 = vunpack.c.l.b16 %v3372
        %v4878 = vunpack.c.h.b16 %v3372
        %v4879 = vunpack.c.l.b16 %v3373
        %v4880 = vunpack.c.h.b16 %v3373
        %v4881 = vunpack.c.l.b16 %v3374
        %v4882 = vunpack.c.h.b16 %v3374
        %v4883 = vunpack.c.l.b16 %v3375
        %v4884 = vunpack.c.h.b16 %v3375
        %v4885 = vunpack.c.l.b16 %v3376
        %v4886 = vunpack.c.h.b16 %v3376
        %v4887 = vunpack.c.l.b16 %v3377
        %v4888 = vunpack.c.h.b16 %v3377
        %v4889 = vunpack.c.l.b16 %v3378
        %v4890 = vunpack.c.h.b16 %v3378
        %v4891 = vunpack.c.l.b16 %v3379
        %v4892 = vunpack.c.h.b16 %v3379
        %v4893 = vunpack.c.l.b16 %v3380
        %v4894 = vunpack.c.h.b16 %v3380
        %v4895 = vunpack.c.l.b16 %v3381
        %v4896 = vunpack.c.h.b16 %v3381
        %v4897 = vunpack.c.l.b16 %v3382
        %v4898 = vunpack.c.h.b16 %v3382
        %v4899 = vunpack.c.l.b16 %v3383
        %v4900 = vunpack.c.h.b16 %v3383
        %v4901 = vunpack.c.l.b16 %v3384
        %v4902 = vunpack.c.h.b16 %v3384
        %v4903 = vunpack.c.l.b16 %v3385
        %v4904 = vunpack.c.h.b16 %v3385
        %v4905 = vunpack.c.l.b16 %v3386
        %v4906 = vunpack.c.h.b16 %v3386
        %v4907 = vunpack.c.l.b16 %v3387
        %v4908 = vunpack.c.h.b16 %v3387
        %v4909 = vunpack.c.l.b16 %v3388
        %v4910 = vunpack.c.h.b16 %v3388
        %v4911 = vunpack.c.l.b16 %v3389
        %v4912 = vunpack.c.h.b16 %v3389
        %v4913 = vunpack.c.l.b16 %v3390
        %v4914 = vunpack.c.h.b16 %v3390
        %v4915 = vunpack.c.l.b16 %v3391
        %v4916 = vunpack.c.h.b16 %v3391
        %v4917 = vunpack.c.l.b16 %v3392
        %v4918 = vunpack.c.h.b16 %v3392
        %v4919 = vunpack.c.l.b16 %v3393
        %v4920 = vunpack.c.h.b16 %v3393
        %v4921 = vunpack.c.l.b16 %v3394
        %v4922 = vunpack.c.h.b16 %v3394
        %v4923 = vunpack.c.l.b16 %v3395
        %v4924 = vunpack.c.h.b16 %v3395
        %v4925 = vunpack.c.l.b16 %v3396
        %v4926 = vunpack.c.h.b16 %v3396
        %v4927 = vunpack.c.l.b16 %v3397
        %v4928 = vunpack.c.h.b16 %v3397
        %v4929 = vunpack.c.l.b16 %v3398
        %v4930 = vunpack.c.h.b16 %v3398
        %v4931 = vunpack.c.l.b16 %v3399
        %v4932 = vunpack.c.h.b16 %v3399
        %v4933 = vunpack.c.l.b16 %v3400
        %v4934 = vunpack.c.h.b16 %v3400
        %v4935 = vunpack.c.l.b16 %v3401
        %v4936 = vunpack.c.h.b16 %v3401
        %v4937 = vunpack.c.l.b16 %v3402
        %v4938 = vunpack.c.h.b16 %v3402
        %v4939 = vunpack.c.l.b16 %v3403
        %v4940 = vunpack.c.h.b16 %v3403
        %v4941 = vunpack.c.l.b16 %v3404
        %v4942 = vunpack.c.h.b16 %v3404
        %v4943 = vunpack.c.l.b16 %v3405
        %v4944 = vunpack.c.h.b16 %v3405
        %v4945 = vunpack.c.l.b16 %v3406
        %v4946 = vunpack.c.h.b16 %v3406
        %v4947 = vunpack.c.l.b16 %v3407
        %v4948 = vunpack.c.h.b16 %v3407
        %v4949 = vunpack.c.l.b16 %v3408
        %v4950 = vunpack.c.h.b16 %v3408
        %v4951 = vunpack.c.l.b16 %v3409
        %v4952 = vunpack.c.h.b16 %v3409
        %v4953 = vunpack.c.l.b16 %v3410
        %v4954 = vunpack.c.h.b16 %v3410
        %v4955 = vunpack.c.l.b16 %v3411
        %v4956 = vunpack.c.h.b16 %v3411
        %v4957 = vunpack.c.l.b16 %v3412
        %v4958 = vunpack.c.h.b16 %v3412
        %v4959 = vunpack.c.l.b16 %v3413
        %v4960 = vunpack.c.h.b16 %v3413
        %v4961 = vunpack.c.l.b16 %v3414
        %v4962 = vunpack.c.h.b16 %v3414
        %v4963 = vunpack.c.l.b16 %v3415
        %v4964 = vunpack.c.h.b16 %v3415
        %v4965 = vunpack.c.l.b16 %v3416
        %v4966 = vunpack.c.h.b16 %v3416
        %v4967 = vunpack.c.l.b16 %v3417
        %v4968 = vunpack.c.h.b16 %v3417
        %v4969 = vunpack.c.l.b16 %v3418
        %v4970 = vunpack.c.h.b16 %v3418
        %v4971 = vunpack.c.l.b16 %v3419
        %v4972 = vunpack.c.h.b16 %v3419
        %v4973 = vunpack.c.l.b16 %v3420
        %v4974 = vunpack.c.h.b16 %v3420
        %v4975 = vpack.c.b16 %v3959, %v3951
        %v4976 = vpack.c.b16 %v3960, %v3952
        %v4977 = vpack.c.b16 %v3961, %v3953
        %v4978 = vpack.c.b16 %v3962, %v3954
        %v4979 = vpack.c.b16 %v3963, %v3955
        %v4980 = vpack.c.b16 %v3964, %v3956
        %v4981 = vpack.c.b16 %v3965, %v3957
        %v4982 = vpack.c.b16 %v3966, %v3958
        %v4983 = vpack.c.b16 %v3975, %v3967
        %v4984 = vpack.c.b16 %v3976, %v3968
        %v4985 = vpack.c.b16 %v3977, %v3969
        %v4986 = vpack.c.b16 %v3978, %v3970
        %v4987 = vpack.c.b16 %v3979, %v3971
        %v4988 = vpack.c.b16 %v3980, %v3972
        %v4989 = vpack.c.b16 %v3981, %v3973
        %v4990 = vpack.c.b16 %v3982, %v3974
        %v4991 = vpack.c.b16 %v3991, %v3983
        %v4992 = vpack.c.b16 %v3992, %v3984
        %v4993 = vpack.c.b16 %v3993, %v3985
        %v4994 = vpack.c.b16 %v3994, %v3986
        %v4995 = vpack.c.b16 %v3995, %v3987
        %v4996 = vpack.c.b16 %v3996, %v3988
        %v4997 = vpack.c.b16 %v3997, %v3989
        %v4998 = vpack.c.b16 %v3998, %v3990
        %v4999 = vpack.c.b16 %v4007, %v3999
        %v5000 = vpack.c.b16 %v4008, %v4000
        %v5001 = vpack.c.b16 %v4009, %v4001
        %v5002 = vpack.c.b16 %v4010, %v4002
        %v5003 = vpack.c.b16 %v4011, %v4003
        %v5004 = vpack.c.b16 %v4012, %v4004
        %v5005 = vpack.c.b16 %v4013, %v4005
        %v5006 = vpack.c.b16 %v4014, %v4006
        %v5007 = vpack.c.b16 %v4023, %v4015
        %v5008 = vpack.c.b16 %v4024, %v4016
        %v5009 = vpack.c.b16 %v4025, %v4017
        %v5010 = vpack.c.b16 %v4026, %v4018
        %v5011 = vpack.c.b16 %v4027, %v4019
        %v5012 = vpack.c.b16 %v4028, %v4020
        %v5013 = vpack.c.b16 %v4029, %v4021
        %v5014 = vpack.c.b16 %v4030, %v4022
        %v5015 = vpack.c.b16 %v4039, %v4031
        %v5016 = vpack.c.b16 %v4040, %v4032
        %v5017 = vpack.c.b16 %v4041, %v4033
        %v5018 = vpack.c.b16 %v4042, %v4034
        %v5019 = vpack.c.b16 %v4043, %v4035
        %v5020 = vpack.c.b16 %v4044, %v4036
        %v5021 = vpack.c.b16 %v4045, %v4037
        %v5022 = vpack.c.b16 %v4046, %v4038
        %v5023 = vpack.c.b16 %v4055, %v4047
        %v5024 = vpack.c.b16 %v4056, %v4048
        %v5025 = vpack.c.b16 %v4057, %v4049
        %v5026 = vpack.c.b16 %v4058, %v4050
        %v5027 = vpack.c.b16 %v4059, %v4051
        %v5028 = vpack.c.b16 %v4060, %v4052
        %v5029 = vpack.c.b16 %v4061, %v4053
        %v5030 = vpack.c.b16 %v4062, %v4054
        %v5031 = vpack.c.b16 %v4071, %v4063
        %v5032 = vpack.c.b16 %v4072, %v4064
        %v5033 = vpack.c.b16 %v4073, %v4065
        %v5034 = vpack.c.b16 %v4074, %v4066
        %v5035 = vpack.c.b16 %v4075, %v4067
        %v5036 = vpack.c.b16 %v4076, %v4068
        %v5037 = vpack.c.b16 %v4077, %v4069
        %v5038 = vpack.c.b16 %v4078, %v4070
        %v5039 = vpack.c.b16 %v4087, %v4079
        %v5040 = vpack.c.b16 %v4088, %v4080
        %v5041 = vpack.c.b16 %v4089, %v4081
        %v5042 = vpack.c.b16 %v4090, %v4082
        %v5043 = vpack.c.b16 %v4091, %v4083
        %v5044 = vpack.c.b16 %v4092, %v4084
        %v5045 = vpack.c.b16 %v4093, %v4085
        %v5046 = vpack.c.b16 %v4094, %v4086
        %v5047 = vpack.c.b16 %v4103, %v4095
        %v5048 = vpack.c.b16 %v4104, %v4096
        %v5049 = vpack.c.b16 %v4105, %v4097
        %v5050 = vpack.c.b16 %v4106, %v4098
        %v5051 = vpack.c.b16 %v4107, %v4099
        %v5052 = vpack.c.b16 %v4108, %v4100
        %v5053 = vpack.c.b16 %v4109, %v4101
        %v5054 = vpack.c.b16 %v4110, %v4102
        %v5055 = vpack.c.b16 %v4119, %v4111
        %v5056 = vpack.c.b16 %v4120, %v4112
        %v5057 = vpack.c.b16 %v4121, %v4113
        %v5058 = vpack.c.b16 %v4122, %v4114
        %v5059 = vpack.c.b16 %v4123, %v4115
        %v5060 = vpack.c.b16 %v4124, %v4116
        %v5061 = vpack.c.b16 %v4125, %v4117
        %v5062 = vpack.c.b16 %v4126, %v4118
        %v5063 = vpack.c.b16 %v4135, %v4127
        %v5064 = vpack.c.b16 %v4136, %v4128
        %v5065 = vpack.c.b16 %v4137, %v4129
        %v5066 = vpack.c.b16 %v4138, %v4130
        %v5067 = vpack.c.b16 %v4139, %v4131
        %v5068 = vpack.c.b16 %v4140, %v4132
        %v5069 = vpack.c.b16 %v4141, %v4133
        %v5070 = vpack.c.b16 %v4142, %v4134
        %v5071 = vpack.c.b16 %v4151, %v4143
        %v5072 = vpack.c.b16 %v4152, %v4144
        %v5073 = vpack.c.b16 %v4153, %v4145
        %v5074 = vpack.c.b16 %v4154, %v4146
        %v5075 = vpack.c.b16 %v4155, %v4147
        %v5076 = vpack.c.b16 %v4156, %v4148
        %v5077 = vpack.c.b16 %v4157, %v4149
        %v5078 = vpack.c.b16 %v4158, %v4150
        %v5079 = vpack.c.b16 %v4167, %v4159
        %v5080 = vpack.c.b16 %v4168, %v4160
        %v5081 = vpack.c.b16 %v4169, %v4161
        %v5082 = vpack.c.b16 %v4170, %v4162
        %v5083 = vpack.c.b16 %v4171, %v4163
        %v5084 = vpack.c.b16 %v4172, %v4164
        %v5085 = vpack.c.b16 %v4173, %v4165
        %v5086 = vpack.c.b16 %v4174, %v4166
        %v5087 = vpack.c.b16 %v4183, %v4175
        %v5088 = vpack.c.b16 %v4184, %v4176
        %v5089 = vpack.c.b16 %v4185, %v4177
        %v5090 = vpack.c.b16 %v4186, %v4178
        %v5091 = vpack.c.b16 %v4187, %v4179
        %v5092 = vpack.c.b16 %v4188, %v4180
        %v5093 = vpack.c.b16 %v4189, %v4181
        %v5094 = vpack.c.b16 %v4190, %v4182
        %v5095 = vpack.c.b16 %v4199, %v4191
        %v5096 = vpack.c.b16 %v4200, %v4192
        %v5097 = vpack.c.b16 %v4201, %v4193
        %v5098 = vpack.c.b16 %v4202, %v4194
        %v5099 = vpack.c.b16 %v4203, %v4195
        %v5100 = vpack.c.b16 %v4204, %v4196
        %v5101 = vpack.c.b16 %v4205, %v4197
        %v5102 = vpack.c.b16 %v4206, %v4198
        %v5103 = vpack.c.b16 %v4215, %v4207
        %v5104 = vpack.c.b16 %v4216, %v4208
        %v5105 = vpack.c.b16 %v4217, %v4209
        %v5106 = vpack.c.b16 %v4218, %v4210
        %v5107 = vpack.c.b16 %v4219, %v4211
        %v5108 = vpack.c.b16 %v4220, %v4212
        %v5109 = vpack.c.b16 %v4221, %v4213
        %v5110 = vpack.c.b16 %v4222, %v4214
        %v5111 = vpack.c.b16 %v4231, %v4223
        %v5112 = vpack.c.b16 %v4232, %v4224
        %v5113 = vpack.c.b16 %v4233, %v4225
        %v5114 = vpack.c.b16 %v4234, %v4226
        %v5115 = vpack.c.b16 %v4235, %v4227
        %v5116 = vpack.c.b16 %v4236, %v4228
        %v5117 = vpack.c.b16 %v4237, %v4229
        %v5118 = vpack.c.b16 %v4238, %v4230
        %v5119 = vpack.c.b16 %v4247, %v4239
        %v5120 = vpack.c.b16 %v4248, %v4240
        %v5121 = vpack.c.b16 %v4249, %v4241
        %v5122 = vpack.c.b16 %v4250, %v4242
        %v5123 = vpack.c.b16 %v4251, %v4243
        %v5124 = vpack.c.b16 %v4252, %v4244
        %v5125 = vpack.c.b16 %v4253, %v4245
        %v5126 = vpack.c.b16 %v4254, %v4246
        %v5127 = vpack.c.b16 %v4263, %v4255
        %v5128 = vpack.c.b16 %v4264, %v4256
        %v5129 = vpack.c.b16 %v4265, %v4257
        %v5130 = vpack.c.b16 %v4266, %v4258
        %v5131 = vpack.c.b16 %v4267, %v4259
        %v5132 = vpack.c.b16 %v4268, %v4260
        %v5133 = vpack.c.b16 %v4269, %v4261
        %v5134 = vpack.c.b16 %v4270, %v4262
        %v5135 = vpack.c.b16 %v4279, %v4271
        %v5136 = vpack.c.b16 %v4280, %v4272
        %v5137 = vpack.c.b16 %v4281, %v4273
        %v5138 = vpack.c.b16 %v4282, %v4274
        %v5139 = vpack.c.b16 %v4283, %v4275
        %v5140 = vpack.c.b16 %v4284, %v4276
        %v5141 = vpack.c.b16 %v4285, %v4277
        %v5142 = vpack.c.b16 %v4286, %v4278
        %v5143 = vpack.c.b16 %v4295, %v4287
        %v5144 = vpack.c.b16 %v4296, %v4288
        %v5145 = vpack.c.b16 %v4297, %v4289
        %v5146 = vpack.c.b16 %v4298, %v4290
        %v5147 = vpack.c.b16 %v4299, %v4291
        %v5148 = vpack.c.b16 %v4300, %v4292
        %v5149 = vpack.c.b16 %v4301, %v4293
        %v5150 = vpack.c.b16 %v4302, %v4294
        %v5151 = vpack.c.b16 %v4311, %v4303
        %v5152 = vpack.c.b16 %v4312, %v4304
        %v5153 = vpack.c.b16 %v4313, %v4305
        %v5154 = vpack.c.b16 %v4314, %v4306
        %v5155 = vpack.c.b16 %v4315, %v4307
        %v5156 = vpack.c.b16 %v4316, %v4308
        %v5157 = vpack.c.b16 %v4317, %v4309
        %v5158 = vpack.c.b16 %v4318, %v4310
        %v5159 = vpack.c.b16 %v4327, %v4319
        %v5160 = vpack.c.b16 %v4328, %v4320
        %v5161 = vpack.c.b16 %v4329, %v4321
        %v5162 = vpack.c.b16 %v4330, %v4322
        %v5163 = vpack.c.b16 %v4331, %v4323
        %v5164 = vpack.c.b16 %v4332, %v4324
        %v5165 = vpack.c.b16 %v4333, %v4325
        %v5166 = vpack.c.b16 %v4334, %v4326
        %v5167 = vpack.c.b16 %v4343, %v4335
        %v5168 = vpack.c.b16 %v4344, %v4336
        %v5169 = vpack.c.b16 %v4345, %v4337
        %v5170 = vpack.c.b16 %v4346, %v4338
        %v5171 = vpack.c.b16 %v4347, %v4339
        %v5172 = vpack.c.b16 %v4348, %v4340
        %v5173 = vpack.c.b16 %v4349, %v4341
        %v5174 = vpack.c.b16 %v4350, %v4342
        %v5175 = vpack.c.b16 %v4359, %v4351
        %v5176 = vpack.c.b16 %v4360, %v4352
        %v5177 = vpack.c.b16 %v4361, %v4353
        %v5178 = vpack.c.b16 %v4362, %v4354
        %v5179 = vpack.c.b16 %v4363, %v4355
        %v5180 = vpack.c.b16 %v4364, %v4356
        %v5181 = vpack.c.b16 %v4365, %v4357
        %v5182 = vpack.c.b16 %v4366, %v4358
        %v5183 = vpack.c.b16 %v4375, %v4367
        %v5184 = vpack.c.b16 %v4376, %v4368
        %v5185 = vpack.c.b16 %v4377, %v4369
        %v5186 = vpack.c.b16 %v4378, %v4370
        %v5187 = vpack.c.b16 %v4379, %v4371
        %v5188 = vpack.c.b16 %v4380, %v4372
        %v5189 = vpack.c.b16 %v4381, %v4373
        %v5190 = vpack.c.b16 %v4382, %v4374
        %v5191 = vpack.c.b16 %v4391, %v4383
        %v5192 = vpack.c.b16 %v4392, %v4384
        %v5193 = vpack.c.b16 %v4393, %v4385
        %v5194 = vpack.c.b16 %v4394, %v4386
        %v5195 = vpack.c.b16 %v4395, %v4387
        %v5196 = vpack.c.b16 %v4396, %v4388
        %v5197 = vpack.c.b16 %v4397, %v4389
        %v5198 = vpack.c.b16 %v4398, %v4390
        %v5199 = vpack.c.b16 %v4407, %v4399
        %v5200 = vpack.c.b16 %v4408, %v4400
        %v5201 = vpack.c.b16 %v4409, %v4401
        %v5202 = vpack.c.b16 %v4410, %v4402
        %v5203 = vpack.c.b16 %v4411, %v4403
        %v5204 = vpack.c.b16 %v4412, %v4404
        %v5205 = vpack.c.b16 %v4413, %v4405
        %v5206 = vpack.c.b16 %v4414, %v4406
        %v5207 = vpack.c.b16 %v4423, %v4415
        %v5208 = vpack.c.b16 %v4424, %v4416
        %v5209 = vpack.c.b16 %v4425, %v4417
        %v5210 = vpack.c.b16 %v4426, %v4418
        %v5211 = vpack.c.b16 %v4427, %v4419
        %v5212 = vpack.c.b16 %v4428, %v4420
        %v5213 = vpack.c.b16 %v4429, %v4421
        %v5214 = vpack.c.b16 %v4430, %v4422
        %v5215 = vpack.c.b16 %v4439, %v4431
        %v5216 = vpack.c.b16 %v4440, %v4432
        %v5217 = vpack.c.b16 %v4441, %v4433
        %v5218 = vpack.c.b16 %v4442, %v4434
        %v5219 = vpack.c.b16 %v4443, %v4435
        %v5220 = vpack.c.b16 %v4444, %v4436
        %v5221 = vpack.c.b16 %v4445, %v4437
        %v5222 = vpack.c.b16 %v4446, %v4438
        %v5223 = vpack.c.b16 %v4455, %v4447
        %v5224 = vpack.c.b16 %v4456, %v4448
        %v5225 = vpack.c.b16 %v4457, %v4449
        %v5226 = vpack.c.b16 %v4458, %v4450
        %v5227 = vpack.c.b16 %v4459, %v4451
        %v5228 = vpack.c.b16 %v4460, %v4452
        %v5229 = vpack.c.b16 %v4461, %v4453
        %v5230 = vpack.c.b16 %v4462, %v4454
        %v5231 = vpack.c.b16 %v4471, %v4463
        %v5232 = vpack.c.b16 %v4472, %v4464
        %v5233 = vpack.c.b16 %v4473, %v4465
        %v5234 = vpack.c.b16 %v4474, %v4466
        %v5235 = vpack.c.b16 %v4475, %v4467
        %v5236 = vpack.c.b16 %v4476, %v4468
        %v5237 = vpack.c.b16 %v4477, %v4469
        %v5238 = vpack.c.b16 %v4478, %v4470
        %v5239 = vpack.c.b16 %v4487, %v4479
        %v5240 = vpack.c.b16 %v4488, %v4480
        %v5241 = vpack.c.b16 %v4489, %v4481
        %v5242 = vpack.c.b16 %v4490, %v4482
        %v5243 = vpack.c.b16 %v4491, %v4483
        %v5244 = vpack.c.b16 %v4492, %v4484
        %v5245 = vpack.c.b16 %v4493, %v4485
        %v5246 = vpack.c.b16 %v4494, %v4486
        %v5247 = vpack.c.b16 %v4503, %v4495
        %v5248 = vpack.c.b16 %v4504, %v4496
        %v5249 = vpack.c.b16 %v4505, %v4497
        %v5250 = vpack.c.b16 %v4506, %v4498
        %v5251 = vpack.c.b16 %v4507, %v4499
        %v5252 = vpack.c.b16 %v4508, %v4500
        %v5253 = vpack.c.b16 %v4509, %v4501
        %v5254 = vpack.c.b16 %v4510, %v4502
        %v5255 = vpack.c.b16 %v4519, %v4511
        %v5256 = vpack.c.b16 %v4520, %v4512
        %v5257 = vpack.c.b16 %v4521, %v4513
        %v5258 = vpack.c.b16 %v4522, %v4514
        %v5259 = vpack.c.b16 %v4523, %v4515
        %v5260 = vpack.c.b16 %v4524, %v4516
        %v5261 = vpack.c.b16 %v4525, %v4517
        %v5262 = vpack.c.b16 %v4526, %v4518
        %v5263 = vpack.c.b16 %v4535, %v4527
        %v5264 = vpack.c.b16 %v4536, %v4528
        %v5265 = vpack.c.b16 %v4537, %v4529
        %v5266 = vpack.c.b16 %v4538, %v4530
        %v5267 = vpack.c.b16 %v4539, %v4531
        %v5268 = vpack.c.b16 %v4540, %v4532
        %v5269 = vpack.c.b16 %v4541, %v4533
        %v5270 = vpack.c.b16 %v4542, %v4534
        %v5271 = vpack.c.b16 %v4551, %v4543
        %v5272 = vpack.c.b16 %v4552, %v4544
        %v5273 = vpack.c.b16 %v4553, %v4545
        %v5274 = vpack.c.b16 %v4554, %v4546
        %v5275 = vpack.c.b16 %v4555, %v4547
        %v5276 = vpack.c.b16 %v4556, %v4548
        %v5277 = vpack.c.b16 %v4557, %v4549
        %v5278 = vpack.c.b16 %v4558, %v4550
        %v5279 = vpack.c.b16 %v4567, %v4559
        %v5280 = vpack.c.b16 %v4568, %v4560
        %v5281 = vpack.c.b16 %v4569, %v4561
        %v5282 = vpack.c.b16 %v4570, %v4562
        %v5283 = vpack.c.b16 %v4571, %v4563
        %v5284 = vpack.c.b16 %v4572, %v4564
        %v5285 = vpack.c.b16 %v4573, %v4565
        %v5286 = vpack.c.b16 %v4574, %v4566
        %v5287 = vpack.c.b16 %v4583, %v4575
        %v5288 = vpack.c.b16 %v4584, %v4576
        %v5289 = vpack.c.b16 %v4585, %v4577
        %v5290 = vpack.c.b16 %v4586, %v4578
        %v5291 = vpack.c.b16 %v4587, %v4579
        %v5292 = vpack.c.b16 %v4588, %v4580
        %v5293 = vpack.c.b16 %v4589, %v4581
        %v5294 = vpack.c.b16 %v4590, %v4582
        %v5295 = vpack.c.b16 %v4599, %v4591
        %v5296 = vpack.c.b16 %v4600, %v4592
        %v5297 = vpack.c.b16 %v4601, %v4593
        %v5298 = vpack.c.b16 %v4602, %v4594
        %v5299 = vpack.c.b16 %v4603, %v4595
        %v5300 = vpack.c.b16 %v4604, %v4596
        %v5301 = vpack.c.b16 %v4605, %v4597
        %v5302 = vpack.c.b16 %v4606, %v4598
        %v5303 = vpack.c.b16 %v4615, %v4607
        %v5304 = vpack.c.b16 %v4616, %v4608
        %v5305 = vpack.c.b16 %v4617, %v4609
        %v5306 = vpack.c.b16 %v4618, %v4610
        %v5307 = vpack.c.b16 %v4619, %v4611
        %v5308 = vpack.c.b16 %v4620, %v4612
        %v5309 = vpack.c.b16 %v4621, %v4613
        %v5310 = vpack.c.b16 %v4622, %v4614
        %v5311 = vpack.c.b16 %v4631, %v4623
        %v5312 = vpack.c.b16 %v4632, %v4624
        %v5313 = vpack.c.b16 %v4633, %v4625
        %v5314 = vpack.c.b16 %v4634, %v4626
        %v5315 = vpack.c.b16 %v4635, %v4627
        %v5316 = vpack.c.b16 %v4636, %v4628
        %v5317 = vpack.c.b16 %v4637, %v4629
        %v5318 = vpack.c.b16 %v4638, %v4630
        %v5319 = vpack.c.b16 %v4647, %v4639
        %v5320 = vpack.c.b16 %v4648, %v4640
        %v5321 = vpack.c.b16 %v4649, %v4641
        %v5322 = vpack.c.b16 %v4650, %v4642
        %v5323 = vpack.c.b16 %v4651, %v4643
        %v5324 = vpack.c.b16 %v4652, %v4644
        %v5325 = vpack.c.b16 %v4653, %v4645
        %v5326 = vpack.c.b16 %v4654, %v4646
        %v5327 = vpack.c.b16 %v4663, %v4655
        %v5328 = vpack.c.b16 %v4664, %v4656
        %v5329 = vpack.c.b16 %v4665, %v4657
        %v5330 = vpack.c.b16 %v4666, %v4658
        %v5331 = vpack.c.b16 %v4667, %v4659
        %v5332 = vpack.c.b16 %v4668, %v4660
        %v5333 = vpack.c.b16 %v4669, %v4661
        %v5334 = vpack.c.b16 %v4670, %v4662
        %v5335 = vpack.c.b16 %v4679, %v4671
        %v5336 = vpack.c.b16 %v4680, %v4672
        %v5337 = vpack.c.b16 %v4681, %v4673
        %v5338 = vpack.c.b16 %v4682, %v4674
        %v5339 = vpack.c.b16 %v4683, %v4675
        %v5340 = vpack.c.b16 %v4684, %v4676
        %v5341 = vpack.c.b16 %v4685, %v4677
        %v5342 = vpack.c.b16 %v4686, %v4678
        %v5343 = vpack.c.b16 %v4695, %v4687
        %v5344 = vpack.c.b16 %v4696, %v4688
        %v5345 = vpack.c.b16 %v4697, %v4689
        %v5346 = vpack.c.b16 %v4698, %v4690
        %v5347 = vpack.c.b16 %v4699, %v4691
        %v5348 = vpack.c.b16 %v4700, %v4692
        %v5349 = vpack.c.b16 %v4701, %v4693
        %v5350 = vpack.c.b16 %v4702, %v4694
        %v5351 = vpack.c.b16 %v4711, %v4703
        %v5352 = vpack.c.b16 %v4712, %v4704
        %v5353 = vpack.c.b16 %v4713, %v4705
        %v5354 = vpack.c.b16 %v4714, %v4706
        %v5355 = vpack.c.b16 %v4715, %v4707
        %v5356 = vpack.c.b16 %v4716, %v4708
        %v5357 = vpack.c.b16 %v4717, %v4709
        %v5358 = vpack.c.b16 %v4718, %v4710
        %v5359 = vpack.c.b16 %v4727, %v4719
        %v5360 = vpack.c.b16 %v4728, %v4720
        %v5361 = vpack.c.b16 %v4729, %v4721
        %v5362 = vpack.c.b16 %v4730, %v4722
        %v5363 = vpack.c.b16 %v4731, %v4723
        %v5364 = vpack.c.b16 %v4732, %v4724
        %v5365 = vpack.c.b16 %v4733, %v4725
        %v5366 = vpack.c.b16 %v4734, %v4726
        %v5367 = vpack.c.b16 %v4743, %v4735
        %v5368 = vpack.c.b16 %v4744, %v4736
        %v5369 = vpack.c.b16 %v4745, %v4737
        %v5370 = vpack.c.b16 %v4746, %v4738
        %v5371 = vpack.c.b16 %v4747, %v4739
        %v5372 = vpack.c.b16 %v4748, %v4740
        %v5373 = vpack.c.b16 %v4749, %v4741
        %v5374 = vpack.c.b16 %v4750, %v4742
        %v5375 = vpack.c.b16 %v4759, %v4751
        %v5376 = vpack.c.b16 %v4760, %v4752
        %v5377 = vpack.c.b16 %v4761, %v4753
        %v5378 = vpack.c.b16 %v4762, %v4754
        %v5379 = vpack.c.b16 %v4763, %v4755
        %v5380 = vpack.c.b16 %v4764, %v4756
        %v5381 = vpack.c.b16 %v4765, %v4757
        %v5382 = vpack.c.b16 %v4766, %v4758
        %v5383 = vpack.c.b16 %v4775, %v4767
        %v5384 = vpack.c.b16 %v4776, %v4768
        %v5385 = vpack.c.b16 %v4777, %v4769
        %v5386 = vpack.c.b16 %v4778, %v4770
        %v5387 = vpack.c.b16 %v4779, %v4771
        %v5388 = vpack.c.b16 %v4780, %v4772
        %v5389 = vpack.c.b16 %v4781, %v4773
        %v5390 = vpack.c.b16 %v4782, %v4774
        %v5391 = vpack.c.b16 %v4791, %v4783
        %v5392 = vpack.c.b16 %v4792, %v4784
        %v5393 = vpack.c.b16 %v4793, %v4785
        %v5394 = vpack.c.b16 %v4794, %v4786
        %v5395 = vpack.c.b16 %v4795, %v4787
        %v5396 = vpack.c.b16 %v4796, %v4788
        %v5397 = vpack.c.b16 %v4797, %v4789
        %v5398 = vpack.c.b16 %v4798, %v4790
        %v5399 = vpack.c.b16 %v4807, %v4799
        %v5400 = vpack.c.b16 %v4808, %v4800
        %v5401 = vpack.c.b16 %v4809, %v4801
        %v5402 = vpack.c.b16 %v4810, %v4802
        %v5403 = vpack.c.b16 %v4811, %v4803
        %v5404 = vpack.c.b16 %v4812, %v4804
        %v5405 = vpack.c.b16 %v4813, %v4805
        %v5406 = vpack.c.b16 %v4814, %v4806
        %v5407 = vpack.c.b16 %v4823, %v4815
        %v5408 = vpack.c.b16 %v4824, %v4816
        %v5409 = vpack.c.b16 %v4825, %v4817
        %v5410 = vpack.c.b16 %v4826, %v4818
        %v5411 = vpack.c.b16 %v4827, %v4819
        %v5412 = vpack.c.b16 %v4828, %v4820
        %v5413 = vpack.c.b16 %v4829, %v4821
        %v5414 = vpack.c.b16 %v4830, %v4822
        %v5415 = vpack.c.b16 %v4839, %v4831
        %v5416 = vpack.c.b16 %v4840, %v4832
        %v5417 = vpack.c.b16 %v4841, %v4833
        %v5418 = vpack.c.b16 %v4842, %v4834
        %v5419 = vpack.c.b16 %v4843, %v4835
        %v5420 = vpack.c.b16 %v4844, %v4836
        %v5421 = vpack.c.b16 %v4845, %v4837
        %v5422 = vpack.c.b16 %v4846, %v4838
        %v5423 = vpack.c.b16 %v4855, %v4847
        %v5424 = vpack.c.b16 %v4856, %v4848
        %v5425 = vpack.c.b16 %v4857, %v4849
        %v5426 = vpack.c.b16 %v4858, %v4850
        %v5427 = vpack.c.b16 %v4859, %v4851
        %v5428 = vpack.c.b16 %v4860, %v4852
        %v5429 = vpack.c.b16 %v4861, %v4853
        %v5430 = vpack.c.b16 %v4862, %v4854
        %v5431 = vpack.c.b16 %v4871, %v4863
        %v5432 = vpack.c.b16 %v4872, %v4864
        %v5433 = vpack.c.b16 %v4873, %v4865
        %v5434 = vpack.c.b16 %v4874, %v4866
        %v5435 = vpack.c.b16 %v4875, %v4867
        %v5436 = vpack.c.b16 %v4876, %v4868
        %v5437 = vpack.c.b16 %v4877, %v4869
        %v5438 = vpack.c.b16 %v4878, %v4870
        %v5439 = vpack.c.b16 %v4887, %v4879
        %v5440 = vpack.c.b16 %v4888, %v4880
        %v5441 = vpack.c.b16 %v4889, %v4881
        %v5442 = vpack.c.b16 %v4890, %v4882
        %v5443 = vpack.c.b16 %v4891, %v4883
        %v5444 = vpack.c.b16 %v4892, %v4884
        %v5445 = vpack.c.b16 %v4893, %v4885
        %v5446 = vpack.c.b16 %v4894, %v4886
        %v5447 = vpack.c.b16 %v4903, %v4895
        %v5448 = vpack.c.b16 %v4904, %v4896
        %v5449 = vpack.c.b16 %v4905, %v4897
        %v5450 = vpack.c.b16 %v4906, %v4898
        %v5451 = vpack.c.b16 %v4907, %v4899
        %v5452 = vpack.c.b16 %v4908, %v4900
        %v5453 = vpack.c.b16 %v4909, %v4901
        %v5454 = vpack.c.b16 %v4910, %v4902
        %v5455 = vpack.c.b16 %v4919, %v4911
        %v5456 = vpack.c.b16 %v4920, %v4912
        %v5457 = vpack.c.b16 %v4921, %v4913
        %v5458 = vpack.c.b16 %v4922, %v4914
        %v5459 = vpack.c.b16 %v4923, %v4915
        %v5460 = vpack.c.b16 %v4924, %v4916
        %v5461 = vpack.c.b16 %v4925, %v4917
        %v5462 = vpack.c.b16 %v4926, %v4918
        %v5463 = vpack.c.b16 %v4935, %v4927
        %v5464 = vpack.c.b16 %v4936, %v4928
        %v5465 = vpack.c.b16 %v4937, %v4929
        %v5466 = vpack.c.b16 %v4938, %v4930
        %v5467 = vpack.c.b16 %v4939, %v4931
        %v5468 = vpack.c.b16 %v4940, %v4932
        %v5469 = vpack.c.b16 %v4941, %v4933
        %v5470 = vpack.c.b16 %v4942, %v4934
        %v5471 = vpack.c.b16 %v4951, %v4943
        %v5472 = vpack.c.b16 %v4952, %v4944
        %v5473 = vpack.c.b16 %v4953, %v4945
        %v5474 = vpack.c.b16 %v4954, %v4946
        %v5475 = vpack.c.b16 %v4955, %v4947
        %v5476 = vpack.c.b16 %v4956, %v4948
        %v5477 = vpack.c.b16 %v4957, %v4949
        %v5478 = vpack.c.b16 %v4958, %v4950
        %v5479 = vpack.c.b16 %v4967, %v4959
        %v5480 = vpack.c.b16 %v4968, %v4960
        %v5481 = vpack.c.b16 %v4969, %v4961
        %v5482 = vpack.c.b16 %v4970, %v4962
        %v5483 = vpack.c.b16 %v4971, %v4963
        %v5484 = vpack.c.b16 %v4972, %v4964
        %v5485 = vpack.c.b16 %v4973, %v4965
        %v5486 = vpack.c.b16 %v4974, %v4966
        %5999 = vmatpush.bf16.msra.mxu0 %v5031
        %6000 = vmatpush.bf16.msra.mxu0 %v5023
        %6001 = vmatpush.bf16.msra.mxu0 %v5015
        %6002 = vmatpush.bf16.msra.mxu0 %v5007
        %6003 = vmatpush.bf16.msra.mxu0 %v4999
        %6004 = vmatpush.bf16.msra.mxu0 %v4991
        %6005 = vmatpush.bf16.msra.mxu0 %v4983
        %6006 = vmatpush.bf16.msra.mxu0 %v4975
        %6007 = vmatmul.bf16.gmra.mxu0 %v2845
        %v6008 = vpop.f32.mrf.mxu0
        %v6009 = vadd.f32 %v3423, %v6008
        %v6010 = vpop.f32.mrf.mxu0
        %v6011 = vadd.f32 %v3423, %v6010
        %6012 = vmatmul.bf16.gmra.mxu0 %v2853
        %v6013 = vpop.f32.mrf.mxu0
        %v6014 = vadd.f32 %v3423, %v6013
        %v6015 = vpop.f32.mrf.mxu0
        %v6016 = vadd.f32 %v3423, %v6015
        %6017 = vmatmul.bf16.gmra.mxu0 %v2861
        %v6018 = vpop.f32.mrf.mxu0
        %v6019 = vadd.f32 %v3423, %v6018
        %v6020 = vpop.f32.mrf.mxu0
        %v6021 = vadd.f32 %v3423, %v6020
        %6022 = vmatmul.bf16.gmra.mxu0 %v2869
        %v6023 = vpop.f32.mrf.mxu0
        %v6024 = vadd.f32 %v3423, %v6023
        %v6025 = vpop.f32.mrf.mxu0
        %v6026 = vadd.f32 %v3423, %v6025
        %6027 = vmatmul.bf16.gmra.mxu0 %v2877
        %v6028 = vpop.f32.mrf.mxu0
        %v6029 = vadd.f32 %v3423, %v6028
        %v6030 = vpop.f32.mrf.mxu0
        %v6031 = vadd.f32 %v3423, %v6030
        %6032 = vmatmul.bf16.gmra.mxu0 %v2885
        %v6033 = vpop.f32.mrf.mxu0
        %v6034 = vadd.f32 %v3423, %v6033
        %v6035 = vpop.f32.mrf.mxu0
        %v6036 = vadd.f32 %v3423, %v6035
        %6037 = vmatmul.bf16.gmra.mxu0 %v2893
        %v6038 = vpop.f32.mrf.mxu0
        %v6039 = vadd.f32 %v3423, %v6038
        %v6040 = vpop.f32.mrf.mxu0
        %v6041 = vadd.f32 %v3423, %v6040
        %6042 = vmatmul.bf16.gmra.mxu0 %v2901
        %v6043 = vpop.f32.mrf.mxu0
        %v6044 = vadd.f32 %v3423, %v6043
        %v6045 = vpop.f32.mrf.mxu0
        %v6046 = vadd.f32 %v3423, %v6045
        %6047 = vdwg.mxu0
        %6048 = vmatpush.bf16.msra.mxu0 %v5095
        %6049 = vmatpush.bf16.msra.mxu0 %v5087
        %6050 = vmatpush.bf16.msra.mxu0 %v5079
        %6051 = vmatpush.bf16.msra.mxu0 %v5071
        %6052 = vmatpush.bf16.msra.mxu0 %v5063
        %6053 = vmatpush.bf16.msra.mxu0 %v5055
        %6054 = vmatpush.bf16.msra.mxu0 %v5047
        %6055 = vmatpush.bf16.msra.mxu0 %v5039
        %6056 = vmatmul.bf16.gmra.mxu0 %v2846
        %v6057 = vpop.f32.mrf.mxu0
        %v6058 = vadd.f32 %v6009, %v6057
        %v6059 = vpop.f32.mrf.mxu0
        %v6060 = vadd.f32 %v6011, %v6059
        %6061 = vmatmul.bf16.gmra.mxu0 %v2854
        %v6062 = vpop.f32.mrf.mxu0
        %v6063 = vadd.f32 %v6014, %v6062
        %v6064 = vpop.f32.mrf.mxu0
        %v6065 = vadd.f32 %v6016, %v6064
        %6066 = vmatmul.bf16.gmra.mxu0 %v2862
        %v6067 = vpop.f32.mrf.mxu0
        %v6068 = vadd.f32 %v6019, %v6067
        %v6069 = vpop.f32.mrf.mxu0
        %v6070 = vadd.f32 %v6021, %v6069
        %6071 = vmatmul.bf16.gmra.mxu0 %v2870
        %v6072 = vpop.f32.mrf.mxu0
        %v6073 = vadd.f32 %v6024, %v6072
        %v6074 = vpop.f32.mrf.mxu0
        %v6075 = vadd.f32 %v6026, %v6074
        %6076 = vmatmul.bf16.gmra.mxu0 %v2878
        %v6077 = vpop.f32.mrf.mxu0
        %v6078 = vadd.f32 %v6029, %v6077
        %v6079 = vpop.f32.mrf.mxu0
        %v6080 = vadd.f32 %v6031, %v6079
        %6081 = vmatmul.bf16.gmra.mxu0 %v2886
        %v6082 = vpop.f32.mrf.mxu0
        %v6083 = vadd.f32 %v6034, %v6082
        %v6084 = vpop.f32.mrf.mxu0
        %v6085 = vadd.f32 %v6036, %v6084
        %6086 = vmatmul.bf16.gmra.mxu0 %v2894
        %v6087 = vpop.f32.mrf.mxu0
        %v6088 = vadd.f32 %v6039, %v6087
        %v6089 = vpop.f32.mrf.mxu0
        %v6090 = vadd.f32 %v6041, %v6089
        %6091 = vmatmul.bf16.gmra.mxu0 %v2902
        %v6092 = vpop.f32.mrf.mxu0
        %v6093 = vadd.f32 %v6044, %v6092
        %v6094 = vpop.f32.mrf.mxu0
        %v6095 = vadd.f32 %v6046, %v6094
        %6096 = vdwg.mxu0
        %6097 = vmatpush.bf16.msra.mxu0 %v5159
        %6098 = vmatpush.bf16.msra.mxu0 %v5151
        %6099 = vmatpush.bf16.msra.mxu0 %v5143
        %6100 = vmatpush.bf16.msra.mxu0 %v5135
        %6101 = vmatpush.bf16.msra.mxu0 %v5127
        %6102 = vmatpush.bf16.msra.mxu0 %v5119
        %6103 = vmatpush.bf16.msra.mxu0 %v5111
        %6104 = vmatpush.bf16.msra.mxu0 %v5103
        %6105 = vmatmul.bf16.gmra.mxu0 %v2847
        %v6106 = vpop.f32.mrf.mxu0
        %v6107 = vadd.f32 %v6058, %v6106
        %v6108 = vpop.f32.mrf.mxu0
        %v6109 = vadd.f32 %v6060, %v6108
        %6110 = vmatmul.bf16.gmra.mxu0 %v2855
        %v6111 = vpop.f32.mrf.mxu0
        %v6112 = vadd.f32 %v6063, %v6111
        %v6113 = vpop.f32.mrf.mxu0
        %v6114 = vadd.f32 %v6065, %v6113
        %6115 = vmatmul.bf16.gmra.mxu0 %v2863
        %v6116 = vpop.f32.mrf.mxu0
        %v6117 = vadd.f32 %v6068, %v6116
        %v6118 = vpop.f32.mrf.mxu0
        %v6119 = vadd.f32 %v6070, %v6118
        %6120 = vmatmul.bf16.gmra.mxu0 %v2871
        %v6121 = vpop.f32.mrf.mxu0
        %v6122 = vadd.f32 %v6073, %v6121
        %v6123 = vpop.f32.mrf.mxu0
        %v6124 = vadd.f32 %v6075, %v6123
        %6125 = vmatmul.bf16.gmra.mxu0 %v2879
        %v6126 = vpop.f32.mrf.mxu0
        %v6127 = vadd.f32 %v6078, %v6126
        %v6128 = vpop.f32.mrf.mxu0
        %v6129 = vadd.f32 %v6080, %v6128
        %6130 = vmatmul.bf16.gmra.mxu0 %v2887
        %v6131 = vpop.f32.mrf.mxu0
        %v6132 = vadd.f32 %v6083, %v6131
        %v6133 = vpop.f32.mrf.mxu0
        %v6134 = vadd.f32 %v6085, %v6133
        %6135 = vmatmul.bf16.gmra.mxu0 %v2895
        %v6136 = vpop.f32.mrf.mxu0
        %v6137 = vadd.f32 %v6088, %v6136
        %v6138 = vpop.f32.mrf.mxu0
        %v6139 = vadd.f32 %v6090, %v6138
        %6140 = vmatmul.bf16.gmra.mxu0 %v2903
        %v6141 = vpop.f32.mrf.mxu0
        %v6142 = vadd.f32 %v6093, %v6141
        %v6143 = vpop.f32.mrf.mxu0
        %v6144 = vadd.f32 %v6095, %v6143
        %6145 = vdwg.mxu0
        %6146 = vmatpush.bf16.msra.mxu0 %v5223
        %6147 = vmatpush.bf16.msra.mxu0 %v5215
        %6148 = vmatpush.bf16.msra.mxu0 %v5207
        %6149 = vmatpush.bf16.msra.mxu0 %v5199
        %6150 = vmatpush.bf16.msra.mxu0 %v5191
        %6151 = vmatpush.bf16.msra.mxu0 %v5183
        %6152 = vmatpush.bf16.msra.mxu0 %v5175
        %6153 = vmatpush.bf16.msra.mxu0 %v5167
        %6154 = vmatmul.bf16.gmra.mxu0 %v2848
        %v6155 = vpop.f32.mrf.mxu0
        %v6156 = vadd.f32 %v6107, %v6155
        %v6157 = vpop.f32.mrf.mxu0
        %v6158 = vadd.f32 %v6109, %v6157
        %6159 = vmatmul.bf16.gmra.mxu0 %v2856
        %v6160 = vpop.f32.mrf.mxu0
        %v6161 = vadd.f32 %v6112, %v6160
        %v6162 = vpop.f32.mrf.mxu0
        %v6163 = vadd.f32 %v6114, %v6162
        %6164 = vmatmul.bf16.gmra.mxu0 %v2864
        %v6165 = vpop.f32.mrf.mxu0
        %v6166 = vadd.f32 %v6117, %v6165
        %v6167 = vpop.f32.mrf.mxu0
        %v6168 = vadd.f32 %v6119, %v6167
        %6169 = vmatmul.bf16.gmra.mxu0 %v2872
        %v6170 = vpop.f32.mrf.mxu0
        %v6171 = vadd.f32 %v6122, %v6170
        %v6172 = vpop.f32.mrf.mxu0
        %v6173 = vadd.f32 %v6124, %v6172
        %6174 = vmatmul.bf16.gmra.mxu0 %v2880
        %v6175 = vpop.f32.mrf.mxu0
        %v6176 = vadd.f32 %v6127, %v6175
        %v6177 = vpop.f32.mrf.mxu0
        %v6178 = vadd.f32 %v6129, %v6177
        %6179 = vmatmul.bf16.gmra.mxu0 %v2888
        %v6180 = vpop.f32.mrf.mxu0
        %v6181 = vadd.f32 %v6132, %v6180
        %v6182 = vpop.f32.mrf.mxu0
        %v6183 = vadd.f32 %v6134, %v6182
        %6184 = vmatmul.bf16.gmra.mxu0 %v2896
        %v6185 = vpop.f32.mrf.mxu0
        %v6186 = vadd.f32 %v6137, %v6185
        %v6187 = vpop.f32.mrf.mxu0
        %v6188 = vadd.f32 %v6139, %v6187
        %6189 = vmatmul.bf16.gmra.mxu0 %v2904
        %v6190 = vpop.f32.mrf.mxu0
        %v6191 = vadd.f32 %v6142, %v6190
        %v6192 = vpop.f32.mrf.mxu0
        %v6193 = vadd.f32 %v6144, %v6192
        %6194 = vdwg.mxu0
        %6195 = vmatpush.bf16.msra.mxu0 %v5287
        %6196 = vmatpush.bf16.msra.mxu0 %v5279
        %6197 = vmatpush.bf16.msra.mxu0 %v5271
        %6198 = vmatpush.bf16.msra.mxu0 %v5263
        %6199 = vmatpush.bf16.msra.mxu0 %v5255
        %6200 = vmatpush.bf16.msra.mxu0 %v5247
        %6201 = vmatpush.bf16.msra.mxu0 %v5239
        %6202 = vmatpush.bf16.msra.mxu0 %v5231
        %6203 = vmatmul.bf16.gmra.mxu0 %v2849
        %v6204 = vpop.f32.mrf.mxu0
        %v6205 = vadd.f32 %v6156, %v6204
        %v6206 = vpop.f32.mrf.mxu0
        %v6207 = vadd.f32 %v6158, %v6206
        %6208 = vmatmul.bf16.gmra.mxu0 %v2857
        %v6209 = vpop.f32.mrf.mxu0
        %v6210 = vadd.f32 %v6161, %v6209
        %v6211 = vpop.f32.mrf.mxu0
        %v6212 = vadd.f32 %v6163, %v6211
        %6213 = vmatmul.bf16.gmra.mxu0 %v2865
        %v6214 = vpop.f32.mrf.mxu0
        %v6215 = vadd.f32 %v6166, %v6214
        %v6216 = vpop.f32.mrf.mxu0
        %v6217 = vadd.f32 %v6168, %v6216
        %6218 = vmatmul.bf16.gmra.mxu0 %v2873
        %v6219 = vpop.f32.mrf.mxu0
        %v6220 = vadd.f32 %v6171, %v6219
        %v6221 = vpop.f32.mrf.mxu0
        %v6222 = vadd.f32 %v6173, %v6221
        %6223 = vmatmul.bf16.gmra.mxu0 %v2881
        %v6224 = vpop.f32.mrf.mxu0
        %v6225 = vadd.f32 %v6176, %v6224
        %v6226 = vpop.f32.mrf.mxu0
        %v6227 = vadd.f32 %v6178, %v6226
        %6228 = vmatmul.bf16.gmra.mxu0 %v2889
        %v6229 = vpop.f32.mrf.mxu0
        %v6230 = vadd.f32 %v6181, %v6229
        %v6231 = vpop.f32.mrf.mxu0
        %v6232 = vadd.f32 %v6183, %v6231
        %6233 = vmatmul.bf16.gmra.mxu0 %v2897
        %v6234 = vpop.f32.mrf.mxu0
        %v6235 = vadd.f32 %v6186, %v6234
        %v6236 = vpop.f32.mrf.mxu0
        %v6237 = vadd.f32 %v6188, %v6236
        %6238 = vmatmul.bf16.gmra.mxu0 %v2905
        %v6239 = vpop.f32.mrf.mxu0
        %v6240 = vadd.f32 %v6191, %v6239
        %v6241 = vpop.f32.mrf.mxu0
        %v6242 = vadd.f32 %v6193, %v6241
        %6243 = vdwg.mxu0
        %6244 = vmatpush.bf16.msra.mxu0 %v5351
        %6245 = vmatpush.bf16.msra.mxu0 %v5343
        %6246 = vmatpush.bf16.msra.mxu0 %v5335
        %6247 = vmatpush.bf16.msra.mxu0 %v5327
        %6248 = vmatpush.bf16.msra.mxu0 %v5319
        %6249 = vmatpush.bf16.msra.mxu0 %v5311
        %6250 = vmatpush.bf16.msra.mxu0 %v5303
        %6251 = vmatpush.bf16.msra.mxu0 %v5295
        %6252 = vmatmul.bf16.gmra.mxu0 %v2850
        %v6253 = vpop.f32.mrf.mxu0
        %v6254 = vadd.f32 %v6205, %v6253
        %v6255 = vpop.f32.mrf.mxu0
        %v6256 = vadd.f32 %v6207, %v6255
        %6257 = vmatmul.bf16.gmra.mxu0 %v2858
        %v6258 = vpop.f32.mrf.mxu0
        %v6259 = vadd.f32 %v6210, %v6258
        %v6260 = vpop.f32.mrf.mxu0
        %v6261 = vadd.f32 %v6212, %v6260
        %6262 = vmatmul.bf16.gmra.mxu0 %v2866
        %v6263 = vpop.f32.mrf.mxu0
        %v6264 = vadd.f32 %v6215, %v6263
        %v6265 = vpop.f32.mrf.mxu0
        %v6266 = vadd.f32 %v6217, %v6265
        %6267 = vmatmul.bf16.gmra.mxu0 %v2874
        %v6268 = vpop.f32.mrf.mxu0
        %v6269 = vadd.f32 %v6220, %v6268
        %v6270 = vpop.f32.mrf.mxu0
        %v6271 = vadd.f32 %v6222, %v6270
        %6272 = vmatmul.bf16.gmra.mxu0 %v2882
        %v6273 = vpop.f32.mrf.mxu0
        %v6274 = vadd.f32 %v6225, %v6273
        %v6275 = vpop.f32.mrf.mxu0
        %v6276 = vadd.f32 %v6227, %v6275
        %6277 = vmatmul.bf16.gmra.mxu0 %v2890
        %v6278 = vpop.f32.mrf.mxu0
        %v6279 = vadd.f32 %v6230, %v6278
        %v6280 = vpop.f32.mrf.mxu0
        %v6281 = vadd.f32 %v6232, %v6280
        %6282 = vmatmul.bf16.gmra.mxu0 %v2898
        %v6283 = vpop.f32.mrf.mxu0
        %v6284 = vadd.f32 %v6235, %v6283
        %v6285 = vpop.f32.mrf.mxu0
        %v6286 = vadd.f32 %v6237, %v6285
        %6287 = vmatmul.bf16.gmra.mxu0 %v2906
        %v6288 = vpop.f32.mrf.mxu0
        %v6289 = vadd.f32 %v6240, %v6288
        %v6290 = vpop.f32.mrf.mxu0
        %v6291 = vadd.f32 %v6242, %v6290
        %6292 = vdwg.mxu0
        %6293 = vmatpush.bf16.msra.mxu0 %v5415
        %6294 = vmatpush.bf16.msra.mxu0 %v5407
        %6295 = vmatpush.bf16.msra.mxu0 %v5399
        %6296 = vmatpush.bf16.msra.mxu0 %v5391
        %6297 = vmatpush.bf16.msra.mxu0 %v5383
        %6298 = vmatpush.bf16.msra.mxu0 %v5375
        %6299 = vmatpush.bf16.msra.mxu0 %v5367
        %6300 = vmatpush.bf16.msra.mxu0 %v5359
        %6301 = vmatmul.bf16.gmra.mxu0 %v2851
        %v6302 = vpop.f32.mrf.mxu0
        %v6303 = vadd.f32 %v6254, %v6302
        %v6304 = vpop.f32.mrf.mxu0
        %v6305 = vadd.f32 %v6256, %v6304
        %6306 = vmatmul.bf16.gmra.mxu0 %v2859
        %v6307 = vpop.f32.mrf.mxu0
        %v6308 = vadd.f32 %v6259, %v6307
        %v6309 = vpop.f32.mrf.mxu0
        %v6310 = vadd.f32 %v6261, %v6309
        %6311 = vmatmul.bf16.gmra.mxu0 %v2867
        %v6312 = vpop.f32.mrf.mxu0
        %v6313 = vadd.f32 %v6264, %v6312
        %v6314 = vpop.f32.mrf.mxu0
        %v6315 = vadd.f32 %v6266, %v6314
        %6316 = vmatmul.bf16.gmra.mxu0 %v2875
        %v6317 = vpop.f32.mrf.mxu0
        %v6318 = vadd.f32 %v6269, %v6317
        %v6319 = vpop.f32.mrf.mxu0
        %v6320 = vadd.f32 %v6271, %v6319
        %6321 = vmatmul.bf16.gmra.mxu0 %v2883
        %v6322 = vpop.f32.mrf.mxu0
        %v6323 = vadd.f32 %v6274, %v6322
        %v6324 = vpop.f32.mrf.mxu0
        %v6325 = vadd.f32 %v6276, %v6324
        %6326 = vmatmul.bf16.gmra.mxu0 %v2891
        %v6327 = vpop.f32.mrf.mxu0
        %v6328 = vadd.f32 %v6279, %v6327
        %v6329 = vpop.f32.mrf.mxu0
        %v6330 = vadd.f32 %v6281, %v6329
        %6331 = vmatmul.bf16.gmra.mxu0 %v2899
        %v6332 = vpop.f32.mrf.mxu0
        %v6333 = vadd.f32 %v6284, %v6332
        %v6334 = vpop.f32.mrf.mxu0
        %v6335 = vadd.f32 %v6286, %v6334
        %6336 = vmatmul.bf16.gmra.mxu0 %v2907
        %v6337 = vpop.f32.mrf.mxu0
        %v6338 = vadd.f32 %v6289, %v6337
        %v6339 = vpop.f32.mrf.mxu0
        %v6340 = vadd.f32 %v6291, %v6339
        %6341 = vdwg.mxu0
        %6342 = vmatpush.bf16.msra.mxu0 %v5479
        %6343 = vmatpush.bf16.msra.mxu0 %v5471
        %6344 = vmatpush.bf16.msra.mxu0 %v5463
        %6345 = vmatpush.bf16.msra.mxu0 %v5455
        %6346 = vmatpush.bf16.msra.mxu0 %v5447
        %6347 = vmatpush.bf16.msra.mxu0 %v5439
        %6348 = vmatpush.bf16.msra.mxu0 %v5431
        %6349 = vmatpush.bf16.msra.mxu0 %v5423
        %6350 = vmatmul.bf16.gmra.mxu0 %v2852
        %v6351 = vpop.f32.mrf.mxu0
        %v6352 = vadd.f32 %v6303, %v6351
        %v6353 = vpop.f32.mrf.mxu0
        %v6354 = vadd.f32 %v6305, %v6353
        %6355 = vmatmul.bf16.gmra.mxu0 %v2860
        %v6356 = vpop.f32.mrf.mxu0
        %v6357 = vadd.f32 %v6308, %v6356
        %v6358 = vpop.f32.mrf.mxu0
        %v6359 = vadd.f32 %v6310, %v6358
        %6360 = vmatmul.bf16.gmra.mxu0 %v2868
        %v6361 = vpop.f32.mrf.mxu0
        %v6362 = vadd.f32 %v6313, %v6361
        %v6363 = vpop.f32.mrf.mxu0
        %v6364 = vadd.f32 %v6315, %v6363
        %6365 = vmatmul.bf16.gmra.mxu0 %v2876
        %v6366 = vpop.f32.mrf.mxu0
        %v6367 = vadd.f32 %v6318, %v6366
        %v6368 = vpop.f32.mrf.mxu0
        %v6369 = vadd.f32 %v6320, %v6368
        %6370 = vmatmul.bf16.gmra.mxu0 %v2884
        %v6371 = vpop.f32.mrf.mxu0
        %v6372 = vadd.f32 %v6323, %v6371
        %v6373 = vpop.f32.mrf.mxu0
        %v6374 = vadd.f32 %v6325, %v6373
        %6375 = vmatmul.bf16.gmra.mxu0 %v2892
        %v6376 = vpop.f32.mrf.mxu0
        %v6377 = vadd.f32 %v6328, %v6376
        %v6378 = vpop.f32.mrf.mxu0
        %v6379 = vadd.f32 %v6330, %v6378
        %6380 = vmatmul.bf16.gmra.mxu0 %v2900
        %v6381 = vpop.f32.mrf.mxu0
        %v6382 = vadd.f32 %v6333, %v6381
        %v6383 = vpop.f32.mrf.mxu0
        %v6384 = vadd.f32 %v6335, %v6383
        %6385 = vmatmul.bf16.gmra.mxu0 %v2908
        %v6386 = vpop.f32.mrf.mxu0
        %v6387 = vadd.f32 %v6338, %v6386
        %v6388 = vpop.f32.mrf.mxu0
        %v6389 = vadd.f32 %v6340, %v6388
        %6390 = vdwg.mxu0
        %6391 = vmatpush.bf16.msra.mxu0 %v5032
        %6392 = vmatpush.bf16.msra.mxu0 %v5024
        %6393 = vmatpush.bf16.msra.mxu0 %v5016
        %6394 = vmatpush.bf16.msra.mxu0 %v5008
        %6395 = vmatpush.bf16.msra.mxu0 %v5000
        %6396 = vmatpush.bf16.msra.mxu0 %v4992
        %6397 = vmatpush.bf16.msra.mxu0 %v4984
        %6398 = vmatpush.bf16.msra.mxu0 %v4976
        %6399 = vmatmul.bf16.gmra.mxu0 %v2845
        %v6400 = vpop.f32.mrf.mxu0
        %v6401 = vadd.f32 %v3424, %v6400
        %v6402 = vpop.f32.mrf.mxu0
        %v6403 = vadd.f32 %v3424, %v6402
        %6404 = vmatmul.bf16.gmra.mxu0 %v2853
        %v6405 = vpop.f32.mrf.mxu0
        %v6406 = vadd.f32 %v3424, %v6405
        %v6407 = vpop.f32.mrf.mxu0
        %v6408 = vadd.f32 %v3424, %v6407
        %6409 = vmatmul.bf16.gmra.mxu0 %v2861
        %v6410 = vpop.f32.mrf.mxu0
        %v6411 = vadd.f32 %v3424, %v6410
        %v6412 = vpop.f32.mrf.mxu0
        %v6413 = vadd.f32 %v3424, %v6412
        %6414 = vmatmul.bf16.gmra.mxu0 %v2869
        %v6415 = vpop.f32.mrf.mxu0
        %v6416 = vadd.f32 %v3424, %v6415
        %v6417 = vpop.f32.mrf.mxu0
        %v6418 = vadd.f32 %v3424, %v6417
        %6419 = vmatmul.bf16.gmra.mxu0 %v2877
        %v6420 = vpop.f32.mrf.mxu0
        %v6421 = vadd.f32 %v3424, %v6420
        %v6422 = vpop.f32.mrf.mxu0
        %v6423 = vadd.f32 %v3424, %v6422
        %6424 = vmatmul.bf16.gmra.mxu0 %v2885
        %v6425 = vpop.f32.mrf.mxu0
        %v6426 = vadd.f32 %v3424, %v6425
        %v6427 = vpop.f32.mrf.mxu0
        %v6428 = vadd.f32 %v3424, %v6427
        %6429 = vmatmul.bf16.gmra.mxu0 %v2893
        %v6430 = vpop.f32.mrf.mxu0
        %v6431 = vadd.f32 %v3424, %v6430
        %v6432 = vpop.f32.mrf.mxu0
        %v6433 = vadd.f32 %v3424, %v6432
        %6434 = vmatmul.bf16.gmra.mxu0 %v2901
        %v6435 = vpop.f32.mrf.mxu0
        %v6436 = vadd.f32 %v3424, %v6435
        %v6437 = vpop.f32.mrf.mxu0
        %v6438 = vadd.f32 %v3424, %v6437
        %6439 = vdwg.mxu0
        %6440 = vmatpush.bf16.msra.mxu0 %v5096
        %6441 = vmatpush.bf16.msra.mxu0 %v5088
        %6442 = vmatpush.bf16.msra.mxu0 %v5080
        %6443 = vmatpush.bf16.msra.mxu0 %v5072
        %6444 = vmatpush.bf16.msra.mxu0 %v5064
        %6445 = vmatpush.bf16.msra.mxu0 %v5056
        %6446 = vmatpush.bf16.msra.mxu0 %v5048
        %6447 = vmatpush.bf16.msra.mxu0 %v5040
        %6448 = vmatmul.bf16.gmra.mxu0 %v2846
        %v6449 = vpop.f32.mrf.mxu0
        %v6450 = vadd.f32 %v6401, %v6449
        %v6451 = vpop.f32.mrf.mxu0
        %v6452 = vadd.f32 %v6403, %v6451
        %6453 = vmatmul.bf16.gmra.mxu0 %v2854
        %v6454 = vpop.f32.mrf.mxu0
        %v6455 = vadd.f32 %v6406, %v6454
        %v6456 = vpop.f32.mrf.mxu0
        %v6457 = vadd.f32 %v6408, %v6456
        %6458 = vmatmul.bf16.gmra.mxu0 %v2862
        %v6459 = vpop.f32.mrf.mxu0
        %v6460 = vadd.f32 %v6411, %v6459
        %v6461 = vpop.f32.mrf.mxu0
        %v6462 = vadd.f32 %v6413, %v6461
        %6463 = vmatmul.bf16.gmra.mxu0 %v2870
        %v6464 = vpop.f32.mrf.mxu0
        %v6465 = vadd.f32 %v6416, %v6464
        %v6466 = vpop.f32.mrf.mxu0
        %v6467 = vadd.f32 %v6418, %v6466
        %6468 = vmatmul.bf16.gmra.mxu0 %v2878
        %v6469 = vpop.f32.mrf.mxu0
        %v6470 = vadd.f32 %v6421, %v6469
        %v6471 = vpop.f32.mrf.mxu0
        %v6472 = vadd.f32 %v6423, %v6471
        %6473 = vmatmul.bf16.gmra.mxu0 %v2886
        %v6474 = vpop.f32.mrf.mxu0
        %v6475 = vadd.f32 %v6426, %v6474
        %v6476 = vpop.f32.mrf.mxu0
        %v6477 = vadd.f32 %v6428, %v6476
        %6478 = vmatmul.bf16.gmra.mxu0 %v2894
        %v6479 = vpop.f32.mrf.mxu0
        %v6480 = vadd.f32 %v6431, %v6479
        %v6481 = vpop.f32.mrf.mxu0
        %v6482 = vadd.f32 %v6433, %v6481
        %6483 = vmatmul.bf16.gmra.mxu0 %v2902
        %v6484 = vpop.f32.mrf.mxu0
        %v6485 = vadd.f32 %v6436, %v6484
        %v6486 = vpop.f32.mrf.mxu0
        %v6487 = vadd.f32 %v6438, %v6486
        %6488 = vdwg.mxu0
        %6489 = vmatpush.bf16.msra.mxu0 %v5160
        %6490 = vmatpush.bf16.msra.mxu0 %v5152
        %6491 = vmatpush.bf16.msra.mxu0 %v5144
        %6492 = vmatpush.bf16.msra.mxu0 %v5136
        %6493 = vmatpush.bf16.msra.mxu0 %v5128
        %6494 = vmatpush.bf16.msra.mxu0 %v5120
        %6495 = vmatpush.bf16.msra.mxu0 %v5112
        %6496 = vmatpush.bf16.msra.mxu0 %v5104
        %6497 = vmatmul.bf16.gmra.mxu0 %v2847
        %v6498 = vpop.f32.mrf.mxu0
        %v6499 = vadd.f32 %v6450, %v6498
        %v6500 = vpop.f32.mrf.mxu0
        %v6501 = vadd.f32 %v6452, %v6500
        %6502 = vmatmul.bf16.gmra.mxu0 %v2855
        %v6503 = vpop.f32.mrf.mxu0
        %v6504 = vadd.f32 %v6455, %v6503
        %v6505 = vpop.f32.mrf.mxu0
        %v6506 = vadd.f32 %v6457, %v6505
        %6507 = vmatmul.bf16.gmra.mxu0 %v2863
        %v6508 = vpop.f32.mrf.mxu0
        %v6509 = vadd.f32 %v6460, %v6508
        %v6510 = vpop.f32.mrf.mxu0
        %v6511 = vadd.f32 %v6462, %v6510
        %6512 = vmatmul.bf16.gmra.mxu0 %v2871
        %v6513 = vpop.f32.mrf.mxu0
        %v6514 = vadd.f32 %v6465, %v6513
        %v6515 = vpop.f32.mrf.mxu0
        %v6516 = vadd.f32 %v6467, %v6515
        %6517 = vmatmul.bf16.gmra.mxu0 %v2879
        %v6518 = vpop.f32.mrf.mxu0
        %v6519 = vadd.f32 %v6470, %v6518
        %v6520 = vpop.f32.mrf.mxu0
        %v6521 = vadd.f32 %v6472, %v6520
        %6522 = vmatmul.bf16.gmra.mxu0 %v2887
        %v6523 = vpop.f32.mrf.mxu0
        %v6524 = vadd.f32 %v6475, %v6523
        %v6525 = vpop.f32.mrf.mxu0
        %v6526 = vadd.f32 %v6477, %v6525
        %6527 = vmatmul.bf16.gmra.mxu0 %v2895
        %v6528 = vpop.f32.mrf.mxu0
        %v6529 = vadd.f32 %v6480, %v6528
        %v6530 = vpop.f32.mrf.mxu0
        %v6531 = vadd.f32 %v6482, %v6530
        %6532 = vmatmul.bf16.gmra.mxu0 %v2903
        %v6533 = vpop.f32.mrf.mxu0
        %v6534 = vadd.f32 %v6485, %v6533
        %v6535 = vpop.f32.mrf.mxu0
        %v6536 = vadd.f32 %v6487, %v6535
        %6537 = vdwg.mxu0
        %6538 = vmatpush.bf16.msra.mxu0 %v5224
        %6539 = vmatpush.bf16.msra.mxu0 %v5216
        %6540 = vmatpush.bf16.msra.mxu0 %v5208
        %6541 = vmatpush.bf16.msra.mxu0 %v5200
        %6542 = vmatpush.bf16.msra.mxu0 %v5192
        %6543 = vmatpush.bf16.msra.mxu0 %v5184
        %6544 = vmatpush.bf16.msra.mxu0 %v5176
        %6545 = vmatpush.bf16.msra.mxu0 %v5168
        %6546 = vmatmul.bf16.gmra.mxu0 %v2848
        %v6547 = vpop.f32.mrf.mxu0
        %v6548 = vadd.f32 %v6499, %v6547
        %v6549 = vpop.f32.mrf.mxu0
        %v6550 = vadd.f32 %v6501, %v6549
        %6551 = vmatmul.bf16.gmra.mxu0 %v2856
        %v6552 = vpop.f32.mrf.mxu0
        %v6553 = vadd.f32 %v6504, %v6552
        %v6554 = vpop.f32.mrf.mxu0
        %v6555 = vadd.f32 %v6506, %v6554
        %6556 = vmatmul.bf16.gmra.mxu0 %v2864
        %v6557 = vpop.f32.mrf.mxu0
        %v6558 = vadd.f32 %v6509, %v6557
        %v6559 = vpop.f32.mrf.mxu0
        %v6560 = vadd.f32 %v6511, %v6559
        %6561 = vmatmul.bf16.gmra.mxu0 %v2872
        %v6562 = vpop.f32.mrf.mxu0
        %v6563 = vadd.f32 %v6514, %v6562
        %v6564 = vpop.f32.mrf.mxu0
        %v6565 = vadd.f32 %v6516, %v6564
        %6566 = vmatmul.bf16.gmra.mxu0 %v2880
        %v6567 = vpop.f32.mrf.mxu0
        %v6568 = vadd.f32 %v6519, %v6567
        %v6569 = vpop.f32.mrf.mxu0
        %v6570 = vadd.f32 %v6521, %v6569
        %6571 = vmatmul.bf16.gmra.mxu0 %v2888
        %v6572 = vpop.f32.mrf.mxu0
        %v6573 = vadd.f32 %v6524, %v6572
        %v6574 = vpop.f32.mrf.mxu0
        %v6575 = vadd.f32 %v6526, %v6574
        %6576 = vmatmul.bf16.gmra.mxu0 %v2896
        %v6577 = vpop.f32.mrf.mxu0
        %v6578 = vadd.f32 %v6529, %v6577
        %v6579 = vpop.f32.mrf.mxu0
        %v6580 = vadd.f32 %v6531, %v6579
        %6581 = vmatmul.bf16.gmra.mxu0 %v2904
        %v6582 = vpop.f32.mrf.mxu0
        %v6583 = vadd.f32 %v6534, %v6582
        %v6584 = vpop.f32.mrf.mxu0
        %v6585 = vadd.f32 %v6536, %v6584
        %6586 = vdwg.mxu0
        %6587 = vmatpush.bf16.msra.mxu0 %v5288
        %6588 = vmatpush.bf16.msra.mxu0 %v5280
        %6589 = vmatpush.bf16.msra.mxu0 %v5272
        %6590 = vmatpush.bf16.msra.mxu0 %v5264
        %6591 = vmatpush.bf16.msra.mxu0 %v5256
        %6592 = vmatpush.bf16.msra.mxu0 %v5248
        %6593 = vmatpush.bf16.msra.mxu0 %v5240
        %6594 = vmatpush.bf16.msra.mxu0 %v5232
        %6595 = vmatmul.bf16.gmra.mxu0 %v2849
        %v6596 = vpop.f32.mrf.mxu0
        %v6597 = vadd.f32 %v6548, %v6596
        %v6598 = vpop.f32.mrf.mxu0
        %v6599 = vadd.f32 %v6550, %v6598
        %6600 = vmatmul.bf16.gmra.mxu0 %v2857
        %v6601 = vpop.f32.mrf.mxu0
        %v6602 = vadd.f32 %v6553, %v6601
        %v6603 = vpop.f32.mrf.mxu0
        %v6604 = vadd.f32 %v6555, %v6603
        %6605 = vmatmul.bf16.gmra.mxu0 %v2865
        %v6606 = vpop.f32.mrf.mxu0
        %v6607 = vadd.f32 %v6558, %v6606
        %v6608 = vpop.f32.mrf.mxu0
        %v6609 = vadd.f32 %v6560, %v6608
        %6610 = vmatmul.bf16.gmra.mxu0 %v2873
        %v6611 = vpop.f32.mrf.mxu0
        %v6612 = vadd.f32 %v6563, %v6611
        %v6613 = vpop.f32.mrf.mxu0
        %v6614 = vadd.f32 %v6565, %v6613
        %6615 = vmatmul.bf16.gmra.mxu0 %v2881
        %v6616 = vpop.f32.mrf.mxu0
        %v6617 = vadd.f32 %v6568, %v6616
        %v6618 = vpop.f32.mrf.mxu0
        %v6619 = vadd.f32 %v6570, %v6618
        %6620 = vmatmul.bf16.gmra.mxu0 %v2889
        %v6621 = vpop.f32.mrf.mxu0
        %v6622 = vadd.f32 %v6573, %v6621
        %v6623 = vpop.f32.mrf.mxu0
        %v6624 = vadd.f32 %v6575, %v6623
        %6625 = vmatmul.bf16.gmra.mxu0 %v2897
        %v6626 = vpop.f32.mrf.mxu0
        %v6627 = vadd.f32 %v6578, %v6626
        %v6628 = vpop.f32.mrf.mxu0
        %v6629 = vadd.f32 %v6580, %v6628
        %6630 = vmatmul.bf16.gmra.mxu0 %v2905
        %v6631 = vpop.f32.mrf.mxu0
        %v6632 = vadd.f32 %v6583, %v6631
        %v6633 = vpop.f32.mrf.mxu0
        %v6634 = vadd.f32 %v6585, %v6633
        %6635 = vdwg.mxu0
        %6636 = vmatpush.bf16.msra.mxu0 %v5352
        %6637 = vmatpush.bf16.msra.mxu0 %v5344
        %6638 = vmatpush.bf16.msra.mxu0 %v5336
        %6639 = vmatpush.bf16.msra.mxu0 %v5328
        %6640 = vmatpush.bf16.msra.mxu0 %v5320
        %6641 = vmatpush.bf16.msra.mxu0 %v5312
        %6642 = vmatpush.bf16.msra.mxu0 %v5304
        %6643 = vmatpush.bf16.msra.mxu0 %v5296
        %6644 = vmatmul.bf16.gmra.mxu0 %v2850
        %v6645 = vpop.f32.mrf.mxu0
        %v6646 = vadd.f32 %v6597, %v6645
        %v6647 = vpop.f32.mrf.mxu0
        %v6648 = vadd.f32 %v6599, %v6647
        %6649 = vmatmul.bf16.gmra.mxu0 %v2858
        %v6650 = vpop.f32.mrf.mxu0
        %v6651 = vadd.f32 %v6602, %v6650
        %v6652 = vpop.f32.mrf.mxu0
        %v6653 = vadd.f32 %v6604, %v6652
        %6654 = vmatmul.bf16.gmra.mxu0 %v2866
        %v6655 = vpop.f32.mrf.mxu0
        %v6656 = vadd.f32 %v6607, %v6655
        %v6657 = vpop.f32.mrf.mxu0
        %v6658 = vadd.f32 %v6609, %v6657
        %6659 = vmatmul.bf16.gmra.mxu0 %v2874
        %v6660 = vpop.f32.mrf.mxu0
        %v6661 = vadd.f32 %v6612, %v6660
        %v6662 = vpop.f32.mrf.mxu0
        %v6663 = vadd.f32 %v6614, %v6662
        %6664 = vmatmul.bf16.gmra.mxu0 %v2882
        %v6665 = vpop.f32.mrf.mxu0
        %v6666 = vadd.f32 %v6617, %v6665
        %v6667 = vpop.f32.mrf.mxu0
        %v6668 = vadd.f32 %v6619, %v6667
        %6669 = vmatmul.bf16.gmra.mxu0 %v2890
        %v6670 = vpop.f32.mrf.mxu0
        %v6671 = vadd.f32 %v6622, %v6670
        %v6672 = vpop.f32.mrf.mxu0
        %v6673 = vadd.f32 %v6624, %v6672
        %6674 = vmatmul.bf16.gmra.mxu0 %v2898
        %v6675 = vpop.f32.mrf.mxu0
        %v6676 = vadd.f32 %v6627, %v6675
        %v6677 = vpop.f32.mrf.mxu0
        %v6678 = vadd.f32 %v6629, %v6677
        %6679 = vmatmul.bf16.gmra.mxu0 %v2906
        %v6680 = vpop.f32.mrf.mxu0
        %v6681 = vadd.f32 %v6632, %v6680
        %v6682 = vpop.f32.mrf.mxu0
        %v6683 = vadd.f32 %v6634, %v6682
        %6684 = vdwg.mxu0
        %6685 = vmatpush.bf16.msra.mxu0 %v5416
        %6686 = vmatpush.bf16.msra.mxu0 %v5408
        %6687 = vmatpush.bf16.msra.mxu0 %v5400
        %6688 = vmatpush.bf16.msra.mxu0 %v5392
        %6689 = vmatpush.bf16.msra.mxu0 %v5384
        %6690 = vmatpush.bf16.msra.mxu0 %v5376
        %6691 = vmatpush.bf16.msra.mxu0 %v5368
        %6692 = vmatpush.bf16.msra.mxu0 %v5360
        %6693 = vmatmul.bf16.gmra.mxu0 %v2851
        %v6694 = vpop.f32.mrf.mxu0
        %v6695 = vadd.f32 %v6646, %v6694
        %v6696 = vpop.f32.mrf.mxu0
        %v6697 = vadd.f32 %v6648, %v6696
        %6698 = vmatmul.bf16.gmra.mxu0 %v2859
        %v6699 = vpop.f32.mrf.mxu0
        %v6700 = vadd.f32 %v6651, %v6699
        %v6701 = vpop.f32.mrf.mxu0
        %v6702 = vadd.f32 %v6653, %v6701
        %6703 = vmatmul.bf16.gmra.mxu0 %v2867
        %v6704 = vpop.f32.mrf.mxu0
        %v6705 = vadd.f32 %v6656, %v6704
        %v6706 = vpop.f32.mrf.mxu0
        %v6707 = vadd.f32 %v6658, %v6706
        %6708 = vmatmul.bf16.gmra.mxu0 %v2875
        %v6709 = vpop.f32.mrf.mxu0
        %v6710 = vadd.f32 %v6661, %v6709
        %v6711 = vpop.f32.mrf.mxu0
        %v6712 = vadd.f32 %v6663, %v6711
        %6713 = vmatmul.bf16.gmra.mxu0 %v2883
        %v6714 = vpop.f32.mrf.mxu0
        %v6715 = vadd.f32 %v6666, %v6714
        %v6716 = vpop.f32.mrf.mxu0
        %v6717 = vadd.f32 %v6668, %v6716
        %6718 = vmatmul.bf16.gmra.mxu0 %v2891
        %v6719 = vpop.f32.mrf.mxu0
        %v6720 = vadd.f32 %v6671, %v6719
        %v6721 = vpop.f32.mrf.mxu0
        %v6722 = vadd.f32 %v6673, %v6721
        %6723 = vmatmul.bf16.gmra.mxu0 %v2899
        %v6724 = vpop.f32.mrf.mxu0
        %v6725 = vadd.f32 %v6676, %v6724
        %v6726 = vpop.f32.mrf.mxu0
        %v6727 = vadd.f32 %v6678, %v6726
        %6728 = vmatmul.bf16.gmra.mxu0 %v2907
        %v6729 = vpop.f32.mrf.mxu0
        %v6730 = vadd.f32 %v6681, %v6729
        %v6731 = vpop.f32.mrf.mxu0
        %v6732 = vadd.f32 %v6683, %v6731
        %6733 = vdwg.mxu0
        %6734 = vmatpush.bf16.msra.mxu0 %v5480
        %6735 = vmatpush.bf16.msra.mxu0 %v5472
        %6736 = vmatpush.bf16.msra.mxu0 %v5464
        %6737 = vmatpush.bf16.msra.mxu0 %v5456
        %6738 = vmatpush.bf16.msra.mxu0 %v5448
        %6739 = vmatpush.bf16.msra.mxu0 %v5440
        %6740 = vmatpush.bf16.msra.mxu0 %v5432
        %6741 = vmatpush.bf16.msra.mxu0 %v5424
        %6742 = vmatmul.bf16.gmra.mxu0 %v2852
        %v6743 = vpop.f32.mrf.mxu0
        %v6744 = vadd.f32 %v6695, %v6743
        %v6745 = vpop.f32.mrf.mxu0
        %v6746 = vadd.f32 %v6697, %v6745
        %6747 = vmatmul.bf16.gmra.mxu0 %v2860
        %v6748 = vpop.f32.mrf.mxu0
        %v6749 = vadd.f32 %v6700, %v6748
        %v6750 = vpop.f32.mrf.mxu0
        %v6751 = vadd.f32 %v6702, %v6750
        %6752 = vmatmul.bf16.gmra.mxu0 %v2868
        %v6753 = vpop.f32.mrf.mxu0
        %v6754 = vadd.f32 %v6705, %v6753
        %v6755 = vpop.f32.mrf.mxu0
        %v6756 = vadd.f32 %v6707, %v6755
        %6757 = vmatmul.bf16.gmra.mxu0 %v2876
        %v6758 = vpop.f32.mrf.mxu0
        %v6759 = vadd.f32 %v6710, %v6758
        %v6760 = vpop.f32.mrf.mxu0
        %v6761 = vadd.f32 %v6712, %v6760
        %6762 = vmatmul.bf16.gmra.mxu0 %v2884
        %v6763 = vpop.f32.mrf.mxu0
        %v6764 = vadd.f32 %v6715, %v6763
        %v6765 = vpop.f32.mrf.mxu0
        %v6766 = vadd.f32 %v6717, %v6765
        %6767 = vmatmul.bf16.gmra.mxu0 %v2892
        %v6768 = vpop.f32.mrf.mxu0
        %v6769 = vadd.f32 %v6720, %v6768
        %v6770 = vpop.f32.mrf.mxu0
        %v6771 = vadd.f32 %v6722, %v6770
        %6772 = vmatmul.bf16.gmra.mxu0 %v2900
        %v6773 = vpop.f32.mrf.mxu0
        %v6774 = vadd.f32 %v6725, %v6773
        %v6775 = vpop.f32.mrf.mxu0
        %v6776 = vadd.f32 %v6727, %v6775
        %6777 = vmatmul.bf16.gmra.mxu0 %v2908
        %v6778 = vpop.f32.mrf.mxu0
        %v6779 = vadd.f32 %v6730, %v6778
        %v6780 = vpop.f32.mrf.mxu0
        %v6781 = vadd.f32 %v6732, %v6780
        %6782 = vdwg.mxu0
        %6783 = vmatpush.bf16.msra.mxu0 %v5033
        %6784 = vmatpush.bf16.msra.mxu0 %v5025
        %6785 = vmatpush.bf16.msra.mxu0 %v5017
        %6786 = vmatpush.bf16.msra.mxu0 %v5009
        %6787 = vmatpush.bf16.msra.mxu0 %v5001
        %6788 = vmatpush.bf16.msra.mxu0 %v4993
        %6789 = vmatpush.bf16.msra.mxu0 %v4985
        %6790 = vmatpush.bf16.msra.mxu0 %v4977
        %6791 = vmatmul.bf16.gmra.mxu0 %v2845
        %v6792 = vpop.f32.mrf.mxu0
        %v6793 = vadd.f32 %v3425, %v6792
        %v6794 = vpop.f32.mrf.mxu0
        %v6795 = vadd.f32 %v3425, %v6794
        %6796 = vmatmul.bf16.gmra.mxu0 %v2853
        %v6797 = vpop.f32.mrf.mxu0
        %v6798 = vadd.f32 %v3425, %v6797
        %v6799 = vpop.f32.mrf.mxu0
        %v6800 = vadd.f32 %v3425, %v6799
        %6801 = vmatmul.bf16.gmra.mxu0 %v2861
        %v6802 = vpop.f32.mrf.mxu0
        %v6803 = vadd.f32 %v3425, %v6802
        %v6804 = vpop.f32.mrf.mxu0
        %v6805 = vadd.f32 %v3425, %v6804
        %6806 = vmatmul.bf16.gmra.mxu0 %v2869
        %v6807 = vpop.f32.mrf.mxu0
        %v6808 = vadd.f32 %v3425, %v6807
        %v6809 = vpop.f32.mrf.mxu0
        %v6810 = vadd.f32 %v3425, %v6809
        %6811 = vmatmul.bf16.gmra.mxu0 %v2877
        %v6812 = vpop.f32.mrf.mxu0
        %v6813 = vadd.f32 %v3425, %v6812
        %v6814 = vpop.f32.mrf.mxu0
        %v6815 = vadd.f32 %v3425, %v6814
        %6816 = vmatmul.bf16.gmra.mxu0 %v2885
        %v6817 = vpop.f32.mrf.mxu0
        %v6818 = vadd.f32 %v3425, %v6817
        %v6819 = vpop.f32.mrf.mxu0
        %v6820 = vadd.f32 %v3425, %v6819
        %6821 = vmatmul.bf16.gmra.mxu0 %v2893
        %v6822 = vpop.f32.mrf.mxu0
        %v6823 = vadd.f32 %v3425, %v6822
        %v6824 = vpop.f32.mrf.mxu0
        %v6825 = vadd.f32 %v3425, %v6824
        %6826 = vmatmul.bf16.gmra.mxu0 %v2901
        %v6827 = vpop.f32.mrf.mxu0
        %v6828 = vadd.f32 %v3425, %v6827
        %v6829 = vpop.f32.mrf.mxu0
        %v6830 = vadd.f32 %v3425, %v6829
        %6831 = vdwg.mxu0
        %6832 = vmatpush.bf16.msra.mxu0 %v5097
        %6833 = vmatpush.bf16.msra.mxu0 %v5089
        %6834 = vmatpush.bf16.msra.mxu0 %v5081
        %6835 = vmatpush.bf16.msra.mxu0 %v5073
        %6836 = vmatpush.bf16.msra.mxu0 %v5065
        %6837 = vmatpush.bf16.msra.mxu0 %v5057
        %6838 = vmatpush.bf16.msra.mxu0 %v5049
        %6839 = vmatpush.bf16.msra.mxu0 %v5041
        %6840 = vmatmul.bf16.gmra.mxu0 %v2846
        %v6841 = vpop.f32.mrf.mxu0
        %v6842 = vadd.f32 %v6793, %v6841
        %v6843 = vpop.f32.mrf.mxu0
        %v6844 = vadd.f32 %v6795, %v6843
        %6845 = vmatmul.bf16.gmra.mxu0 %v2854
        %v6846 = vpop.f32.mrf.mxu0
        %v6847 = vadd.f32 %v6798, %v6846
        %v6848 = vpop.f32.mrf.mxu0
        %v6849 = vadd.f32 %v6800, %v6848
        %6850 = vmatmul.bf16.gmra.mxu0 %v2862
        %v6851 = vpop.f32.mrf.mxu0
        %v6852 = vadd.f32 %v6803, %v6851
        %v6853 = vpop.f32.mrf.mxu0
        %v6854 = vadd.f32 %v6805, %v6853
        %6855 = vmatmul.bf16.gmra.mxu0 %v2870
        %v6856 = vpop.f32.mrf.mxu0
        %v6857 = vadd.f32 %v6808, %v6856
        %v6858 = vpop.f32.mrf.mxu0
        %v6859 = vadd.f32 %v6810, %v6858
        %6860 = vmatmul.bf16.gmra.mxu0 %v2878
        %v6861 = vpop.f32.mrf.mxu0
        %v6862 = vadd.f32 %v6813, %v6861
        %v6863 = vpop.f32.mrf.mxu0
        %v6864 = vadd.f32 %v6815, %v6863
        %6865 = vmatmul.bf16.gmra.mxu0 %v2886
        %v6866 = vpop.f32.mrf.mxu0
        %v6867 = vadd.f32 %v6818, %v6866
        %v6868 = vpop.f32.mrf.mxu0
        %v6869 = vadd.f32 %v6820, %v6868
        %6870 = vmatmul.bf16.gmra.mxu0 %v2894
        %v6871 = vpop.f32.mrf.mxu0
        %v6872 = vadd.f32 %v6823, %v6871
        %v6873 = vpop.f32.mrf.mxu0
        %v6874 = vadd.f32 %v6825, %v6873
        %6875 = vmatmul.bf16.gmra.mxu0 %v2902
        %v6876 = vpop.f32.mrf.mxu0
        %v6877 = vadd.f32 %v6828, %v6876
        %v6878 = vpop.f32.mrf.mxu0
        %v6879 = vadd.f32 %v6830, %v6878
        %6880 = vdwg.mxu0
        %6881 = vmatpush.bf16.msra.mxu0 %v5161
        %6882 = vmatpush.bf16.msra.mxu0 %v5153
        %6883 = vmatpush.bf16.msra.mxu0 %v5145
        %6884 = vmatpush.bf16.msra.mxu0 %v5137
        %6885 = vmatpush.bf16.msra.mxu0 %v5129
        %6886 = vmatpush.bf16.msra.mxu0 %v5121
        %6887 = vmatpush.bf16.msra.mxu0 %v5113
        %6888 = vmatpush.bf16.msra.mxu0 %v5105
        %6889 = vmatmul.bf16.gmra.mxu0 %v2847
        %v6890 = vpop.f32.mrf.mxu0
        %v6891 = vadd.f32 %v6842, %v6890
        %v6892 = vpop.f32.mrf.mxu0
        %v6893 = vadd.f32 %v6844, %v6892
        %6894 = vmatmul.bf16.gmra.mxu0 %v2855
        %v6895 = vpop.f32.mrf.mxu0
        %v6896 = vadd.f32 %v6847, %v6895
        %v6897 = vpop.f32.mrf.mxu0
        %v6898 = vadd.f32 %v6849, %v6897
        %6899 = vmatmul.bf16.gmra.mxu0 %v2863
        %v6900 = vpop.f32.mrf.mxu0
        %v6901 = vadd.f32 %v6852, %v6900
        %v6902 = vpop.f32.mrf.mxu0
        %v6903 = vadd.f32 %v6854, %v6902
        %6904 = vmatmul.bf16.gmra.mxu0 %v2871
        %v6905 = vpop.f32.mrf.mxu0
        %v6906 = vadd.f32 %v6857, %v6905
        %v6907 = vpop.f32.mrf.mxu0
        %v6908 = vadd.f32 %v6859, %v6907
        %6909 = vmatmul.bf16.gmra.mxu0 %v2879
        %v6910 = vpop.f32.mrf.mxu0
        %v6911 = vadd.f32 %v6862, %v6910
        %v6912 = vpop.f32.mrf.mxu0
        %v6913 = vadd.f32 %v6864, %v6912
        %6914 = vmatmul.bf16.gmra.mxu0 %v2887
        %v6915 = vpop.f32.mrf.mxu0
        %v6916 = vadd.f32 %v6867, %v6915
        %v6917 = vpop.f32.mrf.mxu0
        %v6918 = vadd.f32 %v6869, %v6917
        %6919 = vmatmul.bf16.gmra.mxu0 %v2895
        %v6920 = vpop.f32.mrf.mxu0
        %v6921 = vadd.f32 %v6872, %v6920
        %v6922 = vpop.f32.mrf.mxu0
        %v6923 = vadd.f32 %v6874, %v6922
        %6924 = vmatmul.bf16.gmra.mxu0 %v2903
        %v6925 = vpop.f32.mrf.mxu0
        %v6926 = vadd.f32 %v6877, %v6925
        %v6927 = vpop.f32.mrf.mxu0
        %v6928 = vadd.f32 %v6879, %v6927
        %6929 = vdwg.mxu0
        %6930 = vmatpush.bf16.msra.mxu0 %v5225
        %6931 = vmatpush.bf16.msra.mxu0 %v5217
        %6932 = vmatpush.bf16.msra.mxu0 %v5209
        %6933 = vmatpush.bf16.msra.mxu0 %v5201
        %6934 = vmatpush.bf16.msra.mxu0 %v5193
        %6935 = vmatpush.bf16.msra.mxu0 %v5185
        %6936 = vmatpush.bf16.msra.mxu0 %v5177
        %6937 = vmatpush.bf16.msra.mxu0 %v5169
        %6938 = vmatmul.bf16.gmra.mxu0 %v2848
        %v6939 = vpop.f32.mrf.mxu0
        %v6940 = vadd.f32 %v6891, %v6939
        %v6941 = vpop.f32.mrf.mxu0
        %v6942 = vadd.f32 %v6893, %v6941
        %6943 = vmatmul.bf16.gmra.mxu0 %v2856
        %v6944 = vpop.f32.mrf.mxu0
        %v6945 = vadd.f32 %v6896, %v6944
        %v6946 = vpop.f32.mrf.mxu0
        %v6947 = vadd.f32 %v6898, %v6946
        %6948 = vmatmul.bf16.gmra.mxu0 %v2864
        %v6949 = vpop.f32.mrf.mxu0
        %v6950 = vadd.f32 %v6901, %v6949
        %v6951 = vpop.f32.mrf.mxu0
        %v6952 = vadd.f32 %v6903, %v6951
        %6953 = vmatmul.bf16.gmra.mxu0 %v2872
        %v6954 = vpop.f32.mrf.mxu0
        %v6955 = vadd.f32 %v6906, %v6954
        %v6956 = vpop.f32.mrf.mxu0
        %v6957 = vadd.f32 %v6908, %v6956
        %6958 = vmatmul.bf16.gmra.mxu0 %v2880
        %v6959 = vpop.f32.mrf.mxu0
        %v6960 = vadd.f32 %v6911, %v6959
        %v6961 = vpop.f32.mrf.mxu0
        %v6962 = vadd.f32 %v6913, %v6961
        %6963 = vmatmul.bf16.gmra.mxu0 %v2888
        %v6964 = vpop.f32.mrf.mxu0
        %v6965 = vadd.f32 %v6916, %v6964
        %v6966 = vpop.f32.mrf.mxu0
        %v6967 = vadd.f32 %v6918, %v6966
        %6968 = vmatmul.bf16.gmra.mxu0 %v2896
        %v6969 = vpop.f32.mrf.mxu0
        %v6970 = vadd.f32 %v6921, %v6969
        %v6971 = vpop.f32.mrf.mxu0
        %v6972 = vadd.f32 %v6923, %v6971
        %6973 = vmatmul.bf16.gmra.mxu0 %v2904
        %v6974 = vpop.f32.mrf.mxu0
        %v6975 = vadd.f32 %v6926, %v6974
        %v6976 = vpop.f32.mrf.mxu0
        %v6977 = vadd.f32 %v6928, %v6976
        %6978 = vdwg.mxu0
        %6979 = vmatpush.bf16.msra.mxu0 %v5289
        %6980 = vmatpush.bf16.msra.mxu0 %v5281
        %6981 = vmatpush.bf16.msra.mxu0 %v5273
        %6982 = vmatpush.bf16.msra.mxu0 %v5265
        %6983 = vmatpush.bf16.msra.mxu0 %v5257
        %6984 = vmatpush.bf16.msra.mxu0 %v5249
        %6985 = vmatpush.bf16.msra.mxu0 %v5241
        %6986 = vmatpush.bf16.msra.mxu0 %v5233
        %6987 = vmatmul.bf16.gmra.mxu0 %v2849
        %v6988 = vpop.f32.mrf.mxu0
        %v6989 = vadd.f32 %v6940, %v6988
        %v6990 = vpop.f32.mrf.mxu0
        %v6991 = vadd.f32 %v6942, %v6990
        %6992 = vmatmul.bf16.gmra.mxu0 %v2857
        %v6993 = vpop.f32.mrf.mxu0
        %v6994 = vadd.f32 %v6945, %v6993
        %v6995 = vpop.f32.mrf.mxu0
        %v6996 = vadd.f32 %v6947, %v6995
        %6997 = vmatmul.bf16.gmra.mxu0 %v2865
        %v6998 = vpop.f32.mrf.mxu0
        %v6999 = vadd.f32 %v6950, %v6998
        %v7000 = vpop.f32.mrf.mxu0
        %v7001 = vadd.f32 %v6952, %v7000
        %7002 = vmatmul.bf16.gmra.mxu0 %v2873
        %v7003 = vpop.f32.mrf.mxu0
        %v7004 = vadd.f32 %v6955, %v7003
        %v7005 = vpop.f32.mrf.mxu0
        %v7006 = vadd.f32 %v6957, %v7005
        %7007 = vmatmul.bf16.gmra.mxu0 %v2881
        %v7008 = vpop.f32.mrf.mxu0
        %v7009 = vadd.f32 %v6960, %v7008
        %v7010 = vpop.f32.mrf.mxu0
        %v7011 = vadd.f32 %v6962, %v7010
        %7012 = vmatmul.bf16.gmra.mxu0 %v2889
        %v7013 = vpop.f32.mrf.mxu0
        %v7014 = vadd.f32 %v6965, %v7013
        %v7015 = vpop.f32.mrf.mxu0
        %v7016 = vadd.f32 %v6967, %v7015
        %7017 = vmatmul.bf16.gmra.mxu0 %v2897
        %v7018 = vpop.f32.mrf.mxu0
        %v7019 = vadd.f32 %v6970, %v7018
        %v7020 = vpop.f32.mrf.mxu0
        %v7021 = vadd.f32 %v6972, %v7020
        %7022 = vmatmul.bf16.gmra.mxu0 %v2905
        %v7023 = vpop.f32.mrf.mxu0
        %v7024 = vadd.f32 %v6975, %v7023
        %v7025 = vpop.f32.mrf.mxu0
        %v7026 = vadd.f32 %v6977, %v7025
        %7027 = vdwg.mxu0
        %7028 = vmatpush.bf16.msra.mxu0 %v5353
        %7029 = vmatpush.bf16.msra.mxu0 %v5345
        %7030 = vmatpush.bf16.msra.mxu0 %v5337
        %7031 = vmatpush.bf16.msra.mxu0 %v5329
        %7032 = vmatpush.bf16.msra.mxu0 %v5321
        %7033 = vmatpush.bf16.msra.mxu0 %v5313
        %7034 = vmatpush.bf16.msra.mxu0 %v5305
        %7035 = vmatpush.bf16.msra.mxu0 %v5297
        %7036 = vmatmul.bf16.gmra.mxu0 %v2850
        %v7037 = vpop.f32.mrf.mxu0
        %v7038 = vadd.f32 %v6989, %v7037
        %v7039 = vpop.f32.mrf.mxu0
        %v7040 = vadd.f32 %v6991, %v7039
        %7041 = vmatmul.bf16.gmra.mxu0 %v2858
        %v7042 = vpop.f32.mrf.mxu0
        %v7043 = vadd.f32 %v6994, %v7042
        %v7044 = vpop.f32.mrf.mxu0
        %v7045 = vadd.f32 %v6996, %v7044
        %7046 = vmatmul.bf16.gmra.mxu0 %v2866
        %v7047 = vpop.f32.mrf.mxu0
        %v7048 = vadd.f32 %v6999, %v7047
        %v7049 = vpop.f32.mrf.mxu0
        %v7050 = vadd.f32 %v7001, %v7049
        %7051 = vmatmul.bf16.gmra.mxu0 %v2874
        %v7052 = vpop.f32.mrf.mxu0
        %v7053 = vadd.f32 %v7004, %v7052
        %v7054 = vpop.f32.mrf.mxu0
        %v7055 = vadd.f32 %v7006, %v7054
        %7056 = vmatmul.bf16.gmra.mxu0 %v2882
        %v7057 = vpop.f32.mrf.mxu0
        %v7058 = vadd.f32 %v7009, %v7057
        %v7059 = vpop.f32.mrf.mxu0
        %v7060 = vadd.f32 %v7011, %v7059
        %7061 = vmatmul.bf16.gmra.mxu0 %v2890
        %v7062 = vpop.f32.mrf.mxu0
        %v7063 = vadd.f32 %v7014, %v7062
        %v7064 = vpop.f32.mrf.mxu0
        %v7065 = vadd.f32 %v7016, %v7064
        %7066 = vmatmul.bf16.gmra.mxu0 %v2898
        %v7067 = vpop.f32.mrf.mxu0
        %v7068 = vadd.f32 %v7019, %v7067
        %v7069 = vpop.f32.mrf.mxu0
        %v7070 = vadd.f32 %v7021, %v7069
        %7071 = vmatmul.bf16.gmra.mxu0 %v2906
        %v7072 = vpop.f32.mrf.mxu0
        %v7073 = vadd.f32 %v7024, %v7072
        %v7074 = vpop.f32.mrf.mxu0
        %v7075 = vadd.f32 %v7026, %v7074
        %7076 = vdwg.mxu0
        %7077 = vmatpush.bf16.msra.mxu0 %v5417
        %7078 = vmatpush.bf16.msra.mxu0 %v5409
        %7079 = vmatpush.bf16.msra.mxu0 %v5401
        %7080 = vmatpush.bf16.msra.mxu0 %v5393
        %7081 = vmatpush.bf16.msra.mxu0 %v5385
        %7082 = vmatpush.bf16.msra.mxu0 %v5377
        %7083 = vmatpush.bf16.msra.mxu0 %v5369
        %7084 = vmatpush.bf16.msra.mxu0 %v5361
        %7085 = vmatmul.bf16.gmra.mxu0 %v2851
        %v7086 = vpop.f32.mrf.mxu0
        %v7087 = vadd.f32 %v7038, %v7086
        %v7088 = vpop.f32.mrf.mxu0
        %v7089 = vadd.f32 %v7040, %v7088
        %7090 = vmatmul.bf16.gmra.mxu0 %v2859
        %v7091 = vpop.f32.mrf.mxu0
        %v7092 = vadd.f32 %v7043, %v7091
        %v7093 = vpop.f32.mrf.mxu0
        %v7094 = vadd.f32 %v7045, %v7093
        %7095 = vmatmul.bf16.gmra.mxu0 %v2867
        %v7096 = vpop.f32.mrf.mxu0
        %v7097 = vadd.f32 %v7048, %v7096
        %v7098 = vpop.f32.mrf.mxu0
        %v7099 = vadd.f32 %v7050, %v7098
        %7100 = vmatmul.bf16.gmra.mxu0 %v2875
        %v7101 = vpop.f32.mrf.mxu0
        %v7102 = vadd.f32 %v7053, %v7101
        %v7103 = vpop.f32.mrf.mxu0
        %v7104 = vadd.f32 %v7055, %v7103
        %7105 = vmatmul.bf16.gmra.mxu0 %v2883
        %v7106 = vpop.f32.mrf.mxu0
        %v7107 = vadd.f32 %v7058, %v7106
        %v7108 = vpop.f32.mrf.mxu0
        %v7109 = vadd.f32 %v7060, %v7108
        %7110 = vmatmul.bf16.gmra.mxu0 %v2891
        %v7111 = vpop.f32.mrf.mxu0
        %v7112 = vadd.f32 %v7063, %v7111
        %v7113 = vpop.f32.mrf.mxu0
        %v7114 = vadd.f32 %v7065, %v7113
        %7115 = vmatmul.bf16.gmra.mxu0 %v2899
        %v7116 = vpop.f32.mrf.mxu0
        %v7117 = vadd.f32 %v7068, %v7116
        %v7118 = vpop.f32.mrf.mxu0
        %v7119 = vadd.f32 %v7070, %v7118
        %7120 = vmatmul.bf16.gmra.mxu0 %v2907
        %v7121 = vpop.f32.mrf.mxu0
        %v7122 = vadd.f32 %v7073, %v7121
        %v7123 = vpop.f32.mrf.mxu0
        %v7124 = vadd.f32 %v7075, %v7123
        %7125 = vdwg.mxu0
        %7126 = vmatpush.bf16.msra.mxu0 %v5481
        %7127 = vmatpush.bf16.msra.mxu0 %v5473
        %7128 = vmatpush.bf16.msra.mxu0 %v5465
        %7129 = vmatpush.bf16.msra.mxu0 %v5457
        %7130 = vmatpush.bf16.msra.mxu0 %v5449
        %7131 = vmatpush.bf16.msra.mxu0 %v5441
        %7132 = vmatpush.bf16.msra.mxu0 %v5433
        %7133 = vmatpush.bf16.msra.mxu0 %v5425
        %7134 = vmatmul.bf16.gmra.mxu0 %v2852
        %v7135 = vpop.f32.mrf.mxu0
        %v7136 = vadd.f32 %v7087, %v7135
        %v7137 = vpop.f32.mrf.mxu0
        %v7138 = vadd.f32 %v7089, %v7137
        %7139 = vmatmul.bf16.gmra.mxu0 %v2860
        %v7140 = vpop.f32.mrf.mxu0
        %v7141 = vadd.f32 %v7092, %v7140
        %v7142 = vpop.f32.mrf.mxu0
        %v7143 = vadd.f32 %v7094, %v7142
        %7144 = vmatmul.bf16.gmra.mxu0 %v2868
        %v7145 = vpop.f32.mrf.mxu0
        %v7146 = vadd.f32 %v7097, %v7145
        %v7147 = vpop.f32.mrf.mxu0
        %v7148 = vadd.f32 %v7099, %v7147
        %7149 = vmatmul.bf16.gmra.mxu0 %v2876
        %v7150 = vpop.f32.mrf.mxu0
        %v7151 = vadd.f32 %v7102, %v7150
        %v7152 = vpop.f32.mrf.mxu0
        %v7153 = vadd.f32 %v7104, %v7152
        %7154 = vmatmul.bf16.gmra.mxu0 %v2884
        %v7155 = vpop.f32.mrf.mxu0
        %v7156 = vadd.f32 %v7107, %v7155
        %v7157 = vpop.f32.mrf.mxu0
        %v7158 = vadd.f32 %v7109, %v7157
        %7159 = vmatmul.bf16.gmra.mxu0 %v2892
        %v7160 = vpop.f32.mrf.mxu0
        %v7161 = vadd.f32 %v7112, %v7160
        %v7162 = vpop.f32.mrf.mxu0
        %v7163 = vadd.f32 %v7114, %v7162
        %7164 = vmatmul.bf16.gmra.mxu0 %v2900
        %v7165 = vpop.f32.mrf.mxu0
        %v7166 = vadd.f32 %v7117, %v7165
        %v7167 = vpop.f32.mrf.mxu0
        %v7168 = vadd.f32 %v7119, %v7167
        %7169 = vmatmul.bf16.gmra.mxu0 %v2908
        %v7170 = vpop.f32.mrf.mxu0
        %v7171 = vadd.f32 %v7122, %v7170
        %v7172 = vpop.f32.mrf.mxu0
        %v7173 = vadd.f32 %v7124, %v7172
        %7174 = vdwg.mxu0
        %7175 = vmatpush.bf16.msra.mxu0 %v5034
        %7176 = vmatpush.bf16.msra.mxu0 %v5026
        %7177 = vmatpush.bf16.msra.mxu0 %v5018
        %7178 = vmatpush.bf16.msra.mxu0 %v5010
        %7179 = vmatpush.bf16.msra.mxu0 %v5002
        %7180 = vmatpush.bf16.msra.mxu0 %v4994
        %7181 = vmatpush.bf16.msra.mxu0 %v4986
        %7182 = vmatpush.bf16.msra.mxu0 %v4978
        %7183 = vmatmul.bf16.gmra.mxu0 %v2845
        %v7184 = vpop.f32.mrf.mxu0
        %v7185 = vadd.f32 %v3426, %v7184
        %v7186 = vpop.f32.mrf.mxu0
        %v7187 = vadd.f32 %v3426, %v7186
        %7188 = vmatmul.bf16.gmra.mxu0 %v2853
        %v7189 = vpop.f32.mrf.mxu0
        %v7190 = vadd.f32 %v3426, %v7189
        %v7191 = vpop.f32.mrf.mxu0
        %v7192 = vadd.f32 %v3426, %v7191
        %7193 = vmatmul.bf16.gmra.mxu0 %v2861
        %v7194 = vpop.f32.mrf.mxu0
        %v7195 = vadd.f32 %v3426, %v7194
        %v7196 = vpop.f32.mrf.mxu0
        %v7197 = vadd.f32 %v3426, %v7196
        %7198 = vmatmul.bf16.gmra.mxu0 %v2869
        %v7199 = vpop.f32.mrf.mxu0
        %v7200 = vadd.f32 %v3426, %v7199
        %v7201 = vpop.f32.mrf.mxu0
        %v7202 = vadd.f32 %v3426, %v7201
        %7203 = vmatmul.bf16.gmra.mxu0 %v2877
        %v7204 = vpop.f32.mrf.mxu0
        %v7205 = vadd.f32 %v3426, %v7204
        %v7206 = vpop.f32.mrf.mxu0
        %v7207 = vadd.f32 %v3426, %v7206
        %7208 = vmatmul.bf16.gmra.mxu0 %v2885
        %v7209 = vpop.f32.mrf.mxu0
        %v7210 = vadd.f32 %v3426, %v7209
        %v7211 = vpop.f32.mrf.mxu0
        %v7212 = vadd.f32 %v3426, %v7211
        %7213 = vmatmul.bf16.gmra.mxu0 %v2893
        %v7214 = vpop.f32.mrf.mxu0
        %v7215 = vadd.f32 %v3426, %v7214
        %v7216 = vpop.f32.mrf.mxu0
        %v7217 = vadd.f32 %v3426, %v7216
        %7218 = vmatmul.bf16.gmra.mxu0 %v2901
        %v7219 = vpop.f32.mrf.mxu0
        %v7220 = vadd.f32 %v3426, %v7219
        %v7221 = vpop.f32.mrf.mxu0
        %v7222 = vadd.f32 %v3426, %v7221
        %7223 = vdwg.mxu0
        %7224 = vmatpush.bf16.msra.mxu0 %v5098
        %7225 = vmatpush.bf16.msra.mxu0 %v5090
        %7226 = vmatpush.bf16.msra.mxu0 %v5082
        %7227 = vmatpush.bf16.msra.mxu0 %v5074
        %7228 = vmatpush.bf16.msra.mxu0 %v5066
        %7229 = vmatpush.bf16.msra.mxu0 %v5058
        %7230 = vmatpush.bf16.msra.mxu0 %v5050
        %7231 = vmatpush.bf16.msra.mxu0 %v5042
        %7232 = vmatmul.bf16.gmra.mxu0 %v2846
        %v7233 = vpop.f32.mrf.mxu0
        %v7234 = vadd.f32 %v7185, %v7233
        %v7235 = vpop.f32.mrf.mxu0
        %v7236 = vadd.f32 %v7187, %v7235
        %7237 = vmatmul.bf16.gmra.mxu0 %v2854
        %v7238 = vpop.f32.mrf.mxu0
        %v7239 = vadd.f32 %v7190, %v7238
        %v7240 = vpop.f32.mrf.mxu0
        %v7241 = vadd.f32 %v7192, %v7240
        %7242 = vmatmul.bf16.gmra.mxu0 %v2862
        %v7243 = vpop.f32.mrf.mxu0
        %v7244 = vadd.f32 %v7195, %v7243
        %v7245 = vpop.f32.mrf.mxu0
        %v7246 = vadd.f32 %v7197, %v7245
        %7247 = vmatmul.bf16.gmra.mxu0 %v2870
        %v7248 = vpop.f32.mrf.mxu0
        %v7249 = vadd.f32 %v7200, %v7248
        %v7250 = vpop.f32.mrf.mxu0
        %v7251 = vadd.f32 %v7202, %v7250
        %7252 = vmatmul.bf16.gmra.mxu0 %v2878
        %v7253 = vpop.f32.mrf.mxu0
        %v7254 = vadd.f32 %v7205, %v7253
        %v7255 = vpop.f32.mrf.mxu0
        %v7256 = vadd.f32 %v7207, %v7255
        %7257 = vmatmul.bf16.gmra.mxu0 %v2886
        %v7258 = vpop.f32.mrf.mxu0
        %v7259 = vadd.f32 %v7210, %v7258
        %v7260 = vpop.f32.mrf.mxu0
        %v7261 = vadd.f32 %v7212, %v7260
        %7262 = vmatmul.bf16.gmra.mxu0 %v2894
        %v7263 = vpop.f32.mrf.mxu0
        %v7264 = vadd.f32 %v7215, %v7263
        %v7265 = vpop.f32.mrf.mxu0
        %v7266 = vadd.f32 %v7217, %v7265
        %7267 = vmatmul.bf16.gmra.mxu0 %v2902
        %v7268 = vpop.f32.mrf.mxu0
        %v7269 = vadd.f32 %v7220, %v7268
        %v7270 = vpop.f32.mrf.mxu0
        %v7271 = vadd.f32 %v7222, %v7270
        %7272 = vdwg.mxu0
        %7273 = vmatpush.bf16.msra.mxu0 %v5162
        %7274 = vmatpush.bf16.msra.mxu0 %v5154
        %7275 = vmatpush.bf16.msra.mxu0 %v5146
        %7276 = vmatpush.bf16.msra.mxu0 %v5138
        %7277 = vmatpush.bf16.msra.mxu0 %v5130
        %7278 = vmatpush.bf16.msra.mxu0 %v5122
        %7279 = vmatpush.bf16.msra.mxu0 %v5114
        %7280 = vmatpush.bf16.msra.mxu0 %v5106
        %7281 = vmatmul.bf16.gmra.mxu0 %v2847
        %v7282 = vpop.f32.mrf.mxu0
        %v7283 = vadd.f32 %v7234, %v7282
        %v7284 = vpop.f32.mrf.mxu0
        %v7285 = vadd.f32 %v7236, %v7284
        %7286 = vmatmul.bf16.gmra.mxu0 %v2855
        %v7287 = vpop.f32.mrf.mxu0
        %v7288 = vadd.f32 %v7239, %v7287
        %v7289 = vpop.f32.mrf.mxu0
        %v7290 = vadd.f32 %v7241, %v7289
        %7291 = vmatmul.bf16.gmra.mxu0 %v2863
        %v7292 = vpop.f32.mrf.mxu0
        %v7293 = vadd.f32 %v7244, %v7292
        %v7294 = vpop.f32.mrf.mxu0
        %v7295 = vadd.f32 %v7246, %v7294
        %7296 = vmatmul.bf16.gmra.mxu0 %v2871
        %v7297 = vpop.f32.mrf.mxu0
        %v7298 = vadd.f32 %v7249, %v7297
        %v7299 = vpop.f32.mrf.mxu0
        %v7300 = vadd.f32 %v7251, %v7299
        %7301 = vmatmul.bf16.gmra.mxu0 %v2879
        %v7302 = vpop.f32.mrf.mxu0
        %v7303 = vadd.f32 %v7254, %v7302
        %v7304 = vpop.f32.mrf.mxu0
        %v7305 = vadd.f32 %v7256, %v7304
        %7306 = vmatmul.bf16.gmra.mxu0 %v2887
        %v7307 = vpop.f32.mrf.mxu0
        %v7308 = vadd.f32 %v7259, %v7307
        %v7309 = vpop.f32.mrf.mxu0
        %v7310 = vadd.f32 %v7261, %v7309
        %7311 = vmatmul.bf16.gmra.mxu0 %v2895
        %v7312 = vpop.f32.mrf.mxu0
        %v7313 = vadd.f32 %v7264, %v7312
        %v7314 = vpop.f32.mrf.mxu0
        %v7315 = vadd.f32 %v7266, %v7314
        %7316 = vmatmul.bf16.gmra.mxu0 %v2903
        %v7317 = vpop.f32.mrf.mxu0
        %v7318 = vadd.f32 %v7269, %v7317
        %v7319 = vpop.f32.mrf.mxu0
        %v7320 = vadd.f32 %v7271, %v7319
        %7321 = vdwg.mxu0
        %7322 = vmatpush.bf16.msra.mxu0 %v5226
        %7323 = vmatpush.bf16.msra.mxu0 %v5218
        %7324 = vmatpush.bf16.msra.mxu0 %v5210
        %7325 = vmatpush.bf16.msra.mxu0 %v5202
        %7326 = vmatpush.bf16.msra.mxu0 %v5194
        %7327 = vmatpush.bf16.msra.mxu0 %v5186
        %7328 = vmatpush.bf16.msra.mxu0 %v5178
        %7329 = vmatpush.bf16.msra.mxu0 %v5170
        %7330 = vmatmul.bf16.gmra.mxu0 %v2848
        %v7331 = vpop.f32.mrf.mxu0
        %v7332 = vadd.f32 %v7283, %v7331
        %v7333 = vpop.f32.mrf.mxu0
        %v7334 = vadd.f32 %v7285, %v7333
        %7335 = vmatmul.bf16.gmra.mxu0 %v2856
        %v7336 = vpop.f32.mrf.mxu0
        %v7337 = vadd.f32 %v7288, %v7336
        %v7338 = vpop.f32.mrf.mxu0
        %v7339 = vadd.f32 %v7290, %v7338
        %7340 = vmatmul.bf16.gmra.mxu0 %v2864
        %v7341 = vpop.f32.mrf.mxu0
        %v7342 = vadd.f32 %v7293, %v7341
        %v7343 = vpop.f32.mrf.mxu0
        %v7344 = vadd.f32 %v7295, %v7343
        %7345 = vmatmul.bf16.gmra.mxu0 %v2872
        %v7346 = vpop.f32.mrf.mxu0
        %v7347 = vadd.f32 %v7298, %v7346
        %v7348 = vpop.f32.mrf.mxu0
        %v7349 = vadd.f32 %v7300, %v7348
        %7350 = vmatmul.bf16.gmra.mxu0 %v2880
        %v7351 = vpop.f32.mrf.mxu0
        %v7352 = vadd.f32 %v7303, %v7351
        %v7353 = vpop.f32.mrf.mxu0
        %v7354 = vadd.f32 %v7305, %v7353
        %7355 = vmatmul.bf16.gmra.mxu0 %v2888
        %v7356 = vpop.f32.mrf.mxu0
        %v7357 = vadd.f32 %v7308, %v7356
        %v7358 = vpop.f32.mrf.mxu0
        %v7359 = vadd.f32 %v7310, %v7358
        %7360 = vmatmul.bf16.gmra.mxu0 %v2896
        %v7361 = vpop.f32.mrf.mxu0
        %v7362 = vadd.f32 %v7313, %v7361
        %v7363 = vpop.f32.mrf.mxu0
        %v7364 = vadd.f32 %v7315, %v7363
        %7365 = vmatmul.bf16.gmra.mxu0 %v2904
        %v7366 = vpop.f32.mrf.mxu0
        %v7367 = vadd.f32 %v7318, %v7366
        %v7368 = vpop.f32.mrf.mxu0
        %v7369 = vadd.f32 %v7320, %v7368
        %7370 = vdwg.mxu0
        %7371 = vmatpush.bf16.msra.mxu0 %v5290
        %7372 = vmatpush.bf16.msra.mxu0 %v5282
        %7373 = vmatpush.bf16.msra.mxu0 %v5274
        %7374 = vmatpush.bf16.msra.mxu0 %v5266
        %7375 = vmatpush.bf16.msra.mxu0 %v5258
        %7376 = vmatpush.bf16.msra.mxu0 %v5250
        %7377 = vmatpush.bf16.msra.mxu0 %v5242
        %7378 = vmatpush.bf16.msra.mxu0 %v5234
        %7379 = vmatmul.bf16.gmra.mxu0 %v2849
        %v7380 = vpop.f32.mrf.mxu0
        %v7381 = vadd.f32 %v7332, %v7380
        %v7382 = vpop.f32.mrf.mxu0
        %v7383 = vadd.f32 %v7334, %v7382
        %7384 = vmatmul.bf16.gmra.mxu0 %v2857
        %v7385 = vpop.f32.mrf.mxu0
        %v7386 = vadd.f32 %v7337, %v7385
        %v7387 = vpop.f32.mrf.mxu0
        %v7388 = vadd.f32 %v7339, %v7387
        %7389 = vmatmul.bf16.gmra.mxu0 %v2865
        %v7390 = vpop.f32.mrf.mxu0
        %v7391 = vadd.f32 %v7342, %v7390
        %v7392 = vpop.f32.mrf.mxu0
        %v7393 = vadd.f32 %v7344, %v7392
        %7394 = vmatmul.bf16.gmra.mxu0 %v2873
        %v7395 = vpop.f32.mrf.mxu0
        %v7396 = vadd.f32 %v7347, %v7395
        %v7397 = vpop.f32.mrf.mxu0
        %v7398 = vadd.f32 %v7349, %v7397
        %7399 = vmatmul.bf16.gmra.mxu0 %v2881
        %v7400 = vpop.f32.mrf.mxu0
        %v7401 = vadd.f32 %v7352, %v7400
        %v7402 = vpop.f32.mrf.mxu0
        %v7403 = vadd.f32 %v7354, %v7402
        %7404 = vmatmul.bf16.gmra.mxu0 %v2889
        %v7405 = vpop.f32.mrf.mxu0
        %v7406 = vadd.f32 %v7357, %v7405
        %v7407 = vpop.f32.mrf.mxu0
        %v7408 = vadd.f32 %v7359, %v7407
        %7409 = vmatmul.bf16.gmra.mxu0 %v2897
        %v7410 = vpop.f32.mrf.mxu0
        %v7411 = vadd.f32 %v7362, %v7410
        %v7412 = vpop.f32.mrf.mxu0
        %v7413 = vadd.f32 %v7364, %v7412
        %7414 = vmatmul.bf16.gmra.mxu0 %v2905
        %v7415 = vpop.f32.mrf.mxu0
        %v7416 = vadd.f32 %v7367, %v7415
        %v7417 = vpop.f32.mrf.mxu0
        %v7418 = vadd.f32 %v7369, %v7417
        %7419 = vdwg.mxu0
        %7420 = vmatpush.bf16.msra.mxu0 %v5354
        %7421 = vmatpush.bf16.msra.mxu0 %v5346
        %7422 = vmatpush.bf16.msra.mxu0 %v5338
        %7423 = vmatpush.bf16.msra.mxu0 %v5330
        %7424 = vmatpush.bf16.msra.mxu0 %v5322
        %7425 = vmatpush.bf16.msra.mxu0 %v5314
        %7426 = vmatpush.bf16.msra.mxu0 %v5306
        %7427 = vmatpush.bf16.msra.mxu0 %v5298
        %7428 = vmatmul.bf16.gmra.mxu0 %v2850
        %v7429 = vpop.f32.mrf.mxu0
        %v7430 = vadd.f32 %v7381, %v7429
        %v7431 = vpop.f32.mrf.mxu0
        %v7432 = vadd.f32 %v7383, %v7431
        %7433 = vmatmul.bf16.gmra.mxu0 %v2858
        %v7434 = vpop.f32.mrf.mxu0
        %v7435 = vadd.f32 %v7386, %v7434
        %v7436 = vpop.f32.mrf.mxu0
        %v7437 = vadd.f32 %v7388, %v7436
        %7438 = vmatmul.bf16.gmra.mxu0 %v2866
        %v7439 = vpop.f32.mrf.mxu0
        %v7440 = vadd.f32 %v7391, %v7439
        %v7441 = vpop.f32.mrf.mxu0
        %v7442 = vadd.f32 %v7393, %v7441
        %7443 = vmatmul.bf16.gmra.mxu0 %v2874
        %v7444 = vpop.f32.mrf.mxu0
        %v7445 = vadd.f32 %v7396, %v7444
        %v7446 = vpop.f32.mrf.mxu0
        %v7447 = vadd.f32 %v7398, %v7446
        %7448 = vmatmul.bf16.gmra.mxu0 %v2882
        %v7449 = vpop.f32.mrf.mxu0
        %v7450 = vadd.f32 %v7401, %v7449
        %v7451 = vpop.f32.mrf.mxu0
        %v7452 = vadd.f32 %v7403, %v7451
        %7453 = vmatmul.bf16.gmra.mxu0 %v2890
        %v7454 = vpop.f32.mrf.mxu0
        %v7455 = vadd.f32 %v7406, %v7454
        %v7456 = vpop.f32.mrf.mxu0
        %v7457 = vadd.f32 %v7408, %v7456
        %7458 = vmatmul.bf16.gmra.mxu0 %v2898
        %v7459 = vpop.f32.mrf.mxu0
        %v7460 = vadd.f32 %v7411, %v7459
        %v7461 = vpop.f32.mrf.mxu0
        %v7462 = vadd.f32 %v7413, %v7461
        %7463 = vmatmul.bf16.gmra.mxu0 %v2906
        %v7464 = vpop.f32.mrf.mxu0
        %v7465 = vadd.f32 %v7416, %v7464
        %v7466 = vpop.f32.mrf.mxu0
        %v7467 = vadd.f32 %v7418, %v7466
        %7468 = vdwg.mxu0
        %7469 = vmatpush.bf16.msra.mxu0 %v5418
        %7470 = vmatpush.bf16.msra.mxu0 %v5410
        %7471 = vmatpush.bf16.msra.mxu0 %v5402
        %7472 = vmatpush.bf16.msra.mxu0 %v5394
        %7473 = vmatpush.bf16.msra.mxu0 %v5386
        %7474 = vmatpush.bf16.msra.mxu0 %v5378
        %7475 = vmatpush.bf16.msra.mxu0 %v5370
        %7476 = vmatpush.bf16.msra.mxu0 %v5362
        %7477 = vmatmul.bf16.gmra.mxu0 %v2851
        %v7478 = vpop.f32.mrf.mxu0
        %v7479 = vadd.f32 %v7430, %v7478
        %v7480 = vpop.f32.mrf.mxu0
        %v7481 = vadd.f32 %v7432, %v7480
        %7482 = vmatmul.bf16.gmra.mxu0 %v2859
        %v7483 = vpop.f32.mrf.mxu0
        %v7484 = vadd.f32 %v7435, %v7483
        %v7485 = vpop.f32.mrf.mxu0
        %v7486 = vadd.f32 %v7437, %v7485
        %7487 = vmatmul.bf16.gmra.mxu0 %v2867
        %v7488 = vpop.f32.mrf.mxu0
        %v7489 = vadd.f32 %v7440, %v7488
        %v7490 = vpop.f32.mrf.mxu0
        %v7491 = vadd.f32 %v7442, %v7490
        %7492 = vmatmul.bf16.gmra.mxu0 %v2875
        %v7493 = vpop.f32.mrf.mxu0
        %v7494 = vadd.f32 %v7445, %v7493
        %v7495 = vpop.f32.mrf.mxu0
        %v7496 = vadd.f32 %v7447, %v7495
        %7497 = vmatmul.bf16.gmra.mxu0 %v2883
        %v7498 = vpop.f32.mrf.mxu0
        %v7499 = vadd.f32 %v7450, %v7498
        %v7500 = vpop.f32.mrf.mxu0
        %v7501 = vadd.f32 %v7452, %v7500
        %7502 = vmatmul.bf16.gmra.mxu0 %v2891
        %v7503 = vpop.f32.mrf.mxu0
        %v7504 = vadd.f32 %v7455, %v7503
        %v7505 = vpop.f32.mrf.mxu0
        %v7506 = vadd.f32 %v7457, %v7505
        %7507 = vmatmul.bf16.gmra.mxu0 %v2899
        %v7508 = vpop.f32.mrf.mxu0
        %v7509 = vadd.f32 %v7460, %v7508
        %v7510 = vpop.f32.mrf.mxu0
        %v7511 = vadd.f32 %v7462, %v7510
        %7512 = vmatmul.bf16.gmra.mxu0 %v2907
        %v7513 = vpop.f32.mrf.mxu0
        %v7514 = vadd.f32 %v7465, %v7513
        %v7515 = vpop.f32.mrf.mxu0
        %v7516 = vadd.f32 %v7467, %v7515
        %7517 = vdwg.mxu0
        %7518 = vmatpush.bf16.msra.mxu0 %v5482
        %7519 = vmatpush.bf16.msra.mxu0 %v5474
        %7520 = vmatpush.bf16.msra.mxu0 %v5466
        %7521 = vmatpush.bf16.msra.mxu0 %v5458
        %7522 = vmatpush.bf16.msra.mxu0 %v5450
        %7523 = vmatpush.bf16.msra.mxu0 %v5442
        %7524 = vmatpush.bf16.msra.mxu0 %v5434
        %7525 = vmatpush.bf16.msra.mxu0 %v5426
        %7526 = vmatmul.bf16.gmra.mxu0 %v2852
        %v7527 = vpop.f32.mrf.mxu0
        %v7528 = vadd.f32 %v7479, %v7527
        %v7529 = vpop.f32.mrf.mxu0
        %v7530 = vadd.f32 %v7481, %v7529
        %7531 = vmatmul.bf16.gmra.mxu0 %v2860
        %v7532 = vpop.f32.mrf.mxu0
        %v7533 = vadd.f32 %v7484, %v7532
        %v7534 = vpop.f32.mrf.mxu0
        %v7535 = vadd.f32 %v7486, %v7534
        %7536 = vmatmul.bf16.gmra.mxu0 %v2868
        %v7537 = vpop.f32.mrf.mxu0
        %v7538 = vadd.f32 %v7489, %v7537
        %v7539 = vpop.f32.mrf.mxu0
        %v7540 = vadd.f32 %v7491, %v7539
        %7541 = vmatmul.bf16.gmra.mxu0 %v2876
        %v7542 = vpop.f32.mrf.mxu0
        %v7543 = vadd.f32 %v7494, %v7542
        %v7544 = vpop.f32.mrf.mxu0
        %v7545 = vadd.f32 %v7496, %v7544
        %7546 = vmatmul.bf16.gmra.mxu0 %v2884
        %v7547 = vpop.f32.mrf.mxu0
        %v7548 = vadd.f32 %v7499, %v7547
        %v7549 = vpop.f32.mrf.mxu0
        %v7550 = vadd.f32 %v7501, %v7549
        %7551 = vmatmul.bf16.gmra.mxu0 %v2892
        %v7552 = vpop.f32.mrf.mxu0
        %v7553 = vadd.f32 %v7504, %v7552
        %v7554 = vpop.f32.mrf.mxu0
        %v7555 = vadd.f32 %v7506, %v7554
        %7556 = vmatmul.bf16.gmra.mxu0 %v2900
        %v7557 = vpop.f32.mrf.mxu0
        %v7558 = vadd.f32 %v7509, %v7557
        %v7559 = vpop.f32.mrf.mxu0
        %v7560 = vadd.f32 %v7511, %v7559
        %7561 = vmatmul.bf16.gmra.mxu0 %v2908
        %v7562 = vpop.f32.mrf.mxu0
        %v7563 = vadd.f32 %v7514, %v7562
        %v7564 = vpop.f32.mrf.mxu0
        %v7565 = vadd.f32 %v7516, %v7564
        %7566 = vdwg.mxu0
        %7567 = vmatpush.bf16.msra.mxu0 %v5035
        %7568 = vmatpush.bf16.msra.mxu0 %v5027
        %7569 = vmatpush.bf16.msra.mxu0 %v5019
        %7570 = vmatpush.bf16.msra.mxu0 %v5011
        %7571 = vmatpush.bf16.msra.mxu0 %v5003
        %7572 = vmatpush.bf16.msra.mxu0 %v4995
        %7573 = vmatpush.bf16.msra.mxu0 %v4987
        %7574 = vmatpush.bf16.msra.mxu0 %v4979
        %7575 = vmatmul.bf16.gmra.mxu0 %v2845
        %v7576 = vpop.f32.mrf.mxu0
        %v7577 = vadd.f32 %v3427, %v7576
        %v7578 = vpop.f32.mrf.mxu0
        %v7579 = vadd.f32 %v3427, %v7578
        %7580 = vmatmul.bf16.gmra.mxu0 %v2853
        %v7581 = vpop.f32.mrf.mxu0
        %v7582 = vadd.f32 %v3427, %v7581
        %v7583 = vpop.f32.mrf.mxu0
        %v7584 = vadd.f32 %v3427, %v7583
        %7585 = vmatmul.bf16.gmra.mxu0 %v2861
        %v7586 = vpop.f32.mrf.mxu0
        %v7587 = vadd.f32 %v3427, %v7586
        %v7588 = vpop.f32.mrf.mxu0
        %v7589 = vadd.f32 %v3427, %v7588
        %7590 = vmatmul.bf16.gmra.mxu0 %v2869
        %v7591 = vpop.f32.mrf.mxu0
        %v7592 = vadd.f32 %v3427, %v7591
        %v7593 = vpop.f32.mrf.mxu0
        %v7594 = vadd.f32 %v3427, %v7593
        %7595 = vmatmul.bf16.gmra.mxu0 %v2877
        %v7596 = vpop.f32.mrf.mxu0
        %v7597 = vadd.f32 %v3427, %v7596
        %v7598 = vpop.f32.mrf.mxu0
        %v7599 = vadd.f32 %v3427, %v7598
        %7600 = vmatmul.bf16.gmra.mxu0 %v2885
        %v7601 = vpop.f32.mrf.mxu0
        %v7602 = vadd.f32 %v3427, %v7601
        %v7603 = vpop.f32.mrf.mxu0
        %v7604 = vadd.f32 %v3427, %v7603
        %7605 = vmatmul.bf16.gmra.mxu0 %v2893
        %v7606 = vpop.f32.mrf.mxu0
        %v7607 = vadd.f32 %v3427, %v7606
        %v7608 = vpop.f32.mrf.mxu0
        %v7609 = vadd.f32 %v3427, %v7608
        %7610 = vmatmul.bf16.gmra.mxu0 %v2901
        %v7611 = vpop.f32.mrf.mxu0
        %v7612 = vadd.f32 %v3427, %v7611
        %v7613 = vpop.f32.mrf.mxu0
        %v7614 = vadd.f32 %v3427, %v7613
        %7615 = vdwg.mxu0
        %7616 = vmatpush.bf16.msra.mxu0 %v5099
        %7617 = vmatpush.bf16.msra.mxu0 %v5091
        %7618 = vmatpush.bf16.msra.mxu0 %v5083
        %7619 = vmatpush.bf16.msra.mxu0 %v5075
        %7620 = vmatpush.bf16.msra.mxu0 %v5067
        %7621 = vmatpush.bf16.msra.mxu0 %v5059
        %7622 = vmatpush.bf16.msra.mxu0 %v5051
        %7623 = vmatpush.bf16.msra.mxu0 %v5043
        %7624 = vmatmul.bf16.gmra.mxu0 %v2846
        %v7625 = vpop.f32.mrf.mxu0
        %v7626 = vadd.f32 %v7577, %v7625
        %v7627 = vpop.f32.mrf.mxu0
        %v7628 = vadd.f32 %v7579, %v7627
        %7629 = vmatmul.bf16.gmra.mxu0 %v2854
        %v7630 = vpop.f32.mrf.mxu0
        %v7631 = vadd.f32 %v7582, %v7630
        %v7632 = vpop.f32.mrf.mxu0
        %v7633 = vadd.f32 %v7584, %v7632
        %7634 = vmatmul.bf16.gmra.mxu0 %v2862
        %v7635 = vpop.f32.mrf.mxu0
        %v7636 = vadd.f32 %v7587, %v7635
        %v7637 = vpop.f32.mrf.mxu0
        %v7638 = vadd.f32 %v7589, %v7637
        %7639 = vmatmul.bf16.gmra.mxu0 %v2870
        %v7640 = vpop.f32.mrf.mxu0
        %v7641 = vadd.f32 %v7592, %v7640
        %v7642 = vpop.f32.mrf.mxu0
        %v7643 = vadd.f32 %v7594, %v7642
        %7644 = vmatmul.bf16.gmra.mxu0 %v2878
        %v7645 = vpop.f32.mrf.mxu0
        %v7646 = vadd.f32 %v7597, %v7645
        %v7647 = vpop.f32.mrf.mxu0
        %v7648 = vadd.f32 %v7599, %v7647
        %7649 = vmatmul.bf16.gmra.mxu0 %v2886
        %v7650 = vpop.f32.mrf.mxu0
        %v7651 = vadd.f32 %v7602, %v7650
        %v7652 = vpop.f32.mrf.mxu0
        %v7653 = vadd.f32 %v7604, %v7652
        %7654 = vmatmul.bf16.gmra.mxu0 %v2894
        %v7655 = vpop.f32.mrf.mxu0
        %v7656 = vadd.f32 %v7607, %v7655
        %v7657 = vpop.f32.mrf.mxu0
        %v7658 = vadd.f32 %v7609, %v7657
        %7659 = vmatmul.bf16.gmra.mxu0 %v2902
        %v7660 = vpop.f32.mrf.mxu0
        %v7661 = vadd.f32 %v7612, %v7660
        %v7662 = vpop.f32.mrf.mxu0
        %v7663 = vadd.f32 %v7614, %v7662
        %7664 = vdwg.mxu0
        %7665 = vmatpush.bf16.msra.mxu0 %v5163
        %7666 = vmatpush.bf16.msra.mxu0 %v5155
        %7667 = vmatpush.bf16.msra.mxu0 %v5147
        %7668 = vmatpush.bf16.msra.mxu0 %v5139
        %7669 = vmatpush.bf16.msra.mxu0 %v5131
        %7670 = vmatpush.bf16.msra.mxu0 %v5123
        %7671 = vmatpush.bf16.msra.mxu0 %v5115
        %7672 = vmatpush.bf16.msra.mxu0 %v5107
        %7673 = vmatmul.bf16.gmra.mxu0 %v2847
        %v7674 = vpop.f32.mrf.mxu0
        %v7675 = vadd.f32 %v7626, %v7674
        %v7676 = vpop.f32.mrf.mxu0
        %v7677 = vadd.f32 %v7628, %v7676
        %7678 = vmatmul.bf16.gmra.mxu0 %v2855
        %v7679 = vpop.f32.mrf.mxu0
        %v7680 = vadd.f32 %v7631, %v7679
        %v7681 = vpop.f32.mrf.mxu0
        %v7682 = vadd.f32 %v7633, %v7681
        %7683 = vmatmul.bf16.gmra.mxu0 %v2863
        %v7684 = vpop.f32.mrf.mxu0
        %v7685 = vadd.f32 %v7636, %v7684
        %v7686 = vpop.f32.mrf.mxu0
        %v7687 = vadd.f32 %v7638, %v7686
        %7688 = vmatmul.bf16.gmra.mxu0 %v2871
        %v7689 = vpop.f32.mrf.mxu0
        %v7690 = vadd.f32 %v7641, %v7689
        %v7691 = vpop.f32.mrf.mxu0
        %v7692 = vadd.f32 %v7643, %v7691
        %7693 = vmatmul.bf16.gmra.mxu0 %v2879
        %v7694 = vpop.f32.mrf.mxu0
        %v7695 = vadd.f32 %v7646, %v7694
        %v7696 = vpop.f32.mrf.mxu0
        %v7697 = vadd.f32 %v7648, %v7696
        %7698 = vmatmul.bf16.gmra.mxu0 %v2887
        %v7699 = vpop.f32.mrf.mxu0
        %v7700 = vadd.f32 %v7651, %v7699
        %v7701 = vpop.f32.mrf.mxu0
        %v7702 = vadd.f32 %v7653, %v7701
        %7703 = vmatmul.bf16.gmra.mxu0 %v2895
        %v7704 = vpop.f32.mrf.mxu0
        %v7705 = vadd.f32 %v7656, %v7704
        %v7706 = vpop.f32.mrf.mxu0
        %v7707 = vadd.f32 %v7658, %v7706
        %7708 = vmatmul.bf16.gmra.mxu0 %v2903
        %v7709 = vpop.f32.mrf.mxu0
        %v7710 = vadd.f32 %v7661, %v7709
        %v7711 = vpop.f32.mrf.mxu0
        %v7712 = vadd.f32 %v7663, %v7711
        %7713 = vdwg.mxu0
        %7714 = vmatpush.bf16.msra.mxu0 %v5227
        %7715 = vmatpush.bf16.msra.mxu0 %v5219
        %7716 = vmatpush.bf16.msra.mxu0 %v5211
        %7717 = vmatpush.bf16.msra.mxu0 %v5203
        %7718 = vmatpush.bf16.msra.mxu0 %v5195
        %7719 = vmatpush.bf16.msra.mxu0 %v5187
        %7720 = vmatpush.bf16.msra.mxu0 %v5179
        %7721 = vmatpush.bf16.msra.mxu0 %v5171
        %7722 = vmatmul.bf16.gmra.mxu0 %v2848
        %v7723 = vpop.f32.mrf.mxu0
        %v7724 = vadd.f32 %v7675, %v7723
        %v7725 = vpop.f32.mrf.mxu0
        %v7726 = vadd.f32 %v7677, %v7725
        %7727 = vmatmul.bf16.gmra.mxu0 %v2856
        %v7728 = vpop.f32.mrf.mxu0
        %v7729 = vadd.f32 %v7680, %v7728
        %v7730 = vpop.f32.mrf.mxu0
        %v7731 = vadd.f32 %v7682, %v7730
        %7732 = vmatmul.bf16.gmra.mxu0 %v2864
        %v7733 = vpop.f32.mrf.mxu0
        %v7734 = vadd.f32 %v7685, %v7733
        %v7735 = vpop.f32.mrf.mxu0
        %v7736 = vadd.f32 %v7687, %v7735
        %7737 = vmatmul.bf16.gmra.mxu0 %v2872
        %v7738 = vpop.f32.mrf.mxu0
        %v7739 = vadd.f32 %v7690, %v7738
        %v7740 = vpop.f32.mrf.mxu0
        %v7741 = vadd.f32 %v7692, %v7740
        %7742 = vmatmul.bf16.gmra.mxu0 %v2880
        %v7743 = vpop.f32.mrf.mxu0
        %v7744 = vadd.f32 %v7695, %v7743
        %v7745 = vpop.f32.mrf.mxu0
        %v7746 = vadd.f32 %v7697, %v7745
        %7747 = vmatmul.bf16.gmra.mxu0 %v2888
        %v7748 = vpop.f32.mrf.mxu0
        %v7749 = vadd.f32 %v7700, %v7748
        %v7750 = vpop.f32.mrf.mxu0
        %v7751 = vadd.f32 %v7702, %v7750
        %7752 = vmatmul.bf16.gmra.mxu0 %v2896
        %v7753 = vpop.f32.mrf.mxu0
        %v7754 = vadd.f32 %v7705, %v7753
        %v7755 = vpop.f32.mrf.mxu0
        %v7756 = vadd.f32 %v7707, %v7755
        %7757 = vmatmul.bf16.gmra.mxu0 %v2904
        %v7758 = vpop.f32.mrf.mxu0
        %v7759 = vadd.f32 %v7710, %v7758
        %v7760 = vpop.f32.mrf.mxu0
        %v7761 = vadd.f32 %v7712, %v7760
        %7762 = vdwg.mxu0
        %7763 = vmatpush.bf16.msra.mxu0 %v5291
        %7764 = vmatpush.bf16.msra.mxu0 %v5283
        %7765 = vmatpush.bf16.msra.mxu0 %v5275
        %7766 = vmatpush.bf16.msra.mxu0 %v5267
        %7767 = vmatpush.bf16.msra.mxu0 %v5259
        %7768 = vmatpush.bf16.msra.mxu0 %v5251
        %7769 = vmatpush.bf16.msra.mxu0 %v5243
        %7770 = vmatpush.bf16.msra.mxu0 %v5235
        %7771 = vmatmul.bf16.gmra.mxu0 %v2849
        %v7772 = vpop.f32.mrf.mxu0
        %v7773 = vadd.f32 %v7724, %v7772
        %v7774 = vpop.f32.mrf.mxu0
        %v7775 = vadd.f32 %v7726, %v7774
        %7776 = vmatmul.bf16.gmra.mxu0 %v2857
        %v7777 = vpop.f32.mrf.mxu0
        %v7778 = vadd.f32 %v7729, %v7777
        %v7779 = vpop.f32.mrf.mxu0
        %v7780 = vadd.f32 %v7731, %v7779
        %7781 = vmatmul.bf16.gmra.mxu0 %v2865
        %v7782 = vpop.f32.mrf.mxu0
        %v7783 = vadd.f32 %v7734, %v7782
        %v7784 = vpop.f32.mrf.mxu0
        %v7785 = vadd.f32 %v7736, %v7784
        %7786 = vmatmul.bf16.gmra.mxu0 %v2873
        %v7787 = vpop.f32.mrf.mxu0
        %v7788 = vadd.f32 %v7739, %v7787
        %v7789 = vpop.f32.mrf.mxu0
        %v7790 = vadd.f32 %v7741, %v7789
        %7791 = vmatmul.bf16.gmra.mxu0 %v2881
        %v7792 = vpop.f32.mrf.mxu0
        %v7793 = vadd.f32 %v7744, %v7792
        %v7794 = vpop.f32.mrf.mxu0
        %v7795 = vadd.f32 %v7746, %v7794
        %7796 = vmatmul.bf16.gmra.mxu0 %v2889
        %v7797 = vpop.f32.mrf.mxu0
        %v7798 = vadd.f32 %v7749, %v7797
        %v7799 = vpop.f32.mrf.mxu0
        %v7800 = vadd.f32 %v7751, %v7799
        %7801 = vmatmul.bf16.gmra.mxu0 %v2897
        %v7802 = vpop.f32.mrf.mxu0
        %v7803 = vadd.f32 %v7754, %v7802
        %v7804 = vpop.f32.mrf.mxu0
        %v7805 = vadd.f32 %v7756, %v7804
        %7806 = vmatmul.bf16.gmra.mxu0 %v2905
        %v7807 = vpop.f32.mrf.mxu0
        %v7808 = vadd.f32 %v7759, %v7807
        %v7809 = vpop.f32.mrf.mxu0
        %v7810 = vadd.f32 %v7761, %v7809
        %7811 = vdwg.mxu0
        %7812 = vmatpush.bf16.msra.mxu0 %v5355
        %7813 = vmatpush.bf16.msra.mxu0 %v5347
        %7814 = vmatpush.bf16.msra.mxu0 %v5339
        %7815 = vmatpush.bf16.msra.mxu0 %v5331
        %7816 = vmatpush.bf16.msra.mxu0 %v5323
        %7817 = vmatpush.bf16.msra.mxu0 %v5315
        %7818 = vmatpush.bf16.msra.mxu0 %v5307
        %7819 = vmatpush.bf16.msra.mxu0 %v5299
        %7820 = vmatmul.bf16.gmra.mxu0 %v2850
        %v7821 = vpop.f32.mrf.mxu0
        %v7822 = vadd.f32 %v7773, %v7821
        %v7823 = vpop.f32.mrf.mxu0
        %v7824 = vadd.f32 %v7775, %v7823
        %7825 = vmatmul.bf16.gmra.mxu0 %v2858
        %v7826 = vpop.f32.mrf.mxu0
        %v7827 = vadd.f32 %v7778, %v7826
        %v7828 = vpop.f32.mrf.mxu0
        %v7829 = vadd.f32 %v7780, %v7828
        %7830 = vmatmul.bf16.gmra.mxu0 %v2866
        %v7831 = vpop.f32.mrf.mxu0
        %v7832 = vadd.f32 %v7783, %v7831
        %v7833 = vpop.f32.mrf.mxu0
        %v7834 = vadd.f32 %v7785, %v7833
        %7835 = vmatmul.bf16.gmra.mxu0 %v2874
        %v7836 = vpop.f32.mrf.mxu0
        %v7837 = vadd.f32 %v7788, %v7836
        %v7838 = vpop.f32.mrf.mxu0
        %v7839 = vadd.f32 %v7790, %v7838
        %7840 = vmatmul.bf16.gmra.mxu0 %v2882
        %v7841 = vpop.f32.mrf.mxu0
        %v7842 = vadd.f32 %v7793, %v7841
        %v7843 = vpop.f32.mrf.mxu0
        %v7844 = vadd.f32 %v7795, %v7843
        %7845 = vmatmul.bf16.gmra.mxu0 %v2890
        %v7846 = vpop.f32.mrf.mxu0
        %v7847 = vadd.f32 %v7798, %v7846
        %v7848 = vpop.f32.mrf.mxu0
        %v7849 = vadd.f32 %v7800, %v7848
        %7850 = vmatmul.bf16.gmra.mxu0 %v2898
        %v7851 = vpop.f32.mrf.mxu0
        %v7852 = vadd.f32 %v7803, %v7851
        %v7853 = vpop.f32.mrf.mxu0
        %v7854 = vadd.f32 %v7805, %v7853
        %7855 = vmatmul.bf16.gmra.mxu0 %v2906
        %v7856 = vpop.f32.mrf.mxu0
        %v7857 = vadd.f32 %v7808, %v7856
        %v7858 = vpop.f32.mrf.mxu0
        %v7859 = vadd.f32 %v7810, %v7858
        %7860 = vdwg.mxu0
        %7861 = vmatpush.bf16.msra.mxu0 %v5419
        %7862 = vmatpush.bf16.msra.mxu0 %v5411
        %7863 = vmatpush.bf16.msra.mxu0 %v5403
        %7864 = vmatpush.bf16.msra.mxu0 %v5395
        %7865 = vmatpush.bf16.msra.mxu0 %v5387
        %7866 = vmatpush.bf16.msra.mxu0 %v5379
        %7867 = vmatpush.bf16.msra.mxu0 %v5371
        %7868 = vmatpush.bf16.msra.mxu0 %v5363
        %7869 = vmatmul.bf16.gmra.mxu0 %v2851
        %v7870 = vpop.f32.mrf.mxu0
        %v7871 = vadd.f32 %v7822, %v7870
        %v7872 = vpop.f32.mrf.mxu0
        %v7873 = vadd.f32 %v7824, %v7872
        %7874 = vmatmul.bf16.gmra.mxu0 %v2859
        %v7875 = vpop.f32.mrf.mxu0
        %v7876 = vadd.f32 %v7827, %v7875
        %v7877 = vpop.f32.mrf.mxu0
        %v7878 = vadd.f32 %v7829, %v7877
        %7879 = vmatmul.bf16.gmra.mxu0 %v2867
        %v7880 = vpop.f32.mrf.mxu0
        %v7881 = vadd.f32 %v7832, %v7880
        %v7882 = vpop.f32.mrf.mxu0
        %v7883 = vadd.f32 %v7834, %v7882
        %7884 = vmatmul.bf16.gmra.mxu0 %v2875
        %v7885 = vpop.f32.mrf.mxu0
        %v7886 = vadd.f32 %v7837, %v7885
        %v7887 = vpop.f32.mrf.mxu0
        %v7888 = vadd.f32 %v7839, %v7887
        %7889 = vmatmul.bf16.gmra.mxu0 %v2883
        %v7890 = vpop.f32.mrf.mxu0
        %v7891 = vadd.f32 %v7842, %v7890
        %v7892 = vpop.f32.mrf.mxu0
        %v7893 = vadd.f32 %v7844, %v7892
        %7894 = vmatmul.bf16.gmra.mxu0 %v2891
        %v7895 = vpop.f32.mrf.mxu0
        %v7896 = vadd.f32 %v7847, %v7895
        %v7897 = vpop.f32.mrf.mxu0
        %v7898 = vadd.f32 %v7849, %v7897
        %7899 = vmatmul.bf16.gmra.mxu0 %v2899
        %v7900 = vpop.f32.mrf.mxu0
        %v7901 = vadd.f32 %v7852, %v7900
        %v7902 = vpop.f32.mrf.mxu0
        %v7903 = vadd.f32 %v7854, %v7902
        %7904 = vmatmul.bf16.gmra.mxu0 %v2907
        %v7905 = vpop.f32.mrf.mxu0
        %v7906 = vadd.f32 %v7857, %v7905
        %v7907 = vpop.f32.mrf.mxu0
        %v7908 = vadd.f32 %v7859, %v7907
        %7909 = vdwg.mxu0
        %7910 = vmatpush.bf16.msra.mxu0 %v5483
        %7911 = vmatpush.bf16.msra.mxu0 %v5475
        %7912 = vmatpush.bf16.msra.mxu0 %v5467
        %7913 = vmatpush.bf16.msra.mxu0 %v5459
        %7914 = vmatpush.bf16.msra.mxu0 %v5451
        %7915 = vmatpush.bf16.msra.mxu0 %v5443
        %7916 = vmatpush.bf16.msra.mxu0 %v5435
        %7917 = vmatpush.bf16.msra.mxu0 %v5427
        %7918 = vmatmul.bf16.gmra.mxu0 %v2852
        %v7919 = vpop.f32.mrf.mxu0
        %v7920 = vadd.f32 %v7871, %v7919
        %v7921 = vpop.f32.mrf.mxu0
        %v7922 = vadd.f32 %v7873, %v7921
        %7923 = vmatmul.bf16.gmra.mxu0 %v2860
        %v7924 = vpop.f32.mrf.mxu0
        %v7925 = vadd.f32 %v7876, %v7924
        %v7926 = vpop.f32.mrf.mxu0
        %v7927 = vadd.f32 %v7878, %v7926
        %7928 = vmatmul.bf16.gmra.mxu0 %v2868
        %v7929 = vpop.f32.mrf.mxu0
        %v7930 = vadd.f32 %v7881, %v7929
        %v7931 = vpop.f32.mrf.mxu0
        %v7932 = vadd.f32 %v7883, %v7931
        %7933 = vmatmul.bf16.gmra.mxu0 %v2876
        %v7934 = vpop.f32.mrf.mxu0
        %v7935 = vadd.f32 %v7886, %v7934
        %v7936 = vpop.f32.mrf.mxu0
        %v7937 = vadd.f32 %v7888, %v7936
        %7938 = vmatmul.bf16.gmra.mxu0 %v2884
        %v7939 = vpop.f32.mrf.mxu0
        %v7940 = vadd.f32 %v7891, %v7939
        %v7941 = vpop.f32.mrf.mxu0
        %v7942 = vadd.f32 %v7893, %v7941
        %7943 = vmatmul.bf16.gmra.mxu0 %v2892
        %v7944 = vpop.f32.mrf.mxu0
        %v7945 = vadd.f32 %v7896, %v7944
        %v7946 = vpop.f32.mrf.mxu0
        %v7947 = vadd.f32 %v7898, %v7946
        %7948 = vmatmul.bf16.gmra.mxu0 %v2900
        %v7949 = vpop.f32.mrf.mxu0
        %v7950 = vadd.f32 %v7901, %v7949
        %v7951 = vpop.f32.mrf.mxu0
        %v7952 = vadd.f32 %v7903, %v7951
        %7953 = vmatmul.bf16.gmra.mxu0 %v2908
        %v7954 = vpop.f32.mrf.mxu0
        %v7955 = vadd.f32 %v7906, %v7954
        %v7956 = vpop.f32.mrf.mxu0
        %v7957 = vadd.f32 %v7908, %v7956
        %7958 = vdwg.mxu0
        %7959 = vmatpush.bf16.msra.mxu0 %v5036
        %7960 = vmatpush.bf16.msra.mxu0 %v5028
        %7961 = vmatpush.bf16.msra.mxu0 %v5020
        %7962 = vmatpush.bf16.msra.mxu0 %v5012
        %7963 = vmatpush.bf16.msra.mxu0 %v5004
        %7964 = vmatpush.bf16.msra.mxu0 %v4996
        %7965 = vmatpush.bf16.msra.mxu0 %v4988
        %7966 = vmatpush.bf16.msra.mxu0 %v4980
        %7967 = vmatmul.bf16.gmra.mxu0 %v2845
        %v7968 = vpop.f32.mrf.mxu0
        %v7969 = vadd.f32 %v3428, %v7968
        %v7970 = vpop.f32.mrf.mxu0
        %v7971 = vadd.f32 %v3428, %v7970
        %7972 = vmatmul.bf16.gmra.mxu0 %v2853
        %v7973 = vpop.f32.mrf.mxu0
        %v7974 = vadd.f32 %v3428, %v7973
        %v7975 = vpop.f32.mrf.mxu0
        %v7976 = vadd.f32 %v3428, %v7975
        %7977 = vmatmul.bf16.gmra.mxu0 %v2861
        %v7978 = vpop.f32.mrf.mxu0
        %v7979 = vadd.f32 %v3428, %v7978
        %v7980 = vpop.f32.mrf.mxu0
        %v7981 = vadd.f32 %v3428, %v7980
        %7982 = vmatmul.bf16.gmra.mxu0 %v2869
        %v7983 = vpop.f32.mrf.mxu0
        %v7984 = vadd.f32 %v3428, %v7983
        %v7985 = vpop.f32.mrf.mxu0
        %v7986 = vadd.f32 %v3428, %v7985
        %7987 = vmatmul.bf16.gmra.mxu0 %v2877
        %v7988 = vpop.f32.mrf.mxu0
        %v7989 = vadd.f32 %v3428, %v7988
        %v7990 = vpop.f32.mrf.mxu0
        %v7991 = vadd.f32 %v3428, %v7990
        %7992 = vmatmul.bf16.gmra.mxu0 %v2885
        %v7993 = vpop.f32.mrf.mxu0
        %v7994 = vadd.f32 %v3428, %v7993
        %v7995 = vpop.f32.mrf.mxu0
        %v7996 = vadd.f32 %v3428, %v7995
        %7997 = vmatmul.bf16.gmra.mxu0 %v2893
        %v7998 = vpop.f32.mrf.mxu0
        %v7999 = vadd.f32 %v3428, %v7998
        %v8000 = vpop.f32.mrf.mxu0
        %v8001 = vadd.f32 %v3428, %v8000
        %8002 = vmatmul.bf16.gmra.mxu0 %v2901
        %v8003 = vpop.f32.mrf.mxu0
        %v8004 = vadd.f32 %v3428, %v8003
        %v8005 = vpop.f32.mrf.mxu0
        %v8006 = vadd.f32 %v3428, %v8005
        %8007 = vdwg.mxu0
        %8008 = vmatpush.bf16.msra.mxu0 %v5100
        %8009 = vmatpush.bf16.msra.mxu0 %v5092
        %8010 = vmatpush.bf16.msra.mxu0 %v5084
        %8011 = vmatpush.bf16.msra.mxu0 %v5076
        %8012 = vmatpush.bf16.msra.mxu0 %v5068
        %8013 = vmatpush.bf16.msra.mxu0 %v5060
        %8014 = vmatpush.bf16.msra.mxu0 %v5052
        %8015 = vmatpush.bf16.msra.mxu0 %v5044
        %8016 = vmatmul.bf16.gmra.mxu0 %v2846
        %v8017 = vpop.f32.mrf.mxu0
        %v8018 = vadd.f32 %v7969, %v8017
        %v8019 = vpop.f32.mrf.mxu0
        %v8020 = vadd.f32 %v7971, %v8019
        %8021 = vmatmul.bf16.gmra.mxu0 %v2854
        %v8022 = vpop.f32.mrf.mxu0
        %v8023 = vadd.f32 %v7974, %v8022
        %v8024 = vpop.f32.mrf.mxu0
        %v8025 = vadd.f32 %v7976, %v8024
        %8026 = vmatmul.bf16.gmra.mxu0 %v2862
        %v8027 = vpop.f32.mrf.mxu0
        %v8028 = vadd.f32 %v7979, %v8027
        %v8029 = vpop.f32.mrf.mxu0
        %v8030 = vadd.f32 %v7981, %v8029
        %8031 = vmatmul.bf16.gmra.mxu0 %v2870
        %v8032 = vpop.f32.mrf.mxu0
        %v8033 = vadd.f32 %v7984, %v8032
        %v8034 = vpop.f32.mrf.mxu0
        %v8035 = vadd.f32 %v7986, %v8034
        %8036 = vmatmul.bf16.gmra.mxu0 %v2878
        %v8037 = vpop.f32.mrf.mxu0
        %v8038 = vadd.f32 %v7989, %v8037
        %v8039 = vpop.f32.mrf.mxu0
        %v8040 = vadd.f32 %v7991, %v8039
        %8041 = vmatmul.bf16.gmra.mxu0 %v2886
        %v8042 = vpop.f32.mrf.mxu0
        %v8043 = vadd.f32 %v7994, %v8042
        %v8044 = vpop.f32.mrf.mxu0
        %v8045 = vadd.f32 %v7996, %v8044
        %8046 = vmatmul.bf16.gmra.mxu0 %v2894
        %v8047 = vpop.f32.mrf.mxu0
        %v8048 = vadd.f32 %v7999, %v8047
        %v8049 = vpop.f32.mrf.mxu0
        %v8050 = vadd.f32 %v8001, %v8049
        %8051 = vmatmul.bf16.gmra.mxu0 %v2902
        %v8052 = vpop.f32.mrf.mxu0
        %v8053 = vadd.f32 %v8004, %v8052
        %v8054 = vpop.f32.mrf.mxu0
        %v8055 = vadd.f32 %v8006, %v8054
        %8056 = vdwg.mxu0
        %8057 = vmatpush.bf16.msra.mxu0 %v5164
        %8058 = vmatpush.bf16.msra.mxu0 %v5156
        %8059 = vmatpush.bf16.msra.mxu0 %v5148
        %8060 = vmatpush.bf16.msra.mxu0 %v5140
        %8061 = vmatpush.bf16.msra.mxu0 %v5132
        %8062 = vmatpush.bf16.msra.mxu0 %v5124
        %8063 = vmatpush.bf16.msra.mxu0 %v5116
        %8064 = vmatpush.bf16.msra.mxu0 %v5108
        %8065 = vmatmul.bf16.gmra.mxu0 %v2847
        %v8066 = vpop.f32.mrf.mxu0
        %v8067 = vadd.f32 %v8018, %v8066
        %v8068 = vpop.f32.mrf.mxu0
        %v8069 = vadd.f32 %v8020, %v8068
        %8070 = vmatmul.bf16.gmra.mxu0 %v2855
        %v8071 = vpop.f32.mrf.mxu0
        %v8072 = vadd.f32 %v8023, %v8071
        %v8073 = vpop.f32.mrf.mxu0
        %v8074 = vadd.f32 %v8025, %v8073
        %8075 = vmatmul.bf16.gmra.mxu0 %v2863
        %v8076 = vpop.f32.mrf.mxu0
        %v8077 = vadd.f32 %v8028, %v8076
        %v8078 = vpop.f32.mrf.mxu0
        %v8079 = vadd.f32 %v8030, %v8078
        %8080 = vmatmul.bf16.gmra.mxu0 %v2871
        %v8081 = vpop.f32.mrf.mxu0
        %v8082 = vadd.f32 %v8033, %v8081
        %v8083 = vpop.f32.mrf.mxu0
        %v8084 = vadd.f32 %v8035, %v8083
        %8085 = vmatmul.bf16.gmra.mxu0 %v2879
        %v8086 = vpop.f32.mrf.mxu0
        %v8087 = vadd.f32 %v8038, %v8086
        %v8088 = vpop.f32.mrf.mxu0
        %v8089 = vadd.f32 %v8040, %v8088
        %8090 = vmatmul.bf16.gmra.mxu0 %v2887
        %v8091 = vpop.f32.mrf.mxu0
        %v8092 = vadd.f32 %v8043, %v8091
        %v8093 = vpop.f32.mrf.mxu0
        %v8094 = vadd.f32 %v8045, %v8093
        %8095 = vmatmul.bf16.gmra.mxu0 %v2895
        %v8096 = vpop.f32.mrf.mxu0
        %v8097 = vadd.f32 %v8048, %v8096
        %v8098 = vpop.f32.mrf.mxu0
        %v8099 = vadd.f32 %v8050, %v8098
        %8100 = vmatmul.bf16.gmra.mxu0 %v2903
        %v8101 = vpop.f32.mrf.mxu0
        %v8102 = vadd.f32 %v8053, %v8101
        %v8103 = vpop.f32.mrf.mxu0
        %v8104 = vadd.f32 %v8055, %v8103
        %8105 = vdwg.mxu0
        %8106 = vmatpush.bf16.msra.mxu0 %v5228
        %8107 = vmatpush.bf16.msra.mxu0 %v5220
        %8108 = vmatpush.bf16.msra.mxu0 %v5212
        %8109 = vmatpush.bf16.msra.mxu0 %v5204
        %8110 = vmatpush.bf16.msra.mxu0 %v5196
        %8111 = vmatpush.bf16.msra.mxu0 %v5188
        %8112 = vmatpush.bf16.msra.mxu0 %v5180
        %8113 = vmatpush.bf16.msra.mxu0 %v5172
        %8114 = vmatmul.bf16.gmra.mxu0 %v2848
        %v8115 = vpop.f32.mrf.mxu0
        %v8116 = vadd.f32 %v8067, %v8115
        %v8117 = vpop.f32.mrf.mxu0
        %v8118 = vadd.f32 %v8069, %v8117
        %8119 = vmatmul.bf16.gmra.mxu0 %v2856
        %v8120 = vpop.f32.mrf.mxu0
        %v8121 = vadd.f32 %v8072, %v8120
        %v8122 = vpop.f32.mrf.mxu0
        %v8123 = vadd.f32 %v8074, %v8122
        %8124 = vmatmul.bf16.gmra.mxu0 %v2864
        %v8125 = vpop.f32.mrf.mxu0
        %v8126 = vadd.f32 %v8077, %v8125
        %v8127 = vpop.f32.mrf.mxu0
        %v8128 = vadd.f32 %v8079, %v8127
        %8129 = vmatmul.bf16.gmra.mxu0 %v2872
        %v8130 = vpop.f32.mrf.mxu0
        %v8131 = vadd.f32 %v8082, %v8130
        %v8132 = vpop.f32.mrf.mxu0
        %v8133 = vadd.f32 %v8084, %v8132
        %8134 = vmatmul.bf16.gmra.mxu0 %v2880
        %v8135 = vpop.f32.mrf.mxu0
        %v8136 = vadd.f32 %v8087, %v8135
        %v8137 = vpop.f32.mrf.mxu0
        %v8138 = vadd.f32 %v8089, %v8137
        %8139 = vmatmul.bf16.gmra.mxu0 %v2888
        %v8140 = vpop.f32.mrf.mxu0
        %v8141 = vadd.f32 %v8092, %v8140
        %v8142 = vpop.f32.mrf.mxu0
        %v8143 = vadd.f32 %v8094, %v8142
        %8144 = vmatmul.bf16.gmra.mxu0 %v2896
        %v8145 = vpop.f32.mrf.mxu0
        %v8146 = vadd.f32 %v8097, %v8145
        %v8147 = vpop.f32.mrf.mxu0
        %v8148 = vadd.f32 %v8099, %v8147
        %8149 = vmatmul.bf16.gmra.mxu0 %v2904
        %v8150 = vpop.f32.mrf.mxu0
        %v8151 = vadd.f32 %v8102, %v8150
        %v8152 = vpop.f32.mrf.mxu0
        %v8153 = vadd.f32 %v8104, %v8152
        %8154 = vdwg.mxu0
        %8155 = vmatpush.bf16.msra.mxu0 %v5292
        %8156 = vmatpush.bf16.msra.mxu0 %v5284
        %8157 = vmatpush.bf16.msra.mxu0 %v5276
        %8158 = vmatpush.bf16.msra.mxu0 %v5268
        %8159 = vmatpush.bf16.msra.mxu0 %v5260
        %8160 = vmatpush.bf16.msra.mxu0 %v5252
        %8161 = vmatpush.bf16.msra.mxu0 %v5244
        %8162 = vmatpush.bf16.msra.mxu0 %v5236
        %8163 = vmatmul.bf16.gmra.mxu0 %v2849
        %v8164 = vpop.f32.mrf.mxu0
        %v8165 = vadd.f32 %v8116, %v8164
        %v8166 = vpop.f32.mrf.mxu0
        %v8167 = vadd.f32 %v8118, %v8166
        %8168 = vmatmul.bf16.gmra.mxu0 %v2857
        %v8169 = vpop.f32.mrf.mxu0
        %v8170 = vadd.f32 %v8121, %v8169
        %v8171 = vpop.f32.mrf.mxu0
        %v8172 = vadd.f32 %v8123, %v8171
        %8173 = vmatmul.bf16.gmra.mxu0 %v2865
        %v8174 = vpop.f32.mrf.mxu0
        %v8175 = vadd.f32 %v8126, %v8174
        %v8176 = vpop.f32.mrf.mxu0
        %v8177 = vadd.f32 %v8128, %v8176
        %8178 = vmatmul.bf16.gmra.mxu0 %v2873
        %v8179 = vpop.f32.mrf.mxu0
        %v8180 = vadd.f32 %v8131, %v8179
        %v8181 = vpop.f32.mrf.mxu0
        %v8182 = vadd.f32 %v8133, %v8181
        %8183 = vmatmul.bf16.gmra.mxu0 %v2881
        %v8184 = vpop.f32.mrf.mxu0
        %v8185 = vadd.f32 %v8136, %v8184
        %v8186 = vpop.f32.mrf.mxu0
        %v8187 = vadd.f32 %v8138, %v8186
        %8188 = vmatmul.bf16.gmra.mxu0 %v2889
        %v8189 = vpop.f32.mrf.mxu0
        %v8190 = vadd.f32 %v8141, %v8189
        %v8191 = vpop.f32.mrf.mxu0
        %v8192 = vadd.f32 %v8143, %v8191
        %8193 = vmatmul.bf16.gmra.mxu0 %v2897
        %v8194 = vpop.f32.mrf.mxu0
        %v8195 = vadd.f32 %v8146, %v8194
        %v8196 = vpop.f32.mrf.mxu0
        %v8197 = vadd.f32 %v8148, %v8196
        %8198 = vmatmul.bf16.gmra.mxu0 %v2905
        %v8199 = vpop.f32.mrf.mxu0
        %v8200 = vadd.f32 %v8151, %v8199
        %v8201 = vpop.f32.mrf.mxu0
        %v8202 = vadd.f32 %v8153, %v8201
        %8203 = vdwg.mxu0
        %8204 = vmatpush.bf16.msra.mxu0 %v5356
        %8205 = vmatpush.bf16.msra.mxu0 %v5348
        %8206 = vmatpush.bf16.msra.mxu0 %v5340
        %8207 = vmatpush.bf16.msra.mxu0 %v5332
        %8208 = vmatpush.bf16.msra.mxu0 %v5324
        %8209 = vmatpush.bf16.msra.mxu0 %v5316
        %8210 = vmatpush.bf16.msra.mxu0 %v5308
        %8211 = vmatpush.bf16.msra.mxu0 %v5300
        %8212 = vmatmul.bf16.gmra.mxu0 %v2850
        %v8213 = vpop.f32.mrf.mxu0
        %v8214 = vadd.f32 %v8165, %v8213
        %v8215 = vpop.f32.mrf.mxu0
        %v8216 = vadd.f32 %v8167, %v8215
        %8217 = vmatmul.bf16.gmra.mxu0 %v2858
        %v8218 = vpop.f32.mrf.mxu0
        %v8219 = vadd.f32 %v8170, %v8218
        %v8220 = vpop.f32.mrf.mxu0
        %v8221 = vadd.f32 %v8172, %v8220
        %8222 = vmatmul.bf16.gmra.mxu0 %v2866
        %v8223 = vpop.f32.mrf.mxu0
        %v8224 = vadd.f32 %v8175, %v8223
        %v8225 = vpop.f32.mrf.mxu0
        %v8226 = vadd.f32 %v8177, %v8225
        %8227 = vmatmul.bf16.gmra.mxu0 %v2874
        %v8228 = vpop.f32.mrf.mxu0
        %v8229 = vadd.f32 %v8180, %v8228
        %v8230 = vpop.f32.mrf.mxu0
        %v8231 = vadd.f32 %v8182, %v8230
        %8232 = vmatmul.bf16.gmra.mxu0 %v2882
        %v8233 = vpop.f32.mrf.mxu0
        %v8234 = vadd.f32 %v8185, %v8233
        %v8235 = vpop.f32.mrf.mxu0
        %v8236 = vadd.f32 %v8187, %v8235
        %8237 = vmatmul.bf16.gmra.mxu0 %v2890
        %v8238 = vpop.f32.mrf.mxu0
        %v8239 = vadd.f32 %v8190, %v8238
        %v8240 = vpop.f32.mrf.mxu0
        %v8241 = vadd.f32 %v8192, %v8240
        %8242 = vmatmul.bf16.gmra.mxu0 %v2898
        %v8243 = vpop.f32.mrf.mxu0
        %v8244 = vadd.f32 %v8195, %v8243
        %v8245 = vpop.f32.mrf.mxu0
        %v8246 = vadd.f32 %v8197, %v8245
        %8247 = vmatmul.bf16.gmra.mxu0 %v2906
        %v8248 = vpop.f32.mrf.mxu0
        %v8249 = vadd.f32 %v8200, %v8248
        %v8250 = vpop.f32.mrf.mxu0
        %v8251 = vadd.f32 %v8202, %v8250
        %8252 = vdwg.mxu0
        %8253 = vmatpush.bf16.msra.mxu0 %v5420
        %8254 = vmatpush.bf16.msra.mxu0 %v5412
        %8255 = vmatpush.bf16.msra.mxu0 %v5404
        %8256 = vmatpush.bf16.msra.mxu0 %v5396
        %8257 = vmatpush.bf16.msra.mxu0 %v5388
        %8258 = vmatpush.bf16.msra.mxu0 %v5380
        %8259 = vmatpush.bf16.msra.mxu0 %v5372
        %8260 = vmatpush.bf16.msra.mxu0 %v5364
        %8261 = vmatmul.bf16.gmra.mxu0 %v2851
        %v8262 = vpop.f32.mrf.mxu0
        %v8263 = vadd.f32 %v8214, %v8262
        %v8264 = vpop.f32.mrf.mxu0
        %v8265 = vadd.f32 %v8216, %v8264
        %8266 = vmatmul.bf16.gmra.mxu0 %v2859
        %v8267 = vpop.f32.mrf.mxu0
        %v8268 = vadd.f32 %v8219, %v8267
        %v8269 = vpop.f32.mrf.mxu0
        %v8270 = vadd.f32 %v8221, %v8269
        %8271 = vmatmul.bf16.gmra.mxu0 %v2867
        %v8272 = vpop.f32.mrf.mxu0
        %v8273 = vadd.f32 %v8224, %v8272
        %v8274 = vpop.f32.mrf.mxu0
        %v8275 = vadd.f32 %v8226, %v8274
        %8276 = vmatmul.bf16.gmra.mxu0 %v2875
        %v8277 = vpop.f32.mrf.mxu0
        %v8278 = vadd.f32 %v8229, %v8277
        %v8279 = vpop.f32.mrf.mxu0
        %v8280 = vadd.f32 %v8231, %v8279
        %8281 = vmatmul.bf16.gmra.mxu0 %v2883
        %v8282 = vpop.f32.mrf.mxu0
        %v8283 = vadd.f32 %v8234, %v8282
        %v8284 = vpop.f32.mrf.mxu0
        %v8285 = vadd.f32 %v8236, %v8284
        %8286 = vmatmul.bf16.gmra.mxu0 %v2891
        %v8287 = vpop.f32.mrf.mxu0
        %v8288 = vadd.f32 %v8239, %v8287
        %v8289 = vpop.f32.mrf.mxu0
        %v8290 = vadd.f32 %v8241, %v8289
        %8291 = vmatmul.bf16.gmra.mxu0 %v2899
        %v8292 = vpop.f32.mrf.mxu0
        %v8293 = vadd.f32 %v8244, %v8292
        %v8294 = vpop.f32.mrf.mxu0
        %v8295 = vadd.f32 %v8246, %v8294
        %8296 = vmatmul.bf16.gmra.mxu0 %v2907
        %v8297 = vpop.f32.mrf.mxu0
        %v8298 = vadd.f32 %v8249, %v8297
        %v8299 = vpop.f32.mrf.mxu0
        %v8300 = vadd.f32 %v8251, %v8299
        %8301 = vdwg.mxu0
        %8302 = vmatpush.bf16.msra.mxu0 %v5484
        %8303 = vmatpush.bf16.msra.mxu0 %v5476
        %8304 = vmatpush.bf16.msra.mxu0 %v5468
        %8305 = vmatpush.bf16.msra.mxu0 %v5460
        %8306 = vmatpush.bf16.msra.mxu0 %v5452
        %8307 = vmatpush.bf16.msra.mxu0 %v5444
        %8308 = vmatpush.bf16.msra.mxu0 %v5436
        %8309 = vmatpush.bf16.msra.mxu0 %v5428
        %8310 = vmatmul.bf16.gmra.mxu0 %v2852
        %v8311 = vpop.f32.mrf.mxu0
        %v8312 = vadd.f32 %v8263, %v8311
        %v8313 = vpop.f32.mrf.mxu0
        %v8314 = vadd.f32 %v8265, %v8313
        %8315 = vmatmul.bf16.gmra.mxu0 %v2860
        %v8316 = vpop.f32.mrf.mxu0
        %v8317 = vadd.f32 %v8268, %v8316
        %v8318 = vpop.f32.mrf.mxu0
        %v8319 = vadd.f32 %v8270, %v8318
        %8320 = vmatmul.bf16.gmra.mxu0 %v2868
        %v8321 = vpop.f32.mrf.mxu0
        %v8322 = vadd.f32 %v8273, %v8321
        %v8323 = vpop.f32.mrf.mxu0
        %v8324 = vadd.f32 %v8275, %v8323
        %8325 = vmatmul.bf16.gmra.mxu0 %v2876
        %v8326 = vpop.f32.mrf.mxu0
        %v8327 = vadd.f32 %v8278, %v8326
        %v8328 = vpop.f32.mrf.mxu0
        %v8329 = vadd.f32 %v8280, %v8328
        %8330 = vmatmul.bf16.gmra.mxu0 %v2884
        %v8331 = vpop.f32.mrf.mxu0
        %v8332 = vadd.f32 %v8283, %v8331
        %v8333 = vpop.f32.mrf.mxu0
        %v8334 = vadd.f32 %v8285, %v8333
        %8335 = vmatmul.bf16.gmra.mxu0 %v2892
        %v8336 = vpop.f32.mrf.mxu0
        %v8337 = vadd.f32 %v8288, %v8336
        %v8338 = vpop.f32.mrf.mxu0
        %v8339 = vadd.f32 %v8290, %v8338
        %8340 = vmatmul.bf16.gmra.mxu0 %v2900
        %v8341 = vpop.f32.mrf.mxu0
        %v8342 = vadd.f32 %v8293, %v8341
        %v8343 = vpop.f32.mrf.mxu0
        %v8344 = vadd.f32 %v8295, %v8343
        %8345 = vmatmul.bf16.gmra.mxu0 %v2908
        %v8346 = vpop.f32.mrf.mxu0
        %v8347 = vadd.f32 %v8298, %v8346
        %v8348 = vpop.f32.mrf.mxu0
        %v8349 = vadd.f32 %v8300, %v8348
        %8350 = vdwg.mxu0
        %8351 = vmatpush.bf16.msra.mxu0 %v5037
        %8352 = vmatpush.bf16.msra.mxu0 %v5029
        %8353 = vmatpush.bf16.msra.mxu0 %v5021
        %8354 = vmatpush.bf16.msra.mxu0 %v5013
        %8355 = vmatpush.bf16.msra.mxu0 %v5005
        %8356 = vmatpush.bf16.msra.mxu0 %v4997
        %8357 = vmatpush.bf16.msra.mxu0 %v4989
        %8358 = vmatpush.bf16.msra.mxu0 %v4981
        %8359 = vmatmul.bf16.gmra.mxu0 %v2845
        %v8360 = vpop.f32.mrf.mxu0
        %v8361 = vadd.f32 %v3429, %v8360
        %v8362 = vpop.f32.mrf.mxu0
        %v8363 = vadd.f32 %v3429, %v8362
        %8364 = vmatmul.bf16.gmra.mxu0 %v2853
        %v8365 = vpop.f32.mrf.mxu0
        %v8366 = vadd.f32 %v3429, %v8365
        %v8367 = vpop.f32.mrf.mxu0
        %v8368 = vadd.f32 %v3429, %v8367
        %8369 = vmatmul.bf16.gmra.mxu0 %v2861
        %v8370 = vpop.f32.mrf.mxu0
        %v8371 = vadd.f32 %v3429, %v8370
        %v8372 = vpop.f32.mrf.mxu0
        %v8373 = vadd.f32 %v3429, %v8372
        %8374 = vmatmul.bf16.gmra.mxu0 %v2869
        %v8375 = vpop.f32.mrf.mxu0
        %v8376 = vadd.f32 %v3429, %v8375
        %v8377 = vpop.f32.mrf.mxu0
        %v8378 = vadd.f32 %v3429, %v8377
        %8379 = vmatmul.bf16.gmra.mxu0 %v2877
        %v8380 = vpop.f32.mrf.mxu0
        %v8381 = vadd.f32 %v3429, %v8380
        %v8382 = vpop.f32.mrf.mxu0
        %v8383 = vadd.f32 %v3429, %v8382
        %8384 = vmatmul.bf16.gmra.mxu0 %v2885
        %v8385 = vpop.f32.mrf.mxu0
        %v8386 = vadd.f32 %v3429, %v8385
        %v8387 = vpop.f32.mrf.mxu0
        %v8388 = vadd.f32 %v3429, %v8387
        %8389 = vmatmul.bf16.gmra.mxu0 %v2893
        %v8390 = vpop.f32.mrf.mxu0
        %v8391 = vadd.f32 %v3429, %v8390
        %v8392 = vpop.f32.mrf.mxu0
        %v8393 = vadd.f32 %v3429, %v8392
        %8394 = vmatmul.bf16.gmra.mxu0 %v2901
        %v8395 = vpop.f32.mrf.mxu0
        %v8396 = vadd.f32 %v3429, %v8395
        %v8397 = vpop.f32.mrf.mxu0
        %v8398 = vadd.f32 %v3429, %v8397
        %8399 = vdwg.mxu0
        %8400 = vmatpush.bf16.msra.mxu0 %v5101
        %8401 = vmatpush.bf16.msra.mxu0 %v5093
        %8402 = vmatpush.bf16.msra.mxu0 %v5085
        %8403 = vmatpush.bf16.msra.mxu0 %v5077
        %8404 = vmatpush.bf16.msra.mxu0 %v5069
        %8405 = vmatpush.bf16.msra.mxu0 %v5061
        %8406 = vmatpush.bf16.msra.mxu0 %v5053
        %8407 = vmatpush.bf16.msra.mxu0 %v5045
        %8408 = vmatmul.bf16.gmra.mxu0 %v2846
        %v8409 = vpop.f32.mrf.mxu0
        %v8410 = vadd.f32 %v8361, %v8409
        %v8411 = vpop.f32.mrf.mxu0
        %v8412 = vadd.f32 %v8363, %v8411
        %8413 = vmatmul.bf16.gmra.mxu0 %v2854
        %v8414 = vpop.f32.mrf.mxu0
        %v8415 = vadd.f32 %v8366, %v8414
        %v8416 = vpop.f32.mrf.mxu0
        %v8417 = vadd.f32 %v8368, %v8416
        %8418 = vmatmul.bf16.gmra.mxu0 %v2862
        %v8419 = vpop.f32.mrf.mxu0
        %v8420 = vadd.f32 %v8371, %v8419
        %v8421 = vpop.f32.mrf.mxu0
        %v8422 = vadd.f32 %v8373, %v8421
        %8423 = vmatmul.bf16.gmra.mxu0 %v2870
        %v8424 = vpop.f32.mrf.mxu0
        %v8425 = vadd.f32 %v8376, %v8424
        %v8426 = vpop.f32.mrf.mxu0
        %v8427 = vadd.f32 %v8378, %v8426
        %8428 = vmatmul.bf16.gmra.mxu0 %v2878
        %v8429 = vpop.f32.mrf.mxu0
        %v8430 = vadd.f32 %v8381, %v8429
        %v8431 = vpop.f32.mrf.mxu0
        %v8432 = vadd.f32 %v8383, %v8431
        %8433 = vmatmul.bf16.gmra.mxu0 %v2886
        %v8434 = vpop.f32.mrf.mxu0
        %v8435 = vadd.f32 %v8386, %v8434
        %v8436 = vpop.f32.mrf.mxu0
        %v8437 = vadd.f32 %v8388, %v8436
        %8438 = vmatmul.bf16.gmra.mxu0 %v2894
        %v8439 = vpop.f32.mrf.mxu0
        %v8440 = vadd.f32 %v8391, %v8439
        %v8441 = vpop.f32.mrf.mxu0
        %v8442 = vadd.f32 %v8393, %v8441
        %8443 = vmatmul.bf16.gmra.mxu0 %v2902
        %v8444 = vpop.f32.mrf.mxu0
        %v8445 = vadd.f32 %v8396, %v8444
        %v8446 = vpop.f32.mrf.mxu0
        %v8447 = vadd.f32 %v8398, %v8446
        %8448 = vdwg.mxu0
        %8449 = vmatpush.bf16.msra.mxu0 %v5165
        %8450 = vmatpush.bf16.msra.mxu0 %v5157
        %8451 = vmatpush.bf16.msra.mxu0 %v5149
        %8452 = vmatpush.bf16.msra.mxu0 %v5141
        %8453 = vmatpush.bf16.msra.mxu0 %v5133
        %8454 = vmatpush.bf16.msra.mxu0 %v5125
        %8455 = vmatpush.bf16.msra.mxu0 %v5117
        %8456 = vmatpush.bf16.msra.mxu0 %v5109
        %8457 = vmatmul.bf16.gmra.mxu0 %v2847
        %v8458 = vpop.f32.mrf.mxu0
        %v8459 = vadd.f32 %v8410, %v8458
        %v8460 = vpop.f32.mrf.mxu0
        %v8461 = vadd.f32 %v8412, %v8460
        %8462 = vmatmul.bf16.gmra.mxu0 %v2855
        %v8463 = vpop.f32.mrf.mxu0
        %v8464 = vadd.f32 %v8415, %v8463
        %v8465 = vpop.f32.mrf.mxu0
        %v8466 = vadd.f32 %v8417, %v8465
        %8467 = vmatmul.bf16.gmra.mxu0 %v2863
        %v8468 = vpop.f32.mrf.mxu0
        %v8469 = vadd.f32 %v8420, %v8468
        %v8470 = vpop.f32.mrf.mxu0
        %v8471 = vadd.f32 %v8422, %v8470
        %8472 = vmatmul.bf16.gmra.mxu0 %v2871
        %v8473 = vpop.f32.mrf.mxu0
        %v8474 = vadd.f32 %v8425, %v8473
        %v8475 = vpop.f32.mrf.mxu0
        %v8476 = vadd.f32 %v8427, %v8475
        %8477 = vmatmul.bf16.gmra.mxu0 %v2879
        %v8478 = vpop.f32.mrf.mxu0
        %v8479 = vadd.f32 %v8430, %v8478
        %v8480 = vpop.f32.mrf.mxu0
        %v8481 = vadd.f32 %v8432, %v8480
        %8482 = vmatmul.bf16.gmra.mxu0 %v2887
        %v8483 = vpop.f32.mrf.mxu0
        %v8484 = vadd.f32 %v8435, %v8483
        %v8485 = vpop.f32.mrf.mxu0
        %v8486 = vadd.f32 %v8437, %v8485
        %8487 = vmatmul.bf16.gmra.mxu0 %v2895
        %v8488 = vpop.f32.mrf.mxu0
        %v8489 = vadd.f32 %v8440, %v8488
        %v8490 = vpop.f32.mrf.mxu0
        %v8491 = vadd.f32 %v8442, %v8490
        %8492 = vmatmul.bf16.gmra.mxu0 %v2903
        %v8493 = vpop.f32.mrf.mxu0
        %v8494 = vadd.f32 %v8445, %v8493
        %v8495 = vpop.f32.mrf.mxu0
        %v8496 = vadd.f32 %v8447, %v8495
        %8497 = vdwg.mxu0
        %8498 = vmatpush.bf16.msra.mxu0 %v5229
        %8499 = vmatpush.bf16.msra.mxu0 %v5221
        %8500 = vmatpush.bf16.msra.mxu0 %v5213
        %8501 = vmatpush.bf16.msra.mxu0 %v5205
        %8502 = vmatpush.bf16.msra.mxu0 %v5197
        %8503 = vmatpush.bf16.msra.mxu0 %v5189
        %8504 = vmatpush.bf16.msra.mxu0 %v5181
        %8505 = vmatpush.bf16.msra.mxu0 %v5173
        %8506 = vmatmul.bf16.gmra.mxu0 %v2848
        %v8507 = vpop.f32.mrf.mxu0
        %v8508 = vadd.f32 %v8459, %v8507
        %v8509 = vpop.f32.mrf.mxu0
        %v8510 = vadd.f32 %v8461, %v8509
        %8511 = vmatmul.bf16.gmra.mxu0 %v2856
        %v8512 = vpop.f32.mrf.mxu0
        %v8513 = vadd.f32 %v8464, %v8512
        %v8514 = vpop.f32.mrf.mxu0
        %v8515 = vadd.f32 %v8466, %v8514
        %8516 = vmatmul.bf16.gmra.mxu0 %v2864
        %v8517 = vpop.f32.mrf.mxu0
        %v8518 = vadd.f32 %v8469, %v8517
        %v8519 = vpop.f32.mrf.mxu0
        %v8520 = vadd.f32 %v8471, %v8519
        %8521 = vmatmul.bf16.gmra.mxu0 %v2872
        %v8522 = vpop.f32.mrf.mxu0
        %v8523 = vadd.f32 %v8474, %v8522
        %v8524 = vpop.f32.mrf.mxu0
        %v8525 = vadd.f32 %v8476, %v8524
        %8526 = vmatmul.bf16.gmra.mxu0 %v2880
        %v8527 = vpop.f32.mrf.mxu0
        %v8528 = vadd.f32 %v8479, %v8527
        %v8529 = vpop.f32.mrf.mxu0
        %v8530 = vadd.f32 %v8481, %v8529
        %8531 = vmatmul.bf16.gmra.mxu0 %v2888
        %v8532 = vpop.f32.mrf.mxu0
        %v8533 = vadd.f32 %v8484, %v8532
        %v8534 = vpop.f32.mrf.mxu0
        %v8535 = vadd.f32 %v8486, %v8534
        %8536 = vmatmul.bf16.gmra.mxu0 %v2896
        %v8537 = vpop.f32.mrf.mxu0
        %v8538 = vadd.f32 %v8489, %v8537
        %v8539 = vpop.f32.mrf.mxu0
        %v8540 = vadd.f32 %v8491, %v8539
        %8541 = vmatmul.bf16.gmra.mxu0 %v2904
        %v8542 = vpop.f32.mrf.mxu0
        %v8543 = vadd.f32 %v8494, %v8542
        %v8544 = vpop.f32.mrf.mxu0
        %v8545 = vadd.f32 %v8496, %v8544
        %8546 = vdwg.mxu0
        %8547 = vmatpush.bf16.msra.mxu0 %v5293
        %8548 = vmatpush.bf16.msra.mxu0 %v5285
        %8549 = vmatpush.bf16.msra.mxu0 %v5277
        %8550 = vmatpush.bf16.msra.mxu0 %v5269
        %8551 = vmatpush.bf16.msra.mxu0 %v5261
        %8552 = vmatpush.bf16.msra.mxu0 %v5253
        %8553 = vmatpush.bf16.msra.mxu0 %v5245
        %8554 = vmatpush.bf16.msra.mxu0 %v5237
        %8555 = vmatmul.bf16.gmra.mxu0 %v2849
        %v8556 = vpop.f32.mrf.mxu0
        %v8557 = vadd.f32 %v8508, %v8556
        %v8558 = vpop.f32.mrf.mxu0
        %v8559 = vadd.f32 %v8510, %v8558
        %8560 = vmatmul.bf16.gmra.mxu0 %v2857
        %v8561 = vpop.f32.mrf.mxu0
        %v8562 = vadd.f32 %v8513, %v8561
        %v8563 = vpop.f32.mrf.mxu0
        %v8564 = vadd.f32 %v8515, %v8563
        %8565 = vmatmul.bf16.gmra.mxu0 %v2865
        %v8566 = vpop.f32.mrf.mxu0
        %v8567 = vadd.f32 %v8518, %v8566
        %v8568 = vpop.f32.mrf.mxu0
        %v8569 = vadd.f32 %v8520, %v8568
        %8570 = vmatmul.bf16.gmra.mxu0 %v2873
        %v8571 = vpop.f32.mrf.mxu0
        %v8572 = vadd.f32 %v8523, %v8571
        %v8573 = vpop.f32.mrf.mxu0
        %v8574 = vadd.f32 %v8525, %v8573
        %8575 = vmatmul.bf16.gmra.mxu0 %v2881
        %v8576 = vpop.f32.mrf.mxu0
        %v8577 = vadd.f32 %v8528, %v8576
        %v8578 = vpop.f32.mrf.mxu0
        %v8579 = vadd.f32 %v8530, %v8578
        %8580 = vmatmul.bf16.gmra.mxu0 %v2889
        %v8581 = vpop.f32.mrf.mxu0
        %v8582 = vadd.f32 %v8533, %v8581
        %v8583 = vpop.f32.mrf.mxu0
        %v8584 = vadd.f32 %v8535, %v8583
        %8585 = vmatmul.bf16.gmra.mxu0 %v2897
        %v8586 = vpop.f32.mrf.mxu0
        %v8587 = vadd.f32 %v8538, %v8586
        %v8588 = vpop.f32.mrf.mxu0
        %v8589 = vadd.f32 %v8540, %v8588
        %8590 = vmatmul.bf16.gmra.mxu0 %v2905
        %v8591 = vpop.f32.mrf.mxu0
        %v8592 = vadd.f32 %v8543, %v8591
        %v8593 = vpop.f32.mrf.mxu0
        %v8594 = vadd.f32 %v8545, %v8593
        %8595 = vdwg.mxu0
        %8596 = vmatpush.bf16.msra.mxu0 %v5357
        %8597 = vmatpush.bf16.msra.mxu0 %v5349
        %8598 = vmatpush.bf16.msra.mxu0 %v5341
        %8599 = vmatpush.bf16.msra.mxu0 %v5333
        %8600 = vmatpush.bf16.msra.mxu0 %v5325
        %8601 = vmatpush.bf16.msra.mxu0 %v5317
        %8602 = vmatpush.bf16.msra.mxu0 %v5309
        %8603 = vmatpush.bf16.msra.mxu0 %v5301
        %8604 = vmatmul.bf16.gmra.mxu0 %v2850
        %v8605 = vpop.f32.mrf.mxu0
        %v8606 = vadd.f32 %v8557, %v8605
        %v8607 = vpop.f32.mrf.mxu0
        %v8608 = vadd.f32 %v8559, %v8607
        %8609 = vmatmul.bf16.gmra.mxu0 %v2858
        %v8610 = vpop.f32.mrf.mxu0
        %v8611 = vadd.f32 %v8562, %v8610
        %v8612 = vpop.f32.mrf.mxu0
        %v8613 = vadd.f32 %v8564, %v8612
        %8614 = vmatmul.bf16.gmra.mxu0 %v2866
        %v8615 = vpop.f32.mrf.mxu0
        %v8616 = vadd.f32 %v8567, %v8615
        %v8617 = vpop.f32.mrf.mxu0
        %v8618 = vadd.f32 %v8569, %v8617
        %8619 = vmatmul.bf16.gmra.mxu0 %v2874
        %v8620 = vpop.f32.mrf.mxu0
        %v8621 = vadd.f32 %v8572, %v8620
        %v8622 = vpop.f32.mrf.mxu0
        %v8623 = vadd.f32 %v8574, %v8622
        %8624 = vmatmul.bf16.gmra.mxu0 %v2882
        %v8625 = vpop.f32.mrf.mxu0
        %v8626 = vadd.f32 %v8577, %v8625
        %v8627 = vpop.f32.mrf.mxu0
        %v8628 = vadd.f32 %v8579, %v8627
        %8629 = vmatmul.bf16.gmra.mxu0 %v2890
        %v8630 = vpop.f32.mrf.mxu0
        %v8631 = vadd.f32 %v8582, %v8630
        %v8632 = vpop.f32.mrf.mxu0
        %v8633 = vadd.f32 %v8584, %v8632
        %8634 = vmatmul.bf16.gmra.mxu0 %v2898
        %v8635 = vpop.f32.mrf.mxu0
        %v8636 = vadd.f32 %v8587, %v8635
        %v8637 = vpop.f32.mrf.mxu0
        %v8638 = vadd.f32 %v8589, %v8637
        %8639 = vmatmul.bf16.gmra.mxu0 %v2906
        %v8640 = vpop.f32.mrf.mxu0
        %v8641 = vadd.f32 %v8592, %v8640
        %v8642 = vpop.f32.mrf.mxu0
        %v8643 = vadd.f32 %v8594, %v8642
        %8644 = vdwg.mxu0
        %8645 = vmatpush.bf16.msra.mxu0 %v5421
        %8646 = vmatpush.bf16.msra.mxu0 %v5413
        %8647 = vmatpush.bf16.msra.mxu0 %v5405
        %8648 = vmatpush.bf16.msra.mxu0 %v5397
        %8649 = vmatpush.bf16.msra.mxu0 %v5389
        %8650 = vmatpush.bf16.msra.mxu0 %v5381
        %8651 = vmatpush.bf16.msra.mxu0 %v5373
        %8652 = vmatpush.bf16.msra.mxu0 %v5365
        %8653 = vmatmul.bf16.gmra.mxu0 %v2851
        %v8654 = vpop.f32.mrf.mxu0
        %v8655 = vadd.f32 %v8606, %v8654
        %v8656 = vpop.f32.mrf.mxu0
        %v8657 = vadd.f32 %v8608, %v8656
        %8658 = vmatmul.bf16.gmra.mxu0 %v2859
        %v8659 = vpop.f32.mrf.mxu0
        %v8660 = vadd.f32 %v8611, %v8659
        %v8661 = vpop.f32.mrf.mxu0
        %v8662 = vadd.f32 %v8613, %v8661
        %8663 = vmatmul.bf16.gmra.mxu0 %v2867
        %v8664 = vpop.f32.mrf.mxu0
        %v8665 = vadd.f32 %v8616, %v8664
        %v8666 = vpop.f32.mrf.mxu0
        %v8667 = vadd.f32 %v8618, %v8666
        %8668 = vmatmul.bf16.gmra.mxu0 %v2875
        %v8669 = vpop.f32.mrf.mxu0
        %v8670 = vadd.f32 %v8621, %v8669
        %v8671 = vpop.f32.mrf.mxu0
        %v8672 = vadd.f32 %v8623, %v8671
        %8673 = vmatmul.bf16.gmra.mxu0 %v2883
        %v8674 = vpop.f32.mrf.mxu0
        %v8675 = vadd.f32 %v8626, %v8674
        %v8676 = vpop.f32.mrf.mxu0
        %v8677 = vadd.f32 %v8628, %v8676
        %8678 = vmatmul.bf16.gmra.mxu0 %v2891
        %v8679 = vpop.f32.mrf.mxu0
        %v8680 = vadd.f32 %v8631, %v8679
        %v8681 = vpop.f32.mrf.mxu0
        %v8682 = vadd.f32 %v8633, %v8681
        %8683 = vmatmul.bf16.gmra.mxu0 %v2899
        %v8684 = vpop.f32.mrf.mxu0
        %v8685 = vadd.f32 %v8636, %v8684
        %v8686 = vpop.f32.mrf.mxu0
        %v8687 = vadd.f32 %v8638, %v8686
        %8688 = vmatmul.bf16.gmra.mxu0 %v2907
        %v8689 = vpop.f32.mrf.mxu0
        %v8690 = vadd.f32 %v8641, %v8689
        %v8691 = vpop.f32.mrf.mxu0
        %v8692 = vadd.f32 %v8643, %v8691
        %8693 = vdwg.mxu0
        %8694 = vmatpush.bf16.msra.mxu0 %v5485
        %8695 = vmatpush.bf16.msra.mxu0 %v5477
        %8696 = vmatpush.bf16.msra.mxu0 %v5469
        %8697 = vmatpush.bf16.msra.mxu0 %v5461
        %8698 = vmatpush.bf16.msra.mxu0 %v5453
        %8699 = vmatpush.bf16.msra.mxu0 %v5445
        %8700 = vmatpush.bf16.msra.mxu0 %v5437
        %8701 = vmatpush.bf16.msra.mxu0 %v5429
        %8702 = vmatmul.bf16.gmra.mxu0 %v2852
        %v8703 = vpop.f32.mrf.mxu0
        %v8704 = vadd.f32 %v8655, %v8703
        %v8705 = vpop.f32.mrf.mxu0
        %v8706 = vadd.f32 %v8657, %v8705
        %8707 = vmatmul.bf16.gmra.mxu0 %v2860
        %v8708 = vpop.f32.mrf.mxu0
        %v8709 = vadd.f32 %v8660, %v8708
        %v8710 = vpop.f32.mrf.mxu0
        %v8711 = vadd.f32 %v8662, %v8710
        %8712 = vmatmul.bf16.gmra.mxu0 %v2868
        %v8713 = vpop.f32.mrf.mxu0
        %v8714 = vadd.f32 %v8665, %v8713
        %v8715 = vpop.f32.mrf.mxu0
        %v8716 = vadd.f32 %v8667, %v8715
        %8717 = vmatmul.bf16.gmra.mxu0 %v2876
        %v8718 = vpop.f32.mrf.mxu0
        %v8719 = vadd.f32 %v8670, %v8718
        %v8720 = vpop.f32.mrf.mxu0
        %v8721 = vadd.f32 %v8672, %v8720
        %8722 = vmatmul.bf16.gmra.mxu0 %v2884
        %v8723 = vpop.f32.mrf.mxu0
        %v8724 = vadd.f32 %v8675, %v8723
        %v8725 = vpop.f32.mrf.mxu0
        %v8726 = vadd.f32 %v8677, %v8725
        %8727 = vmatmul.bf16.gmra.mxu0 %v2892
        %v8728 = vpop.f32.mrf.mxu0
        %v8729 = vadd.f32 %v8680, %v8728
        %v8730 = vpop.f32.mrf.mxu0
        %v8731 = vadd.f32 %v8682, %v8730
        %8732 = vmatmul.bf16.gmra.mxu0 %v2900
        %v8733 = vpop.f32.mrf.mxu0
        %v8734 = vadd.f32 %v8685, %v8733
        %v8735 = vpop.f32.mrf.mxu0
        %v8736 = vadd.f32 %v8687, %v8735
        %8737 = vmatmul.bf16.gmra.mxu0 %v2908
        %v8738 = vpop.f32.mrf.mxu0
        %v8739 = vadd.f32 %v8690, %v8738
        %v8740 = vpop.f32.mrf.mxu0
        %v8741 = vadd.f32 %v8692, %v8740
        %8742 = vdwg.mxu0
        %8743 = vmatpush.bf16.msra.mxu0 %v5038
        %8744 = vmatpush.bf16.msra.mxu0 %v5030
        %8745 = vmatpush.bf16.msra.mxu0 %v5022
        %8746 = vmatpush.bf16.msra.mxu0 %v5014
        %8747 = vmatpush.bf16.msra.mxu0 %v5006
        %8748 = vmatpush.bf16.msra.mxu0 %v4998
        %8749 = vmatpush.bf16.msra.mxu0 %v4990
        %8750 = vmatpush.bf16.msra.mxu0 %v4982
        %8751 = vmatmul.bf16.gmra.mxu0 %v2845
        %v8752 = vpop.f32.mrf.mxu0
        %v8753 = vadd.f32 %v3430, %v8752
        %v8754 = vpop.f32.mrf.mxu0
        %v8755 = vadd.f32 %v3430, %v8754
        %8756 = vmatmul.bf16.gmra.mxu0 %v2853
        %v8757 = vpop.f32.mrf.mxu0
        %v8758 = vadd.f32 %v3430, %v8757
        %v8759 = vpop.f32.mrf.mxu0
        %v8760 = vadd.f32 %v3430, %v8759
        %8761 = vmatmul.bf16.gmra.mxu0 %v2861
        %v8762 = vpop.f32.mrf.mxu0
        %v8763 = vadd.f32 %v3430, %v8762
        %v8764 = vpop.f32.mrf.mxu0
        %v8765 = vadd.f32 %v3430, %v8764
        %8766 = vmatmul.bf16.gmra.mxu0 %v2869
        %v8767 = vpop.f32.mrf.mxu0
        %v8768 = vadd.f32 %v3430, %v8767
        %v8769 = vpop.f32.mrf.mxu0
        %v8770 = vadd.f32 %v3430, %v8769
        %8771 = vmatmul.bf16.gmra.mxu0 %v2877
        %v8772 = vpop.f32.mrf.mxu0
        %v8773 = vadd.f32 %v3430, %v8772
        %v8774 = vpop.f32.mrf.mxu0
        %v8775 = vadd.f32 %v3430, %v8774
        %8776 = vmatmul.bf16.gmra.mxu0 %v2885
        %v8777 = vpop.f32.mrf.mxu0
        %v8778 = vadd.f32 %v3430, %v8777
        %v8779 = vpop.f32.mrf.mxu0
        %v8780 = vadd.f32 %v3430, %v8779
        %8781 = vmatmul.bf16.gmra.mxu0 %v2893
        %v8782 = vpop.f32.mrf.mxu0
        %v8783 = vadd.f32 %v3430, %v8782
        %v8784 = vpop.f32.mrf.mxu0
        %v8785 = vadd.f32 %v3430, %v8784
        %8786 = vmatmul.bf16.gmra.mxu0 %v2901
        %v8787 = vpop.f32.mrf.mxu0
        %v8788 = vadd.f32 %v3430, %v8787
        %v8789 = vpop.f32.mrf.mxu0
        %v8790 = vadd.f32 %v3430, %v8789
        %8791 = vdwg.mxu0
        %8792 = vmatpush.bf16.msra.mxu0 %v5102
        %8793 = vmatpush.bf16.msra.mxu0 %v5094
        %8794 = vmatpush.bf16.msra.mxu0 %v5086
        %8795 = vmatpush.bf16.msra.mxu0 %v5078
        %8796 = vmatpush.bf16.msra.mxu0 %v5070
        %8797 = vmatpush.bf16.msra.mxu0 %v5062
        %8798 = vmatpush.bf16.msra.mxu0 %v5054
        %8799 = vmatpush.bf16.msra.mxu0 %v5046
        %8800 = vmatmul.bf16.gmra.mxu0 %v2846
        %v8801 = vpop.f32.mrf.mxu0
        %v8802 = vadd.f32 %v8753, %v8801
        %v8803 = vpop.f32.mrf.mxu0
        %v8804 = vadd.f32 %v8755, %v8803
        %8805 = vmatmul.bf16.gmra.mxu0 %v2854
        %v8806 = vpop.f32.mrf.mxu0
        %v8807 = vadd.f32 %v8758, %v8806
        %v8808 = vpop.f32.mrf.mxu0
        %v8809 = vadd.f32 %v8760, %v8808
        %8810 = vmatmul.bf16.gmra.mxu0 %v2862
        %v8811 = vpop.f32.mrf.mxu0
        %v8812 = vadd.f32 %v8763, %v8811
        %v8813 = vpop.f32.mrf.mxu0
        %v8814 = vadd.f32 %v8765, %v8813
        %8815 = vmatmul.bf16.gmra.mxu0 %v2870
        %v8816 = vpop.f32.mrf.mxu0
        %v8817 = vadd.f32 %v8768, %v8816
        %v8818 = vpop.f32.mrf.mxu0
        %v8819 = vadd.f32 %v8770, %v8818
        %8820 = vmatmul.bf16.gmra.mxu0 %v2878
        %v8821 = vpop.f32.mrf.mxu0
        %v8822 = vadd.f32 %v8773, %v8821
        %v8823 = vpop.f32.mrf.mxu0
        %v8824 = vadd.f32 %v8775, %v8823
        %8825 = vmatmul.bf16.gmra.mxu0 %v2886
        %v8826 = vpop.f32.mrf.mxu0
        %v8827 = vadd.f32 %v8778, %v8826
        %v8828 = vpop.f32.mrf.mxu0
        %v8829 = vadd.f32 %v8780, %v8828
        %8830 = vmatmul.bf16.gmra.mxu0 %v2894
        %v8831 = vpop.f32.mrf.mxu0
        %v8832 = vadd.f32 %v8783, %v8831
        %v8833 = vpop.f32.mrf.mxu0
        %v8834 = vadd.f32 %v8785, %v8833
        %8835 = vmatmul.bf16.gmra.mxu0 %v2902
        %v8836 = vpop.f32.mrf.mxu0
        %v8837 = vadd.f32 %v8788, %v8836
        %v8838 = vpop.f32.mrf.mxu0
        %v8839 = vadd.f32 %v8790, %v8838
        %8840 = vdwg.mxu0
        %8841 = vmatpush.bf16.msra.mxu0 %v5166
        %8842 = vmatpush.bf16.msra.mxu0 %v5158
        %8843 = vmatpush.bf16.msra.mxu0 %v5150
        %8844 = vmatpush.bf16.msra.mxu0 %v5142
        %8845 = vmatpush.bf16.msra.mxu0 %v5134
        %8846 = vmatpush.bf16.msra.mxu0 %v5126
        %8847 = vmatpush.bf16.msra.mxu0 %v5118
        %8848 = vmatpush.bf16.msra.mxu0 %v5110
        %8849 = vmatmul.bf16.gmra.mxu0 %v2847
        %v8850 = vpop.f32.mrf.mxu0
        %v8851 = vadd.f32 %v8802, %v8850
        %v8852 = vpop.f32.mrf.mxu0
        %v8853 = vadd.f32 %v8804, %v8852
        %8854 = vmatmul.bf16.gmra.mxu0 %v2855
        %v8855 = vpop.f32.mrf.mxu0
        %v8856 = vadd.f32 %v8807, %v8855
        %v8857 = vpop.f32.mrf.mxu0
        %v8858 = vadd.f32 %v8809, %v8857
        %8859 = vmatmul.bf16.gmra.mxu0 %v2863
        %v8860 = vpop.f32.mrf.mxu0
        %v8861 = vadd.f32 %v8812, %v8860
        %v8862 = vpop.f32.mrf.mxu0
        %v8863 = vadd.f32 %v8814, %v8862
        %8864 = vmatmul.bf16.gmra.mxu0 %v2871
        %v8865 = vpop.f32.mrf.mxu0
        %v8866 = vadd.f32 %v8817, %v8865
        %v8867 = vpop.f32.mrf.mxu0
        %v8868 = vadd.f32 %v8819, %v8867
        %8869 = vmatmul.bf16.gmra.mxu0 %v2879
        %v8870 = vpop.f32.mrf.mxu0
        %v8871 = vadd.f32 %v8822, %v8870
        %v8872 = vpop.f32.mrf.mxu0
        %v8873 = vadd.f32 %v8824, %v8872
        %8874 = vmatmul.bf16.gmra.mxu0 %v2887
        %v8875 = vpop.f32.mrf.mxu0
        %v8876 = vadd.f32 %v8827, %v8875
        %v8877 = vpop.f32.mrf.mxu0
        %v8878 = vadd.f32 %v8829, %v8877
        %8879 = vmatmul.bf16.gmra.mxu0 %v2895
        %v8880 = vpop.f32.mrf.mxu0
        %v8881 = vadd.f32 %v8832, %v8880
        %v8882 = vpop.f32.mrf.mxu0
        %v8883 = vadd.f32 %v8834, %v8882
        %8884 = vmatmul.bf16.gmra.mxu0 %v2903
        %v8885 = vpop.f32.mrf.mxu0
        %v8886 = vadd.f32 %v8837, %v8885
        %v8887 = vpop.f32.mrf.mxu0
        %v8888 = vadd.f32 %v8839, %v8887
        %8889 = vdwg.mxu0
        %8890 = vmatpush.bf16.msra.mxu0 %v5230
        %8891 = vmatpush.bf16.msra.mxu0 %v5222
        %8892 = vmatpush.bf16.msra.mxu0 %v5214
        %8893 = vmatpush.bf16.msra.mxu0 %v5206
        %8894 = vmatpush.bf16.msra.mxu0 %v5198
        %8895 = vmatpush.bf16.msra.mxu0 %v5190
        %8896 = vmatpush.bf16.msra.mxu0 %v5182
        %8897 = vmatpush.bf16.msra.mxu0 %v5174
        %8898 = vmatmul.bf16.gmra.mxu0 %v2848
        %v8899 = vpop.f32.mrf.mxu0
        %v8900 = vadd.f32 %v8851, %v8899
        %v8901 = vpop.f32.mrf.mxu0
        %v8902 = vadd.f32 %v8853, %v8901
        %8903 = vmatmul.bf16.gmra.mxu0 %v2856
        %v8904 = vpop.f32.mrf.mxu0
        %v8905 = vadd.f32 %v8856, %v8904
        %v8906 = vpop.f32.mrf.mxu0
        %v8907 = vadd.f32 %v8858, %v8906
        %8908 = vmatmul.bf16.gmra.mxu0 %v2864
        %v8909 = vpop.f32.mrf.mxu0
        %v8910 = vadd.f32 %v8861, %v8909
        %v8911 = vpop.f32.mrf.mxu0
        %v8912 = vadd.f32 %v8863, %v8911
        %8913 = vmatmul.bf16.gmra.mxu0 %v2872
        %v8914 = vpop.f32.mrf.mxu0
        %v8915 = vadd.f32 %v8866, %v8914
        %v8916 = vpop.f32.mrf.mxu0
        %v8917 = vadd.f32 %v8868, %v8916
        %8918 = vmatmul.bf16.gmra.mxu0 %v2880
        %v8919 = vpop.f32.mrf.mxu0
        %v8920 = vadd.f32 %v8871, %v8919
        %v8921 = vpop.f32.mrf.mxu0
        %v8922 = vadd.f32 %v8873, %v8921
        %8923 = vmatmul.bf16.gmra.mxu0 %v2888
        %v8924 = vpop.f32.mrf.mxu0
        %v8925 = vadd.f32 %v8876, %v8924
        %v8926 = vpop.f32.mrf.mxu0
        %v8927 = vadd.f32 %v8878, %v8926
        %8928 = vmatmul.bf16.gmra.mxu0 %v2896
        %v8929 = vpop.f32.mrf.mxu0
        %v8930 = vadd.f32 %v8881, %v8929
        %v8931 = vpop.f32.mrf.mxu0
        %v8932 = vadd.f32 %v8883, %v8931
        %8933 = vmatmul.bf16.gmra.mxu0 %v2904
        %v8934 = vpop.f32.mrf.mxu0
        %v8935 = vadd.f32 %v8886, %v8934
        %v8936 = vpop.f32.mrf.mxu0
        %v8937 = vadd.f32 %v8888, %v8936
        %8938 = vdwg.mxu0
        %8939 = vmatpush.bf16.msra.mxu0 %v5294
        %8940 = vmatpush.bf16.msra.mxu0 %v5286
        %8941 = vmatpush.bf16.msra.mxu0 %v5278
        %8942 = vmatpush.bf16.msra.mxu0 %v5270
        %8943 = vmatpush.bf16.msra.mxu0 %v5262
        %8944 = vmatpush.bf16.msra.mxu0 %v5254
        %8945 = vmatpush.bf16.msra.mxu0 %v5246
        %8946 = vmatpush.bf16.msra.mxu0 %v5238
        %8947 = vmatmul.bf16.gmra.mxu0 %v2849
        %v8948 = vpop.f32.mrf.mxu0
        %v8949 = vadd.f32 %v8900, %v8948
        %v8950 = vpop.f32.mrf.mxu0
        %v8951 = vadd.f32 %v8902, %v8950
        %8952 = vmatmul.bf16.gmra.mxu0 %v2857
        %v8953 = vpop.f32.mrf.mxu0
        %v8954 = vadd.f32 %v8905, %v8953
        %v8955 = vpop.f32.mrf.mxu0
        %v8956 = vadd.f32 %v8907, %v8955
        %8957 = vmatmul.bf16.gmra.mxu0 %v2865
        %v8958 = vpop.f32.mrf.mxu0
        %v8959 = vadd.f32 %v8910, %v8958
        %v8960 = vpop.f32.mrf.mxu0
        %v8961 = vadd.f32 %v8912, %v8960
        %8962 = vmatmul.bf16.gmra.mxu0 %v2873
        %v8963 = vpop.f32.mrf.mxu0
        %v8964 = vadd.f32 %v8915, %v8963
        %v8965 = vpop.f32.mrf.mxu0
        %v8966 = vadd.f32 %v8917, %v8965
        %8967 = vmatmul.bf16.gmra.mxu0 %v2881
        %v8968 = vpop.f32.mrf.mxu0
        %v8969 = vadd.f32 %v8920, %v8968
        %v8970 = vpop.f32.mrf.mxu0
        %v8971 = vadd.f32 %v8922, %v8970
        %8972 = vmatmul.bf16.gmra.mxu0 %v2889
        %v8973 = vpop.f32.mrf.mxu0
        %v8974 = vadd.f32 %v8925, %v8973
        %v8975 = vpop.f32.mrf.mxu0
        %v8976 = vadd.f32 %v8927, %v8975
        %8977 = vmatmul.bf16.gmra.mxu0 %v2897
        %v8978 = vpop.f32.mrf.mxu0
        %v8979 = vadd.f32 %v8930, %v8978
        %v8980 = vpop.f32.mrf.mxu0
        %v8981 = vadd.f32 %v8932, %v8980
        %8982 = vmatmul.bf16.gmra.mxu0 %v2905
        %v8983 = vpop.f32.mrf.mxu0
        %v8984 = vadd.f32 %v8935, %v8983
        %v8985 = vpop.f32.mrf.mxu0
        %v8986 = vadd.f32 %v8937, %v8985
        %8987 = vdwg.mxu0
        %8988 = vmatpush.bf16.msra.mxu0 %v5358
        %8989 = vmatpush.bf16.msra.mxu0 %v5350
        %8990 = vmatpush.bf16.msra.mxu0 %v5342
        %8991 = vmatpush.bf16.msra.mxu0 %v5334
        %8992 = vmatpush.bf16.msra.mxu0 %v5326
        %8993 = vmatpush.bf16.msra.mxu0 %v5318
        %8994 = vmatpush.bf16.msra.mxu0 %v5310
        %8995 = vmatpush.bf16.msra.mxu0 %v5302
        %8996 = vmatmul.bf16.gmra.mxu0 %v2850
        %v8997 = vpop.f32.mrf.mxu0
        %v8998 = vadd.f32 %v8949, %v8997
        %v8999 = vpop.f32.mrf.mxu0
        %v9000 = vadd.f32 %v8951, %v8999
        %9001 = vmatmul.bf16.gmra.mxu0 %v2858
        %v9002 = vpop.f32.mrf.mxu0
        %v9003 = vadd.f32 %v8954, %v9002
        %v9004 = vpop.f32.mrf.mxu0
        %v9005 = vadd.f32 %v8956, %v9004
        %9006 = vmatmul.bf16.gmra.mxu0 %v2866
        %v9007 = vpop.f32.mrf.mxu0
        %v9008 = vadd.f32 %v8959, %v9007
        %v9009 = vpop.f32.mrf.mxu0
        %v9010 = vadd.f32 %v8961, %v9009
        %9011 = vmatmul.bf16.gmra.mxu0 %v2874
        %v9012 = vpop.f32.mrf.mxu0
        %v9013 = vadd.f32 %v8964, %v9012
        %v9014 = vpop.f32.mrf.mxu0
        %v9015 = vadd.f32 %v8966, %v9014
        %9016 = vmatmul.bf16.gmra.mxu0 %v2882
        %v9017 = vpop.f32.mrf.mxu0
        %v9018 = vadd.f32 %v8969, %v9017
        %v9019 = vpop.f32.mrf.mxu0
        %v9020 = vadd.f32 %v8971, %v9019
        %9021 = vmatmul.bf16.gmra.mxu0 %v2890
        %v9022 = vpop.f32.mrf.mxu0
        %v9023 = vadd.f32 %v8974, %v9022
        %v9024 = vpop.f32.mrf.mxu0
        %v9025 = vadd.f32 %v8976, %v9024
        %9026 = vmatmul.bf16.gmra.mxu0 %v2898
        %v9027 = vpop.f32.mrf.mxu0
        %v9028 = vadd.f32 %v8979, %v9027
        %v9029 = vpop.f32.mrf.mxu0
        %v9030 = vadd.f32 %v8981, %v9029
        %9031 = vmatmul.bf16.gmra.mxu0 %v2906
        %v9032 = vpop.f32.mrf.mxu0
        %v9033 = vadd.f32 %v8984, %v9032
        %v9034 = vpop.f32.mrf.mxu0
        %v9035 = vadd.f32 %v8986, %v9034
        %9036 = vdwg.mxu0
        %9037 = vmatpush.bf16.msra.mxu0 %v5422
        %9038 = vmatpush.bf16.msra.mxu0 %v5414
        %9039 = vmatpush.bf16.msra.mxu0 %v5406
        %9040 = vmatpush.bf16.msra.mxu0 %v5398
        %9041 = vmatpush.bf16.msra.mxu0 %v5390
        %9042 = vmatpush.bf16.msra.mxu0 %v5382
        %9043 = vmatpush.bf16.msra.mxu0 %v5374
        %9044 = vmatpush.bf16.msra.mxu0 %v5366
        %9045 = vmatmul.bf16.gmra.mxu0 %v2851
        %v9046 = vpop.f32.mrf.mxu0
        %v9047 = vadd.f32 %v8998, %v9046
        %v9048 = vpop.f32.mrf.mxu0
        %v9049 = vadd.f32 %v9000, %v9048
        %9050 = vmatmul.bf16.gmra.mxu0 %v2859
        %v9051 = vpop.f32.mrf.mxu0
        %v9052 = vadd.f32 %v9003, %v9051
        %v9053 = vpop.f32.mrf.mxu0
        %v9054 = vadd.f32 %v9005, %v9053
        %9055 = vmatmul.bf16.gmra.mxu0 %v2867
        %v9056 = vpop.f32.mrf.mxu0
        %v9057 = vadd.f32 %v9008, %v9056
        %v9058 = vpop.f32.mrf.mxu0
        %v9059 = vadd.f32 %v9010, %v9058
        %9060 = vmatmul.bf16.gmra.mxu0 %v2875
        %v9061 = vpop.f32.mrf.mxu0
        %v9062 = vadd.f32 %v9013, %v9061
        %v9063 = vpop.f32.mrf.mxu0
        %v9064 = vadd.f32 %v9015, %v9063
        %9065 = vmatmul.bf16.gmra.mxu0 %v2883
        %v9066 = vpop.f32.mrf.mxu0
        %v9067 = vadd.f32 %v9018, %v9066
        %v9068 = vpop.f32.mrf.mxu0
        %v9069 = vadd.f32 %v9020, %v9068
        %9070 = vmatmul.bf16.gmra.mxu0 %v2891
        %v9071 = vpop.f32.mrf.mxu0
        %v9072 = vadd.f32 %v9023, %v9071
        %v9073 = vpop.f32.mrf.mxu0
        %v9074 = vadd.f32 %v9025, %v9073
        %9075 = vmatmul.bf16.gmra.mxu0 %v2899
        %v9076 = vpop.f32.mrf.mxu0
        %v9077 = vadd.f32 %v9028, %v9076
        %v9078 = vpop.f32.mrf.mxu0
        %v9079 = vadd.f32 %v9030, %v9078
        %9080 = vmatmul.bf16.gmra.mxu0 %v2907
        %v9081 = vpop.f32.mrf.mxu0
        %v9082 = vadd.f32 %v9033, %v9081
        %v9083 = vpop.f32.mrf.mxu0
        %v9084 = vadd.f32 %v9035, %v9083
        %9085 = vdwg.mxu0
        %9086 = vmatpush.bf16.msra.mxu0 %v5486
        %9087 = vmatpush.bf16.msra.mxu0 %v5478
        %9088 = vmatpush.bf16.msra.mxu0 %v5470
        %9089 = vmatpush.bf16.msra.mxu0 %v5462
        %9090 = vmatpush.bf16.msra.mxu0 %v5454
        %9091 = vmatpush.bf16.msra.mxu0 %v5446
        %9092 = vmatpush.bf16.msra.mxu0 %v5438
        %9093 = vmatpush.bf16.msra.mxu0 %v5430
        %9094 = vmatmul.bf16.gmra.mxu0 %v2852
        %v9095 = vpop.f32.mrf.mxu0
        %v9096 = vadd.f32 %v9047, %v9095
        %v9097 = vpop.f32.mrf.mxu0
        %v9098 = vadd.f32 %v9049, %v9097
        %9099 = vmatmul.bf16.gmra.mxu0 %v2860
        %v9100 = vpop.f32.mrf.mxu0
        %v9101 = vadd.f32 %v9052, %v9100
        %v9102 = vpop.f32.mrf.mxu0
        %v9103 = vadd.f32 %v9054, %v9102
        %9104 = vmatmul.bf16.gmra.mxu0 %v2868
        %v9105 = vpop.f32.mrf.mxu0
        %v9106 = vadd.f32 %v9057, %v9105
        %v9107 = vpop.f32.mrf.mxu0
        %v9108 = vadd.f32 %v9059, %v9107
        %9109 = vmatmul.bf16.gmra.mxu0 %v2876
        %v9110 = vpop.f32.mrf.mxu0
        %v9111 = vadd.f32 %v9062, %v9110
        %v9112 = vpop.f32.mrf.mxu0
        %v9113 = vadd.f32 %v9064, %v9112
        %9114 = vmatmul.bf16.gmra.mxu0 %v2884
        %v9115 = vpop.f32.mrf.mxu0
        %v9116 = vadd.f32 %v9067, %v9115
        %v9117 = vpop.f32.mrf.mxu0
        %v9118 = vadd.f32 %v9069, %v9117
        %9119 = vmatmul.bf16.gmra.mxu0 %v2892
        %v9120 = vpop.f32.mrf.mxu0
        %v9121 = vadd.f32 %v9072, %v9120
        %v9122 = vpop.f32.mrf.mxu0
        %v9123 = vadd.f32 %v9074, %v9122
        %9124 = vmatmul.bf16.gmra.mxu0 %v2900
        %v9125 = vpop.f32.mrf.mxu0
        %v9126 = vadd.f32 %v9077, %v9125
        %v9127 = vpop.f32.mrf.mxu0
        %v9128 = vadd.f32 %v9079, %v9127
        %9129 = vmatmul.bf16.gmra.mxu0 %v2908
        %v9130 = vpop.f32.mrf.mxu0
        %v9131 = vadd.f32 %v9082, %v9130
        %v9132 = vpop.f32.mrf.mxu0
        %v9133 = vadd.f32 %v9084, %v9132
        %9134 = vdwg.mxu0
        %v9135 = vmax.f32 %v6352, 0.0
        %v9136 = vmax.f32 %v6744, 0.0
        %v9137 = vmax.f32 %v7136, 0.0
        %v9138 = vmax.f32 %v7528, 0.0
        %v9139 = vmax.f32 %v7920, 0.0
        %v9140 = vmax.f32 %v8312, 0.0
        %v9141 = vmax.f32 %v8704, 0.0
        %v9142 = vmax.f32 %v9096, 0.0
        %v9143 = vmax.f32 %v6354, 0.0
        %v9144 = vmax.f32 %v6746, 0.0
        %v9145 = vmax.f32 %v7138, 0.0
        %v9146 = vmax.f32 %v7530, 0.0
        %v9147 = vmax.f32 %v7922, 0.0
        %v9148 = vmax.f32 %v8314, 0.0
        %v9149 = vmax.f32 %v8706, 0.0
        %v9150 = vmax.f32 %v9098, 0.0
        %v9151 = vmax.f32 %v6357, 0.0
        %v9152 = vmax.f32 %v6749, 0.0
        %v9153 = vmax.f32 %v7141, 0.0
        %v9154 = vmax.f32 %v7533, 0.0
        %v9155 = vmax.f32 %v7925, 0.0
        %v9156 = vmax.f32 %v8317, 0.0
        %v9157 = vmax.f32 %v8709, 0.0
        %v9158 = vmax.f32 %v9101, 0.0
        %v9159 = vmax.f32 %v6359, 0.0
        %v9160 = vmax.f32 %v6751, 0.0
        %v9161 = vmax.f32 %v7143, 0.0
        %v9162 = vmax.f32 %v7535, 0.0
        %v9163 = vmax.f32 %v7927, 0.0
        %v9164 = vmax.f32 %v8319, 0.0
        %v9165 = vmax.f32 %v8711, 0.0
        %v9166 = vmax.f32 %v9103, 0.0
        %v9167 = vmax.f32 %v6362, 0.0
        %v9168 = vmax.f32 %v6754, 0.0
        %v9169 = vmax.f32 %v7146, 0.0
        %v9170 = vmax.f32 %v7538, 0.0
        %v9171 = vmax.f32 %v7930, 0.0
        %v9172 = vmax.f32 %v8322, 0.0
        %v9173 = vmax.f32 %v8714, 0.0
        %v9174 = vmax.f32 %v9106, 0.0
        %v9175 = vmax.f32 %v6364, 0.0
        %v9176 = vmax.f32 %v6756, 0.0
        %v9177 = vmax.f32 %v7148, 0.0
        %v9178 = vmax.f32 %v7540, 0.0
        %v9179 = vmax.f32 %v7932, 0.0
        %v9180 = vmax.f32 %v8324, 0.0
        %v9181 = vmax.f32 %v8716, 0.0
        %v9182 = vmax.f32 %v9108, 0.0
        %v9183 = vmax.f32 %v6367, 0.0
        %v9184 = vmax.f32 %v6759, 0.0
        %v9185 = vmax.f32 %v7151, 0.0
        %v9186 = vmax.f32 %v7543, 0.0
        %v9187 = vmax.f32 %v7935, 0.0
        %v9188 = vmax.f32 %v8327, 0.0
        %v9189 = vmax.f32 %v8719, 0.0
        %v9190 = vmax.f32 %v9111, 0.0
        %v9191 = vmax.f32 %v6369, 0.0
        %v9192 = vmax.f32 %v6761, 0.0
        %v9193 = vmax.f32 %v7153, 0.0
        %v9194 = vmax.f32 %v7545, 0.0
        %v9195 = vmax.f32 %v7937, 0.0
        %v9196 = vmax.f32 %v8329, 0.0
        %v9197 = vmax.f32 %v8721, 0.0
        %v9198 = vmax.f32 %v9113, 0.0
        %v9199 = vmax.f32 %v6372, 0.0
        %v9200 = vmax.f32 %v6764, 0.0
        %v9201 = vmax.f32 %v7156, 0.0
        %v9202 = vmax.f32 %v7548, 0.0
        %v9203 = vmax.f32 %v7940, 0.0
        %v9204 = vmax.f32 %v8332, 0.0
        %v9205 = vmax.f32 %v8724, 0.0
        %v9206 = vmax.f32 %v9116, 0.0
        %v9207 = vmax.f32 %v6374, 0.0
        %v9208 = vmax.f32 %v6766, 0.0
        %v9209 = vmax.f32 %v7158, 0.0
        %v9210 = vmax.f32 %v7550, 0.0
        %v9211 = vmax.f32 %v7942, 0.0
        %v9212 = vmax.f32 %v8334, 0.0
        %v9213 = vmax.f32 %v8726, 0.0
        %v9214 = vmax.f32 %v9118, 0.0
        %v9215 = vmax.f32 %v6377, 0.0
        %v9216 = vmax.f32 %v6769, 0.0
        %v9217 = vmax.f32 %v7161, 0.0
        %v9218 = vmax.f32 %v7553, 0.0
        %v9219 = vmax.f32 %v7945, 0.0
        %v9220 = vmax.f32 %v8337, 0.0
        %v9221 = vmax.f32 %v8729, 0.0
        %v9222 = vmax.f32 %v9121, 0.0
        %v9223 = vmax.f32 %v6379, 0.0
        %v9224 = vmax.f32 %v6771, 0.0
        %v9225 = vmax.f32 %v7163, 0.0
        %v9226 = vmax.f32 %v7555, 0.0
        %v9227 = vmax.f32 %v7947, 0.0
        %v9228 = vmax.f32 %v8339, 0.0
        %v9229 = vmax.f32 %v8731, 0.0
        %v9230 = vmax.f32 %v9123, 0.0
        %v9231 = vmax.f32 %v6382, 0.0
        %v9232 = vmax.f32 %v6774, 0.0
        %v9233 = vmax.f32 %v7166, 0.0
        %v9234 = vmax.f32 %v7558, 0.0
        %v9235 = vmax.f32 %v7950, 0.0
        %v9236 = vmax.f32 %v8342, 0.0
        %v9237 = vmax.f32 %v8734, 0.0
        %v9238 = vmax.f32 %v9126, 0.0
        %v9239 = vmax.f32 %v6384, 0.0
        %v9240 = vmax.f32 %v6776, 0.0
        %v9241 = vmax.f32 %v7168, 0.0
        %v9242 = vmax.f32 %v7560, 0.0
        %v9243 = vmax.f32 %v7952, 0.0
        %v9244 = vmax.f32 %v8344, 0.0
        %v9245 = vmax.f32 %v8736, 0.0
        %v9246 = vmax.f32 %v9128, 0.0
        %v9247 = vmax.f32 %v6387, 0.0
        %v9248 = vmax.f32 %v6779, 0.0
        %v9249 = vmax.f32 %v7171, 0.0
        %v9250 = vmax.f32 %v7563, 0.0
        %v9251 = vmax.f32 %v7955, 0.0
        %v9252 = vmax.f32 %v8347, 0.0
        %v9253 = vmax.f32 %v8739, 0.0
        %v9254 = vmax.f32 %v9131, 0.0
        %v9255 = vmax.f32 %v6389, 0.0
        %v9256 = vmax.f32 %v6781, 0.0
        %v9257 = vmax.f32 %v7173, 0.0
        %v9258 = vmax.f32 %v7565, 0.0
        %v9259 = vmax.f32 %v7957, 0.0
        %v9260 = vmax.f32 %v8349, 0.0
        %v9261 = vmax.f32 %v8741, 0.0
        %v9262 = vmax.f32 %v9133, 0.0
        %v9263 = vpack.c.bf16 %v9143, %v9135
        %v9264 = vpack.c.bf16 %v9144, %v9136
        %v9265 = vpack.c.bf16 %v9145, %v9137
        %v9266 = vpack.c.bf16 %v9146, %v9138
        %v9267 = vpack.c.bf16 %v9147, %v9139
        %v9268 = vpack.c.bf16 %v9148, %v9140
        %v9269 = vpack.c.bf16 %v9149, %v9141
        %v9270 = vpack.c.bf16 %v9150, %v9142
        %v9271 = vpack.c.bf16 %v9159, %v9151
        %v9272 = vpack.c.bf16 %v9160, %v9152
        %v9273 = vpack.c.bf16 %v9161, %v9153
        %v9274 = vpack.c.bf16 %v9162, %v9154
        %v9275 = vpack.c.bf16 %v9163, %v9155
        %v9276 = vpack.c.bf16 %v9164, %v9156
        %v9277 = vpack.c.bf16 %v9165, %v9157
        %v9278 = vpack.c.bf16 %v9166, %v9158
        %v9279 = vpack.c.bf16 %v9175, %v9167
        %v9280 = vpack.c.bf16 %v9176, %v9168
        %v9281 = vpack.c.bf16 %v9177, %v9169
        %v9282 = vpack.c.bf16 %v9178, %v9170
        %v9283 = vpack.c.bf16 %v9179, %v9171
        %v9284 = vpack.c.bf16 %v9180, %v9172
        %v9285 = vpack.c.bf16 %v9181, %v9173
        %v9286 = vpack.c.bf16 %v9182, %v9174
        %v9287 = vpack.c.bf16 %v9191, %v9183
        %v9288 = vpack.c.bf16 %v9192, %v9184
        %v9289 = vpack.c.bf16 %v9193, %v9185
        %v9290 = vpack.c.bf16 %v9194, %v9186
        %v9291 = vpack.c.bf16 %v9195, %v9187
        %v9292 = vpack.c.bf16 %v9196, %v9188
        %v9293 = vpack.c.bf16 %v9197, %v9189
        %v9294 = vpack.c.bf16 %v9198, %v9190
        %v9295 = vpack.c.bf16 %v9207, %v9199
        %v9296 = vpack.c.bf16 %v9208, %v9200
        %v9297 = vpack.c.bf16 %v9209, %v9201
        %v9298 = vpack.c.bf16 %v9210, %v9202
        %v9299 = vpack.c.bf16 %v9211, %v9203
        %v9300 = vpack.c.bf16 %v9212, %v9204
        %v9301 = vpack.c.bf16 %v9213, %v9205
        %v9302 = vpack.c.bf16 %v9214, %v9206
        %v9303 = vpack.c.bf16 %v9223, %v9215
        %v9304 = vpack.c.bf16 %v9224, %v9216
        %v9305 = vpack.c.bf16 %v9225, %v9217
        %v9306 = vpack.c.bf16 %v9226, %v9218
        %v9307 = vpack.c.bf16 %v9227, %v9219
        %v9308 = vpack.c.bf16 %v9228, %v9220
        %v9309 = vpack.c.bf16 %v9229, %v9221
        %v9310 = vpack.c.bf16 %v9230, %v9222
        %v9311 = vpack.c.bf16 %v9239, %v9231
        %v9312 = vpack.c.bf16 %v9240, %v9232
        %v9313 = vpack.c.bf16 %v9241, %v9233
        %v9314 = vpack.c.bf16 %v9242, %v9234
        %v9315 = vpack.c.bf16 %v9243, %v9235
        %v9316 = vpack.c.bf16 %v9244, %v9236
        %v9317 = vpack.c.bf16 %v9245, %v9237
        %v9318 = vpack.c.bf16 %v9246, %v9238
        %v9319 = vpack.c.bf16 %v9255, %v9247
        %v9320 = vpack.c.bf16 %v9256, %v9248
        %v9321 = vpack.c.bf16 %v9257, %v9249
        %v9322 = vpack.c.bf16 %v9258, %v9250
        %v9323 = vpack.c.bf16 %v9259, %v9251
        %v9324 = vpack.c.bf16 %v9260, %v9252
        %v9325 = vpack.c.bf16 %v9261, %v9253
        %v9326 = vpack.c.bf16 %v9262, %v9254
        %v9327 = vld [vmem:[#allocation17] sm:$0xff]
        %v9328 = vld [vmem:[#allocation17 + $0x8] sm:$0xff]
        %v9329 = vld [vmem:[#allocation17 + $0x10] sm:$0xff]
        %v9330 = vld [vmem:[#allocation17 + $0x18] sm:$0xff]
        %v9331 = vld [vmem:[#allocation17 + $0x20] sm:$0xff]
        %v9332 = vld [vmem:[#allocation17 + $0x28] sm:$0xff]
        %v9333 = vld [vmem:[#allocation17 + $0x30] sm:$0xff]
        %v9334 = vld [vmem:[#allocation17 + $0x38] sm:$0xff]
        %v9335 = vld [vmem:[#allocation17 + $0x40] sm:$0xff]
        %v9336 = vld [vmem:[#allocation17 + $0x48] sm:$0xff]
        %v9337 = vld [vmem:[#allocation17 + $0x50] sm:$0xff]
        %v9338 = vld [vmem:[#allocation17 + $0x58] sm:$0xff]
        %v9339 = vld [vmem:[#allocation17 + $0x60] sm:$0xff]
        %v9340 = vld [vmem:[#allocation17 + $0x68] sm:$0xff]
        %v9341 = vld [vmem:[#allocation17 + $0x70] sm:$0xff]
        %v9342 = vld [vmem:[#allocation17 + $0x78] sm:$0xff]
        %v9343 = vld [vmem:[#allocation17 + $0x80] sm:$0xff]
        %v9344 = vld [vmem:[#allocation17 + $0x88] sm:$0xff]
        %v9345 = vld [vmem:[#allocation17 + $0x90] sm:$0xff]
        %v9346 = vld [vmem:[#allocation17 + $0x98] sm:$0xff]
        %v9347 = vld [vmem:[#allocation17 + $0xa0] sm:$0xff]
        %v9348 = vld [vmem:[#allocation17 + $0xa8] sm:$0xff]
        %v9349 = vld [vmem:[#allocation17 + $0xb0] sm:$0xff]
        %v9350 = vld [vmem:[#allocation17 + $0xb8] sm:$0xff]
        %v9351 = vld [vmem:[#allocation17 + $0xc0] sm:$0xff]
        %v9352 = vld [vmem:[#allocation17 + $0xc8] sm:$0xff]
        %v9353 = vld [vmem:[#allocation17 + $0xd0] sm:$0xff]
        %v9354 = vld [vmem:[#allocation17 + $0xd8] sm:$0xff]
        %v9355 = vld [vmem:[#allocation17 + $0xe0] sm:$0xff]
        %v9356 = vld [vmem:[#allocation17 + $0xe8] sm:$0xff]
        %v9357 = vld [vmem:[#allocation17 + $0xf0] sm:$0xff]
        %v9358 = vld [vmem:[#allocation17 + $0xf8] sm:$0xff]
        %v9359 = vld [vmem:[#allocation17 + $0x100] sm:$0xff]
        %v9360 = vld [vmem:[#allocation17 + $0x108] sm:$0xff]
        %v9361 = vld [vmem:[#allocation17 + $0x110] sm:$0xff]
        %v9362 = vld [vmem:[#allocation17 + $0x118] sm:$0xff]
        %v9363 = vld [vmem:[#allocation17 + $0x120] sm:$0xff]
        %v9364 = vld [vmem:[#allocation17 + $0x128] sm:$0xff]
        %v9365 = vld [vmem:[#allocation17 + $0x130] sm:$0xff]
        %v9366 = vld [vmem:[#allocation17 + $0x138] sm:$0xff]
        %v9367 = vld [vmem:[#allocation17 + $0x140] sm:$0xff]
        %v9368 = vld [vmem:[#allocation17 + $0x148] sm:$0xff]
        %v9369 = vld [vmem:[#allocation17 + $0x150] sm:$0xff]
        %v9370 = vld [vmem:[#allocation17 + $0x158] sm:$0xff]
        %v9371 = vld [vmem:[#allocation17 + $0x160] sm:$0xff]
        %v9372 = vld [vmem:[#allocation17 + $0x168] sm:$0xff]
        %v9373 = vld [vmem:[#allocation17 + $0x170] sm:$0xff]
        %v9374 = vld [vmem:[#allocation17 + $0x178] sm:$0xff]
        %v9375 = vld [vmem:[#allocation17 + $0x180] sm:$0xff]
        %v9376 = vld [vmem:[#allocation17 + $0x188] sm:$0xff]
        %v9377 = vld [vmem:[#allocation17 + $0x190] sm:$0xff]
        %v9378 = vld [vmem:[#allocation17 + $0x198] sm:$0xff]
        %v9379 = vld [vmem:[#allocation17 + $0x1a0] sm:$0xff]
        %v9380 = vld [vmem:[#allocation17 + $0x1a8] sm:$0xff]
        %v9381 = vld [vmem:[#allocation17 + $0x1b0] sm:$0xff]
        %v9382 = vld [vmem:[#allocation17 + $0x1b8] sm:$0xff]
        %v9383 = vld [vmem:[#allocation17 + $0x1c0] sm:$0xff]
        %v9384 = vld [vmem:[#allocation17 + $0x1c8] sm:$0xff]
        %v9385 = vld [vmem:[#allocation17 + $0x1d0] sm:$0xff]
        %v9386 = vld [vmem:[#allocation17 + $0x1d8] sm:$0xff]
        %v9387 = vld [vmem:[#allocation17 + $0x1e0] sm:$0xff]
        %v9388 = vld [vmem:[#allocation17 + $0x1e8] sm:$0xff]
        %v9389 = vld [vmem:[#allocation17 + $0x1f0] sm:$0xff]
        %v9390 = vld [vmem:[#allocation17 + $0x1f8] sm:$0xff]
        %v9391 = vld [vmem:[#allocation17 + $0x200] sm:$0xff]
        %v9392 = vld [vmem:[#allocation17 + $0x208] sm:$0xff]
        %v9393 = vld [vmem:[#allocation17 + $0x210] sm:$0xff]
        %v9394 = vld [vmem:[#allocation17 + $0x218] sm:$0xff]
        %v9395 = vld [vmem:[#allocation17 + $0x220] sm:$0xff]
        %v9396 = vld [vmem:[#allocation17 + $0x228] sm:$0xff]
        %v9397 = vld [vmem:[#allocation17 + $0x230] sm:$0xff]
        %v9398 = vld [vmem:[#allocation17 + $0x238] sm:$0xff]
        %v9399 = vld [vmem:[#allocation17 + $0x240] sm:$0xff]
        %v9400 = vld [vmem:[#allocation17 + $0x248] sm:$0xff]
        %v9401 = vld [vmem:[#allocation17 + $0x250] sm:$0xff]
        %v9402 = vld [vmem:[#allocation17 + $0x258] sm:$0xff]
        %v9403 = vld [vmem:[#allocation17 + $0x260] sm:$0xff]
        %v9404 = vld [vmem:[#allocation17 + $0x268] sm:$0xff]
        %v9405 = vld [vmem:[#allocation17 + $0x270] sm:$0xff]
        %v9406 = vld [vmem:[#allocation17 + $0x278] sm:$0xff]
        %v9407 = vld [vmem:[#allocation17 + $0x280] sm:$0xff]
        %v9408 = vld [vmem:[#allocation17 + $0x288] sm:$0xff]
        %v9409 = vld [vmem:[#allocation17 + $0x290] sm:$0xff]
        %v9410 = vld [vmem:[#allocation17 + $0x298] sm:$0xff]
        %v9411 = vld [vmem:[#allocation17 + $0x2a0] sm:$0xff]
        %v9412 = vld [vmem:[#allocation17 + $0x2a8] sm:$0xff]
        %v9413 = vld [vmem:[#allocation17 + $0x2b0] sm:$0xff]
        %v9414 = vld [vmem:[#allocation17 + $0x2b8] sm:$0xff]
        %v9415 = vld [vmem:[#allocation17 + $0x2c0] sm:$0xff]
        %v9416 = vld [vmem:[#allocation17 + $0x2c8] sm:$0xff]
        %v9417 = vld [vmem:[#allocation17 + $0x2d0] sm:$0xff]
        %v9418 = vld [vmem:[#allocation17 + $0x2d8] sm:$0xff]
        %v9419 = vld [vmem:[#allocation17 + $0x2e0] sm:$0xff]
        %v9420 = vld [vmem:[#allocation17 + $0x2e8] sm:$0xff]
        %v9421 = vld [vmem:[#allocation17 + $0x2f0] sm:$0xff]
        %v9422 = vld [vmem:[#allocation17 + $0x2f8] sm:$0xff]
        %v9423 = vld [vmem:[#allocation17 + $0x300] sm:$0xff]
        %v9424 = vld [vmem:[#allocation17 + $0x308] sm:$0xff]
        %v9425 = vld [vmem:[#allocation17 + $0x310] sm:$0xff]
        %v9426 = vld [vmem:[#allocation17 + $0x318] sm:$0xff]
        %v9427 = vld [vmem:[#allocation17 + $0x320] sm:$0xff]
        %v9428 = vld [vmem:[#allocation17 + $0x328] sm:$0xff]
        %v9429 = vld [vmem:[#allocation17 + $0x330] sm:$0xff]
        %v9430 = vld [vmem:[#allocation17 + $0x338] sm:$0xff]
        %v9431 = vld [vmem:[#allocation17 + $0x340] sm:$0xff]
        %v9432 = vld [vmem:[#allocation17 + $0x348] sm:$0xff]
        %v9433 = vld [vmem:[#allocation17 + $0x350] sm:$0xff]
        %v9434 = vld [vmem:[#allocation17 + $0x358] sm:$0xff]
        %v9435 = vld [vmem:[#allocation17 + $0x360] sm:$0xff]
        %v9436 = vld [vmem:[#allocation17 + $0x368] sm:$0xff]
        %v9437 = vld [vmem:[#allocation17 + $0x370] sm:$0xff]
        %v9438 = vld [vmem:[#allocation17 + $0x378] sm:$0xff]
        %v9439 = vld [vmem:[#allocation17 + $0x380] sm:$0xff]
        %v9440 = vld [vmem:[#allocation17 + $0x388] sm:$0xff]
        %v9441 = vld [vmem:[#allocation17 + $0x390] sm:$0xff]
        %v9442 = vld [vmem:[#allocation17 + $0x398] sm:$0xff]
        %v9443 = vld [vmem:[#allocation17 + $0x3a0] sm:$0xff]
        %v9444 = vld [vmem:[#allocation17 + $0x3a8] sm:$0xff]
        %v9445 = vld [vmem:[#allocation17 + $0x3b0] sm:$0xff]
        %v9446 = vld [vmem:[#allocation17 + $0x3b8] sm:$0xff]
        %v9447 = vld [vmem:[#allocation17 + $0x3c0] sm:$0xff]
        %v9448 = vld [vmem:[#allocation17 + $0x3c8] sm:$0xff]
        %v9449 = vld [vmem:[#allocation17 + $0x3d0] sm:$0xff]
        %v9450 = vld [vmem:[#allocation17 + $0x3d8] sm:$0xff]
        %v9451 = vld [vmem:[#allocation17 + $0x3e0] sm:$0xff]
        %v9452 = vld [vmem:[#allocation17 + $0x3e8] sm:$0xff]
        %v9453 = vld [vmem:[#allocation17 + $0x3f0] sm:$0xff]
        %v9454 = vld [vmem:[#allocation17 + $0x3f8] sm:$0xff]
        %v9455 = vld [vmem:[#allocation19] sm:$0x3]
        %v9457 = vperm.slane %v9455, 0
        %v9458 = vperm.slane %v9455, 1
        %v9589 = vunpack.c.l.b16 %v9327
        %v9590 = vunpack.c.h.b16 %v9327
        %v9591 = vunpack.c.l.b16 %v9328
        %v9592 = vunpack.c.h.b16 %v9328
        %v9593 = vunpack.c.l.b16 %v9329
        %v9594 = vunpack.c.h.b16 %v9329
        %v9595 = vunpack.c.l.b16 %v9330
        %v9596 = vunpack.c.h.b16 %v9330
        %v9597 = vunpack.c.l.b16 %v9331
        %v9598 = vunpack.c.h.b16 %v9331
        %v9599 = vunpack.c.l.b16 %v9332
        %v9600 = vunpack.c.h.b16 %v9332
        %v9601 = vunpack.c.l.b16 %v9333
        %v9602 = vunpack.c.h.b16 %v9333
        %v9603 = vunpack.c.l.b16 %v9334
        %v9604 = vunpack.c.h.b16 %v9334
        %v9605 = vunpack.c.l.b16 %v9335
        %v9606 = vunpack.c.h.b16 %v9335
        %v9607 = vunpack.c.l.b16 %v9336
        %v9608 = vunpack.c.h.b16 %v9336
        %v9609 = vunpack.c.l.b16 %v9337
        %v9610 = vunpack.c.h.b16 %v9337
        %v9611 = vunpack.c.l.b16 %v9338
        %v9612 = vunpack.c.h.b16 %v9338
        %v9613 = vunpack.c.l.b16 %v9339
        %v9614 = vunpack.c.h.b16 %v9339
        %v9615 = vunpack.c.l.b16 %v9340
        %v9616 = vunpack.c.h.b16 %v9340
        %v9617 = vunpack.c.l.b16 %v9341
        %v9618 = vunpack.c.h.b16 %v9341
        %v9619 = vunpack.c.l.b16 %v9342
        %v9620 = vunpack.c.h.b16 %v9342
        %v9621 = vunpack.c.l.b16 %v9343
        %v9622 = vunpack.c.h.b16 %v9343
        %v9623 = vunpack.c.l.b16 %v9344
        %v9624 = vunpack.c.h.b16 %v9344
        %v9625 = vunpack.c.l.b16 %v9345
        %v9626 = vunpack.c.h.b16 %v9345
        %v9627 = vunpack.c.l.b16 %v9346
        %v9628 = vunpack.c.h.b16 %v9346
        %v9629 = vunpack.c.l.b16 %v9347
        %v9630 = vunpack.c.h.b16 %v9347
        %v9631 = vunpack.c.l.b16 %v9348
        %v9632 = vunpack.c.h.b16 %v9348
        %v9633 = vunpack.c.l.b16 %v9349
        %v9634 = vunpack.c.h.b16 %v9349
        %v9635 = vunpack.c.l.b16 %v9350
        %v9636 = vunpack.c.h.b16 %v9350
        %v9637 = vunpack.c.l.b16 %v9351
        %v9638 = vunpack.c.h.b16 %v9351
        %v9639 = vunpack.c.l.b16 %v9352
        %v9640 = vunpack.c.h.b16 %v9352
        %v9641 = vunpack.c.l.b16 %v9353
        %v9642 = vunpack.c.h.b16 %v9353
        %v9643 = vunpack.c.l.b16 %v9354
        %v9644 = vunpack.c.h.b16 %v9354
        %v9645 = vunpack.c.l.b16 %v9355
        %v9646 = vunpack.c.h.b16 %v9355
        %v9647 = vunpack.c.l.b16 %v9356
        %v9648 = vunpack.c.h.b16 %v9356
        %v9649 = vunpack.c.l.b16 %v9357
        %v9650 = vunpack.c.h.b16 %v9357
        %v9651 = vunpack.c.l.b16 %v9358
        %v9652 = vunpack.c.h.b16 %v9358
        %v9653 = vunpack.c.l.b16 %v9359
        %v9654 = vunpack.c.h.b16 %v9359
        %v9655 = vunpack.c.l.b16 %v9360
        %v9656 = vunpack.c.h.b16 %v9360
        %v9657 = vunpack.c.l.b16 %v9361
        %v9658 = vunpack.c.h.b16 %v9361
        %v9659 = vunpack.c.l.b16 %v9362
        %v9660 = vunpack.c.h.b16 %v9362
        %v9661 = vunpack.c.l.b16 %v9363
        %v9662 = vunpack.c.h.b16 %v9363
        %v9663 = vunpack.c.l.b16 %v9364
        %v9664 = vunpack.c.h.b16 %v9364
        %v9665 = vunpack.c.l.b16 %v9365
        %v9666 = vunpack.c.h.b16 %v9365
        %v9667 = vunpack.c.l.b16 %v9366
        %v9668 = vunpack.c.h.b16 %v9366
        %v9669 = vunpack.c.l.b16 %v9367
        %v9670 = vunpack.c.h.b16 %v9367
        %v9671 = vunpack.c.l.b16 %v9368
        %v9672 = vunpack.c.h.b16 %v9368
        %v9673 = vunpack.c.l.b16 %v9369
        %v9674 = vunpack.c.h.b16 %v9369
        %v9675 = vunpack.c.l.b16 %v9370
        %v9676 = vunpack.c.h.b16 %v9370
        %v9677 = vunpack.c.l.b16 %v9371
        %v9678 = vunpack.c.h.b16 %v9371
        %v9679 = vunpack.c.l.b16 %v9372
        %v9680 = vunpack.c.h.b16 %v9372
        %v9681 = vunpack.c.l.b16 %v9373
        %v9682 = vunpack.c.h.b16 %v9373
        %v9683 = vunpack.c.l.b16 %v9374
        %v9684 = vunpack.c.h.b16 %v9374
        %v9685 = vunpack.c.l.b16 %v9375
        %v9686 = vunpack.c.h.b16 %v9375
        %v9687 = vunpack.c.l.b16 %v9376
        %v9688 = vunpack.c.h.b16 %v9376
        %v9689 = vunpack.c.l.b16 %v9377
        %v9690 = vunpack.c.h.b16 %v9377
        %v9691 = vunpack.c.l.b16 %v9378
        %v9692 = vunpack.c.h.b16 %v9378
        %v9693 = vunpack.c.l.b16 %v9379
        %v9694 = vunpack.c.h.b16 %v9379
        %v9695 = vunpack.c.l.b16 %v9380
        %v9696 = vunpack.c.h.b16 %v9380
        %v9697 = vunpack.c.l.b16 %v9381
        %v9698 = vunpack.c.h.b16 %v9381
        %v9699 = vunpack.c.l.b16 %v9382
        %v9700 = vunpack.c.h.b16 %v9382
        %v9701 = vunpack.c.l.b16 %v9383
        %v9702 = vunpack.c.h.b16 %v9383
        %v9703 = vunpack.c.l.b16 %v9384
        %v9704 = vunpack.c.h.b16 %v9384
        %v9705 = vunpack.c.l.b16 %v9385
        %v9706 = vunpack.c.h.b16 %v9385
        %v9707 = vunpack.c.l.b16 %v9386
        %v9708 = vunpack.c.h.b16 %v9386
        %v9709 = vunpack.c.l.b16 %v9387
        %v9710 = vunpack.c.h.b16 %v9387
        %v9711 = vunpack.c.l.b16 %v9388
        %v9712 = vunpack.c.h.b16 %v9388
        %v9713 = vunpack.c.l.b16 %v9389
        %v9714 = vunpack.c.h.b16 %v9389
        %v9715 = vunpack.c.l.b16 %v9390
        %v9716 = vunpack.c.h.b16 %v9390
        %v9717 = vunpack.c.l.b16 %v9391
        %v9718 = vunpack.c.h.b16 %v9391
        %v9719 = vunpack.c.l.b16 %v9392
        %v9720 = vunpack.c.h.b16 %v9392
        %v9721 = vunpack.c.l.b16 %v9393
        %v9722 = vunpack.c.h.b16 %v9393
        %v9723 = vunpack.c.l.b16 %v9394
        %v9724 = vunpack.c.h.b16 %v9394
        %v9725 = vunpack.c.l.b16 %v9395
        %v9726 = vunpack.c.h.b16 %v9395
        %v9727 = vunpack.c.l.b16 %v9396
        %v9728 = vunpack.c.h.b16 %v9396
        %v9729 = vunpack.c.l.b16 %v9397
        %v9730 = vunpack.c.h.b16 %v9397
        %v9731 = vunpack.c.l.b16 %v9398
        %v9732 = vunpack.c.h.b16 %v9398
        %v9733 = vunpack.c.l.b16 %v9399
        %v9734 = vunpack.c.h.b16 %v9399
        %v9735 = vunpack.c.l.b16 %v9400
        %v9736 = vunpack.c.h.b16 %v9400
        %v9737 = vunpack.c.l.b16 %v9401
        %v9738 = vunpack.c.h.b16 %v9401
        %v9739 = vunpack.c.l.b16 %v9402
        %v9740 = vunpack.c.h.b16 %v9402
        %v9741 = vunpack.c.l.b16 %v9403
        %v9742 = vunpack.c.h.b16 %v9403
        %v9743 = vunpack.c.l.b16 %v9404
        %v9744 = vunpack.c.h.b16 %v9404
        %v9745 = vunpack.c.l.b16 %v9405
        %v9746 = vunpack.c.h.b16 %v9405
        %v9747 = vunpack.c.l.b16 %v9406
        %v9748 = vunpack.c.h.b16 %v9406
        %v9749 = vunpack.c.l.b16 %v9407
        %v9750 = vunpack.c.h.b16 %v9407
        %v9751 = vunpack.c.l.b16 %v9408
        %v9752 = vunpack.c.h.b16 %v9408
        %v9753 = vunpack.c.l.b16 %v9409
        %v9754 = vunpack.c.h.b16 %v9409
        %v9755 = vunpack.c.l.b16 %v9410
        %v9756 = vunpack.c.h.b16 %v9410
        %v9757 = vunpack.c.l.b16 %v9411
        %v9758 = vunpack.c.h.b16 %v9411
        %v9759 = vunpack.c.l.b16 %v9412
        %v9760 = vunpack.c.h.b16 %v9412
        %v9761 = vunpack.c.l.b16 %v9413
        %v9762 = vunpack.c.h.b16 %v9413
        %v9763 = vunpack.c.l.b16 %v9414
        %v9764 = vunpack.c.h.b16 %v9414
        %v9765 = vunpack.c.l.b16 %v9415
        %v9766 = vunpack.c.h.b16 %v9415
        %v9767 = vunpack.c.l.b16 %v9416
        %v9768 = vunpack.c.h.b16 %v9416
        %v9769 = vunpack.c.l.b16 %v9417
        %v9770 = vunpack.c.h.b16 %v9417
        %v9771 = vunpack.c.l.b16 %v9418
        %v9772 = vunpack.c.h.b16 %v9418
        %v9773 = vunpack.c.l.b16 %v9419
        %v9774 = vunpack.c.h.b16 %v9419
        %v9775 = vunpack.c.l.b16 %v9420
        %v9776 = vunpack.c.h.b16 %v9420
        %v9777 = vunpack.c.l.b16 %v9421
        %v9778 = vunpack.c.h.b16 %v9421
        %v9779 = vunpack.c.l.b16 %v9422
        %v9780 = vunpack.c.h.b16 %v9422
        %v9781 = vunpack.c.l.b16 %v9423
        %v9782 = vunpack.c.h.b16 %v9423
        %v9783 = vunpack.c.l.b16 %v9424
        %v9784 = vunpack.c.h.b16 %v9424
        %v9785 = vunpack.c.l.b16 %v9425
        %v9786 = vunpack.c.h.b16 %v9425
        %v9787 = vunpack.c.l.b16 %v9426
        %v9788 = vunpack.c.h.b16 %v9426
        %v9789 = vunpack.c.l.b16 %v9427
        %v9790 = vunpack.c.h.b16 %v9427
        %v9791 = vunpack.c.l.b16 %v9428
        %v9792 = vunpack.c.h.b16 %v9428
        %v9793 = vunpack.c.l.b16 %v9429
        %v9794 = vunpack.c.h.b16 %v9429
        %v9795 = vunpack.c.l.b16 %v9430
        %v9796 = vunpack.c.h.b16 %v9430
        %v9797 = vunpack.c.l.b16 %v9431
        %v9798 = vunpack.c.h.b16 %v9431
        %v9799 = vunpack.c.l.b16 %v9432
        %v9800 = vunpack.c.h.b16 %v9432
        %v9801 = vunpack.c.l.b16 %v9433
        %v9802 = vunpack.c.h.b16 %v9433
        %v9803 = vunpack.c.l.b16 %v9434
        %v9804 = vunpack.c.h.b16 %v9434
        %v9805 = vunpack.c.l.b16 %v9435
        %v9806 = vunpack.c.h.b16 %v9435
        %v9807 = vunpack.c.l.b16 %v9436
        %v9808 = vunpack.c.h.b16 %v9436
        %v9809 = vunpack.c.l.b16 %v9437
        %v9810 = vunpack.c.h.b16 %v9437
        %v9811 = vunpack.c.l.b16 %v9438
        %v9812 = vunpack.c.h.b16 %v9438
        %v9813 = vunpack.c.l.b16 %v9439
        %v9814 = vunpack.c.h.b16 %v9439
        %v9815 = vunpack.c.l.b16 %v9440
        %v9816 = vunpack.c.h.b16 %v9440
        %v9817 = vunpack.c.l.b16 %v9441
        %v9818 = vunpack.c.h.b16 %v9441
        %v9819 = vunpack.c.l.b16 %v9442
        %v9820 = vunpack.c.h.b16 %v9442
        %v9821 = vunpack.c.l.b16 %v9443
        %v9822 = vunpack.c.h.b16 %v9443
        %v9823 = vunpack.c.l.b16 %v9444
        %v9824 = vunpack.c.h.b16 %v9444
        %v9825 = vunpack.c.l.b16 %v9445
        %v9826 = vunpack.c.h.b16 %v9445
        %v9827 = vunpack.c.l.b16 %v9446
        %v9828 = vunpack.c.h.b16 %v9446
        %v9829 = vunpack.c.l.b16 %v9447
        %v9830 = vunpack.c.h.b16 %v9447
        %v9831 = vunpack.c.l.b16 %v9448
        %v9832 = vunpack.c.h.b16 %v9448
        %v9833 = vunpack.c.l.b16 %v9449
        %v9834 = vunpack.c.h.b16 %v9449
        %v9835 = vunpack.c.l.b16 %v9450
        %v9836 = vunpack.c.h.b16 %v9450
        %v9837 = vunpack.c.l.b16 %v9451
        %v9838 = vunpack.c.h.b16 %v9451
        %v9839 = vunpack.c.l.b16 %v9452
        %v9840 = vunpack.c.h.b16 %v9452
        %v9841 = vunpack.c.l.b16 %v9453
        %v9842 = vunpack.c.h.b16 %v9453
        %v9843 = vunpack.c.l.b16 %v9454
        %v9844 = vunpack.c.h.b16 %v9454
        %v9845 = vpack.c.b16 %v9591, %v9589
        %v9846 = vpack.c.b16 %v9592, %v9590
        %v9847 = vpack.c.b16 %v9595, %v9593
        %v9848 = vpack.c.b16 %v9596, %v9594
        %v9849 = vpack.c.b16 %v9599, %v9597
        %v9850 = vpack.c.b16 %v9600, %v9598
        %v9851 = vpack.c.b16 %v9603, %v9601
        %v9852 = vpack.c.b16 %v9604, %v9602
        %v9853 = vpack.c.b16 %v9607, %v9605
        %v9854 = vpack.c.b16 %v9608, %v9606
        %v9855 = vpack.c.b16 %v9611, %v9609
        %v9856 = vpack.c.b16 %v9612, %v9610
        %v9857 = vpack.c.b16 %v9615, %v9613
        %v9858 = vpack.c.b16 %v9616, %v9614
        %v9859 = vpack.c.b16 %v9619, %v9617
        %v9860 = vpack.c.b16 %v9620, %v9618
        %v9861 = vpack.c.b16 %v9623, %v9621
        %v9862 = vpack.c.b16 %v9624, %v9622
        %v9863 = vpack.c.b16 %v9627, %v9625
        %v9864 = vpack.c.b16 %v9628, %v9626
        %v9865 = vpack.c.b16 %v9631, %v9629
        %v9866 = vpack.c.b16 %v9632, %v9630
        %v9867 = vpack.c.b16 %v9635, %v9633
        %v9868 = vpack.c.b16 %v9636, %v9634
        %v9869 = vpack.c.b16 %v9639, %v9637
        %v9870 = vpack.c.b16 %v9640, %v9638
        %v9871 = vpack.c.b16 %v9643, %v9641
        %v9872 = vpack.c.b16 %v9644, %v9642
        %v9873 = vpack.c.b16 %v9647, %v9645
        %v9874 = vpack.c.b16 %v9648, %v9646
        %v9875 = vpack.c.b16 %v9651, %v9649
        %v9876 = vpack.c.b16 %v9652, %v9650
        %v9877 = vpack.c.b16 %v9655, %v9653
        %v9878 = vpack.c.b16 %v9656, %v9654
        %v9879 = vpack.c.b16 %v9659, %v9657
        %v9880 = vpack.c.b16 %v9660, %v9658
        %v9881 = vpack.c.b16 %v9663, %v9661
        %v9882 = vpack.c.b16 %v9664, %v9662
        %v9883 = vpack.c.b16 %v9667, %v9665
        %v9884 = vpack.c.b16 %v9668, %v9666
        %v9885 = vpack.c.b16 %v9671, %v9669
        %v9886 = vpack.c.b16 %v9672, %v9670
        %v9887 = vpack.c.b16 %v9675, %v9673
        %v9888 = vpack.c.b16 %v9676, %v9674
        %v9889 = vpack.c.b16 %v9679, %v9677
        %v9890 = vpack.c.b16 %v9680, %v9678
        %v9891 = vpack.c.b16 %v9683, %v9681
        %v9892 = vpack.c.b16 %v9684, %v9682
        %v9893 = vpack.c.b16 %v9687, %v9685
        %v9894 = vpack.c.b16 %v9688, %v9686
        %v9895 = vpack.c.b16 %v9691, %v9689
        %v9896 = vpack.c.b16 %v9692, %v9690
        %v9897 = vpack.c.b16 %v9695, %v9693
        %v9898 = vpack.c.b16 %v9696, %v9694
        %v9899 = vpack.c.b16 %v9699, %v9697
        %v9900 = vpack.c.b16 %v9700, %v9698
        %v9901 = vpack.c.b16 %v9703, %v9701
        %v9902 = vpack.c.b16 %v9704, %v9702
        %v9903 = vpack.c.b16 %v9707, %v9705
        %v9904 = vpack.c.b16 %v9708, %v9706
        %v9905 = vpack.c.b16 %v9711, %v9709
        %v9906 = vpack.c.b16 %v9712, %v9710
        %v9907 = vpack.c.b16 %v9715, %v9713
        %v9908 = vpack.c.b16 %v9716, %v9714
        %v9909 = vpack.c.b16 %v9719, %v9717
        %v9910 = vpack.c.b16 %v9720, %v9718
        %v9911 = vpack.c.b16 %v9723, %v9721
        %v9912 = vpack.c.b16 %v9724, %v9722
        %v9913 = vpack.c.b16 %v9727, %v9725
        %v9914 = vpack.c.b16 %v9728, %v9726
        %v9915 = vpack.c.b16 %v9731, %v9729
        %v9916 = vpack.c.b16 %v9732, %v9730
        %v9917 = vpack.c.b16 %v9735, %v9733
        %v9918 = vpack.c.b16 %v9736, %v9734
        %v9919 = vpack.c.b16 %v9739, %v9737
        %v9920 = vpack.c.b16 %v9740, %v9738
        %v9921 = vpack.c.b16 %v9743, %v9741
        %v9922 = vpack.c.b16 %v9744, %v9742
        %v9923 = vpack.c.b16 %v9747, %v9745
        %v9924 = vpack.c.b16 %v9748, %v9746
        %v9925 = vpack.c.b16 %v9751, %v9749
        %v9926 = vpack.c.b16 %v9752, %v9750
        %v9927 = vpack.c.b16 %v9755, %v9753
        %v9928 = vpack.c.b16 %v9756, %v9754
        %v9929 = vpack.c.b16 %v9759, %v9757
        %v9930 = vpack.c.b16 %v9760, %v9758
        %v9931 = vpack.c.b16 %v9763, %v9761
        %v9932 = vpack.c.b16 %v9764, %v9762
        %v9933 = vpack.c.b16 %v9767, %v9765
        %v9934 = vpack.c.b16 %v9768, %v9766
        %v9935 = vpack.c.b16 %v9771, %v9769
        %v9936 = vpack.c.b16 %v9772, %v9770
        %v9937 = vpack.c.b16 %v9775, %v9773
        %v9938 = vpack.c.b16 %v9776, %v9774
        %v9939 = vpack.c.b16 %v9779, %v9777
        %v9940 = vpack.c.b16 %v9780, %v9778
        %v9941 = vpack.c.b16 %v9783, %v9781
        %v9942 = vpack.c.b16 %v9784, %v9782
        %v9943 = vpack.c.b16 %v9787, %v9785
        %v9944 = vpack.c.b16 %v9788, %v9786
        %v9945 = vpack.c.b16 %v9791, %v9789
        %v9946 = vpack.c.b16 %v9792, %v9790
        %v9947 = vpack.c.b16 %v9795, %v9793
        %v9948 = vpack.c.b16 %v9796, %v9794
        %v9949 = vpack.c.b16 %v9799, %v9797
        %v9950 = vpack.c.b16 %v9800, %v9798
        %v9951 = vpack.c.b16 %v9803, %v9801
        %v9952 = vpack.c.b16 %v9804, %v9802
        %v9953 = vpack.c.b16 %v9807, %v9805
        %v9954 = vpack.c.b16 %v9808, %v9806
        %v9955 = vpack.c.b16 %v9811, %v9809
        %v9956 = vpack.c.b16 %v9812, %v9810
        %v9957 = vpack.c.b16 %v9815, %v9813
        %v9958 = vpack.c.b16 %v9816, %v9814
        %v9959 = vpack.c.b16 %v9819, %v9817
        %v9960 = vpack.c.b16 %v9820, %v9818
        %v9961 = vpack.c.b16 %v9823, %v9821
        %v9962 = vpack.c.b16 %v9824, %v9822
        %v9963 = vpack.c.b16 %v9827, %v9825
        %v9964 = vpack.c.b16 %v9828, %v9826
        %v9965 = vpack.c.b16 %v9831, %v9829
        %v9966 = vpack.c.b16 %v9832, %v9830
        %v9967 = vpack.c.b16 %v9835, %v9833
        %v9968 = vpack.c.b16 %v9836, %v9834
        %v9969 = vpack.c.b16 %v9839, %v9837
        %v9970 = vpack.c.b16 %v9840, %v9838
        %v9971 = vpack.c.b16 %v9843, %v9841
        %v9972 = vpack.c.b16 %v9844, %v9842
        %10101 = vmatpush.bf16.msra.mxu0 %v9859
        %10102 = vmatpush.bf16.msra.mxu0 %v9857
        %10103 = vmatpush.bf16.msra.mxu0 %v9855
        %10104 = vmatpush.bf16.msra.mxu0 %v9853
        %10105 = vmatpush.bf16.msra.mxu0 %v9851
        %10106 = vmatpush.bf16.msra.mxu0 %v9849
        %10107 = vmatpush.bf16.msra.mxu0 %v9847
        %10108 = vmatpush.bf16.msra.mxu0 %v9845
        %10109 = vmatmul.bf16.gmra.mxu0 %v9263
        %v10110 = vpop.f32.mrf.mxu0
        %v10111 = vadd.f32 %v9457, %v10110
        %v10112 = vpop.f32.mrf.mxu0
        %v10113 = vadd.f32 %v9457, %v10112
        %10114 = vmatmul.bf16.gmra.mxu0 %v9271
        %v10115 = vpop.f32.mrf.mxu0
        %v10116 = vadd.f32 %v9457, %v10115
        %v10117 = vpop.f32.mrf.mxu0
        %v10118 = vadd.f32 %v9457, %v10117
        %10119 = vmatmul.bf16.gmra.mxu0 %v9279
        %v10120 = vpop.f32.mrf.mxu0
        %v10121 = vadd.f32 %v9457, %v10120
        %v10122 = vpop.f32.mrf.mxu0
        %v10123 = vadd.f32 %v9457, %v10122
        %10124 = vmatmul.bf16.gmra.mxu0 %v9287
        %v10125 = vpop.f32.mrf.mxu0
        %v10126 = vadd.f32 %v9457, %v10125
        %v10127 = vpop.f32.mrf.mxu0
        %v10128 = vadd.f32 %v9457, %v10127
        %10129 = vmatmul.bf16.gmra.mxu0 %v9295
        %v10130 = vpop.f32.mrf.mxu0
        %v10131 = vadd.f32 %v9457, %v10130
        %v10132 = vpop.f32.mrf.mxu0
        %v10133 = vadd.f32 %v9457, %v10132
        %10134 = vmatmul.bf16.gmra.mxu0 %v9303
        %v10135 = vpop.f32.mrf.mxu0
        %v10136 = vadd.f32 %v9457, %v10135
        %v10137 = vpop.f32.mrf.mxu0
        %v10138 = vadd.f32 %v9457, %v10137
        %10139 = vmatmul.bf16.gmra.mxu0 %v9311
        %v10140 = vpop.f32.mrf.mxu0
        %v10141 = vadd.f32 %v9457, %v10140
        %v10142 = vpop.f32.mrf.mxu0
        %v10143 = vadd.f32 %v9457, %v10142
        %10144 = vmatmul.bf16.gmra.mxu0 %v9319
        %v10145 = vpop.f32.mrf.mxu0
        %v10146 = vadd.f32 %v9457, %v10145
        %v10147 = vpop.f32.mrf.mxu0
        %v10148 = vadd.f32 %v9457, %v10147
        %10149 = vdwg.mxu0
        %10150 = vmatpush.bf16.msra.mxu0 %v9875
        %10151 = vmatpush.bf16.msra.mxu0 %v9873
        %10152 = vmatpush.bf16.msra.mxu0 %v9871
        %10153 = vmatpush.bf16.msra.mxu0 %v9869
        %10154 = vmatpush.bf16.msra.mxu0 %v9867
        %10155 = vmatpush.bf16.msra.mxu0 %v9865
        %10156 = vmatpush.bf16.msra.mxu0 %v9863
        %10157 = vmatpush.bf16.msra.mxu0 %v9861
        %10158 = vmatmul.bf16.gmra.mxu0 %v9264
        %v10159 = vpop.f32.mrf.mxu0
        %v10160 = vadd.f32 %v10111, %v10159
        %v10161 = vpop.f32.mrf.mxu0
        %v10162 = vadd.f32 %v10113, %v10161
        %10163 = vmatmul.bf16.gmra.mxu0 %v9272
        %v10164 = vpop.f32.mrf.mxu0
        %v10165 = vadd.f32 %v10116, %v10164
        %v10166 = vpop.f32.mrf.mxu0
        %v10167 = vadd.f32 %v10118, %v10166
        %10168 = vmatmul.bf16.gmra.mxu0 %v9280
        %v10169 = vpop.f32.mrf.mxu0
        %v10170 = vadd.f32 %v10121, %v10169
        %v10171 = vpop.f32.mrf.mxu0
        %v10172 = vadd.f32 %v10123, %v10171
        %10173 = vmatmul.bf16.gmra.mxu0 %v9288
        %v10174 = vpop.f32.mrf.mxu0
        %v10175 = vadd.f32 %v10126, %v10174
        %v10176 = vpop.f32.mrf.mxu0
        %v10177 = vadd.f32 %v10128, %v10176
        %10178 = vmatmul.bf16.gmra.mxu0 %v9296
        %v10179 = vpop.f32.mrf.mxu0
        %v10180 = vadd.f32 %v10131, %v10179
        %v10181 = vpop.f32.mrf.mxu0
        %v10182 = vadd.f32 %v10133, %v10181
        %10183 = vmatmul.bf16.gmra.mxu0 %v9304
        %v10184 = vpop.f32.mrf.mxu0
        %v10185 = vadd.f32 %v10136, %v10184
        %v10186 = vpop.f32.mrf.mxu0
        %v10187 = vadd.f32 %v10138, %v10186
        %10188 = vmatmul.bf16.gmra.mxu0 %v9312
        %v10189 = vpop.f32.mrf.mxu0
        %v10190 = vadd.f32 %v10141, %v10189
        %v10191 = vpop.f32.mrf.mxu0
        %v10192 = vadd.f32 %v10143, %v10191
        %10193 = vmatmul.bf16.gmra.mxu0 %v9320
        %v10194 = vpop.f32.mrf.mxu0
        %v10195 = vadd.f32 %v10146, %v10194
        %v10196 = vpop.f32.mrf.mxu0
        %v10197 = vadd.f32 %v10148, %v10196
        %10198 = vdwg.mxu0
        %10199 = vmatpush.bf16.msra.mxu0 %v9891
        %10200 = vmatpush.bf16.msra.mxu0 %v9889
        %10201 = vmatpush.bf16.msra.mxu0 %v9887
        %10202 = vmatpush.bf16.msra.mxu0 %v9885
        %10203 = vmatpush.bf16.msra.mxu0 %v9883
        %10204 = vmatpush.bf16.msra.mxu0 %v9881
        %10205 = vmatpush.bf16.msra.mxu0 %v9879
        %10206 = vmatpush.bf16.msra.mxu0 %v9877
        %10207 = vmatmul.bf16.gmra.mxu0 %v9265
        %v10208 = vpop.f32.mrf.mxu0
        %v10209 = vadd.f32 %v10160, %v10208
        %v10210 = vpop.f32.mrf.mxu0
        %v10211 = vadd.f32 %v10162, %v10210
        %10212 = vmatmul.bf16.gmra.mxu0 %v9273
        %v10213 = vpop.f32.mrf.mxu0
        %v10214 = vadd.f32 %v10165, %v10213
        %v10215 = vpop.f32.mrf.mxu0
        %v10216 = vadd.f32 %v10167, %v10215
        %10217 = vmatmul.bf16.gmra.mxu0 %v9281
        %v10218 = vpop.f32.mrf.mxu0
        %v10219 = vadd.f32 %v10170, %v10218
        %v10220 = vpop.f32.mrf.mxu0
        %v10221 = vadd.f32 %v10172, %v10220
        %10222 = vmatmul.bf16.gmra.mxu0 %v9289
        %v10223 = vpop.f32.mrf.mxu0
        %v10224 = vadd.f32 %v10175, %v10223
        %v10225 = vpop.f32.mrf.mxu0
        %v10226 = vadd.f32 %v10177, %v10225
        %10227 = vmatmul.bf16.gmra.mxu0 %v9297
        %v10228 = vpop.f32.mrf.mxu0
        %v10229 = vadd.f32 %v10180, %v10228
        %v10230 = vpop.f32.mrf.mxu0
        %v10231 = vadd.f32 %v10182, %v10230
        %10232 = vmatmul.bf16.gmra.mxu0 %v9305
        %v10233 = vpop.f32.mrf.mxu0
        %v10234 = vadd.f32 %v10185, %v10233
        %v10235 = vpop.f32.mrf.mxu0
        %v10236 = vadd.f32 %v10187, %v10235
        %10237 = vmatmul.bf16.gmra.mxu0 %v9313
        %v10238 = vpop.f32.mrf.mxu0
        %v10239 = vadd.f32 %v10190, %v10238
        %v10240 = vpop.f32.mrf.mxu0
        %v10241 = vadd.f32 %v10192, %v10240
        %10242 = vmatmul.bf16.gmra.mxu0 %v9321
        %v10243 = vpop.f32.mrf.mxu0
        %v10244 = vadd.f32 %v10195, %v10243
        %v10245 = vpop.f32.mrf.mxu0
        %v10246 = vadd.f32 %v10197, %v10245
        %10247 = vdwg.mxu0
        %10248 = vmatpush.bf16.msra.mxu0 %v9907
        %10249 = vmatpush.bf16.msra.mxu0 %v9905
        %10250 = vmatpush.bf16.msra.mxu0 %v9903
        %10251 = vmatpush.bf16.msra.mxu0 %v9901
        %10252 = vmatpush.bf16.msra.mxu0 %v9899
        %10253 = vmatpush.bf16.msra.mxu0 %v9897
        %10254 = vmatpush.bf16.msra.mxu0 %v9895
        %10255 = vmatpush.bf16.msra.mxu0 %v9893
        %10256 = vmatmul.bf16.gmra.mxu0 %v9266
        %v10257 = vpop.f32.mrf.mxu0
        %v10258 = vadd.f32 %v10209, %v10257
        %v10259 = vpop.f32.mrf.mxu0
        %v10260 = vadd.f32 %v10211, %v10259
        %10261 = vmatmul.bf16.gmra.mxu0 %v9274
        %v10262 = vpop.f32.mrf.mxu0
        %v10263 = vadd.f32 %v10214, %v10262
        %v10264 = vpop.f32.mrf.mxu0
        %v10265 = vadd.f32 %v10216, %v10264
        %10266 = vmatmul.bf16.gmra.mxu0 %v9282
        %v10267 = vpop.f32.mrf.mxu0
        %v10268 = vadd.f32 %v10219, %v10267
        %v10269 = vpop.f32.mrf.mxu0
        %v10270 = vadd.f32 %v10221, %v10269
        %10271 = vmatmul.bf16.gmra.mxu0 %v9290
        %v10272 = vpop.f32.mrf.mxu0
        %v10273 = vadd.f32 %v10224, %v10272
        %v10274 = vpop.f32.mrf.mxu0
        %v10275 = vadd.f32 %v10226, %v10274
        %10276 = vmatmul.bf16.gmra.mxu0 %v9298
        %v10277 = vpop.f32.mrf.mxu0
        %v10278 = vadd.f32 %v10229, %v10277
        %v10279 = vpop.f32.mrf.mxu0
        %v10280 = vadd.f32 %v10231, %v10279
        %10281 = vmatmul.bf16.gmra.mxu0 %v9306
        %v10282 = vpop.f32.mrf.mxu0
        %v10283 = vadd.f32 %v10234, %v10282
        %v10284 = vpop.f32.mrf.mxu0
        %v10285 = vadd.f32 %v10236, %v10284
        %10286 = vmatmul.bf16.gmra.mxu0 %v9314
        %v10287 = vpop.f32.mrf.mxu0
        %v10288 = vadd.f32 %v10239, %v10287
        %v10289 = vpop.f32.mrf.mxu0
        %v10290 = vadd.f32 %v10241, %v10289
        %10291 = vmatmul.bf16.gmra.mxu0 %v9322
        %v10292 = vpop.f32.mrf.mxu0
        %v10293 = vadd.f32 %v10244, %v10292
        %v10294 = vpop.f32.mrf.mxu0
        %v10295 = vadd.f32 %v10246, %v10294
        %10296 = vdwg.mxu0
        %10297 = vmatpush.bf16.msra.mxu0 %v9923
        %10298 = vmatpush.bf16.msra.mxu0 %v9921
        %10299 = vmatpush.bf16.msra.mxu0 %v9919
        %10300 = vmatpush.bf16.msra.mxu0 %v9917
        %10301 = vmatpush.bf16.msra.mxu0 %v9915
        %10302 = vmatpush.bf16.msra.mxu0 %v9913
        %10303 = vmatpush.bf16.msra.mxu0 %v9911
        %10304 = vmatpush.bf16.msra.mxu0 %v9909
        %10305 = vmatmul.bf16.gmra.mxu0 %v9267
        %v10306 = vpop.f32.mrf.mxu0
        %v10307 = vadd.f32 %v10258, %v10306
        %v10308 = vpop.f32.mrf.mxu0
        %v10309 = vadd.f32 %v10260, %v10308
        %10310 = vmatmul.bf16.gmra.mxu0 %v9275
        %v10311 = vpop.f32.mrf.mxu0
        %v10312 = vadd.f32 %v10263, %v10311
        %v10313 = vpop.f32.mrf.mxu0
        %v10314 = vadd.f32 %v10265, %v10313
        %10315 = vmatmul.bf16.gmra.mxu0 %v9283
        %v10316 = vpop.f32.mrf.mxu0
        %v10317 = vadd.f32 %v10268, %v10316
        %v10318 = vpop.f32.mrf.mxu0
        %v10319 = vadd.f32 %v10270, %v10318
        %10320 = vmatmul.bf16.gmra.mxu0 %v9291
        %v10321 = vpop.f32.mrf.mxu0
        %v10322 = vadd.f32 %v10273, %v10321
        %v10323 = vpop.f32.mrf.mxu0
        %v10324 = vadd.f32 %v10275, %v10323
        %10325 = vmatmul.bf16.gmra.mxu0 %v9299
        %v10326 = vpop.f32.mrf.mxu0
        %v10327 = vadd.f32 %v10278, %v10326
        %v10328 = vpop.f32.mrf.mxu0
        %v10329 = vadd.f32 %v10280, %v10328
        %10330 = vmatmul.bf16.gmra.mxu0 %v9307
        %v10331 = vpop.f32.mrf.mxu0
        %v10332 = vadd.f32 %v10283, %v10331
        %v10333 = vpop.f32.mrf.mxu0
        %v10334 = vadd.f32 %v10285, %v10333
        %10335 = vmatmul.bf16.gmra.mxu0 %v9315
        %v10336 = vpop.f32.mrf.mxu0
        %v10337 = vadd.f32 %v10288, %v10336
        %v10338 = vpop.f32.mrf.mxu0
        %v10339 = vadd.f32 %v10290, %v10338
        %10340 = vmatmul.bf16.gmra.mxu0 %v9323
        %v10341 = vpop.f32.mrf.mxu0
        %v10342 = vadd.f32 %v10293, %v10341
        %v10343 = vpop.f32.mrf.mxu0
        %v10344 = vadd.f32 %v10295, %v10343
        %10345 = vdwg.mxu0
        %10346 = vmatpush.bf16.msra.mxu0 %v9939
        %10347 = vmatpush.bf16.msra.mxu0 %v9937
        %10348 = vmatpush.bf16.msra.mxu0 %v9935
        %10349 = vmatpush.bf16.msra.mxu0 %v9933
        %10350 = vmatpush.bf16.msra.mxu0 %v9931
        %10351 = vmatpush.bf16.msra.mxu0 %v9929
        %10352 = vmatpush.bf16.msra.mxu0 %v9927
        %10353 = vmatpush.bf16.msra.mxu0 %v9925
        %10354 = vmatmul.bf16.gmra.mxu0 %v9268
        %v10355 = vpop.f32.mrf.mxu0
        %v10356 = vadd.f32 %v10307, %v10355
        %v10357 = vpop.f32.mrf.mxu0
        %v10358 = vadd.f32 %v10309, %v10357
        %10359 = vmatmul.bf16.gmra.mxu0 %v9276
        %v10360 = vpop.f32.mrf.mxu0
        %v10361 = vadd.f32 %v10312, %v10360
        %v10362 = vpop.f32.mrf.mxu0
        %v10363 = vadd.f32 %v10314, %v10362
        %10364 = vmatmul.bf16.gmra.mxu0 %v9284
        %v10365 = vpop.f32.mrf.mxu0
        %v10366 = vadd.f32 %v10317, %v10365
        %v10367 = vpop.f32.mrf.mxu0
        %v10368 = vadd.f32 %v10319, %v10367
        %10369 = vmatmul.bf16.gmra.mxu0 %v9292
        %v10370 = vpop.f32.mrf.mxu0
        %v10371 = vadd.f32 %v10322, %v10370
        %v10372 = vpop.f32.mrf.mxu0
        %v10373 = vadd.f32 %v10324, %v10372
        %10374 = vmatmul.bf16.gmra.mxu0 %v9300
        %v10375 = vpop.f32.mrf.mxu0
        %v10376 = vadd.f32 %v10327, %v10375
        %v10377 = vpop.f32.mrf.mxu0
        %v10378 = vadd.f32 %v10329, %v10377
        %10379 = vmatmul.bf16.gmra.mxu0 %v9308
        %v10380 = vpop.f32.mrf.mxu0
        %v10381 = vadd.f32 %v10332, %v10380
        %v10382 = vpop.f32.mrf.mxu0
        %v10383 = vadd.f32 %v10334, %v10382
        %10384 = vmatmul.bf16.gmra.mxu0 %v9316
        %v10385 = vpop.f32.mrf.mxu0
        %v10386 = vadd.f32 %v10337, %v10385
        %v10387 = vpop.f32.mrf.mxu0
        %v10388 = vadd.f32 %v10339, %v10387
        %10389 = vmatmul.bf16.gmra.mxu0 %v9324
        %v10390 = vpop.f32.mrf.mxu0
        %v10391 = vadd.f32 %v10342, %v10390
        %v10392 = vpop.f32.mrf.mxu0
        %v10393 = vadd.f32 %v10344, %v10392
        %10394 = vdwg.mxu0
        %10395 = vmatpush.bf16.msra.mxu0 %v9955
        %10396 = vmatpush.bf16.msra.mxu0 %v9953
        %10397 = vmatpush.bf16.msra.mxu0 %v9951
        %10398 = vmatpush.bf16.msra.mxu0 %v9949
        %10399 = vmatpush.bf16.msra.mxu0 %v9947
        %10400 = vmatpush.bf16.msra.mxu0 %v9945
        %10401 = vmatpush.bf16.msra.mxu0 %v9943
        %10402 = vmatpush.bf16.msra.mxu0 %v9941
        %10403 = vmatmul.bf16.gmra.mxu0 %v9269
        %v10404 = vpop.f32.mrf.mxu0
        %v10405 = vadd.f32 %v10356, %v10404
        %v10406 = vpop.f32.mrf.mxu0
        %v10407 = vadd.f32 %v10358, %v10406
        %10408 = vmatmul.bf16.gmra.mxu0 %v9277
        %v10409 = vpop.f32.mrf.mxu0
        %v10410 = vadd.f32 %v10361, %v10409
        %v10411 = vpop.f32.mrf.mxu0
        %v10412 = vadd.f32 %v10363, %v10411
        %10413 = vmatmul.bf16.gmra.mxu0 %v9285
        %v10414 = vpop.f32.mrf.mxu0
        %v10415 = vadd.f32 %v10366, %v10414
        %v10416 = vpop.f32.mrf.mxu0
        %v10417 = vadd.f32 %v10368, %v10416
        %10418 = vmatmul.bf16.gmra.mxu0 %v9293
        %v10419 = vpop.f32.mrf.mxu0
        %v10420 = vadd.f32 %v10371, %v10419
        %v10421 = vpop.f32.mrf.mxu0
        %v10422 = vadd.f32 %v10373, %v10421
        %10423 = vmatmul.bf16.gmra.mxu0 %v9301
        %v10424 = vpop.f32.mrf.mxu0
        %v10425 = vadd.f32 %v10376, %v10424
        %v10426 = vpop.f32.mrf.mxu0
        %v10427 = vadd.f32 %v10378, %v10426
        %10428 = vmatmul.bf16.gmra.mxu0 %v9309
        %v10429 = vpop.f32.mrf.mxu0
        %v10430 = vadd.f32 %v10381, %v10429
        %v10431 = vpop.f32.mrf.mxu0
        %v10432 = vadd.f32 %v10383, %v10431
        %10433 = vmatmul.bf16.gmra.mxu0 %v9317
        %v10434 = vpop.f32.mrf.mxu0
        %v10435 = vadd.f32 %v10386, %v10434
        %v10436 = vpop.f32.mrf.mxu0
        %v10437 = vadd.f32 %v10388, %v10436
        %10438 = vmatmul.bf16.gmra.mxu0 %v9325
        %v10439 = vpop.f32.mrf.mxu0
        %v10440 = vadd.f32 %v10391, %v10439
        %v10441 = vpop.f32.mrf.mxu0
        %v10442 = vadd.f32 %v10393, %v10441
        %10443 = vdwg.mxu0
        %10444 = vmatpush.bf16.msra.mxu0 %v9971
        %10445 = vmatpush.bf16.msra.mxu0 %v9969
        %10446 = vmatpush.bf16.msra.mxu0 %v9967
        %10447 = vmatpush.bf16.msra.mxu0 %v9965
        %10448 = vmatpush.bf16.msra.mxu0 %v9963
        %10449 = vmatpush.bf16.msra.mxu0 %v9961
        %10450 = vmatpush.bf16.msra.mxu0 %v9959
        %10451 = vmatpush.bf16.msra.mxu0 %v9957
        %10452 = vmatmul.bf16.gmra.mxu0 %v9270
        %v10453 = vpop.f32.mrf.mxu0
        %v10454 = vadd.f32 %v10405, %v10453
        %v10455 = vpop.f32.mrf.mxu0
        %v10456 = vadd.f32 %v10407, %v10455
        %10457 = vmatmul.bf16.gmra.mxu0 %v9278
        %v10458 = vpop.f32.mrf.mxu0
        %v10459 = vadd.f32 %v10410, %v10458
        %v10460 = vpop.f32.mrf.mxu0
        %v10461 = vadd.f32 %v10412, %v10460
        %10462 = vmatmul.bf16.gmra.mxu0 %v9286
        %v10463 = vpop.f32.mrf.mxu0
        %v10464 = vadd.f32 %v10415, %v10463
        %v10465 = vpop.f32.mrf.mxu0
        %v10466 = vadd.f32 %v10417, %v10465
        %10467 = vmatmul.bf16.gmra.mxu0 %v9294
        %v10468 = vpop.f32.mrf.mxu0
        %v10469 = vadd.f32 %v10420, %v10468
        %v10470 = vpop.f32.mrf.mxu0
        %v10471 = vadd.f32 %v10422, %v10470
        %10472 = vmatmul.bf16.gmra.mxu0 %v9302
        %v10473 = vpop.f32.mrf.mxu0
        %v10474 = vadd.f32 %v10425, %v10473
        %v10475 = vpop.f32.mrf.mxu0
        %v10476 = vadd.f32 %v10427, %v10475
        %10477 = vmatmul.bf16.gmra.mxu0 %v9310
        %v10478 = vpop.f32.mrf.mxu0
        %v10479 = vadd.f32 %v10430, %v10478
        %v10480 = vpop.f32.mrf.mxu0
        %v10481 = vadd.f32 %v10432, %v10480
        %10482 = vmatmul.bf16.gmra.mxu0 %v9318
        %v10483 = vpop.f32.mrf.mxu0
        %v10484 = vadd.f32 %v10435, %v10483
        %v10485 = vpop.f32.mrf.mxu0
        %v10486 = vadd.f32 %v10437, %v10485
        %10487 = vmatmul.bf16.gmra.mxu0 %v9326
        %v10488 = vpop.f32.mrf.mxu0
        %v10489 = vadd.f32 %v10440, %v10488
        %v10490 = vpop.f32.mrf.mxu0
        %v10491 = vadd.f32 %v10442, %v10490
        %10492 = vdwg.mxu0
        %10493 = vmatpush.bf16.msra.mxu0 %v9860
        %10494 = vmatpush.bf16.msra.mxu0 %v9858
        %10495 = vmatpush.bf16.msra.mxu0 %v9856
        %10496 = vmatpush.bf16.msra.mxu0 %v9854
        %10497 = vmatpush.bf16.msra.mxu0 %v9852
        %10498 = vmatpush.bf16.msra.mxu0 %v9850
        %10499 = vmatpush.bf16.msra.mxu0 %v9848
        %10500 = vmatpush.bf16.msra.mxu0 %v9846
        %10501 = vmatmul.bf16.gmra.mxu0 %v9263
        %v10502 = vpop.f32.mrf.mxu0
        %v10503 = vadd.f32 %v9458, %v10502
        %v10504 = vpop.f32.mrf.mxu0
        %v10505 = vadd.f32 %v9458, %v10504
        %10506 = vmatmul.bf16.gmra.mxu0 %v9271
        %v10507 = vpop.f32.mrf.mxu0
        %v10508 = vadd.f32 %v9458, %v10507
        %v10509 = vpop.f32.mrf.mxu0
        %v10510 = vadd.f32 %v9458, %v10509
        %10511 = vmatmul.bf16.gmra.mxu0 %v9279
        %v10512 = vpop.f32.mrf.mxu0
        %v10513 = vadd.f32 %v9458, %v10512
        %v10514 = vpop.f32.mrf.mxu0
        %v10515 = vadd.f32 %v9458, %v10514
        %10516 = vmatmul.bf16.gmra.mxu0 %v9287
        %v10517 = vpop.f32.mrf.mxu0
        %v10518 = vadd.f32 %v9458, %v10517
        %v10519 = vpop.f32.mrf.mxu0
        %v10520 = vadd.f32 %v9458, %v10519
        %10521 = vmatmul.bf16.gmra.mxu0 %v9295
        %v10522 = vpop.f32.mrf.mxu0
        %v10523 = vadd.f32 %v9458, %v10522
        %v10524 = vpop.f32.mrf.mxu0
        %v10525 = vadd.f32 %v9458, %v10524
        %10526 = vmatmul.bf16.gmra.mxu0 %v9303
        %v10527 = vpop.f32.mrf.mxu0
        %v10528 = vadd.f32 %v9458, %v10527
        %v10529 = vpop.f32.mrf.mxu0
        %v10530 = vadd.f32 %v9458, %v10529
        %10531 = vmatmul.bf16.gmra.mxu0 %v9311
        %v10532 = vpop.f32.mrf.mxu0
        %v10533 = vadd.f32 %v9458, %v10532
        %v10534 = vpop.f32.mrf.mxu0
        %v10535 = vadd.f32 %v9458, %v10534
        %10536 = vmatmul.bf16.gmra.mxu0 %v9319
        %v10537 = vpop.f32.mrf.mxu0
        %v10538 = vadd.f32 %v9458, %v10537
        %v10539 = vpop.f32.mrf.mxu0
        %v10540 = vadd.f32 %v9458, %v10539
        %10541 = vdwg.mxu0
        %10542 = vmatpush.bf16.msra.mxu0 %v9876
        %10543 = vmatpush.bf16.msra.mxu0 %v9874
        %10544 = vmatpush.bf16.msra.mxu0 %v9872
        %10545 = vmatpush.bf16.msra.mxu0 %v9870
        %10546 = vmatpush.bf16.msra.mxu0 %v9868
        %10547 = vmatpush.bf16.msra.mxu0 %v9866
        %10548 = vmatpush.bf16.msra.mxu0 %v9864
        %10549 = vmatpush.bf16.msra.mxu0 %v9862
        %10550 = vmatmul.bf16.gmra.mxu0 %v9264
        %v10551 = vpop.f32.mrf.mxu0
        %v10552 = vadd.f32 %v10503, %v10551
        %v10553 = vpop.f32.mrf.mxu0
        %v10554 = vadd.f32 %v10505, %v10553
        %10555 = vmatmul.bf16.gmra.mxu0 %v9272
        %v10556 = vpop.f32.mrf.mxu0
        %v10557 = vadd.f32 %v10508, %v10556
        %v10558 = vpop.f32.mrf.mxu0
        %v10559 = vadd.f32 %v10510, %v10558
        %10560 = vmatmul.bf16.gmra.mxu0 %v9280
        %v10561 = vpop.f32.mrf.mxu0
        %v10562 = vadd.f32 %v10513, %v10561
        %v10563 = vpop.f32.mrf.mxu0
        %v10564 = vadd.f32 %v10515, %v10563
        %10565 = vmatmul.bf16.gmra.mxu0 %v9288
        %v10566 = vpop.f32.mrf.mxu0
        %v10567 = vadd.f32 %v10518, %v10566
        %v10568 = vpop.f32.mrf.mxu0
        %v10569 = vadd.f32 %v10520, %v10568
        %10570 = vmatmul.bf16.gmra.mxu0 %v9296
        %v10571 = vpop.f32.mrf.mxu0
        %v10572 = vadd.f32 %v10523, %v10571
        %v10573 = vpop.f32.mrf.mxu0
        %v10574 = vadd.f32 %v10525, %v10573
        %10575 = vmatmul.bf16.gmra.mxu0 %v9304
        %v10576 = vpop.f32.mrf.mxu0
        %v10577 = vadd.f32 %v10528, %v10576
        %v10578 = vpop.f32.mrf.mxu0
        %v10579 = vadd.f32 %v10530, %v10578
        %10580 = vmatmul.bf16.gmra.mxu0 %v9312
        %v10581 = vpop.f32.mrf.mxu0
        %v10582 = vadd.f32 %v10533, %v10581
        %v10583 = vpop.f32.mrf.mxu0
        %v10584 = vadd.f32 %v10535, %v10583
        %10585 = vmatmul.bf16.gmra.mxu0 %v9320
        %v10586 = vpop.f32.mrf.mxu0
        %v10587 = vadd.f32 %v10538, %v10586
        %v10588 = vpop.f32.mrf.mxu0
        %v10589 = vadd.f32 %v10540, %v10588
        %10590 = vdwg.mxu0
        %10591 = vmatpush.bf16.msra.mxu0 %v9892
        %10592 = vmatpush.bf16.msra.mxu0 %v9890
        %10593 = vmatpush.bf16.msra.mxu0 %v9888
        %10594 = vmatpush.bf16.msra.mxu0 %v9886
        %10595 = vmatpush.bf16.msra.mxu0 %v9884
        %10596 = vmatpush.bf16.msra.mxu0 %v9882
        %10597 = vmatpush.bf16.msra.mxu0 %v9880
        %10598 = vmatpush.bf16.msra.mxu0 %v9878
        %10599 = vmatmul.bf16.gmra.mxu0 %v9265
        %v10600 = vpop.f32.mrf.mxu0
        %v10601 = vadd.f32 %v10552, %v10600
        %v10602 = vpop.f32.mrf.mxu0
        %v10603 = vadd.f32 %v10554, %v10602
        %10604 = vmatmul.bf16.gmra.mxu0 %v9273
        %v10605 = vpop.f32.mrf.mxu0
        %v10606 = vadd.f32 %v10557, %v10605
        %v10607 = vpop.f32.mrf.mxu0
        %v10608 = vadd.f32 %v10559, %v10607
        %10609 = vmatmul.bf16.gmra.mxu0 %v9281
        %v10610 = vpop.f32.mrf.mxu0
        %v10611 = vadd.f32 %v10562, %v10610
        %v10612 = vpop.f32.mrf.mxu0
        %v10613 = vadd.f32 %v10564, %v10612
        %10614 = vmatmul.bf16.gmra.mxu0 %v9289
        %v10615 = vpop.f32.mrf.mxu0
        %v10616 = vadd.f32 %v10567, %v10615
        %v10617 = vpop.f32.mrf.mxu0
        %v10618 = vadd.f32 %v10569, %v10617
        %10619 = vmatmul.bf16.gmra.mxu0 %v9297
        %v10620 = vpop.f32.mrf.mxu0
        %v10621 = vadd.f32 %v10572, %v10620
        %v10622 = vpop.f32.mrf.mxu0
        %v10623 = vadd.f32 %v10574, %v10622
        %10624 = vmatmul.bf16.gmra.mxu0 %v9305
        %v10625 = vpop.f32.mrf.mxu0
        %v10626 = vadd.f32 %v10577, %v10625
        %v10627 = vpop.f32.mrf.mxu0
        %v10628 = vadd.f32 %v10579, %v10627
        %10629 = vmatmul.bf16.gmra.mxu0 %v9313
        %v10630 = vpop.f32.mrf.mxu0
        %v10631 = vadd.f32 %v10582, %v10630
        %v10632 = vpop.f32.mrf.mxu0
        %v10633 = vadd.f32 %v10584, %v10632
        %10634 = vmatmul.bf16.gmra.mxu0 %v9321
        %v10635 = vpop.f32.mrf.mxu0
        %v10636 = vadd.f32 %v10587, %v10635
        %v10637 = vpop.f32.mrf.mxu0
        %v10638 = vadd.f32 %v10589, %v10637
        %10639 = vdwg.mxu0
        %10640 = vmatpush.bf16.msra.mxu0 %v9908
        %10641 = vmatpush.bf16.msra.mxu0 %v9906
        %10642 = vmatpush.bf16.msra.mxu0 %v9904
        %10643 = vmatpush.bf16.msra.mxu0 %v9902
        %10644 = vmatpush.bf16.msra.mxu0 %v9900
        %10645 = vmatpush.bf16.msra.mxu0 %v9898
        %10646 = vmatpush.bf16.msra.mxu0 %v9896
        %10647 = vmatpush.bf16.msra.mxu0 %v9894
        %10648 = vmatmul.bf16.gmra.mxu0 %v9266
        %v10649 = vpop.f32.mrf.mxu0
        %v10650 = vadd.f32 %v10601, %v10649
        %v10651 = vpop.f32.mrf.mxu0
        %v10652 = vadd.f32 %v10603, %v10651
        %10653 = vmatmul.bf16.gmra.mxu0 %v9274
        %v10654 = vpop.f32.mrf.mxu0
        %v10655 = vadd.f32 %v10606, %v10654
        %v10656 = vpop.f32.mrf.mxu0
        %v10657 = vadd.f32 %v10608, %v10656
        %10658 = vmatmul.bf16.gmra.mxu0 %v9282
        %v10659 = vpop.f32.mrf.mxu0
        %v10660 = vadd.f32 %v10611, %v10659
        %v10661 = vpop.f32.mrf.mxu0
        %v10662 = vadd.f32 %v10613, %v10661
        %10663 = vmatmul.bf16.gmra.mxu0 %v9290
        %v10664 = vpop.f32.mrf.mxu0
        %v10665 = vadd.f32 %v10616, %v10664
        %v10666 = vpop.f32.mrf.mxu0
        %v10667 = vadd.f32 %v10618, %v10666
        %10668 = vmatmul.bf16.gmra.mxu0 %v9298
        %v10669 = vpop.f32.mrf.mxu0
        %v10670 = vadd.f32 %v10621, %v10669
        %v10671 = vpop.f32.mrf.mxu0
        %v10672 = vadd.f32 %v10623, %v10671
        %10673 = vmatmul.bf16.gmra.mxu0 %v9306
        %v10674 = vpop.f32.mrf.mxu0
        %v10675 = vadd.f32 %v10626, %v10674
        %v10676 = vpop.f32.mrf.mxu0
        %v10677 = vadd.f32 %v10628, %v10676
        %10678 = vmatmul.bf16.gmra.mxu0 %v9314
        %v10679 = vpop.f32.mrf.mxu0
        %v10680 = vadd.f32 %v10631, %v10679
        %v10681 = vpop.f32.mrf.mxu0
        %v10682 = vadd.f32 %v10633, %v10681
        %10683 = vmatmul.bf16.gmra.mxu0 %v9322
        %v10684 = vpop.f32.mrf.mxu0
        %v10685 = vadd.f32 %v10636, %v10684
        %v10686 = vpop.f32.mrf.mxu0
        %v10687 = vadd.f32 %v10638, %v10686
        %10688 = vdwg.mxu0
        %10689 = vmatpush.bf16.msra.mxu0 %v9924
        %10690 = vmatpush.bf16.msra.mxu0 %v9922
        %10691 = vmatpush.bf16.msra.mxu0 %v9920
        %10692 = vmatpush.bf16.msra.mxu0 %v9918
        %10693 = vmatpush.bf16.msra.mxu0 %v9916
        %10694 = vmatpush.bf16.msra.mxu0 %v9914
        %10695 = vmatpush.bf16.msra.mxu0 %v9912
        %10696 = vmatpush.bf16.msra.mxu0 %v9910
        %10697 = vmatmul.bf16.gmra.mxu0 %v9267
        %v10698 = vpop.f32.mrf.mxu0
        %v10699 = vadd.f32 %v10650, %v10698
        %v10700 = vpop.f32.mrf.mxu0
        %v10701 = vadd.f32 %v10652, %v10700
        %10702 = vmatmul.bf16.gmra.mxu0 %v9275
        %v10703 = vpop.f32.mrf.mxu0
        %v10704 = vadd.f32 %v10655, %v10703
        %v10705 = vpop.f32.mrf.mxu0
        %v10706 = vadd.f32 %v10657, %v10705
        %10707 = vmatmul.bf16.gmra.mxu0 %v9283
        %v10708 = vpop.f32.mrf.mxu0
        %v10709 = vadd.f32 %v10660, %v10708
        %v10710 = vpop.f32.mrf.mxu0
        %v10711 = vadd.f32 %v10662, %v10710
        %10712 = vmatmul.bf16.gmra.mxu0 %v9291
        %v10713 = vpop.f32.mrf.mxu0
        %v10714 = vadd.f32 %v10665, %v10713
        %v10715 = vpop.f32.mrf.mxu0
        %v10716 = vadd.f32 %v10667, %v10715
        %10717 = vmatmul.bf16.gmra.mxu0 %v9299
        %v10718 = vpop.f32.mrf.mxu0
        %v10719 = vadd.f32 %v10670, %v10718
        %v10720 = vpop.f32.mrf.mxu0
        %v10721 = vadd.f32 %v10672, %v10720
        %10722 = vmatmul.bf16.gmra.mxu0 %v9307
        %v10723 = vpop.f32.mrf.mxu0
        %v10724 = vadd.f32 %v10675, %v10723
        %v10725 = vpop.f32.mrf.mxu0
        %v10726 = vadd.f32 %v10677, %v10725
        %10727 = vmatmul.bf16.gmra.mxu0 %v9315
        %v10728 = vpop.f32.mrf.mxu0
        %v10729 = vadd.f32 %v10680, %v10728
        %v10730 = vpop.f32.mrf.mxu0
        %v10731 = vadd.f32 %v10682, %v10730
        %10732 = vmatmul.bf16.gmra.mxu0 %v9323
        %v10733 = vpop.f32.mrf.mxu0
        %v10734 = vadd.f32 %v10685, %v10733
        %v10735 = vpop.f32.mrf.mxu0
        %v10736 = vadd.f32 %v10687, %v10735
        %10737 = vdwg.mxu0
        %10738 = vmatpush.bf16.msra.mxu0 %v9940
        %10739 = vmatpush.bf16.msra.mxu0 %v9938
        %10740 = vmatpush.bf16.msra.mxu0 %v9936
        %10741 = vmatpush.bf16.msra.mxu0 %v9934
        %10742 = vmatpush.bf16.msra.mxu0 %v9932
        %10743 = vmatpush.bf16.msra.mxu0 %v9930
        %10744 = vmatpush.bf16.msra.mxu0 %v9928
        %10745 = vmatpush.bf16.msra.mxu0 %v9926
        %10746 = vmatmul.bf16.gmra.mxu0 %v9268
        %v10747 = vpop.f32.mrf.mxu0
        %v10748 = vadd.f32 %v10699, %v10747
        %v10749 = vpop.f32.mrf.mxu0
        %v10750 = vadd.f32 %v10701, %v10749
        %10751 = vmatmul.bf16.gmra.mxu0 %v9276
        %v10752 = vpop.f32.mrf.mxu0
        %v10753 = vadd.f32 %v10704, %v10752
        %v10754 = vpop.f32.mrf.mxu0
        %v10755 = vadd.f32 %v10706, %v10754
        %10756 = vmatmul.bf16.gmra.mxu0 %v9284
        %v10757 = vpop.f32.mrf.mxu0
        %v10758 = vadd.f32 %v10709, %v10757
        %v10759 = vpop.f32.mrf.mxu0
        %v10760 = vadd.f32 %v10711, %v10759
        %10761 = vmatmul.bf16.gmra.mxu0 %v9292
        %v10762 = vpop.f32.mrf.mxu0
        %v10763 = vadd.f32 %v10714, %v10762
        %v10764 = vpop.f32.mrf.mxu0
        %v10765 = vadd.f32 %v10716, %v10764
        %10766 = vmatmul.bf16.gmra.mxu0 %v9300
        %v10767 = vpop.f32.mrf.mxu0
        %v10768 = vadd.f32 %v10719, %v10767
        %v10769 = vpop.f32.mrf.mxu0
        %v10770 = vadd.f32 %v10721, %v10769
        %10771 = vmatmul.bf16.gmra.mxu0 %v9308
        %v10772 = vpop.f32.mrf.mxu0
        %v10773 = vadd.f32 %v10724, %v10772
        %v10774 = vpop.f32.mrf.mxu0
        %v10775 = vadd.f32 %v10726, %v10774
        %10776 = vmatmul.bf16.gmra.mxu0 %v9316
        %v10777 = vpop.f32.mrf.mxu0
        %v10778 = vadd.f32 %v10729, %v10777
        %v10779 = vpop.f32.mrf.mxu0
        %v10780 = vadd.f32 %v10731, %v10779
        %10781 = vmatmul.bf16.gmra.mxu0 %v9324
        %v10782 = vpop.f32.mrf.mxu0
        %v10783 = vadd.f32 %v10734, %v10782
        %v10784 = vpop.f32.mrf.mxu0
        %v10785 = vadd.f32 %v10736, %v10784
        %10786 = vdwg.mxu0
        %10787 = vmatpush.bf16.msra.mxu0 %v9956
        %10788 = vmatpush.bf16.msra.mxu0 %v9954
        %10789 = vmatpush.bf16.msra.mxu0 %v9952
        %10790 = vmatpush.bf16.msra.mxu0 %v9950
        %10791 = vmatpush.bf16.msra.mxu0 %v9948
        %10792 = vmatpush.bf16.msra.mxu0 %v9946
        %10793 = vmatpush.bf16.msra.mxu0 %v9944
        %10794 = vmatpush.bf16.msra.mxu0 %v9942
        %10795 = vmatmul.bf16.gmra.mxu0 %v9269
        %v10796 = vpop.f32.mrf.mxu0
        %v10797 = vadd.f32 %v10748, %v10796
        %v10798 = vpop.f32.mrf.mxu0
        %v10799 = vadd.f32 %v10750, %v10798
        %10800 = vmatmul.bf16.gmra.mxu0 %v9277
        %v10801 = vpop.f32.mrf.mxu0
        %v10802 = vadd.f32 %v10753, %v10801
        %v10803 = vpop.f32.mrf.mxu0
        %v10804 = vadd.f32 %v10755, %v10803
        %10805 = vmatmul.bf16.gmra.mxu0 %v9285
        %v10806 = vpop.f32.mrf.mxu0
        %v10807 = vadd.f32 %v10758, %v10806
        %v10808 = vpop.f32.mrf.mxu0
        %v10809 = vadd.f32 %v10760, %v10808
        %10810 = vmatmul.bf16.gmra.mxu0 %v9293
        %v10811 = vpop.f32.mrf.mxu0
        %v10812 = vadd.f32 %v10763, %v10811
        %v10813 = vpop.f32.mrf.mxu0
        %v10814 = vadd.f32 %v10765, %v10813
        %10815 = vmatmul.bf16.gmra.mxu0 %v9301
        %v10816 = vpop.f32.mrf.mxu0
        %v10817 = vadd.f32 %v10768, %v10816
        %v10818 = vpop.f32.mrf.mxu0
        %v10819 = vadd.f32 %v10770, %v10818
        %10820 = vmatmul.bf16.gmra.mxu0 %v9309
        %v10821 = vpop.f32.mrf.mxu0
        %v10822 = vadd.f32 %v10773, %v10821
        %v10823 = vpop.f32.mrf.mxu0
        %v10824 = vadd.f32 %v10775, %v10823
        %10825 = vmatmul.bf16.gmra.mxu0 %v9317
        %v10826 = vpop.f32.mrf.mxu0
        %v10827 = vadd.f32 %v10778, %v10826
        %v10828 = vpop.f32.mrf.mxu0
        %v10829 = vadd.f32 %v10780, %v10828
        %10830 = vmatmul.bf16.gmra.mxu0 %v9325
        %v10831 = vpop.f32.mrf.mxu0
        %v10832 = vadd.f32 %v10783, %v10831
        %v10833 = vpop.f32.mrf.mxu0
        %v10834 = vadd.f32 %v10785, %v10833
        %10835 = vdwg.mxu0
        %10836 = vmatpush.bf16.msra.mxu0 %v9972
        %10837 = vmatpush.bf16.msra.mxu0 %v9970
        %10838 = vmatpush.bf16.msra.mxu0 %v9968
        %10839 = vmatpush.bf16.msra.mxu0 %v9966
        %10840 = vmatpush.bf16.msra.mxu0 %v9964
        %10841 = vmatpush.bf16.msra.mxu0 %v9962
        %10842 = vmatpush.bf16.msra.mxu0 %v9960
        %10843 = vmatpush.bf16.msra.mxu0 %v9958
        %10844 = vmatmul.bf16.gmra.mxu0 %v9270
        %v10845 = vpop.f32.mrf.mxu0
        %v10846 = vadd.f32 %v10797, %v10845
        %v10847 = vpop.f32.mrf.mxu0
        %v10848 = vadd.f32 %v10799, %v10847
        %10849 = vmatmul.bf16.gmra.mxu0 %v9278
        %v10850 = vpop.f32.mrf.mxu0
        %v10851 = vadd.f32 %v10802, %v10850
        %v10852 = vpop.f32.mrf.mxu0
        %v10853 = vadd.f32 %v10804, %v10852
        %10854 = vmatmul.bf16.gmra.mxu0 %v9286
        %v10855 = vpop.f32.mrf.mxu0
        %v10856 = vadd.f32 %v10807, %v10855
        %v10857 = vpop.f32.mrf.mxu0
        %v10858 = vadd.f32 %v10809, %v10857
        %10859 = vmatmul.bf16.gmra.mxu0 %v9294
        %v10860 = vpop.f32.mrf.mxu0
        %v10861 = vadd.f32 %v10812, %v10860
        %v10862 = vpop.f32.mrf.mxu0
        %v10863 = vadd.f32 %v10814, %v10862
        %10864 = vmatmul.bf16.gmra.mxu0 %v9302
        %v10865 = vpop.f32.mrf.mxu0
        %v10866 = vadd.f32 %v10817, %v10865
        %v10867 = vpop.f32.mrf.mxu0
        %v10868 = vadd.f32 %v10819, %v10867
        %10869 = vmatmul.bf16.gmra.mxu0 %v9310
        %v10870 = vpop.f32.mrf.mxu0
        %v10871 = vadd.f32 %v10822, %v10870
        %v10872 = vpop.f32.mrf.mxu0
        %v10873 = vadd.f32 %v10824, %v10872
        %10874 = vmatmul.bf16.gmra.mxu0 %v9318
        %v10875 = vpop.f32.mrf.mxu0
        %v10876 = vadd.f32 %v10827, %v10875
        %v10877 = vpop.f32.mrf.mxu0
        %v10878 = vadd.f32 %v10829, %v10877
        %10879 = vmatmul.bf16.gmra.mxu0 %v9326
        %v10880 = vpop.f32.mrf.mxu0
        %v10881 = vadd.f32 %v10832, %v10880
        %v10882 = vpop.f32.mrf.mxu0
        %v10883 = vadd.f32 %v10834, %v10882
        %10884 = vdwg.mxu0
        %v10885 = vmax.f32 %v10454, 0.0
        %v10886 = vmax.f32 %v10846, 0.0
        %v10887 = vmax.f32 %v10456, 0.0
        %v10888 = vmax.f32 %v10848, 0.0
        %v10889 = vmax.f32 %v10459, 0.0
        %v10890 = vmax.f32 %v10851, 0.0
        %v10891 = vmax.f32 %v10461, 0.0
        %v10892 = vmax.f32 %v10853, 0.0
        %v10893 = vmax.f32 %v10464, 0.0
        %v10894 = vmax.f32 %v10856, 0.0
        %v10895 = vmax.f32 %v10466, 0.0
        %v10896 = vmax.f32 %v10858, 0.0
        %v10897 = vmax.f32 %v10469, 0.0
        %v10898 = vmax.f32 %v10861, 0.0
        %v10899 = vmax.f32 %v10471, 0.0
        %v10900 = vmax.f32 %v10863, 0.0
        %v10901 = vmax.f32 %v10474, 0.0
        %v10902 = vmax.f32 %v10866, 0.0
        %v10903 = vmax.f32 %v10476, 0.0
        %v10904 = vmax.f32 %v10868, 0.0
        %v10905 = vmax.f32 %v10479, 0.0
        %v10906 = vmax.f32 %v10871, 0.0
        %v10907 = vmax.f32 %v10481, 0.0
        %v10908 = vmax.f32 %v10873, 0.0
        %v10909 = vmax.f32 %v10484, 0.0
        %v10910 = vmax.f32 %v10876, 0.0
        %v10911 = vmax.f32 %v10486, 0.0
        %v10912 = vmax.f32 %v10878, 0.0
        %v10913 = vmax.f32 %v10489, 0.0
        %v10914 = vmax.f32 %v10881, 0.0
        %v10915 = vmax.f32 %v10491, 0.0
        %v10916 = vmax.f32 %v10883, 0.0
        %v10917 = vpack.c.bf16 %v10887, %v10885
        %v10918 = vpack.c.bf16 %v10888, %v10886
        %v10919 = vpack.c.bf16 %v10891, %v10889
        %v10920 = vpack.c.bf16 %v10892, %v10890
        %v10921 = vpack.c.bf16 %v10895, %v10893
        %v10922 = vpack.c.bf16 %v10896, %v10894
        %v10923 = vpack.c.bf16 %v10899, %v10897
        %v10924 = vpack.c.bf16 %v10900, %v10898
        %v10925 = vpack.c.bf16 %v10903, %v10901
        %v10926 = vpack.c.bf16 %v10904, %v10902
        %v10927 = vpack.c.bf16 %v10907, %v10905
        %v10928 = vpack.c.bf16 %v10908, %v10906
        %v10929 = vpack.c.bf16 %v10911, %v10909
        %v10930 = vpack.c.bf16 %v10912, %v10910
        %v10931 = vpack.c.bf16 %v10915, %v10913
        %v10932 = vpack.c.bf16 %v10916, %v10914
        %v10933 = vld [vmem:[#allocation20] sm:$0xf]
        %v10934 = vld [vmem:[#allocation20 + $0x4] sm:$0xf]
        %v10935 = vld [vmem:[#allocation20 + $0x8] sm:$0xf]
        %v10936 = vld [vmem:[#allocation20 + $0xc] sm:$0xf]
        %v10937 = vld [vmem:[#allocation20 + $0x10] sm:$0xf]
        %v10938 = vld [vmem:[#allocation20 + $0x14] sm:$0xf]
        %v10939 = vld [vmem:[#allocation20 + $0x18] sm:$0xf]
        %v10940 = vld [vmem:[#allocation20 + $0x1c] sm:$0xf]
        %v10941 = vld [vmem:[#allocation20 + $0x20] sm:$0xf]
        %v10942 = vld [vmem:[#allocation20 + $0x24] sm:$0xf]
        %v10943 = vld [vmem:[#allocation20 + $0x28] sm:$0xf]
        %v10944 = vld [vmem:[#allocation20 + $0x2c] sm:$0xf]
        %v10945 = vld [vmem:[#allocation20 + $0x30] sm:$0xf]
        %v10946 = vld [vmem:[#allocation20 + $0x34] sm:$0xf]
        %v10947 = vld [vmem:[#allocation20 + $0x38] sm:$0xf]
        %v10948 = vld [vmem:[#allocation20 + $0x3c] sm:$0xf]
        %v10949 = vld [vmem:[#allocation20 + $0x40] sm:$0xf]
        %v10950 = vld [vmem:[#allocation20 + $0x44] sm:$0xf]
        %v10951 = vld [vmem:[#allocation20 + $0x48] sm:$0xf]
        %v10952 = vld [vmem:[#allocation20 + $0x4c] sm:$0xf]
        %v10953 = vld [vmem:[#allocation20 + $0x50] sm:$0xf]
        %v10954 = vld [vmem:[#allocation20 + $0x54] sm:$0xf]
        %v10955 = vld [vmem:[#allocation20 + $0x58] sm:$0xf]
        %v10956 = vld [vmem:[#allocation20 + $0x5c] sm:$0xf]
        %v10957 = vld [vmem:[#allocation20 + $0x60] sm:$0xf]
        %v10958 = vld [vmem:[#allocation20 + $0x64] sm:$0xf]
        %v10959 = vld [vmem:[#allocation20 + $0x68] sm:$0xf]
        %v10960 = vld [vmem:[#allocation20 + $0x6c] sm:$0xf]
        %v10961 = vld [vmem:[#allocation20 + $0x70] sm:$0xf]
        %v10962 = vld [vmem:[#allocation20 + $0x74] sm:$0xf]
        %v10963 = vld [vmem:[#allocation20 + $0x78] sm:$0xf]
        %v10964 = vld [vmem:[#allocation20 + $0x7c] sm:$0xf]
        %v10965 = vld [vmem:[#allocation22] sm:$0x1]
        %v10967 = vperm.slane %v10965, 0
        %v11001 = vunpack.c.l.b16 %v10933
        %v11002 = vunpack.c.l.b16 %v10934
        %v11003 = vunpack.c.l.b16 %v10935
        %v11004 = vunpack.c.l.b16 %v10936
        %v11005 = vunpack.c.l.b16 %v10937
        %v11006 = vunpack.c.l.b16 %v10938
        %v11007 = vunpack.c.l.b16 %v10939
        %v11008 = vunpack.c.l.b16 %v10940
        %v11009 = vunpack.c.l.b16 %v10941
        %v11010 = vunpack.c.l.b16 %v10942
        %v11011 = vunpack.c.l.b16 %v10943
        %v11012 = vunpack.c.l.b16 %v10944
        %v11013 = vunpack.c.l.b16 %v10945
        %v11014 = vunpack.c.l.b16 %v10946
        %v11015 = vunpack.c.l.b16 %v10947
        %v11016 = vunpack.c.l.b16 %v10948
        %v11017 = vunpack.c.l.b16 %v10949
        %v11018 = vunpack.c.l.b16 %v10950
        %v11019 = vunpack.c.l.b16 %v10951
        %v11020 = vunpack.c.l.b16 %v10952
        %v11021 = vunpack.c.l.b16 %v10953
        %v11022 = vunpack.c.l.b16 %v10954
        %v11023 = vunpack.c.l.b16 %v10955
        %v11024 = vunpack.c.l.b16 %v10956
        %v11025 = vunpack.c.l.b16 %v10957
        %v11026 = vunpack.c.l.b16 %v10958
        %v11027 = vunpack.c.l.b16 %v10959
        %v11028 = vunpack.c.l.b16 %v10960
        %v11029 = vunpack.c.l.b16 %v10961
        %v11030 = vunpack.c.l.b16 %v10962
        %v11031 = vunpack.c.l.b16 %v10963
        %v11032 = vunpack.c.l.b16 %v10964
        %v11033 = vpack.c.b16 %v11002, %v11001
        %v11034 = vpack.c.b16 %v11004, %v11003
        %v11035 = vpack.c.b16 %v11006, %v11005
        %v11036 = vpack.c.b16 %v11008, %v11007
        %v11037 = vpack.c.b16 %v11010, %v11009
        %v11038 = vpack.c.b16 %v11012, %v11011
        %v11039 = vpack.c.b16 %v11014, %v11013
        %v11040 = vpack.c.b16 %v11016, %v11015
        %v11041 = vpack.c.b16 %v11018, %v11017
        %v11042 = vpack.c.b16 %v11020, %v11019
        %v11043 = vpack.c.b16 %v11022, %v11021
        %v11044 = vpack.c.b16 %v11024, %v11023
        %v11045 = vpack.c.b16 %v11026, %v11025
        %v11046 = vpack.c.b16 %v11028, %v11027
        %v11047 = vpack.c.b16 %v11030, %v11029
        %v11048 = vpack.c.b16 %v11032, %v11031
        %11065 = vmatpush.bf16.msra.mxu0 %v11040
        %11066 = vmatpush.bf16.msra.mxu0 %v11039
        %11067 = vmatpush.bf16.msra.mxu0 %v11038
        %11068 = vmatpush.bf16.msra.mxu0 %v11037
        %11069 = vmatpush.bf16.msra.mxu0 %v11036
        %11070 = vmatpush.bf16.msra.mxu0 %v11035
        %11071 = vmatpush.bf16.msra.mxu0 %v11034
        %11072 = vmatpush.bf16.msra.mxu0 %v11033
        %11073 = vmatmul.bf16.gmra.mxu0 %v10917
        %v11074 = vpop.f32.mrf.mxu0
        %v11075 = vadd.f32 %v10967, %v11074
        %v11076 = vpop.f32.mrf.mxu0
        %v11077 = vadd.f32 %v10967, %v11076
        %11078 = vmatmul.bf16.gmra.mxu0 %v10919
        %v11079 = vpop.f32.mrf.mxu0
        %v11080 = vadd.f32 %v10967, %v11079
        %v11081 = vpop.f32.mrf.mxu0
        %v11082 = vadd.f32 %v10967, %v11081
        %11083 = vmatmul.bf16.gmra.mxu0 %v10921
        %v11084 = vpop.f32.mrf.mxu0
        %v11085 = vadd.f32 %v10967, %v11084
        %v11086 = vpop.f32.mrf.mxu0
        %v11087 = vadd.f32 %v10967, %v11086
        %11088 = vmatmul.bf16.gmra.mxu0 %v10923
        %v11089 = vpop.f32.mrf.mxu0
        %v11090 = vadd.f32 %v10967, %v11089
        %v11091 = vpop.f32.mrf.mxu0
        %v11092 = vadd.f32 %v10967, %v11091
        %11093 = vmatmul.bf16.gmra.mxu0 %v10925
        %v11094 = vpop.f32.mrf.mxu0
        %v11095 = vadd.f32 %v10967, %v11094
        %v11096 = vpop.f32.mrf.mxu0
        %v11097 = vadd.f32 %v10967, %v11096
        %11098 = vmatmul.bf16.gmra.mxu0 %v10927
        %v11099 = vpop.f32.mrf.mxu0
        %v11100 = vadd.f32 %v10967, %v11099
        %v11101 = vpop.f32.mrf.mxu0
        %v11102 = vadd.f32 %v10967, %v11101
        %11103 = vmatmul.bf16.gmra.mxu0 %v10929
        %v11104 = vpop.f32.mrf.mxu0
        %v11105 = vadd.f32 %v10967, %v11104
        %v11106 = vpop.f32.mrf.mxu0
        %v11107 = vadd.f32 %v10967, %v11106
        %11108 = vmatmul.bf16.gmra.mxu0 %v10931
        %v11109 = vpop.f32.mrf.mxu0
        %v11110 = vadd.f32 %v10967, %v11109
        %v11111 = vpop.f32.mrf.mxu0
        %v11112 = vadd.f32 %v10967, %v11111
        %11113 = vdwg.mxu0
        %11114 = vmatpush.bf16.msra.mxu0 %v11048
        %11115 = vmatpush.bf16.msra.mxu0 %v11047
        %11116 = vmatpush.bf16.msra.mxu0 %v11046
        %11117 = vmatpush.bf16.msra.mxu0 %v11045
        %11118 = vmatpush.bf16.msra.mxu0 %v11044
        %11119 = vmatpush.bf16.msra.mxu0 %v11043
        %11120 = vmatpush.bf16.msra.mxu0 %v11042
        %11121 = vmatpush.bf16.msra.mxu0 %v11041
        %11122 = vmatmul.bf16.gmra.mxu0 %v10918
        %v11123 = vpop.f32.mrf.mxu0
        %v11124 = vadd.f32 %v11075, %v11123
        %v11125 = vpop.f32.mrf.mxu0
        %v11126 = vadd.f32 %v11077, %v11125
        %11127 = vmatmul.bf16.gmra.mxu0 %v10920
        %v11128 = vpop.f32.mrf.mxu0
        %v11129 = vadd.f32 %v11080, %v11128
        %v11130 = vpop.f32.mrf.mxu0
        %v11131 = vadd.f32 %v11082, %v11130
        %11132 = vmatmul.bf16.gmra.mxu0 %v10922
        %v11133 = vpop.f32.mrf.mxu0
        %v11134 = vadd.f32 %v11085, %v11133
        %v11135 = vpop.f32.mrf.mxu0
        %v11136 = vadd.f32 %v11087, %v11135
        %11137 = vmatmul.bf16.gmra.mxu0 %v10924
        %v11138 = vpop.f32.mrf.mxu0
        %v11139 = vadd.f32 %v11090, %v11138
        %v11140 = vpop.f32.mrf.mxu0
        %v11141 = vadd.f32 %v11092, %v11140
        %11142 = vmatmul.bf16.gmra.mxu0 %v10926
        %v11143 = vpop.f32.mrf.mxu0
        %v11144 = vadd.f32 %v11095, %v11143
        %v11145 = vpop.f32.mrf.mxu0
        %v11146 = vadd.f32 %v11097, %v11145
        %11147 = vmatmul.bf16.gmra.mxu0 %v10928
        %v11148 = vpop.f32.mrf.mxu0
        %v11149 = vadd.f32 %v11100, %v11148
        %v11150 = vpop.f32.mrf.mxu0
        %v11151 = vadd.f32 %v11102, %v11150
        %11152 = vmatmul.bf16.gmra.mxu0 %v10930
        %v11153 = vpop.f32.mrf.mxu0
        %v11154 = vadd.f32 %v11105, %v11153
        %v11155 = vpop.f32.mrf.mxu0
        %v11156 = vadd.f32 %v11107, %v11155
        %11157 = vmatmul.bf16.gmra.mxu0 %v10932
        %v11158 = vpop.f32.mrf.mxu0
        %v11159 = vadd.f32 %v11110, %v11158
        %v11160 = vpop.f32.mrf.mxu0
        %v11161 = vadd.f32 %v11112, %v11160
        %11162 = vdwg.mxu0
        %v11163 = vmax.f32 %v11124, 0.0
        %v11164 = vmax.f32 %v11126, 0.0
        %v11165 = vmax.f32 %v11129, 0.0
        %v11166 = vmax.f32 %v11131, 0.0
        %v11167 = vmax.f32 %v11134, 0.0
        %v11168 = vmax.f32 %v11136, 0.0
        %v11169 = vmax.f32 %v11139, 0.0
        %v11170 = vmax.f32 %v11141, 0.0
        %v11171 = vmax.f32 %v11144, 0.0
        %v11172 = vmax.f32 %v11146, 0.0
        %v11173 = vmax.f32 %v11149, 0.0
        %v11174 = vmax.f32 %v11151, 0.0
        %v11175 = vmax.f32 %v11154, 0.0
        %v11176 = vmax.f32 %v11156, 0.0
        %v11177 = vmax.f32 %v11159, 0.0
        %v11178 = vmax.f32 %v11161, 0.0
        %v11179 = vpack.c.bf16 %v11164, %v11163
        %v11180 = vpack.c.bf16 %v11166, %v11165
        %v11181 = vpack.c.bf16 %v11168, %v11167
        %v11182 = vpack.c.bf16 %v11170, %v11169
        %v11183 = vpack.c.bf16 %v11172, %v11171
        %v11184 = vpack.c.bf16 %v11174, %v11173
        %v11185 = vpack.c.bf16 %v11176, %v11175
        %v11186 = vpack.c.bf16 %v11178, %v11177
        %v11187 = vld [vmem:[#allocation23] sm:$0xf]
        %v11188 = vld [vmem:[#allocation23 + $0x4] sm:$0xf]
        %v11189 = vld [vmem:[#allocation23 + $0x8] sm:$0xf]
        %v11190 = vld [vmem:[#allocation23 + $0xc] sm:$0xf]
        %v11191 = vld [vmem:[#allocation23 + $0x10] sm:$0xf]
        %v11192 = vld [vmem:[#allocation23 + $0x14] sm:$0xf]
        %v11193 = vld [vmem:[#allocation23 + $0x18] sm:$0xf]
        %v11194 = vld [vmem:[#allocation23 + $0x1c] sm:$0xf]
        %v11195 = vld [vmem:[#allocation23 + $0x20] sm:$0xf]
        %v11196 = vld [vmem:[#allocation23 + $0x24] sm:$0xf]
        %v11197 = vld [vmem:[#allocation23 + $0x28] sm:$0xf]
        %v11198 = vld [vmem:[#allocation23 + $0x2c] sm:$0xf]
        %v11199 = vld [vmem:[#allocation23 + $0x30] sm:$0xf]
        %v11200 = vld [vmem:[#allocation23 + $0x34] sm:$0xf]
        %v11201 = vld [vmem:[#allocation23 + $0x38] sm:$0xf]
        %v11202 = vld [vmem:[#allocation23 + $0x3c] sm:$0xf]
        %v11203 = vld [vmem:[#allocation25] sm:$0x1]
        %v11205 = vperm.slane %v11203, 0
        %v11223 = vunpack.c.l.b16 %v11187
        %v11224 = vunpack.c.l.b16 %v11188
        %v11225 = vunpack.c.l.b16 %v11189
        %v11226 = vunpack.c.l.b16 %v11190
        %v11227 = vunpack.c.l.b16 %v11191
        %v11228 = vunpack.c.l.b16 %v11192
        %v11229 = vunpack.c.l.b16 %v11193
        %v11230 = vunpack.c.l.b16 %v11194
        %v11231 = vunpack.c.l.b16 %v11195
        %v11232 = vunpack.c.l.b16 %v11196
        %v11233 = vunpack.c.l.b16 %v11197
        %v11234 = vunpack.c.l.b16 %v11198
        %v11235 = vunpack.c.l.b16 %v11199
        %v11236 = vunpack.c.l.b16 %v11200
        %v11237 = vunpack.c.l.b16 %v11201
        %v11238 = vunpack.c.l.b16 %v11202
        %v11239 = vpack.c.b16 %v11224, %v11223
        %v11240 = vpack.c.b16 %v11226, %v11225
        %v11241 = vpack.c.b16 %v11228, %v11227
        %v11242 = vpack.c.b16 %v11230, %v11229
        %v11243 = vpack.c.b16 %v11232, %v11231
        %v11244 = vpack.c.b16 %v11234, %v11233
        %v11245 = vpack.c.b16 %v11236, %v11235
        %v11246 = vpack.c.b16 %v11238, %v11237
        %11255 = vmatpush.bf16.msra.mxu0 %v11246
        %11256 = vmatpush.bf16.msra.mxu0 %v11245
        %11257 = vmatpush.bf16.msra.mxu0 %v11244
        %11258 = vmatpush.bf16.msra.mxu0 %v11243
        %11259 = vmatpush.bf16.msra.mxu0 %v11242
        %11260 = vmatpush.bf16.msra.mxu0 %v11241
        %11261 = vmatpush.bf16.msra.mxu0 %v11240
        %11262 = vmatpush.bf16.msra.mxu0 %v11239
        %11263 = vmatmul.bf16.gmra.mxu0 %v11179
        %v11264 = vpop.f32.mrf.mxu0
        %v11265 = vadd.f32 %v11205, %v11264
        %v11266 = vpop.f32.mrf.mxu0
        %v11267 = vadd.f32 %v11205, %v11266
        %11268 = vmatmul.bf16.gmra.mxu0 %v11180
        %v11269 = vpop.f32.mrf.mxu0
        %v11270 = vadd.f32 %v11205, %v11269
        %v11271 = vpop.f32.mrf.mxu0
        %v11272 = vadd.f32 %v11205, %v11271
        %11273 = vmatmul.bf16.gmra.mxu0 %v11181
        %v11274 = vpop.f32.mrf.mxu0
        %v11275 = vadd.f32 %v11205, %v11274
        %v11276 = vpop.f32.mrf.mxu0
        %v11277 = vadd.f32 %v11205, %v11276
        %11278 = vmatmul.bf16.gmra.mxu0 %v11182
        %v11279 = vpop.f32.mrf.mxu0
        %v11280 = vadd.f32 %v11205, %v11279
        %v11281 = vpop.f32.mrf.mxu0
        %v11282 = vadd.f32 %v11205, %v11281
        %11283 = vmatmul.bf16.gmra.mxu0 %v11183
        %v11284 = vpop.f32.mrf.mxu0
        %v11285 = vadd.f32 %v11205, %v11284
        %v11286 = vpop.f32.mrf.mxu0
        %v11287 = vadd.f32 %v11205, %v11286
        %11288 = vmatmul.bf16.gmra.mxu0 %v11184
        %v11289 = vpop.f32.mrf.mxu0
        %v11290 = vadd.f32 %v11205, %v11289
        %v11291 = vpop.f32.mrf.mxu0
        %v11292 = vadd.f32 %v11205, %v11291
        %11293 = vmatmul.bf16.gmra.mxu0 %v11185
        %v11294 = vpop.f32.mrf.mxu0
        %v11295 = vadd.f32 %v11205, %v11294
        %v11296 = vpop.f32.mrf.mxu0
        %v11297 = vadd.f32 %v11205, %v11296
        %11298 = vmatmul.bf16.gmra.mxu0 %v11186
        %v11299 = vpop.f32.mrf.mxu0
        %v11300 = vadd.f32 %v11205, %v11299
        %v11301 = vpop.f32.mrf.mxu0
        %v11302 = vadd.f32 %v11205, %v11301
        %11303 = vdwg.mxu0
        %11304 = vst [vmem:[%s731] sm:$0xff] %v11265
        %11305 = vst [vmem:[%s731 + $0x8] sm:$0xff] %v11267
        %11306 = vst [vmem:[%s731 + $0x10] sm:$0xff] %v11270
        %11307 = vst [vmem:[%s731 + $0x18] sm:$0xff] %v11272
        %11308 = vst [vmem:[%s731 + $0x20] sm:$0xff] %v11275
        %11309 = vst [vmem:[%s731 + $0x28] sm:$0xff] %v11277
        %11310 = vst [vmem:[%s731 + $0x30] sm:$0xff] %v11280
        %11311 = vst [vmem:[%s731 + $0x38] sm:$0xff] %v11282
        %11312 = vst [vmem:[%s731 + $0x40] sm:$0xff] %v11285
        %11313 = vst [vmem:[%s731 + $0x48] sm:$0xff] %v11287
        %11314 = vst [vmem:[%s731 + $0x50] sm:$0xff] %v11290
        %11315 = vst [vmem:[%s731 + $0x58] sm:$0xff] %v11292
        %11316 = vst [vmem:[%s731 + $0x60] sm:$0xff] %v11295
        %11317 = vst [vmem:[%s731 + $0x68] sm:$0xff] %v11297
        %11318 = vst [vmem:[%s731 + $0x70] sm:$0xff] %v11300
        %11319 = vst [vmem:[%s731 + $0x78] sm:$0xff] %v11302
        %s11320 = sand.u32 %s367, 1
        %s11321 = scalar_lea.sflag [#allocation4], %s11320
        %s11322 = sand.u32 %s367, 1
        %s11323 = smul.addr %s11322, 128
        %s11324 = scalar_lea.vmem [#allocation26], %s11323
        // Predicated region
        $region141: #{tpu_custom_call.1} parent=79 // pred_check
          %p11325 = pneg %p377
        $region142: #{tpu_custom_call.1} parent=79 // pred_check_branch
          %11327 = sbr.rel (%p11325) target = $region144
        $region143: #{tpu_custom_call.1} parent=79 // pred_region
          %s11328 = smul.u32 16, %s39
          %11330 = vsyncadd %s11321, 0
          %s11331 = smul.addr %s11328, 8
          %s11332 = scalar_lea.hbm %s15, %s11331
          %s11333 = sshll.u32 %s11324, 4
          %s11334 = int_to_ptr.vmem [resolvable:$true] %s11333
          %s11335 = sshll.u32 %s11332, 4
          %s11336 = int_to_ptr.hbm [resolvable:$true] %s11335
          %11341 = dma.vmem_to_hbm [thread:$0]  %s11334, 2048, %s11336, %s11321, 128, 128, 8
        $region144: #{tpu_custom_call.1} parent=79 // pred_fallthru
          _
      $region80: #{tpu_custom_call.1} parent=5 // pred_fallthru
        _
      %p11342 = scmp.le.s32.totalorder 2, %s34
      // Predicated region
      $region145: #{tpu_custom_call.1} parent=5 // pred_check
        %p11343 = pneg %p11342
      $region146: #{tpu_custom_call.1} parent=5 // pred_check_branch
        %11345 = sbr.rel (%p11343) target = $region148
      $region147: #{tpu_custom_call.1} parent=5 // pred_region
        %s11346 = ssub.s32 %s34, 2
        // Predicated region
        $region149: #{tpu_custom_call.1} parent=147 // pred_check
          %p11347 = pneg %p383
        $region150: #{tpu_custom_call.1} parent=147 // pred_check_branch
          %11349 = sbr.rel (%p11347) target = $region152
        $region151: #{tpu_custom_call.1} parent=147 // pred_region
          %s11350 = sand.u32 %s368, 1
          %s11351 = scalar_lea.sflag [#allocation4], %s11350
          %s11352 = sand.u32 %s368, 1
          %s11353 = smul.addr %s11352, 128
          %s11354 = scalar_lea.vmem [#allocation26], %s11353
          %11356 = dma.done %s11351, 2048
        $region152: #{tpu_custom_call.1} parent=147 // pred_fallthru
          _
      $region148: #{tpu_custom_call.1} parent=5 // pred_fallthru
        _
    $region6: #{tpu_custom_call.1} parent=1 // loop_footer
      %s38 = sadd.s32 1, %s34
    $region7: #{tpu_custom_call.1} parent=1 // loop_footer_branch
      %33 = sbr.rel target = $region3
    $region8: #{tpu_custom_call.1} parent=1 // loop_exit
      _
    %11357 = vsyncpa [#allocation3], 1
    %s11358 = scalar_lea.sflag [#allocation3], 1
    %11359 = vsyncpa %s11358, 1
    %11360 = vsyncpa [#allocation6], 1
    %11361 = vsyncpa [#allocation9], 1
    %11362 = vsyncpa [#allocation12], 1
    %11363 = vsyncpa [#allocation15], 1
    %11364 = vsyncpa [#allocation18], 1
    %11365 = vsyncpa [#allocation21], 1
    %11366 = vsyncpa [#allocation24], 1
    %11367 = vsyncpa [#allocation4], 1
    %s11368 = scalar_lea.sflag [#allocation4], 1
    %11369 = vsyncpa %s11368, 1

</llo_original>
